<compile_context>
chip_gen: v5e
topology: v5e:2x2
jax: 0.10.0
libtpu: 0.0.40
codegen_flags: <defaults>
</compile_context>

<pallas_src>
import numpy as np
import jax
import jax.numpy as jnp
from jax import lax
from jax.experimental import pallas as pl
from jax.experimental.pallas import tpu as pltpu


LEAKY_SLOPE = 0.2
IN_EPS = 1e-5
# MXU operand dtype (accumulation is always f32).  Set to jnp.float32 for
# exact-f32 module semantics.
MATMUL_DTYPE = jnp.bfloat16


# ----------------------------------------------------------------------------
# static per-block geometry
# ----------------------------------------------------------------------------
def _block_geometry(h, w, cin, cout, k, pool, norm):
    ho, wo = h - k + 1, w - k + 1
    q = (ho - 1) * w + wo            # conv-output positions kept on input grid
    hout, wout = (ho // 2, wo // 2) if pool else (ho, wo)
    return dict(h=h, w=w, cin=cin, cout=cout, k=k, ho=ho, wo=wo, q=q,
                pool=pool, norm=norm, hout=hout, wout=wout)


# ----------------------------------------------------------------------------
# fused discriminator kernel (all blocks + final 1x1 conv, one batch element
# per grid step)
# ----------------------------------------------------------------------------
def _make_fused_kernel(geoms):
    nb = len(geoms)

    def kernel(*refs):
        it = iter(refs)
        x_ref = next(it)                                   # (1, C0, H*W) f32
        blk_refs = []
        for g in geoms:
            w_ref = next(it)                               # (K*K, Cout, Cin)
            b_ref = next(it)                               # (Cout, 1) f32
            if g['norm']:
                gm_ref, bt_ref = next(it), next(it)        # (Cout, 1) each
            else:
                gm_ref = bt_ref = None
            blk_refs.append((w_ref, b_ref, gm_ref, bt_ref))
        wf_ref = next(it)                                  # (C_last, 1) f32
        bf_ref = next(it)                                  # (1, 1) f32
        fm_refs = [next(it) for _ in range(nb)]            # (1, Cout, Hp*Wp)
        pred_ref = next(it)                                # (1, 1, Hf*Wf)

        for i, g in enumerate(geoms):
            w_ref, b_ref, gm_ref, bt_ref = blk_refs[i]
            K, W, Wo, Ho, q = g['k'], g['w'], g['wo'], g['ho'], g['q']
            src_ref = x_ref if i == 0 else fm_refs[i - 1]  # previous slab

            # ---- conv: K*K shifted matmuls, accumulated in registers -------
            # rhs for tap (kh,kw) is the source slab read at lane offset
            # kh*W+kw; result (Cout, q) is lane-dense.  Garbage columns
            # (flat positions with col >= Wo) are never selected downstream
            # and are masked out of the IN statistics.
            acc = None
            for t in range(K * K):
                kh, kw = divmod(t, K)
                off = kh * W + kw
                rhs = src_ref[0, :, off:off + q].astype(MATMUL_DTYPE)
                contrib = jnp.dot(w_ref[t], rhs,
                                  preferred_element_type=jnp.float32)
                acc = contrib if acc is None else acc + contrib
            y = acc + b_ref[...]                           # (Cout, q) f32

            # ---- InstanceNorm2d: two-pass masked stats, all in f32 ---------
            if g['norm']:
                lane = lax.broadcasted_iota(jnp.int32, (1, q), 1)
                valid = lane < Wo                           # row 0
                for hrow in range(1, Ho):                   # no int div/mod
                    s = hrow * W
                    valid = valid | ((lane >= s) & (lane < s + Wo))
                inv_cnt = 1.0 / float(Ho * Wo)
                mean = jnp.sum(jnp.where(valid, y, 0.0), axis=1,
                               keepdims=True) * inv_cnt
                d = y - mean
                var = jnp.sum(jnp.where(valid, d * d, 0.0), axis=1,
                              keepdims=True) * inv_cnt
                y = d * lax.rsqrt(var + IN_EPS)
                y = y * gm_ref[...] + bt_ref[...]

            # ---- LeakyReLU(0.2) on the VPU ---------------------------------
            y = jnp.where(y >= 0, y, LEAKY_SLOPE * y)

            fm = fm_refs[i]
            if g['pool']:
                # ---- 2x2 / stride-2 avg pool: per pooled row, one small
                # matmul against an iota-built 0/0.25 selection matrix that
                # covers both conv rows of the window (no strided loads).
                Hp, Wp = g['hout'], g['wout']
                jr = lax.broadcasted_iota(jnp.int32, (W + Wo, Wp), 0)
                jc = lax.broadcasted_iota(jnp.int32, (W + Wo, Wp), 1)
                u = jr - 2 * jc
                m_pool = (((u == 0) | (u == 1) | (u == W) | (u == W + 1))
                          .astype(jnp.float32) * 0.25)      # (W+Wo, Wp)
                for r in range(Hp):
                    sl = y[:, 2 * r * W: 2 * r * W + W + Wo]   # (Cout, W+Wo)
                    row = jnp.dot(sl, m_pool,
                                  preferred_element_type=jnp.float32)
                    fm[0, :, r * Wp:(r + 1) * Wp] = row
            else:
                # ---- compact the valid conv columns into a dense map -------
                for hrow in range(Ho):
                    fm[0, :, hrow * Wo:(hrow + 1) * Wo] = \
                        y[:, hrow * W: hrow * W + Wo]

        # ---- final 1x1 conv (Cout = 1): f32 multiply + sublane reduction ---
        last = fm_refs[-1][0]                              # (C_last, P) f32
        pred = jnp.sum(last * wf_ref[...], axis=0, keepdims=True) + bf_ref[...]
        pred_ref[0] = pred

    return kernel


# ----------------------------------------------------------------------------
# wrapper: builds operands / specs and calls the fused kernel once
# ----------------------------------------------------------------------------
def discriminator_forward(params, x):
    """x: (N, C, H, W) float32, NCHW (PyTorch layout).

    Returns (feature_maps, prediction), each NCHW float32.
    """
    n, c0, h, w = x.shape
    blocks = params['blocks']

    geoms = []
    hh, ww, cc = h, w, c0
    for blk in blocks:
        g = _block_geometry(hh, ww, cc, int(blk['w_hwio'].shape[-1]),
                            blk['kernel_size'], blk['pool'], blk['norm'])
        geoms.append(g)
        hh, ww, cc = g['hout'], g['wout'], g['cout']

    def bcast_spec(shape):
        nd = len(shape)
        return pl.BlockSpec(shape, lambda i, _nd=nd: (0,) * _nd)

    inputs = [x.reshape(n, c0, h * w)]
    in_specs = [pl.BlockSpec((1, c0, h * w), lambda i: (i, 0, 0))]

    for blk, g in zip(blocks, geoms):
        k, cin, cout = g['k'], g['cin'], g['cout']
        # weights as (K*K, Cout, Cin): each tap is a ready (Cout, Cin) lhs
        w_taps = jnp.transpose(blk['w_hwio'], (0, 1, 3, 2)).reshape(
            k * k, cout, cin).astype(MATMUL_DTYPE)
        inputs += [w_taps, blk['b'].reshape(cout, 1).astype(jnp.float32)]
        in_specs += [bcast_spec((k * k, cout, cin)), bcast_spec((cout, 1))]
        if g['norm']:
            inputs += [blk['gamma'].reshape(cout, 1).astype(jnp.float32),
                       blk['beta'].reshape(cout, 1).astype(jnp.float32)]
            in_specs += [bcast_spec((cout, 1)), bcast_spec((cout, 1))]

    c_last = geoms[-1]['cout']
    inputs += [params['final_w'].reshape(c_last, 1).astype(jnp.float32),
               params['final_b'].reshape(1, 1).astype(jnp.float32)]
    in_specs += [bcast_spec((c_last, 1)), bcast_spec((1, 1))]

    hw_f = geoms[-1]['hout'] * geoms[-1]['wout']
    out_shape = tuple(
        [jax.ShapeDtypeStruct((n, g['cout'], g['hout'] * g['wout']),
                              jnp.float32) for g in geoms]
        + [jax.ShapeDtypeStruct((n, 1, hw_f), jnp.float32)])
    out_specs = tuple(
        [pl.BlockSpec((1, g['cout'], g['hout'] * g['wout']),
                      lambda i: (i, 0, 0)) for g in geoms]
        + [pl.BlockSpec((1, 1, hw_f), lambda i: (i, 0, 0))])

    outs = pl.pallas_call(
        _make_fused_kernel(geoms),
        out_shape=out_shape,
        grid=(n,),
        in_specs=in_specs,
        out_specs=out_specs,
        compiler_params=pltpu.CompilerParams(
            dimension_semantics=("parallel",),
            vmem_limit_bytes=32 * 1024 * 1024),
    )(*inputs)

    feature_maps = [o.reshape(n, g['cout'], g['hout'], g['wout'])
                    for o, g in zip(outs[:-1], geoms)]
    pred = outs[-1].reshape(n, 1, geoms[-1]['hout'], geoms[-1]['wout'])
    return feature_maps, pred


# ----------------------------------------------------------------------------
# parameter init (mirrors the PyTorch module's shapes / default init)
# ----------------------------------------------------------------------------
def init_discriminator_params(key, num_channels=3, block_expansion=8,
                              num_blocks=3, max_features=32, kernel_size=4):
    blocks = []
    for i in range(num_blocks):
        cin = num_channels if i == 0 else min(max_features,
                                              block_expansion * 2 ** i)
        cout = min(max_features, block_expansion * 2 ** (i + 1))
        key, kw_, kb_ = jax.random.split(key, 3)
        bound = 1.0 / np.sqrt(cin * kernel_size * kernel_size)
        w = jax.random.uniform(kw_, (kernel_size, kernel_size, cin, cout),
                               jnp.float32, -bound, bound)      # HWIO
        b = jax.random.uniform(kb_, (cout,), jnp.float32, -bound, bound)
        blocks.append(dict(
            w_hwio=w, b=b,
            gamma=jnp.ones((cout,), jnp.float32),   # InstanceNorm affine init
            beta=jnp.zeros((cout,), jnp.float32),
            norm=(i != 0), pool=(i != num_blocks - 1),
            kernel_size=kernel_size))
    key, kw_, kb_ = jax.random.split(key, 3)
    c_last = int(blocks[-1]['w_hwio'].shape[-1])
    bound = 1.0 / np.sqrt(c_last)
    final_w = jax.random.uniform(kw_, (c_last, 1), jnp.float32, -bound, bound)
    final_b = jax.random.uniform(kb_, (1,), jnp.float32, -bound, bound)
    return dict(blocks=blocks, final_w=final_w, final_b=final_b)


# ----------------------------------------------------------------------------
# pure-JAX reference (correctness check).  Mirrors the kernel's precision
# policy: conv operands in MATMUL_DTYPE, f32 accumulation, everything else f32.
# ----------------------------------------------------------------------------
def reference_forward(params, x, matmul_dtype=MATMUL_DTYPE):
    feature_maps = []
    out = x                                                 # NCHW
    for blk in params['blocks']:
        y = lax.conv_general_dilated(
            out.astype(matmul_dtype), blk['w_hwio'].astype(matmul_dtype),
            (1, 1), 'VALID',
            dimension_numbers=('NCHW', 'HWIO', 'NCHW'),
            preferred_element_type=jnp.float32)
        y = y + blk['b'][None, :, None, None]
        if blk['norm']:
            mean = jnp.mean(y, axis=(2, 3), keepdims=True)
            var = jnp.mean((y - mean) ** 2, axis=(2, 3), keepdims=True)
            y = (y - mean) * lax.rsqrt(var + IN_EPS)
            y = y * blk['gamma'][None, :, None, None] \
                + blk['beta'][None, :, None, None]
        y = jnp.where(y >= 0, y, LEAKY_SLOPE * y)
        if blk['pool']:
            nb_, cc, hh, ww = y.shape
            hc, wc = (hh // 2) * 2, (ww // 2) * 2
            y = y[:, :, :hc, :wc].reshape(nb_, cc, hh // 2, 2, wc // 2, 2)
            y = y.mean(axis=(3, 5))
        feature_maps.append(y)
        out = y
    pred = jnp.einsum('nchw,co->nohw', out, params['final_w'],
                      precision=lax.Precision.HIGHEST)
    pred = pred + params['final_b'][None, :, None, None]
    return feature_maps, pred


if __name__ == "__main__":
    key = jax.random.PRNGKey(0)
    key, kx = jax.random.split(key)

    # Small config consistent with the module:
    # num_channels=3, block_expansion=8, num_blocks=3, max_features=32.
    # N=2 keeps both v7x TensorCores busy on the "parallel" batch grid axis.
    N, C, H, W = 2, 3, 32, 32
    x = jax.random.normal(kx, (N, C, H, W), jnp.float32)    # NCHW layout

    params = init_discriminator_params(key, num_channels=C, block_expansion=8,
                                       num_blocks=3, max_features=32)

    fmaps, pred = discriminator_forward(params, x)
    jax.block_until_ready(pred)
    for fm in fmaps:
        jax.block_until_ready(fm)

    ref_fmaps, ref_pred = reference_forward(params, x)
    for a, b in zip(fmaps, ref_fmaps):
        np.testing.assert_allclose(np.asarray(a), np.asarray(b),
                                   rtol=2e-2, atol=2e-2)
    np.testing.assert_allclose(np.asarray(pred), np.asarray(ref_pred),
                               rtol=2e-2, atol=2e-2)

    print("KERNEL_OK")
</pallas_src>

<mosaic_0001>
module attributes {stable_mosaic.version = 11 : i64} {
  func.func @kernel(%arg0: i32, %arg1: memref<1x3x1024xf32, #tpu.memory_space<vmem>>, %arg2: memref<16x16x3xbf16, #tpu.memory_space<vmem>>, %arg3: memref<16x1xf32, #tpu.memory_space<vmem>>, %arg4: memref<16x32x16xbf16, #tpu.memory_space<vmem>>, %arg5: memref<32x1xf32, #tpu.memory_space<vmem>>, %arg6: memref<32x1xf32, #tpu.memory_space<vmem>>, %arg7: memref<32x1xf32, #tpu.memory_space<vmem>>, %arg8: memref<16x32x32xbf16, #tpu.memory_space<vmem>>, %arg9: memref<32x1xf32, #tpu.memory_space<vmem>>, %arg10: memref<32x1xf32, #tpu.memory_space<vmem>>, %arg11: memref<32x1xf32, #tpu.memory_space<vmem>>, %arg12: memref<32x1xf32, #tpu.memory_space<vmem>>, %arg13: memref<1x1xf32, #tpu.memory_space<vmem>>, %arg14: memref<1x16x196xf32, #tpu.memory_space<vmem>>, %arg15: memref<1x32x25xf32, #tpu.memory_space<vmem>>, %arg16: memref<1x32x4xf32, #tpu.memory_space<vmem>>, %arg17: memref<1x1x4xf32, #tpu.memory_space<vmem>>) attributes {dimension_semantics = [#tpu.dimension_semantics<parallel>], iteration_bounds = array<i64: 2>, scalar_prefetch = 0 : i64, scratch_operands = 0 : i64, tpu.core_type = #tpu.core_type<tc>, window_params = [{transform_indices = @transform_0, window_bounds = array<i64: 1, 3, 1024>}, {pipeline_mode = #tpu.pipeline_mode<synchronous>, transform_indices = @transform_1, window_bounds = array<i64: 16, 16, 3>}, {pipeline_mode = #tpu.pipeline_mode<synchronous>, transform_indices = @transform_2, window_bounds = array<i64: 16, 1>}, {pipeline_mode = #tpu.pipeline_mode<synchronous>, transform_indices = @transform_3, window_bounds = array<i64: 16, 32, 16>}, {pipeline_mode = #tpu.pipeline_mode<synchronous>, transform_indices = @transform_4, window_bounds = array<i64: 32, 1>}, {pipeline_mode = #tpu.pipeline_mode<synchronous>, transform_indices = @transform_5, window_bounds = array<i64: 32, 1>}, {pipeline_mode = #tpu.pipeline_mode<synchronous>, transform_indices = @transform_6, window_bounds = array<i64: 32, 1>}, {pipeline_mode = #tpu.pipeline_mode<synchronous>, transform_indices = @transform_7, window_bounds = array<i64: 16, 32, 32>}, {pipeline_mode = #tpu.pipeline_mode<synchronous>, transform_indices = @transform_8, window_bounds = array<i64: 32, 1>}, {pipeline_mode = #tpu.pipeline_mode<synchronous>, transform_indices = @transform_9, window_bounds = array<i64: 32, 1>}, {pipeline_mode = #tpu.pipeline_mode<synchronous>, transform_indices = @transform_10, window_bounds = array<i64: 32, 1>}, {pipeline_mode = #tpu.pipeline_mode<synchronous>, transform_indices = @transform_11, window_bounds = array<i64: 32, 1>}, {pipeline_mode = #tpu.pipeline_mode<synchronous>, transform_indices = @transform_12, window_bounds = array<i64: 1, 1>}, {transform_indices = @transform_13, window_bounds = array<i64: 1, 16, 196>}, {transform_indices = @transform_14, window_bounds = array<i64: 1, 32, 25>}, {transform_indices = @transform_15, window_bounds = array<i64: 1, 32, 4>}, {transform_indices = @transform_16, window_bounds = array<i64: 1, 1, 4>}]} {
    %c0 = arith.constant 0 : index
    %c0_0 = arith.constant 0 : index
    %c0_1 = arith.constant 0 : index
    %0 = vector.load %arg1[%c0, %c0_0, %c0_1] : memref<1x3x1024xf32, #tpu.memory_space<vmem>>, vector<1x3x925xf32>
    %1 = vector.shape_cast %0 : vector<1x3x925xf32> to vector<3x925xf32>
    %2 = arith.truncf %1 : vector<3x925xf32> to vector<3x925xbf16>
    %c0_2 = arith.constant 0 : index
    %c0_3 = arith.constant 0 : index
    %c0_4 = arith.constant 0 : index
    %3 = vector.load %arg2[%c0_2, %c0_3, %c0_4] : memref<16x16x3xbf16, #tpu.memory_space<vmem>>, vector<1x16x3xbf16>
    %4 = vector.shape_cast %3 : vector<1x16x3xbf16> to vector<16x3xbf16>
    %cst = arith.constant dense<0.000000e+00> : vector<16x925xf32>
    %5 = tpu.matmul %4, %2, %cst {dimension_numbers = #tpu.dot_dimension_numbers<[1], [0], [0], [1], [0, 0, 1, 1], [], []>} : vector<16x3xbf16>, vector<3x925xbf16>, vector<16x925xf32> -> vector<16x925xf32>
    %c0_5 = arith.constant 0 : index
    %c0_6 = arith.constant 0 : index
    %c1 = arith.constant 1 : index
    %6 = vector.load %arg1[%c0_5, %c0_6, %c1] : memref<1x3x1024xf32, #tpu.memory_space<vmem>>, vector<1x3x925xf32>
    %7 = vector.shape_cast %6 : vector<1x3x925xf32> to vector<3x925xf32>
    %8 = arith.truncf %7 : vector<3x925xf32> to vector<3x925xbf16>
    %c1_7 = arith.constant 1 : index
    %c0_8 = arith.constant 0 : index
    %c0_9 = arith.constant 0 : index
    %9 = vector.load %arg2[%c1_7, %c0_8, %c0_9] : memref<16x16x3xbf16, #tpu.memory_space<vmem>>, vector<1x16x3xbf16>
    %10 = vector.shape_cast %9 : vector<1x16x3xbf16> to vector<16x3xbf16>
    %cst_10 = arith.constant dense<0.000000e+00> : vector<16x925xf32>
    %11 = tpu.matmul %10, %8, %cst_10 {dimension_numbers = #tpu.dot_dimension_numbers<[1], [0], [0], [1], [0, 0, 1, 1], [], []>} : vector<16x3xbf16>, vector<3x925xbf16>, vector<16x925xf32> -> vector<16x925xf32>
    %12 = arith.addf %5, %11 : vector<16x925xf32>
    %c0_11 = arith.constant 0 : index
    %c0_12 = arith.constant 0 : index
    %c2 = arith.constant 2 : index
    %13 = vector.load %arg1[%c0_11, %c0_12, %c2] : memref<1x3x1024xf32, #tpu.memory_space<vmem>>, vector<1x3x925xf32>
    %14 = vector.shape_cast %13 : vector<1x3x925xf32> to vector<3x925xf32>
    %15 = arith.truncf %14 : vector<3x925xf32> to vector<3x925xbf16>
    %c2_13 = arith.constant 2 : index
    %c0_14 = arith.constant 0 : index
    %c0_15 = arith.constant 0 : index
    %16 = vector.load %arg2[%c2_13, %c0_14, %c0_15] : memref<16x16x3xbf16, #tpu.memory_space<vmem>>, vector<1x16x3xbf16>
    %17 = vector.shape_cast %16 : vector<1x16x3xbf16> to vector<16x3xbf16>
    %cst_16 = arith.constant dense<0.000000e+00> : vector<16x925xf32>
    %18 = tpu.matmul %17, %15, %cst_16 {dimension_numbers = #tpu.dot_dimension_numbers<[1], [0], [0], [1], [0, 0, 1, 1], [], []>} : vector<16x3xbf16>, vector<3x925xbf16>, vector<16x925xf32> -> vector<16x925xf32>
    %19 = arith.addf %12, %18 : vector<16x925xf32>
    %c0_17 = arith.constant 0 : index
    %c0_18 = arith.constant 0 : index
    %c3 = arith.constant 3 : index
    %20 = vector.load %arg1[%c0_17, %c0_18, %c3] : memref<1x3x1024xf32, #tpu.memory_space<vmem>>, vector<1x3x925xf32>
    %21 = vector.shape_cast %20 : vector<1x3x925xf32> to vector<3x925xf32>
    %22 = arith.truncf %21 : vector<3x925xf32> to vector<3x925xbf16>
    %c3_19 = arith.constant 3 : index
    %c0_20 = arith.constant 0 : index
    %c0_21 = arith.constant 0 : index
    %23 = vector.load %arg2[%c3_19, %c0_20, %c0_21] : memref<16x16x3xbf16, #tpu.memory_space<vmem>>, vector<1x16x3xbf16>
    %24 = vector.shape_cast %23 : vector<1x16x3xbf16> to vector<16x3xbf16>
    %cst_22 = arith.constant dense<0.000000e+00> : vector<16x925xf32>
    %25 = tpu.matmul %24, %22, %cst_22 {dimension_numbers = #tpu.dot_dimension_numbers<[1], [0], [0], [1], [0, 0, 1, 1], [], []>} : vector<16x3xbf16>, vector<3x925xbf16>, vector<16x925xf32> -> vector<16x925xf32>
    %26 = arith.addf %19, %25 : vector<16x925xf32>
    %c0_23 = arith.constant 0 : index
    %c0_24 = arith.constant 0 : index
    %c32 = arith.constant 32 : index
    %27 = vector.load %arg1[%c0_23, %c0_24, %c32] : memref<1x3x1024xf32, #tpu.memory_space<vmem>>, vector<1x3x925xf32>
    %28 = vector.shape_cast %27 : vector<1x3x925xf32> to vector<3x925xf32>
    %29 = arith.truncf %28 : vector<3x925xf32> to vector<3x925xbf16>
    %c4 = arith.constant 4 : index
    %c0_25 = arith.constant 0 : index
    %c0_26 = arith.constant 0 : index
    %30 = vector.load %arg2[%c4, %c0_25, %c0_26] : memref<16x16x3xbf16, #tpu.memory_space<vmem>>, vector<1x16x3xbf16>
    %31 = vector.shape_cast %30 : vector<1x16x3xbf16> to vector<16x3xbf16>
    %cst_27 = arith.constant dense<0.000000e+00> : vector<16x925xf32>
    %32 = tpu.matmul %31, %29, %cst_27 {dimension_numbers = #tpu.dot_dimension_numbers<[1], [0], [0], [1], [0, 0, 1, 1], [], []>} : vector<16x3xbf16>, vector<3x925xbf16>, vector<16x925xf32> -> vector<16x925xf32>
    %33 = arith.addf %26, %32 : vector<16x925xf32>
    %c0_28 = arith.constant 0 : index
    %c0_29 = arith.constant 0 : index
    %c33 = arith.constant 33 : index
    %34 = vector.load %arg1[%c0_28, %c0_29, %c33] : memref<1x3x1024xf32, #tpu.memory_space<vmem>>, vector<1x3x925xf32>
    %35 = vector.shape_cast %34 : vector<1x3x925xf32> to vector<3x925xf32>
    %36 = arith.truncf %35 : vector<3x925xf32> to vector<3x925xbf16>
    %c5 = arith.constant 5 : index
    %c0_30 = arith.constant 0 : index
    %c0_31 = arith.constant 0 : index
    %37 = vector.load %arg2[%c5, %c0_30, %c0_31] : memref<16x16x3xbf16, #tpu.memory_space<vmem>>, vector<1x16x3xbf16>
    %38 = vector.shape_cast %37 : vector<1x16x3xbf16> to vector<16x3xbf16>
    %cst_32 = arith.constant dense<0.000000e+00> : vector<16x925xf32>
    %39 = tpu.matmul %38, %36, %cst_32 {dimension_numbers = #tpu.dot_dimension_numbers<[1], [0], [0], [1], [0, 0, 1, 1], [], []>} : vector<16x3xbf16>, vector<3x925xbf16>, vector<16x925xf32> -> vector<16x925xf32>
    %40 = arith.addf %33, %39 : vector<16x925xf32>
    %c0_33 = arith.constant 0 : index
    %c0_34 = arith.constant 0 : index
    %c34 = arith.constant 34 : index
    %41 = vector.load %arg1[%c0_33, %c0_34, %c34] : memref<1x3x1024xf32, #tpu.memory_space<vmem>>, vector<1x3x925xf32>
    %42 = vector.shape_cast %41 : vector<1x3x925xf32> to vector<3x925xf32>
    %43 = arith.truncf %42 : vector<3x925xf32> to vector<3x925xbf16>
    %c6 = arith.constant 6 : index
    %c0_35 = arith.constant 0 : index
    %c0_36 = arith.constant 0 : index
    %44 = vector.load %arg2[%c6, %c0_35, %c0_36] : memref<16x16x3xbf16, #tpu.memory_space<vmem>>, vector<1x16x3xbf16>
    %45 = vector.shape_cast %44 : vector<1x16x3xbf16> to vector<16x3xbf16>
    %cst_37 = arith.constant dense<0.000000e+00> : vector<16x925xf32>
    %46 = tpu.matmul %45, %43, %cst_37 {dimension_numbers = #tpu.dot_dimension_numbers<[1], [0], [0], [1], [0, 0, 1, 1], [], []>} : vector<16x3xbf16>, vector<3x925xbf16>, vector<16x925xf32> -> vector<16x925xf32>
    %47 = arith.addf %40, %46 : vector<16x925xf32>
    %c0_38 = arith.constant 0 : index
    %c0_39 = arith.constant 0 : index
    %c35 = arith.constant 35 : index
    %48 = vector.load %arg1[%c0_38, %c0_39, %c35] : memref<1x3x1024xf32, #tpu.memory_space<vmem>>, vector<1x3x925xf32>
    %49 = vector.shape_cast %48 : vector<1x3x925xf32> to vector<3x925xf32>
    %50 = arith.truncf %49 : vector<3x925xf32> to vector<3x925xbf16>
    %c7 = arith.constant 7 : index
    %c0_40 = arith.constant 0 : index
    %c0_41 = arith.constant 0 : index
    %51 = vector.load %arg2[%c7, %c0_40, %c0_41] : memref<16x16x3xbf16, #tpu.memory_space<vmem>>, vector<1x16x3xbf16>
    %52 = vector.shape_cast %51 : vector<1x16x3xbf16> to vector<16x3xbf16>
    %cst_42 = arith.constant dense<0.000000e+00> : vector<16x925xf32>
    %53 = tpu.matmul %52, %50, %cst_42 {dimension_numbers = #tpu.dot_dimension_numbers<[1], [0], [0], [1], [0, 0, 1, 1], [], []>} : vector<16x3xbf16>, vector<3x925xbf16>, vector<16x925xf32> -> vector<16x925xf32>
    %54 = arith.addf %47, %53 : vector<16x925xf32>
    %c0_43 = arith.constant 0 : index
    %c0_44 = arith.constant 0 : index
    %c64 = arith.constant 64 : index
    %55 = vector.load %arg1[%c0_43, %c0_44, %c64] : memref<1x3x1024xf32, #tpu.memory_space<vmem>>, vector<1x3x925xf32>
    %56 = vector.shape_cast %55 : vector<1x3x925xf32> to vector<3x925xf32>
    %57 = arith.truncf %56 : vector<3x925xf32> to vector<3x925xbf16>
    %c8 = arith.constant 8 : index
    %c0_45 = arith.constant 0 : index
    %c0_46 = arith.constant 0 : index
    %58 = vector.load %arg2[%c8, %c0_45, %c0_46] : memref<16x16x3xbf16, #tpu.memory_space<vmem>>, vector<1x16x3xbf16>
    %59 = vector.shape_cast %58 : vector<1x16x3xbf16> to vector<16x3xbf16>
    %cst_47 = arith.constant dense<0.000000e+00> : vector<16x925xf32>
    %60 = tpu.matmul %59, %57, %cst_47 {dimension_numbers = #tpu.dot_dimension_numbers<[1], [0], [0], [1], [0, 0, 1, 1], [], []>} : vector<16x3xbf16>, vector<3x925xbf16>, vector<16x925xf32> -> vector<16x925xf32>
    %61 = arith.addf %54, %60 : vector<16x925xf32>
    %c0_48 = arith.constant 0 : index
    %c0_49 = arith.constant 0 : index
    %c65 = arith.constant 65 : index
    %62 = vector.load %arg1[%c0_48, %c0_49, %c65] : memref<1x3x1024xf32, #tpu.memory_space<vmem>>, vector<1x3x925xf32>
    %63 = vector.shape_cast %62 : vector<1x3x925xf32> to vector<3x925xf32>
    %64 = arith.truncf %63 : vector<3x925xf32> to vector<3x925xbf16>
    %c9 = arith.constant 9 : index
    %c0_50 = arith.constant 0 : index
    %c0_51 = arith.constant 0 : index
    %65 = vector.load %arg2[%c9, %c0_50, %c0_51] : memref<16x16x3xbf16, #tpu.memory_space<vmem>>, vector<1x16x3xbf16>
    %66 = vector.shape_cast %65 : vector<1x16x3xbf16> to vector<16x3xbf16>
    %cst_52 = arith.constant dense<0.000000e+00> : vector<16x925xf32>
    %67 = tpu.matmul %66, %64, %cst_52 {dimension_numbers = #tpu.dot_dimension_numbers<[1], [0], [0], [1], [0, 0, 1, 1], [], []>} : vector<16x3xbf16>, vector<3x925xbf16>, vector<16x925xf32> -> vector<16x925xf32>
    %68 = arith.addf %61, %67 : vector<16x925xf32>
    %c0_53 = arith.constant 0 : index
    %c0_54 = arith.constant 0 : index
    %c66 = arith.constant 66 : index
    %69 = vector.load %arg1[%c0_53, %c0_54, %c66] : memref<1x3x1024xf32, #tpu.memory_space<vmem>>, vector<1x3x925xf32>
    %70 = vector.shape_cast %69 : vector<1x3x925xf32> to vector<3x925xf32>
    %71 = arith.truncf %70 : vector<3x925xf32> to vector<3x925xbf16>
    %c10 = arith.constant 10 : index
    %c0_55 = arith.constant 0 : index
    %c0_56 = arith.constant 0 : index
    %72 = vector.load %arg2[%c10, %c0_55, %c0_56] : memref<16x16x3xbf16, #tpu.memory_space<vmem>>, vector<1x16x3xbf16>
    %73 = vector.shape_cast %72 : vector<1x16x3xbf16> to vector<16x3xbf16>
    %cst_57 = arith.constant dense<0.000000e+00> : vector<16x925xf32>
    %74 = tpu.matmul %73, %71, %cst_57 {dimension_numbers = #tpu.dot_dimension_numbers<[1], [0], [0], [1], [0, 0, 1, 1], [], []>} : vector<16x3xbf16>, vector<3x925xbf16>, vector<16x925xf32> -> vector<16x925xf32>
    %75 = arith.addf %68, %74 : vector<16x925xf32>
    %c0_58 = arith.constant 0 : index
    %c0_59 = arith.constant 0 : index
    %c67 = arith.constant 67 : index
    %76 = vector.load %arg1[%c0_58, %c0_59, %c67] : memref<1x3x1024xf32, #tpu.memory_space<vmem>>, vector<1x3x925xf32>
    %77 = vector.shape_cast %76 : vector<1x3x925xf32> to vector<3x925xf32>
    %78 = arith.truncf %77 : vector<3x925xf32> to vector<3x925xbf16>
    %c11 = arith.constant 11 : index
    %c0_60 = arith.constant 0 : index
    %c0_61 = arith.constant 0 : index
    %79 = vector.load %arg2[%c11, %c0_60, %c0_61] : memref<16x16x3xbf16, #tpu.memory_space<vmem>>, vector<1x16x3xbf16>
    %80 = vector.shape_cast %79 : vector<1x16x3xbf16> to vector<16x3xbf16>
    %cst_62 = arith.constant dense<0.000000e+00> : vector<16x925xf32>
    %81 = tpu.matmul %80, %78, %cst_62 {dimension_numbers = #tpu.dot_dimension_numbers<[1], [0], [0], [1], [0, 0, 1, 1], [], []>} : vector<16x3xbf16>, vector<3x925xbf16>, vector<16x925xf32> -> vector<16x925xf32>
    %82 = arith.addf %75, %81 : vector<16x925xf32>
    %c0_63 = arith.constant 0 : index
    %c0_64 = arith.constant 0 : index
    %c96 = arith.constant 96 : index
    %83 = vector.load %arg1[%c0_63, %c0_64, %c96] : memref<1x3x1024xf32, #tpu.memory_space<vmem>>, vector<1x3x925xf32>
    %84 = vector.shape_cast %83 : vector<1x3x925xf32> to vector<3x925xf32>
    %85 = arith.truncf %84 : vector<3x925xf32> to vector<3x925xbf16>
    %c12 = arith.constant 12 : index
    %c0_65 = arith.constant 0 : index
    %c0_66 = arith.constant 0 : index
    %86 = vector.load %arg2[%c12, %c0_65, %c0_66] : memref<16x16x3xbf16, #tpu.memory_space<vmem>>, vector<1x16x3xbf16>
    %87 = vector.shape_cast %86 : vector<1x16x3xbf16> to vector<16x3xbf16>
    %cst_67 = arith.constant dense<0.000000e+00> : vector<16x925xf32>
    %88 = tpu.matmul %87, %85, %cst_67 {dimension_numbers = #tpu.dot_dimension_numbers<[1], [0], [0], [1], [0, 0, 1, 1], [], []>} : vector<16x3xbf16>, vector<3x925xbf16>, vector<16x925xf32> -> vector<16x925xf32>
    %89 = arith.addf %82, %88 : vector<16x925xf32>
    %c0_68 = arith.constant 0 : index
    %c0_69 = arith.constant 0 : index
    %c97 = arith.constant 97 : index
    %90 = vector.load %arg1[%c0_68, %c0_69, %c97] : memref<1x3x1024xf32, #tpu.memory_space<vmem>>, vector<1x3x925xf32>
    %91 = vector.shape_cast %90 : vector<1x3x925xf32> to vector<3x925xf32>
    %92 = arith.truncf %91 : vector<3x925xf32> to vector<3x925xbf16>
    %c13 = arith.constant 13 : index
    %c0_70 = arith.constant 0 : index
    %c0_71 = arith.constant 0 : index
    %93 = vector.load %arg2[%c13, %c0_70, %c0_71] : memref<16x16x3xbf16, #tpu.memory_space<vmem>>, vector<1x16x3xbf16>
    %94 = vector.shape_cast %93 : vector<1x16x3xbf16> to vector<16x3xbf16>
    %cst_72 = arith.constant dense<0.000000e+00> : vector<16x925xf32>
    %95 = tpu.matmul %94, %92, %cst_72 {dimension_numbers = #tpu.dot_dimension_numbers<[1], [0], [0], [1], [0, 0, 1, 1], [], []>} : vector<16x3xbf16>, vector<3x925xbf16>, vector<16x925xf32> -> vector<16x925xf32>
    %96 = arith.addf %89, %95 : vector<16x925xf32>
    %c0_73 = arith.constant 0 : index
    %c0_74 = arith.constant 0 : index
    %c98 = arith.constant 98 : index
    %97 = vector.load %arg1[%c0_73, %c0_74, %c98] : memref<1x3x1024xf32, #tpu.memory_space<vmem>>, vector<1x3x925xf32>
    %98 = vector.shape_cast %97 : vector<1x3x925xf32> to vector<3x925xf32>
    %99 = arith.truncf %98 : vector<3x925xf32> to vector<3x925xbf16>
    %c14 = arith.constant 14 : index
    %c0_75 = arith.constant 0 : index
    %c0_76 = arith.constant 0 : index
    %100 = vector.load %arg2[%c14, %c0_75, %c0_76] : memref<16x16x3xbf16, #tpu.memory_space<vmem>>, vector<1x16x3xbf16>
    %101 = vector.shape_cast %100 : vector<1x16x3xbf16> to vector<16x3xbf16>
    %cst_77 = arith.constant dense<0.000000e+00> : vector<16x925xf32>
    %102 = tpu.matmul %101, %99, %cst_77 {dimension_numbers = #tpu.dot_dimension_numbers<[1], [0], [0], [1], [0, 0, 1, 1], [], []>} : vector<16x3xbf16>, vector<3x925xbf16>, vector<16x925xf32> -> vector<16x925xf32>
    %103 = arith.addf %96, %102 : vector<16x925xf32>
    %c0_78 = arith.constant 0 : index
    %c0_79 = arith.constant 0 : index
    %c99 = arith.constant 99 : index
    %104 = vector.load %arg1[%c0_78, %c0_79, %c99] : memref<1x3x1024xf32, #tpu.memory_space<vmem>>, vector<1x3x925xf32>
    %105 = vector.shape_cast %104 : vector<1x3x925xf32> to vector<3x925xf32>
    %106 = arith.truncf %105 : vector<3x925xf32> to vector<3x925xbf16>
    %c15 = arith.constant 15 : index
    %c0_80 = arith.constant 0 : index
    %c0_81 = arith.constant 0 : index
    %107 = vector.load %arg2[%c15, %c0_80, %c0_81] : memref<16x16x3xbf16, #tpu.memory_space<vmem>>, vector<1x16x3xbf16>
    %108 = vector.shape_cast %107 : vector<1x16x3xbf16> to vector<16x3xbf16>
    %cst_82 = arith.constant dense<0.000000e+00> : vector<16x925xf32>
    %109 = tpu.matmul %108, %106, %cst_82 {dimension_numbers = #tpu.dot_dimension_numbers<[1], [0], [0], [1], [0, 0, 1, 1], [], []>} : vector<16x3xbf16>, vector<3x925xbf16>, vector<16x925xf32> -> vector<16x925xf32>
    %110 = arith.addf %103, %109 : vector<16x925xf32>
    %c0_83 = arith.constant 0 : index
    %c0_84 = arith.constant 0 : index
    %111 = vector.load %arg3[%c0_83, %c0_84] : memref<16x1xf32, #tpu.memory_space<vmem>>, vector<16x1xf32>
    %112 = vector.broadcast %111 : vector<16x1xf32> to vector<16x925xf32>
    %113 = arith.addf %110, %112 : vector<16x925xf32>
    %cst_85 = arith.constant 0.000000e+00 : f32
    %114 = vector.broadcast %cst_85 : f32 to vector<16x925xf32>
    %115 = arith.cmpf oge, %113, %114 : vector<16x925xf32>
    %cst_86 = arith.constant 2.000000e-01 : f32
    %116 = vector.broadcast %cst_86 : f32 to vector<16x925xf32>
    %117 = arith.mulf %116, %113 : vector<16x925xf32>
    %118 = arith.select %115, %113, %117 : vector<16x925xi1>, vector<16x925xf32>
    %119 = tpu.iota {dimensions = array<i32: 0>} : vector<61x14xi32>
    %120 = tpu.iota {dimensions = array<i32: 1>} : vector<61x14xi32>
    %c2_i32 = arith.constant 2 : i32
    %121 = vector.broadcast %c2_i32 : i32 to vector<61x14xi32>
    %122 = arith.muli %121, %120 : vector<61x14xi32>
    %123 = arith.subi %119, %122 : vector<61x14xi32>
    %c0_i32 = arith.constant 0 : i32
    %124 = vector.broadcast %c0_i32 : i32 to vector<61x14xi32>
    %125 = arith.cmpi eq, %123, %124 : vector<61x14xi32>
    %c1_i32 = arith.constant 1 : i32
    %126 = vector.broadcast %c1_i32 : i32 to vector<61x14xi32>
    %127 = arith.cmpi eq, %123, %126 : vector<61x14xi32>
    %128 = arith.ori %125, %127 : vector<61x14xi1>
    %c32_i32 = arith.constant 32 : i32
    %129 = vector.broadcast %c32_i32 : i32 to vector<61x14xi32>
    %130 = arith.cmpi eq, %123, %129 : vector<61x14xi32>
    %131 = arith.ori %128, %130 : vector<61x14xi1>
    %c33_i32 = arith.constant 33 : i32
    %132 = vector.broadcast %c33_i32 : i32 to vector<61x14xi32>
    %133 = arith.cmpi eq, %123, %132 : vector<61x14xi32>
    %134 = arith.ori %131, %133 : vector<61x14xi1>
    %135 = arith.extui %134 : vector<61x14xi1> to vector<61x14xi32>
    %136 = arith.sitofp %135 : vector<61x14xi32> to vector<61x14xf32>
    %cst_87 = arith.constant 2.500000e-01 : f32
    %137 = vector.broadcast %cst_87 : f32 to vector<61x14xf32>
    %138 = arith.mulf %136, %137 : vector<61x14xf32>
    %139 = vector.extract_strided_slice %118 {offsets = [0, 0], sizes = [16, 61], strides = [1, 1]} : vector<16x925xf32> to vector<16x61xf32>
    %cst_88 = arith.constant dense<0.000000e+00> : vector<16x14xf32>
    %140 = tpu.matmul %139, %138, %cst_88 {dimension_numbers = #tpu.dot_dimension_numbers<[1], [0], [0], [1], [0, 0, 1, 1], [], []>} : vector<16x61xf32>, vector<61x14xf32>, vector<16x14xf32> -> vector<16x14xf32>
    %c0_89 = arith.constant 0 : index
    %c0_90 = arith.constant 0 : index
    %c0_91 = arith.constant 0 : index
    %141 = vector.load %arg14[%c0_89, %c0_90, %c0_91] : memref<1x16x196xf32, #tpu.memory_space<vmem>>, vector<1x16x14xf32>
    %142 = vector.shape_cast %141 : vector<1x16x14xf32> to vector<16x14xf32>
    %143 = vector.shape_cast %140 : vector<16x14xf32> to vector<1x16x14xf32>
    tpu.vector_store %arg14[%c0_89, %c0_90, %c0_91], %143 {strides = array<i32>} : memref<1x16x196xf32, #tpu.memory_space<vmem>>, vector<1x16x14xf32>,
    %144 = vector.extract_strided_slice %118 {offsets = [0, 64], sizes = [16, 61], strides = [1, 1]} : vector<16x925xf32> to vector<16x61xf32>
    %cst_92 = arith.constant dense<0.000000e+00> : vector<16x14xf32>
    %145 = tpu.matmul %144, %138, %cst_92 {dimension_numbers = #tpu.dot_dimension_numbers<[1], [0], [0], [1], [0, 0, 1, 1], [], []>} : vector<16x61xf32>, vector<61x14xf32>, vector<16x14xf32> -> vector<16x14xf32>
    %c0_93 = arith.constant 0 : index
    %c0_94 = arith.constant 0 : index
    %c14_95 = arith.constant 14 : index
    %146 = vector.load %arg14[%c0_93, %c0_94, %c14_95] : memref<1x16x196xf32, #tpu.memory_space<vmem>>, vector<1x16x14xf32>
    %147 = vector.shape_cast %146 : vector<1x16x14xf32> to vector<16x14xf32>
    %148 = vector.shape_cast %145 : vector<16x14xf32> to vector<1x16x14xf32>
    tpu.vector_store %arg14[%c0_93, %c0_94, %c14_95], %148 {strides = array<i32>} : memref<1x16x196xf32, #tpu.memory_space<vmem>>, vector<1x16x14xf32>,
    %149 = vector.extract_strided_slice %118 {offsets = [0, 128], sizes = [16, 61], strides = [1, 1]} : vector<16x925xf32> to vector<16x61xf32>
    %cst_96 = arith.constant dense<0.000000e+00> : vector<16x14xf32>
    %150 = tpu.matmul %149, %138, %cst_96 {dimension_numbers = #tpu.dot_dimension_numbers<[1], [0], [0], [1], [0, 0, 1, 1], [], []>} : vector<16x61xf32>, vector<61x14xf32>, vector<16x14xf32> -> vector<16x14xf32>
    %c0_97 = arith.constant 0 : index
    %c0_98 = arith.constant 0 : index
    %c28 = arith.constant 28 : index
    %151 = vector.load %arg14[%c0_97, %c0_98, %c28] : memref<1x16x196xf32, #tpu.memory_space<vmem>>, vector<1x16x14xf32>
    %152 = vector.shape_cast %151 : vector<1x16x14xf32> to vector<16x14xf32>
    %153 = vector.shape_cast %150 : vector<16x14xf32> to vector<1x16x14xf32>
    tpu.vector_store %arg14[%c0_97, %c0_98, %c28], %153 {strides = array<i32>} : memref<1x16x196xf32, #tpu.memory_space<vmem>>, vector<1x16x14xf32>,
    %154 = vector.extract_strided_slice %118 {offsets = [0, 192], sizes = [16, 61], strides = [1, 1]} : vector<16x925xf32> to vector<16x61xf32>
    %cst_99 = arith.constant dense<0.000000e+00> : vector<16x14xf32>
    %155 = tpu.matmul %154, %138, %cst_99 {dimension_numbers = #tpu.dot_dimension_numbers<[1], [0], [0], [1], [0, 0, 1, 1], [], []>} : vector<16x61xf32>, vector<61x14xf32>, vector<16x14xf32> -> vector<16x14xf32>
    %c0_100 = arith.constant 0 : index
    %c0_101 = arith.constant 0 : index
    %c42 = arith.constant 42 : index
    %156 = vector.load %arg14[%c0_100, %c0_101, %c42] : memref<1x16x196xf32, #tpu.memory_space<vmem>>, vector<1x16x14xf32>
    %157 = vector.shape_cast %156 : vector<1x16x14xf32> to vector<16x14xf32>
    %158 = vector.shape_cast %155 : vector<16x14xf32> to vector<1x16x14xf32>
    tpu.vector_store %arg14[%c0_100, %c0_101, %c42], %158 {strides = array<i32>} : memref<1x16x196xf32, #tpu.memory_space<vmem>>, vector<1x16x14xf32>,
    %159 = vector.extract_strided_slice %118 {offsets = [0, 256], sizes = [16, 61], strides = [1, 1]} : vector<16x925xf32> to vector<16x61xf32>
    %cst_102 = arith.constant dense<0.000000e+00> : vector<16x14xf32>
    %160 = tpu.matmul %159, %138, %cst_102 {dimension_numbers = #tpu.dot_dimension_numbers<[1], [0], [0], [1], [0, 0, 1, 1], [], []>} : vector<16x61xf32>, vector<61x14xf32>, vector<16x14xf32> -> vector<16x14xf32>
    %c0_103 = arith.constant 0 : index
    %c0_104 = arith.constant 0 : index
    %c56 = arith.constant 56 : index
    %161 = vector.load %arg14[%c0_103, %c0_104, %c56] : memref<1x16x196xf32, #tpu.memory_space<vmem>>, vector<1x16x14xf32>
    %162 = vector.shape_cast %161 : vector<1x16x14xf32> to vector<16x14xf32>
    %163 = vector.shape_cast %160 : vector<16x14xf32> to vector<1x16x14xf32>
    tpu.vector_store %arg14[%c0_103, %c0_104, %c56], %163 {strides = array<i32>} : memref<1x16x196xf32, #tpu.memory_space<vmem>>, vector<1x16x14xf32>,
    %164 = vector.extract_strided_slice %118 {offsets = [0, 320], sizes = [16, 61], strides = [1, 1]} : vector<16x925xf32> to vector<16x61xf32>
    %cst_105 = arith.constant dense<0.000000e+00> : vector<16x14xf32>
    %165 = tpu.matmul %164, %138, %cst_105 {dimension_numbers = #tpu.dot_dimension_numbers<[1], [0], [0], [1], [0, 0, 1, 1], [], []>} : vector<16x61xf32>, vector<61x14xf32>, vector<16x14xf32> -> vector<16x14xf32>
    %c0_106 = arith.constant 0 : index
    %c0_107 = arith.constant 0 : index
    %c70 = arith.constant 70 : index
    %166 = vector.load %arg14[%c0_106, %c0_107, %c70] : memref<1x16x196xf32, #tpu.memory_space<vmem>>, vector<1x16x14xf32>
    %167 = vector.shape_cast %166 : vector<1x16x14xf32> to vector<16x14xf32>
    %168 = vector.shape_cast %165 : vector<16x14xf32> to vector<1x16x14xf32>
    tpu.vector_store %arg14[%c0_106, %c0_107, %c70], %168 {strides = array<i32>} : memref<1x16x196xf32, #tpu.memory_space<vmem>>, vector<1x16x14xf32>,
    %169 = vector.extract_strided_slice %118 {offsets = [0, 384], sizes = [16, 61], strides = [1, 1]} : vector<16x925xf32> to vector<16x61xf32>
    %cst_108 = arith.constant dense<0.000000e+00> : vector<16x14xf32>
    %170 = tpu.matmul %169, %138, %cst_108 {dimension_numbers = #tpu.dot_dimension_numbers<[1], [0], [0], [1], [0, 0, 1, 1], [], []>} : vector<16x61xf32>, vector<61x14xf32>, vector<16x14xf32> -> vector<16x14xf32>
    %c0_109 = arith.constant 0 : index
    %c0_110 = arith.constant 0 : index
    %c84 = arith.constant 84 : index
    %171 = vector.load %arg14[%c0_109, %c0_110, %c84] : memref<1x16x196xf32, #tpu.memory_space<vmem>>, vector<1x16x14xf32>
    %172 = vector.shape_cast %171 : vector<1x16x14xf32> to vector<16x14xf32>
    %173 = vector.shape_cast %170 : vector<16x14xf32> to vector<1x16x14xf32>
    tpu.vector_store %arg14[%c0_109, %c0_110, %c84], %173 {strides = array<i32>} : memref<1x16x196xf32, #tpu.memory_space<vmem>>, vector<1x16x14xf32>,
    %174 = vector.extract_strided_slice %118 {offsets = [0, 448], sizes = [16, 61], strides = [1, 1]} : vector<16x925xf32> to vector<16x61xf32>
    %cst_111 = arith.constant dense<0.000000e+00> : vector<16x14xf32>
    %175 = tpu.matmul %174, %138, %cst_111 {dimension_numbers = #tpu.dot_dimension_numbers<[1], [0], [0], [1], [0, 0, 1, 1], [], []>} : vector<16x61xf32>, vector<61x14xf32>, vector<16x14xf32> -> vector<16x14xf32>
    %c0_112 = arith.constant 0 : index
    %c0_113 = arith.constant 0 : index
    %c98_114 = arith.constant 98 : index
    %176 = vector.load %arg14[%c0_112, %c0_113, %c98_114] : memref<1x16x196xf32, #tpu.memory_space<vmem>>, vector<1x16x14xf32>
    %177 = vector.shape_cast %176 : vector<1x16x14xf32> to vector<16x14xf32>
    %178 = vector.shape_cast %175 : vector<16x14xf32> to vector<1x16x14xf32>
    tpu.vector_store %arg14[%c0_112, %c0_113, %c98_114], %178 {strides = array<i32>} : memref<1x16x196xf32, #tpu.memory_space<vmem>>, vector<1x16x14xf32>,
    %179 = vector.extract_strided_slice %118 {offsets = [0, 512], sizes = [16, 61], strides = [1, 1]} : vector<16x925xf32> to vector<16x61xf32>
    %cst_115 = arith.constant dense<0.000000e+00> : vector<16x14xf32>
    %180 = tpu.matmul %179, %138, %cst_115 {dimension_numbers = #tpu.dot_dimension_numbers<[1], [0], [0], [1], [0, 0, 1, 1], [], []>} : vector<16x61xf32>, vector<61x14xf32>, vector<16x14xf32> -> vector<16x14xf32>
    %c0_116 = arith.constant 0 : index
    %c0_117 = arith.constant 0 : index
    %c112 = arith.constant 112 : index
    %181 = vector.load %arg14[%c0_116, %c0_117, %c112] : memref<1x16x196xf32, #tpu.memory_space<vmem>>, vector<1x16x14xf32>
    %182 = vector.shape_cast %181 : vector<1x16x14xf32> to vector<16x14xf32>
    %183 = vector.shape_cast %180 : vector<16x14xf32> to vector<1x16x14xf32>
    tpu.vector_store %arg14[%c0_116, %c0_117, %c112], %183 {strides = array<i32>} : memref<1x16x196xf32, #tpu.memory_space<vmem>>, vector<1x16x14xf32>,
    %184 = vector.extract_strided_slice %118 {offsets = [0, 576], sizes = [16, 61], strides = [1, 1]} : vector<16x925xf32> to vector<16x61xf32>
    %cst_118 = arith.constant dense<0.000000e+00> : vector<16x14xf32>
    %185 = tpu.matmul %184, %138, %cst_118 {dimension_numbers = #tpu.dot_dimension_numbers<[1], [0], [0], [1], [0, 0, 1, 1], [], []>} : vector<16x61xf32>, vector<61x14xf32>, vector<16x14xf32> -> vector<16x14xf32>
    %c0_119 = arith.constant 0 : index
    %c0_120 = arith.constant 0 : index
    %c126 = arith.constant 126 : index
    %186 = vector.load %arg14[%c0_119, %c0_120, %c126] : memref<1x16x196xf32, #tpu.memory_space<vmem>>, vector<1x16x14xf32>
    %187 = vector.shape_cast %186 : vector<1x16x14xf32> to vector<16x14xf32>
    %188 = vector.shape_cast %185 : vector<16x14xf32> to vector<1x16x14xf32>
    tpu.vector_store %arg14[%c0_119, %c0_120, %c126], %188 {strides = array<i32>} : memref<1x16x196xf32, #tpu.memory_space<vmem>>, vector<1x16x14xf32>,
    %189 = vector.extract_strided_slice %118 {offsets = [0, 640], sizes = [16, 61], strides = [1, 1]} : vector<16x925xf32> to vector<16x61xf32>
    %cst_121 = arith.constant dense<0.000000e+00> : vector<16x14xf32>
    %190 = tpu.matmul %189, %138, %cst_121 {dimension_numbers = #tpu.dot_dimension_numbers<[1], [0], [0], [1], [0, 0, 1, 1], [], []>} : vector<16x61xf32>, vector<61x14xf32>, vector<16x14xf32> -> vector<16x14xf32>
    %c0_122 = arith.constant 0 : index
    %c0_123 = arith.constant 0 : index
    %c140 = arith.constant 140 : index
    %191 = vector.load %arg14[%c0_122, %c0_123, %c140] : memref<1x16x196xf32, #tpu.memory_space<vmem>>, vector<1x16x14xf32>
    %192 = vector.shape_cast %191 : vector<1x16x14xf32> to vector<16x14xf32>
    %193 = vector.shape_cast %190 : vector<16x14xf32> to vector<1x16x14xf32>
    tpu.vector_store %arg14[%c0_122, %c0_123, %c140], %193 {strides = array<i32>} : memref<1x16x196xf32, #tpu.memory_space<vmem>>, vector<1x16x14xf32>,
    %194 = vector.extract_strided_slice %118 {offsets = [0, 704], sizes = [16, 61], strides = [1, 1]} : vector<16x925xf32> to vector<16x61xf32>
    %cst_124 = arith.constant dense<0.000000e+00> : vector<16x14xf32>
    %195 = tpu.matmul %194, %138, %cst_124 {dimension_numbers = #tpu.dot_dimension_numbers<[1], [0], [0], [1], [0, 0, 1, 1], [], []>} : vector<16x61xf32>, vector<61x14xf32>, vector<16x14xf32> -> vector<16x14xf32>
    %c0_125 = arith.constant 0 : index
    %c0_126 = arith.constant 0 : index
    %c154 = arith.constant 154 : index
    %196 = vector.load %arg14[%c0_125, %c0_126, %c154] : memref<1x16x196xf32, #tpu.memory_space<vmem>>, vector<1x16x14xf32>
    %197 = vector.shape_cast %196 : vector<1x16x14xf32> to vector<16x14xf32>
    %198 = vector.shape_cast %195 : vector<16x14xf32> to vector<1x16x14xf32>
    tpu.vector_store %arg14[%c0_125, %c0_126, %c154], %198 {strides = array<i32>} : memref<1x16x196xf32, #tpu.memory_space<vmem>>, vector<1x16x14xf32>,
    %199 = vector.extract_strided_slice %118 {offsets = [0, 768], sizes = [16, 61], strides = [1, 1]} : vector<16x925xf32> to vector<16x61xf32>
    %cst_127 = arith.constant dense<0.000000e+00> : vector<16x14xf32>
    %200 = tpu.matmul %199, %138, %cst_127 {dimension_numbers = #tpu.dot_dimension_numbers<[1], [0], [0], [1], [0, 0, 1, 1], [], []>} : vector<16x61xf32>, vector<61x14xf32>, vector<16x14xf32> -> vector<16x14xf32>
    %c0_128 = arith.constant 0 : index
    %c0_129 = arith.constant 0 : index
    %c168 = arith.constant 168 : index
    %201 = vector.load %arg14[%c0_128, %c0_129, %c168] : memref<1x16x196xf32, #tpu.memory_space<vmem>>, vector<1x16x14xf32>
    %202 = vector.shape_cast %201 : vector<1x16x14xf32> to vector<16x14xf32>
    %203 = vector.shape_cast %200 : vector<16x14xf32> to vector<1x16x14xf32>
    tpu.vector_store %arg14[%c0_128, %c0_129, %c168], %203 {strides = array<i32>} : memref<1x16x196xf32, #tpu.memory_space<vmem>>, vector<1x16x14xf32>,
    %204 = vector.extract_strided_slice %118 {offsets = [0, 832], sizes = [16, 61], strides = [1, 1]} : vector<16x925xf32> to vector<16x61xf32>
    %cst_130 = arith.constant dense<0.000000e+00> : vector<16x14xf32>
    %205 = tpu.matmul %204, %138, %cst_130 {dimension_numbers = #tpu.dot_dimension_numbers<[1], [0], [0], [1], [0, 0, 1, 1], [], []>} : vector<16x61xf32>, vector<61x14xf32>, vector<16x14xf32> -> vector<16x14xf32>
    %c0_131 = arith.constant 0 : index
    %c0_132 = arith.constant 0 : index
    %c182 = arith.constant 182 : index
    %206 = vector.load %arg14[%c0_131, %c0_132, %c182] : memref<1x16x196xf32, #tpu.memory_space<vmem>>, vector<1x16x14xf32>
    %207 = vector.shape_cast %206 : vector<1x16x14xf32> to vector<16x14xf32>
    %208 = vector.shape_cast %205 : vector<16x14xf32> to vector<1x16x14xf32>
    tpu.vector_store %arg14[%c0_131, %c0_132, %c182], %208 {strides = array<i32>} : memref<1x16x196xf32, #tpu.memory_space<vmem>>, vector<1x16x14xf32>,
    %c0_133 = arith.constant 0 : index
    %c0_134 = arith.constant 0 : index
    %c0_135 = arith.constant 0 : index
    %209 = vector.load %arg14[%c0_133, %c0_134, %c0_135] : memref<1x16x196xf32, #tpu.memory_space<vmem>>, vector<1x16x151xf32>
    %210 = vector.shape_cast %209 : vector<1x16x151xf32> to vector<16x151xf32>
    %211 = arith.truncf %210 : vector<16x151xf32> to vector<16x151xbf16>
    %c0_136 = arith.constant 0 : index
    %c0_137 = arith.constant 0 : index
    %c0_138 = arith.constant 0 : index
    %212 = vector.load %arg4[%c0_136, %c0_137, %c0_138] : memref<16x32x16xbf16, #tpu.memory_space<vmem>>, vector<1x32x16xbf16>
    %213 = vector.shape_cast %212 : vector<1x32x16xbf16> to vector<32x16xbf16>
    %cst_139 = arith.constant dense<0.000000e+00> : vector<32x151xf32>
    %214 = tpu.matmul %213, %211, %cst_139 {dimension_numbers = #tpu.dot_dimension_numbers<[1], [0], [0], [1], [0, 0, 1, 1], [], []>} : vector<32x16xbf16>, vector<16x151xbf16>, vector<32x151xf32> -> vector<32x151xf32>
    %c0_140 = arith.constant 0 : index
    %c0_141 = arith.constant 0 : index
    %c1_142 = arith.constant 1 : index
    %215 = vector.load %arg14[%c0_140, %c0_141, %c1_142] : memref<1x16x196xf32, #tpu.memory_space<vmem>>, vector<1x16x151xf32>
    %216 = vector.shape_cast %215 : vector<1x16x151xf32> to vector<16x151xf32>
    %217 = arith.truncf %216 : vector<16x151xf32> to vector<16x151xbf16>
    %c1_143 = arith.constant 1 : index
    %c0_144 = arith.constant 0 : index
    %c0_145 = arith.constant 0 : index
    %218 = vector.load %arg4[%c1_143, %c0_144, %c0_145] : memref<16x32x16xbf16, #tpu.memory_space<vmem>>, vector<1x32x16xbf16>
    %219 = vector.shape_cast %218 : vector<1x32x16xbf16> to vector<32x16xbf16>
    %cst_146 = arith.constant dense<0.000000e+00> : vector<32x151xf32>
    %220 = tpu.matmul %219, %217, %cst_146 {dimension_numbers = #tpu.dot_dimension_numbers<[1], [0], [0], [1], [0, 0, 1, 1], [], []>} : vector<32x16xbf16>, vector<16x151xbf16>, vector<32x151xf32> -> vector<32x151xf32>
    %221 = arith.addf %214, %220 : vector<32x151xf32>
    %c0_147 = arith.constant 0 : index
    %c0_148 = arith.constant 0 : index
    %c2_149 = arith.constant 2 : index
    %222 = vector.load %arg14[%c0_147, %c0_148, %c2_149] : memref<1x16x196xf32, #tpu.memory_space<vmem>>, vector<1x16x151xf32>
    %223 = vector.shape_cast %222 : vector<1x16x151xf32> to vector<16x151xf32>
    %224 = arith.truncf %223 : vector<16x151xf32> to vector<16x151xbf16>
    %c2_150 = arith.constant 2 : index
    %c0_151 = arith.constant 0 : index
    %c0_152 = arith.constant 0 : index
    %225 = vector.load %arg4[%c2_150, %c0_151, %c0_152] : memref<16x32x16xbf16, #tpu.memory_space<vmem>>, vector<1x32x16xbf16>
    %226 = vector.shape_cast %225 : vector<1x32x16xbf16> to vector<32x16xbf16>
    %cst_153 = arith.constant dense<0.000000e+00> : vector<32x151xf32>
    %227 = tpu.matmul %226, %224, %cst_153 {dimension_numbers = #tpu.dot_dimension_numbers<[1], [0], [0], [1], [0, 0, 1, 1], [], []>} : vector<32x16xbf16>, vector<16x151xbf16>, vector<32x151xf32> -> vector<32x151xf32>
    %228 = arith.addf %221, %227 : vector<32x151xf32>
    %c0_154 = arith.constant 0 : index
    %c0_155 = arith.constant 0 : index
    %c3_156 = arith.constant 3 : index
    %229 = vector.load %arg14[%c0_154, %c0_155, %c3_156] : memref<1x16x196xf32, #tpu.memory_space<vmem>>, vector<1x16x151xf32>
    %230 = vector.shape_cast %229 : vector<1x16x151xf32> to vector<16x151xf32>
    %231 = arith.truncf %230 : vector<16x151xf32> to vector<16x151xbf16>
    %c3_157 = arith.constant 3 : index
    %c0_158 = arith.constant 0 : index
    %c0_159 = arith.constant 0 : index
    %232 = vector.load %arg4[%c3_157, %c0_158, %c0_159] : memref<16x32x16xbf16, #tpu.memory_space<vmem>>, vector<1x32x16xbf16>
    %233 = vector.shape_cast %232 : vector<1x32x16xbf16> to vector<32x16xbf16>
    %cst_160 = arith.constant dense<0.000000e+00> : vector<32x151xf32>
    %234 = tpu.matmul %233, %231, %cst_160 {dimension_numbers = #tpu.dot_dimension_numbers<[1], [0], [0], [1], [0, 0, 1, 1], [], []>} : vector<32x16xbf16>, vector<16x151xbf16>, vector<32x151xf32> -> vector<32x151xf32>
    %235 = arith.addf %228, %234 : vector<32x151xf32>
    %c0_161 = arith.constant 0 : index
    %c0_162 = arith.constant 0 : index
    %c14_163 = arith.constant 14 : index
    %236 = vector.load %arg14[%c0_161, %c0_162, %c14_163] : memref<1x16x196xf32, #tpu.memory_space<vmem>>, vector<1x16x151xf32>
    %237 = vector.shape_cast %236 : vector<1x16x151xf32> to vector<16x151xf32>
    %238 = arith.truncf %237 : vector<16x151xf32> to vector<16x151xbf16>
    %c4_164 = arith.constant 4 : index
    %c0_165 = arith.constant 0 : index
    %c0_166 = arith.constant 0 : index
    %239 = vector.load %arg4[%c4_164, %c0_165, %c0_166] : memref<16x32x16xbf16, #tpu.memory_space<vmem>>, vector<1x32x16xbf16>
    %240 = vector.shape_cast %239 : vector<1x32x16xbf16> to vector<32x16xbf16>
    %cst_167 = arith.constant dense<0.000000e+00> : vector<32x151xf32>
    %241 = tpu.matmul %240, %238, %cst_167 {dimension_numbers = #tpu.dot_dimension_numbers<[1], [0], [0], [1], [0, 0, 1, 1], [], []>} : vector<32x16xbf16>, vector<16x151xbf16>, vector<32x151xf32> -> vector<32x151xf32>
    %242 = arith.addf %235, %241 : vector<32x151xf32>
    %c0_168 = arith.constant 0 : index
    %c0_169 = arith.constant 0 : index
    %c15_170 = arith.constant 15 : index
    %243 = vector.load %arg14[%c0_168, %c0_169, %c15_170] : memref<1x16x196xf32, #tpu.memory_space<vmem>>, vector<1x16x151xf32>
    %244 = vector.shape_cast %243 : vector<1x16x151xf32> to vector<16x151xf32>
    %245 = arith.truncf %244 : vector<16x151xf32> to vector<16x151xbf16>
    %c5_171 = arith.constant 5 : index
    %c0_172 = arith.constant 0 : index
    %c0_173 = arith.constant 0 : index
    %246 = vector.load %arg4[%c5_171, %c0_172, %c0_173] : memref<16x32x16xbf16, #tpu.memory_space<vmem>>, vector<1x32x16xbf16>
    %247 = vector.shape_cast %246 : vector<1x32x16xbf16> to vector<32x16xbf16>
    %cst_174 = arith.constant dense<0.000000e+00> : vector<32x151xf32>
    %248 = tpu.matmul %247, %245, %cst_174 {dimension_numbers = #tpu.dot_dimension_numbers<[1], [0], [0], [1], [0, 0, 1, 1], [], []>} : vector<32x16xbf16>, vector<16x151xbf16>, vector<32x151xf32> -> vector<32x151xf32>
    %249 = arith.addf %242, %248 : vector<32x151xf32>
    %c0_175 = arith.constant 0 : index
    %c0_176 = arith.constant 0 : index
    %c16 = arith.constant 16 : index
    %250 = vector.load %arg14[%c0_175, %c0_176, %c16] : memref<1x16x196xf32, #tpu.memory_space<vmem>>, vector<1x16x151xf32>
    %251 = vector.shape_cast %250 : vector<1x16x151xf32> to vector<16x151xf32>
    %252 = arith.truncf %251 : vector<16x151xf32> to vector<16x151xbf16>
    %c6_177 = arith.constant 6 : index
    %c0_178 = arith.constant 0 : index
    %c0_179 = arith.constant 0 : index
    %253 = vector.load %arg4[%c6_177, %c0_178, %c0_179] : memref<16x32x16xbf16, #tpu.memory_space<vmem>>, vector<1x32x16xbf16>
    %254 = vector.shape_cast %253 : vector<1x32x16xbf16> to vector<32x16xbf16>
    %cst_180 = arith.constant dense<0.000000e+00> : vector<32x151xf32>
    %255 = tpu.matmul %254, %252, %cst_180 {dimension_numbers = #tpu.dot_dimension_numbers<[1], [0], [0], [1], [0, 0, 1, 1], [], []>} : vector<32x16xbf16>, vector<16x151xbf16>, vector<32x151xf32> -> vector<32x151xf32>
    %256 = arith.addf %249, %255 : vector<32x151xf32>
    %c0_181 = arith.constant 0 : index
    %c0_182 = arith.constant 0 : index
    %c17 = arith.constant 17 : index
    %257 = vector.load %arg14[%c0_181, %c0_182, %c17] : memref<1x16x196xf32, #tpu.memory_space<vmem>>, vector<1x16x151xf32>
    %258 = vector.shape_cast %257 : vector<1x16x151xf32> to vector<16x151xf32>
    %259 = arith.truncf %258 : vector<16x151xf32> to vector<16x151xbf16>
    %c7_183 = arith.constant 7 : index
    %c0_184 = arith.constant 0 : index
    %c0_185 = arith.constant 0 : index
    %260 = vector.load %arg4[%c7_183, %c0_184, %c0_185] : memref<16x32x16xbf16, #tpu.memory_space<vmem>>, vector<1x32x16xbf16>
    %261 = vector.shape_cast %260 : vector<1x32x16xbf16> to vector<32x16xbf16>
    %cst_186 = arith.constant dense<0.000000e+00> : vector<32x151xf32>
    %262 = tpu.matmul %261, %259, %cst_186 {dimension_numbers = #tpu.dot_dimension_numbers<[1], [0], [0], [1], [0, 0, 1, 1], [], []>} : vector<32x16xbf16>, vector<16x151xbf16>, vector<32x151xf32> -> vector<32x151xf32>
    %263 = arith.addf %256, %262 : vector<32x151xf32>
    %c0_187 = arith.constant 0 : index
    %c0_188 = arith.constant 0 : index
    %c28_189 = arith.constant 28 : index
    %264 = vector.load %arg14[%c0_187, %c0_188, %c28_189] : memref<1x16x196xf32, #tpu.memory_space<vmem>>, vector<1x16x151xf32>
    %265 = vector.shape_cast %264 : vector<1x16x151xf32> to vector<16x151xf32>
    %266 = arith.truncf %265 : vector<16x151xf32> to vector<16x151xbf16>
    %c8_190 = arith.constant 8 : index
    %c0_191 = arith.constant 0 : index
    %c0_192 = arith.constant 0 : index
    %267 = vector.load %arg4[%c8_190, %c0_191, %c0_192] : memref<16x32x16xbf16, #tpu.memory_space<vmem>>, vector<1x32x16xbf16>
    %268 = vector.shape_cast %267 : vector<1x32x16xbf16> to vector<32x16xbf16>
    %cst_193 = arith.constant dense<0.000000e+00> : vector<32x151xf32>
    %269 = tpu.matmul %268, %266, %cst_193 {dimension_numbers = #tpu.dot_dimension_numbers<[1], [0], [0], [1], [0, 0, 1, 1], [], []>} : vector<32x16xbf16>, vector<16x151xbf16>, vector<32x151xf32> -> vector<32x151xf32>
    %270 = arith.addf %263, %269 : vector<32x151xf32>
    %c0_194 = arith.constant 0 : index
    %c0_195 = arith.constant 0 : index
    %c29 = arith.constant 29 : index
    %271 = vector.load %arg14[%c0_194, %c0_195, %c29] : memref<1x16x196xf32, #tpu.memory_space<vmem>>, vector<1x16x151xf32>
    %272 = vector.shape_cast %271 : vector<1x16x151xf32> to vector<16x151xf32>
    %273 = arith.truncf %272 : vector<16x151xf32> to vector<16x151xbf16>
    %c9_196 = arith.constant 9 : index
    %c0_197 = arith.constant 0 : index
    %c0_198 = arith.constant 0 : index
    %274 = vector.load %arg4[%c9_196, %c0_197, %c0_198] : memref<16x32x16xbf16, #tpu.memory_space<vmem>>, vector<1x32x16xbf16>
    %275 = vector.shape_cast %274 : vector<1x32x16xbf16> to vector<32x16xbf16>
    %cst_199 = arith.constant dense<0.000000e+00> : vector<32x151xf32>
    %276 = tpu.matmul %275, %273, %cst_199 {dimension_numbers = #tpu.dot_dimension_numbers<[1], [0], [0], [1], [0, 0, 1, 1], [], []>} : vector<32x16xbf16>, vector<16x151xbf16>, vector<32x151xf32> -> vector<32x151xf32>
    %277 = arith.addf %270, %276 : vector<32x151xf32>
    %c0_200 = arith.constant 0 : index
    %c0_201 = arith.constant 0 : index
    %c30 = arith.constant 30 : index
    %278 = vector.load %arg14[%c0_200, %c0_201, %c30] : memref<1x16x196xf32, #tpu.memory_space<vmem>>, vector<1x16x151xf32>
    %279 = vector.shape_cast %278 : vector<1x16x151xf32> to vector<16x151xf32>
    %280 = arith.truncf %279 : vector<16x151xf32> to vector<16x151xbf16>
    %c10_202 = arith.constant 10 : index
    %c0_203 = arith.constant 0 : index
    %c0_204 = arith.constant 0 : index
    %281 = vector.load %arg4[%c10_202, %c0_203, %c0_204] : memref<16x32x16xbf16, #tpu.memory_space<vmem>>, vector<1x32x16xbf16>
    %282 = vector.shape_cast %281 : vector<1x32x16xbf16> to vector<32x16xbf16>
    %cst_205 = arith.constant dense<0.000000e+00> : vector<32x151xf32>
    %283 = tpu.matmul %282, %280, %cst_205 {dimension_numbers = #tpu.dot_dimension_numbers<[1], [0], [0], [1], [0, 0, 1, 1], [], []>} : vector<32x16xbf16>, vector<16x151xbf16>, vector<32x151xf32> -> vector<32x151xf32>
    %284 = arith.addf %277, %283 : vector<32x151xf32>
    %c0_206 = arith.constant 0 : index
    %c0_207 = arith.constant 0 : index
    %c31 = arith.constant 31 : index
    %285 = vector.load %arg14[%c0_206, %c0_207, %c31] : memref<1x16x196xf32, #tpu.memory_space<vmem>>, vector<1x16x151xf32>
    %286 = vector.shape_cast %285 : vector<1x16x151xf32> to vector<16x151xf32>
    %287 = arith.truncf %286 : vector<16x151xf32> to vector<16x151xbf16>
    %c11_208 = arith.constant 11 : index
    %c0_209 = arith.constant 0 : index
    %c0_210 = arith.constant 0 : index
    %288 = vector.load %arg4[%c11_208, %c0_209, %c0_210] : memref<16x32x16xbf16, #tpu.memory_space<vmem>>, vector<1x32x16xbf16>
    %289 = vector.shape_cast %288 : vector<1x32x16xbf16> to vector<32x16xbf16>
    %cst_211 = arith.constant dense<0.000000e+00> : vector<32x151xf32>
    %290 = tpu.matmul %289, %287, %cst_211 {dimension_numbers = #tpu.dot_dimension_numbers<[1], [0], [0], [1], [0, 0, 1, 1], [], []>} : vector<32x16xbf16>, vector<16x151xbf16>, vector<32x151xf32> -> vector<32x151xf32>
    %291 = arith.addf %284, %290 : vector<32x151xf32>
    %c0_212 = arith.constant 0 : index
    %c0_213 = arith.constant 0 : index
    %c42_214 = arith.constant 42 : index
    %292 = vector.load %arg14[%c0_212, %c0_213, %c42_214] : memref<1x16x196xf32, #tpu.memory_space<vmem>>, vector<1x16x151xf32>
    %293 = vector.shape_cast %292 : vector<1x16x151xf32> to vector<16x151xf32>
    %294 = arith.truncf %293 : vector<16x151xf32> to vector<16x151xbf16>
    %c12_215 = arith.constant 12 : index
    %c0_216 = arith.constant 0 : index
    %c0_217 = arith.constant 0 : index
    %295 = vector.load %arg4[%c12_215, %c0_216, %c0_217] : memref<16x32x16xbf16, #tpu.memory_space<vmem>>, vector<1x32x16xbf16>
    %296 = vector.shape_cast %295 : vector<1x32x16xbf16> to vector<32x16xbf16>
    %cst_218 = arith.constant dense<0.000000e+00> : vector<32x151xf32>
    %297 = tpu.matmul %296, %294, %cst_218 {dimension_numbers = #tpu.dot_dimension_numbers<[1], [0], [0], [1], [0, 0, 1, 1], [], []>} : vector<32x16xbf16>, vector<16x151xbf16>, vector<32x151xf32> -> vector<32x151xf32>
    %298 = arith.addf %291, %297 : vector<32x151xf32>
    %c0_219 = arith.constant 0 : index
    %c0_220 = arith.constant 0 : index
    %c43 = arith.constant 43 : index
    %299 = vector.load %arg14[%c0_219, %c0_220, %c43] : memref<1x16x196xf32, #tpu.memory_space<vmem>>, vector<1x16x151xf32>
    %300 = vector.shape_cast %299 : vector<1x16x151xf32> to vector<16x151xf32>
    %301 = arith.truncf %300 : vector<16x151xf32> to vector<16x151xbf16>
    %c13_221 = arith.constant 13 : index
    %c0_222 = arith.constant 0 : index
    %c0_223 = arith.constant 0 : index
    %302 = vector.load %arg4[%c13_221, %c0_222, %c0_223] : memref<16x32x16xbf16, #tpu.memory_space<vmem>>, vector<1x32x16xbf16>
    %303 = vector.shape_cast %302 : vector<1x32x16xbf16> to vector<32x16xbf16>
    %cst_224 = arith.constant dense<0.000000e+00> : vector<32x151xf32>
    %304 = tpu.matmul %303, %301, %cst_224 {dimension_numbers = #tpu.dot_dimension_numbers<[1], [0], [0], [1], [0, 0, 1, 1], [], []>} : vector<32x16xbf16>, vector<16x151xbf16>, vector<32x151xf32> -> vector<32x151xf32>
    %305 = arith.addf %298, %304 : vector<32x151xf32>
    %c0_225 = arith.constant 0 : index
    %c0_226 = arith.constant 0 : index
    %c44 = arith.constant 44 : index
    %306 = vector.load %arg14[%c0_225, %c0_226, %c44] : memref<1x16x196xf32, #tpu.memory_space<vmem>>, vector<1x16x151xf32>
    %307 = vector.shape_cast %306 : vector<1x16x151xf32> to vector<16x151xf32>
    %308 = arith.truncf %307 : vector<16x151xf32> to vector<16x151xbf16>
    %c14_227 = arith.constant 14 : index
    %c0_228 = arith.constant 0 : index
    %c0_229 = arith.constant 0 : index
    %309 = vector.load %arg4[%c14_227, %c0_228, %c0_229] : memref<16x32x16xbf16, #tpu.memory_space<vmem>>, vector<1x32x16xbf16>
    %310 = vector.shape_cast %309 : vector<1x32x16xbf16> to vector<32x16xbf16>
    %cst_230 = arith.constant dense<0.000000e+00> : vector<32x151xf32>
    %311 = tpu.matmul %310, %308, %cst_230 {dimension_numbers = #tpu.dot_dimension_numbers<[1], [0], [0], [1], [0, 0, 1, 1], [], []>} : vector<32x16xbf16>, vector<16x151xbf16>, vector<32x151xf32> -> vector<32x151xf32>
    %312 = arith.addf %305, %311 : vector<32x151xf32>
    %c0_231 = arith.constant 0 : index
    %c0_232 = arith.constant 0 : index
    %c45 = arith.constant 45 : index
    %313 = vector.load %arg14[%c0_231, %c0_232, %c45] : memref<1x16x196xf32, #tpu.memory_space<vmem>>, vector<1x16x151xf32>
    %314 = vector.shape_cast %313 : vector<1x16x151xf32> to vector<16x151xf32>
    %315 = arith.truncf %314 : vector<16x151xf32> to vector<16x151xbf16>
    %c15_233 = arith.constant 15 : index
    %c0_234 = arith.constant 0 : index
    %c0_235 = arith.constant 0 : index
    %316 = vector.load %arg4[%c15_233, %c0_234, %c0_235] : memref<16x32x16xbf16, #tpu.memory_space<vmem>>, vector<1x32x16xbf16>
    %317 = vector.shape_cast %316 : vector<1x32x16xbf16> to vector<32x16xbf16>
    %cst_236 = arith.constant dense<0.000000e+00> : vector<32x151xf32>
    %318 = tpu.matmul %317, %315, %cst_236 {dimension_numbers = #tpu.dot_dimension_numbers<[1], [0], [0], [1], [0, 0, 1, 1], [], []>} : vector<32x16xbf16>, vector<16x151xbf16>, vector<32x151xf32> -> vector<32x151xf32>
    %319 = arith.addf %312, %318 : vector<32x151xf32>
    %c0_237 = arith.constant 0 : index
    %c0_238 = arith.constant 0 : index
    %320 = vector.load %arg5[%c0_237, %c0_238] : memref<32x1xf32, #tpu.memory_space<vmem>>, vector<32x1xf32>
    %321 = vector.broadcast %320 : vector<32x1xf32> to vector<32x151xf32>
    %322 = arith.addf %319, %321 : vector<32x151xf32>
    %323 = tpu.iota {dimensions = array<i32: 1>} : vector<1x151xi32>
    %c11_i32 = arith.constant 11 : i32
    %324 = vector.broadcast %c11_i32 : i32 to vector<1x151xi32>
    %325 = arith.cmpi slt, %323, %324 : vector<1x151xi32>
    %c14_i32 = arith.constant 14 : i32
    %326 = vector.broadcast %c14_i32 : i32 to vector<1x151xi32>
    %327 = arith.cmpi sge, %323, %326 : vector<1x151xi32>
    %c25_i32 = arith.constant 25 : i32
    %328 = vector.broadcast %c25_i32 : i32 to vector<1x151xi32>
    %329 = arith.cmpi slt, %323, %328 : vector<1x151xi32>
    %330 = arith.andi %327, %329 : vector<1x151xi1>
    %331 = arith.ori %325, %330 : vector<1x151xi1>
    %c28_i32 = arith.constant 28 : i32
    %332 = vector.broadcast %c28_i32 : i32 to vector<1x151xi32>
    %333 = arith.cmpi sge, %323, %332 : vector<1x151xi32>
    %c39_i32 = arith.constant 39 : i32
    %334 = vector.broadcast %c39_i32 : i32 to vector<1x151xi32>
    %335 = arith.cmpi slt, %323, %334 : vector<1x151xi32>
    %336 = arith.andi %333, %335 : vector<1x151xi1>
    %337 = arith.ori %331, %336 : vector<1x151xi1>
    %c42_i32 = arith.constant 42 : i32
    %338 = vector.broadcast %c42_i32 : i32 to vector<1x151xi32>
    %339 = arith.cmpi sge, %323, %338 : vector<1x151xi32>
    %c53_i32 = arith.constant 53 : i32
    %340 = vector.broadcast %c53_i32 : i32 to vector<1x151xi32>
    %341 = arith.cmpi slt, %323, %340 : vector<1x151xi32>
    %342 = arith.andi %339, %341 : vector<1x151xi1>
    %343 = arith.ori %337, %342 : vector<1x151xi1>
    %c56_i32 = arith.constant 56 : i32
    %344 = vector.broadcast %c56_i32 : i32 to vector<1x151xi32>
    %345 = arith.cmpi sge, %323, %344 : vector<1x151xi32>
    %c67_i32 = arith.constant 67 : i32
    %346 = vector.broadcast %c67_i32 : i32 to vector<1x151xi32>
    %347 = arith.cmpi slt, %323, %346 : vector<1x151xi32>
    %348 = arith.andi %345, %347 : vector<1x151xi1>
    %349 = arith.ori %343, %348 : vector<1x151xi1>
    %c70_i32 = arith.constant 70 : i32
    %350 = vector.broadcast %c70_i32 : i32 to vector<1x151xi32>
    %351 = arith.cmpi sge, %323, %350 : vector<1x151xi32>
    %c81_i32 = arith.constant 81 : i32
    %352 = vector.broadcast %c81_i32 : i32 to vector<1x151xi32>
    %353 = arith.cmpi slt, %323, %352 : vector<1x151xi32>
    %354 = arith.andi %351, %353 : vector<1x151xi1>
    %355 = arith.ori %349, %354 : vector<1x151xi1>
    %c84_i32 = arith.constant 84 : i32
    %356 = vector.broadcast %c84_i32 : i32 to vector<1x151xi32>
    %357 = arith.cmpi sge, %323, %356 : vector<1x151xi32>
    %c95_i32 = arith.constant 95 : i32
    %358 = vector.broadcast %c95_i32 : i32 to vector<1x151xi32>
    %359 = arith.cmpi slt, %323, %358 : vector<1x151xi32>
    %360 = arith.andi %357, %359 : vector<1x151xi1>
    %361 = arith.ori %355, %360 : vector<1x151xi1>
    %c98_i32 = arith.constant 98 : i32
    %362 = vector.broadcast %c98_i32 : i32 to vector<1x151xi32>
    %363 = arith.cmpi sge, %323, %362 : vector<1x151xi32>
    %c109_i32 = arith.constant 109 : i32
    %364 = vector.broadcast %c109_i32 : i32 to vector<1x151xi32>
    %365 = arith.cmpi slt, %323, %364 : vector<1x151xi32>
    %366 = arith.andi %363, %365 : vector<1x151xi1>
    %367 = arith.ori %361, %366 : vector<1x151xi1>
    %c112_i32 = arith.constant 112 : i32
    %368 = vector.broadcast %c112_i32 : i32 to vector<1x151xi32>
    %369 = arith.cmpi sge, %323, %368 : vector<1x151xi32>
    %c123_i32 = arith.constant 123 : i32
    %370 = vector.broadcast %c123_i32 : i32 to vector<1x151xi32>
    %371 = arith.cmpi slt, %323, %370 : vector<1x151xi32>
    %372 = arith.andi %369, %371 : vector<1x151xi1>
    %373 = arith.ori %367, %372 : vector<1x151xi1>
    %c126_i32 = arith.constant 126 : i32
    %374 = vector.broadcast %c126_i32 : i32 to vector<1x151xi32>
    %375 = arith.cmpi sge, %323, %374 : vector<1x151xi32>
    %c137_i32 = arith.constant 137 : i32
    %376 = vector.broadcast %c137_i32 : i32 to vector<1x151xi32>
    %377 = arith.cmpi slt, %323, %376 : vector<1x151xi32>
    %378 = arith.andi %375, %377 : vector<1x151xi1>
    %379 = arith.ori %373, %378 : vector<1x151xi1>
    %c140_i32 = arith.constant 140 : i32
    %380 = vector.broadcast %c140_i32 : i32 to vector<1x151xi32>
    %381 = arith.cmpi sge, %323, %380 : vector<1x151xi32>
    %c151_i32 = arith.constant 151 : i32
    %382 = vector.broadcast %c151_i32 : i32 to vector<1x151xi32>
    %383 = arith.cmpi slt, %323, %382 : vector<1x151xi32>
    %384 = arith.andi %381, %383 : vector<1x151xi1>
    %385 = arith.ori %379, %384 : vector<1x151xi1>
    %cst_239 = arith.constant 0.000000e+00 : f32
    %386 = vector.shape_cast %385 : vector<1x151xi1> to vector<1x151xi1>
    %387 = vector.broadcast %386 : vector<1x151xi1> to vector<32x151xi1>
    %388 = vector.broadcast %cst_239 : f32 to vector<32x151xf32>
    %389 = arith.select %387, %322, %388 : vector<32x151xi1>, vector<32x151xf32>
    %cst_240 = arith.constant dense<0.000000e+00> : vector<32xf32>
    %390 = vector.multi_reduction <add>, %389, %cst_240 [1] : vector<32x151xf32> to vector<32xf32>
    %391 = vector.shape_cast %390 : vector<32xf32> to vector<32x1xf32>
    %cst_241 = arith.constant 0.00826446246 : f32
    %392 = vector.broadcast %cst_241 : f32 to vector<32x1xf32>
    %393 = arith.mulf %391, %392 : vector<32x1xf32>
    %394 = vector.broadcast %393 : vector<32x1xf32> to vector<32x151xf32>
    %395 = arith.subf %322, %394 : vector<32x151xf32>
    %396 = arith.mulf %395, %395 : vector<32x151xf32>
    %cst_242 = arith.constant 0.000000e+00 : f32
    %397 = vector.shape_cast %385 : vector<1x151xi1> to vector<1x151xi1>
    %398 = vector.broadcast %397 : vector<1x151xi1> to vector<32x151xi1>
    %399 = vector.broadcast %cst_242 : f32 to vector<32x151xf32>
    %400 = arith.select %398, %396, %399 : vector<32x151xi1>, vector<32x151xf32>
    %cst_243 = arith.constant dense<0.000000e+00> : vector<32xf32>
    %401 = vector.multi_reduction <add>, %400, %cst_243 [1] : vector<32x151xf32> to vector<32xf32>
    %402 = vector.shape_cast %401 : vector<32xf32> to vector<32x1xf32>
    %cst_244 = arith.constant 0.00826446246 : f32
    %403 = vector.broadcast %cst_244 : f32 to vector<32x1xf32>
    %404 = arith.mulf %402, %403 : vector<32x1xf32>
    %cst_245 = arith.constant 9.99999974E-6 : f32
    %405 = vector.broadcast %cst_245 : f32 to vector<32x1xf32>
    %406 = arith.addf %404, %405 : vector<32x1xf32>
    %407 = math.rsqrt %406 : vector<32x1xf32>
    %408 = vector.broadcast %407 : vector<32x1xf32> to vector<32x151xf32>
    %409 = arith.mulf %395, %408 : vector<32x151xf32>
    %c0_246 = arith.constant 0 : index
    %c0_247 = arith.constant 0 : index
    %410 = vector.load %arg6[%c0_246, %c0_247] : memref<32x1xf32, #tpu.memory_space<vmem>>, vector<32x1xf32>
    %411 = vector.broadcast %410 : vector<32x1xf32> to vector<32x151xf32>
    %412 = arith.mulf %409, %411 : vector<32x151xf32>
    %c0_248 = arith.constant 0 : index
    %c0_249 = arith.constant 0 : index
    %413 = vector.load %arg7[%c0_248, %c0_249] : memref<32x1xf32, #tpu.memory_space<vmem>>, vector<32x1xf32>
    %414 = vector.broadcast %413 : vector<32x1xf32> to vector<32x151xf32>
    %415 = arith.addf %412, %414 : vector<32x151xf32>
    %cst_250 = arith.constant 0.000000e+00 : f32
    %416 = vector.broadcast %cst_250 : f32 to vector<32x151xf32>
    %417 = arith.cmpf oge, %415, %416 : vector<32x151xf32>
    %cst_251 = arith.constant 2.000000e-01 : f32
    %418 = vector.broadcast %cst_251 : f32 to vector<32x151xf32>
    %419 = arith.mulf %418, %415 : vector<32x151xf32>
    %420 = arith.select %417, %415, %419 : vector<32x151xi1>, vector<32x151xf32>
    %421 = tpu.iota {dimensions = array<i32: 0>} : vector<25x5xi32>
    %422 = tpu.iota {dimensions = array<i32: 1>} : vector<25x5xi32>
    %c2_i32_252 = arith.constant 2 : i32
    %423 = vector.broadcast %c2_i32_252 : i32 to vector<25x5xi32>
    %424 = arith.muli %423, %422 : vector<25x5xi32>
    %425 = arith.subi %421, %424 : vector<25x5xi32>
    %c0_i32_253 = arith.constant 0 : i32
    %426 = vector.broadcast %c0_i32_253 : i32 to vector<25x5xi32>
    %427 = arith.cmpi eq, %425, %426 : vector<25x5xi32>
    %c1_i32_254 = arith.constant 1 : i32
    %428 = vector.broadcast %c1_i32_254 : i32 to vector<25x5xi32>
    %429 = arith.cmpi eq, %425, %428 : vector<25x5xi32>
    %430 = arith.ori %427, %429 : vector<25x5xi1>
    %c14_i32_255 = arith.constant 14 : i32
    %431 = vector.broadcast %c14_i32_255 : i32 to vector<25x5xi32>
    %432 = arith.cmpi eq, %425, %431 : vector<25x5xi32>
    %433 = arith.ori %430, %432 : vector<25x5xi1>
    %c15_i32 = arith.constant 15 : i32
    %434 = vector.broadcast %c15_i32 : i32 to vector<25x5xi32>
    %435 = arith.cmpi eq, %425, %434 : vector<25x5xi32>
    %436 = arith.ori %433, %435 : vector<25x5xi1>
    %437 = arith.extui %436 : vector<25x5xi1> to vector<25x5xi32>
    %438 = arith.sitofp %437 : vector<25x5xi32> to vector<25x5xf32>
    %cst_256 = arith.constant 2.500000e-01 : f32
    %439 = vector.broadcast %cst_256 : f32 to vector<25x5xf32>
    %440 = arith.mulf %438, %439 : vector<25x5xf32>
    %441 = vector.extract_strided_slice %420 {offsets = [0, 0], sizes = [32, 25], strides = [1, 1]} : vector<32x151xf32> to vector<32x25xf32>
    %cst_257 = arith.constant dense<0.000000e+00> : vector<32x5xf32>
    %442 = tpu.matmul %441, %440, %cst_257 {dimension_numbers = #tpu.dot_dimension_numbers<[1], [0], [0], [1], [0, 0, 1, 1], [], []>} : vector<32x25xf32>, vector<25x5xf32>, vector<32x5xf32> -> vector<32x5xf32>
    %c0_258 = arith.constant 0 : index
    %c0_259 = arith.constant 0 : index
    %c0_260 = arith.constant 0 : index
    %443 = vector.load %arg15[%c0_258, %c0_259, %c0_260] : memref<1x32x25xf32, #tpu.memory_space<vmem>>, vector<1x32x5xf32>
    %444 = vector.shape_cast %443 : vector<1x32x5xf32> to vector<32x5xf32>
    %445 = vector.shape_cast %442 : vector<32x5xf32> to vector<1x32x5xf32>
    tpu.vector_store %arg15[%c0_258, %c0_259, %c0_260], %445 {strides = array<i32>} : memref<1x32x25xf32, #tpu.memory_space<vmem>>, vector<1x32x5xf32>,
    %446 = vector.extract_strided_slice %420 {offsets = [0, 28], sizes = [32, 25], strides = [1, 1]} : vector<32x151xf32> to vector<32x25xf32>
    %cst_261 = arith.constant dense<0.000000e+00> : vector<32x5xf32>
    %447 = tpu.matmul %446, %440, %cst_261 {dimension_numbers = #tpu.dot_dimension_numbers<[1], [0], [0], [1], [0, 0, 1, 1], [], []>} : vector<32x25xf32>, vector<25x5xf32>, vector<32x5xf32> -> vector<32x5xf32>
    %c0_262 = arith.constant 0 : index
    %c0_263 = arith.constant 0 : index
    %c5_264 = arith.constant 5 : index
    %448 = vector.load %arg15[%c0_262, %c0_263, %c5_264] : memref<1x32x25xf32, #tpu.memory_space<vmem>>, vector<1x32x5xf32>
    %449 = vector.shape_cast %448 : vector<1x32x5xf32> to vector<32x5xf32>
    %450 = vector.shape_cast %447 : vector<32x5xf32> to vector<1x32x5xf32>
    tpu.vector_store %arg15[%c0_262, %c0_263, %c5_264], %450 {strides = array<i32>} : memref<1x32x25xf32, #tpu.memory_space<vmem>>, vector<1x32x5xf32>,
    %451 = vector.extract_strided_slice %420 {offsets = [0, 56], sizes = [32, 25], strides = [1, 1]} : vector<32x151xf32> to vector<32x25xf32>
    %cst_265 = arith.constant dense<0.000000e+00> : vector<32x5xf32>
    %452 = tpu.matmul %451, %440, %cst_265 {dimension_numbers = #tpu.dot_dimension_numbers<[1], [0], [0], [1], [0, 0, 1, 1], [], []>} : vector<32x25xf32>, vector<25x5xf32>, vector<32x5xf32> -> vector<32x5xf32>
    %c0_266 = arith.constant 0 : index
    %c0_267 = arith.constant 0 : index
    %c10_268 = arith.constant 10 : index
    %453 = vector.load %arg15[%c0_266, %c0_267, %c10_268] : memref<1x32x25xf32, #tpu.memory_space<vmem>>, vector<1x32x5xf32>
    %454 = vector.shape_cast %453 : vector<1x32x5xf32> to vector<32x5xf32>
    %455 = vector.shape_cast %452 : vector<32x5xf32> to vector<1x32x5xf32>
    tpu.vector_store %arg15[%c0_266, %c0_267, %c10_268], %455 {strides = array<i32>} : memref<1x32x25xf32, #tpu.memory_space<vmem>>, vector<1x32x5xf32>,
    %456 = vector.extract_strided_slice %420 {offsets = [0, 84], sizes = [32, 25], strides = [1, 1]} : vector<32x151xf32> to vector<32x25xf32>
    %cst_269 = arith.constant dense<0.000000e+00> : vector<32x5xf32>
    %457 = tpu.matmul %456, %440, %cst_269 {dimension_numbers = #tpu.dot_dimension_numbers<[1], [0], [0], [1], [0, 0, 1, 1], [], []>} : vector<32x25xf32>, vector<25x5xf32>, vector<32x5xf32> -> vector<32x5xf32>
    %c0_270 = arith.constant 0 : index
    %c0_271 = arith.constant 0 : index
    %c15_272 = arith.constant 15 : index
    %458 = vector.load %arg15[%c0_270, %c0_271, %c15_272] : memref<1x32x25xf32, #tpu.memory_space<vmem>>, vector<1x32x5xf32>
    %459 = vector.shape_cast %458 : vector<1x32x5xf32> to vector<32x5xf32>
    %460 = vector.shape_cast %457 : vector<32x5xf32> to vector<1x32x5xf32>
    tpu.vector_store %arg15[%c0_270, %c0_271, %c15_272], %460 {strides = array<i32>} : memref<1x32x25xf32, #tpu.memory_space<vmem>>, vector<1x32x5xf32>,
    %461 = vector.extract_strided_slice %420 {offsets = [0, 112], sizes = [32, 25], strides = [1, 1]} : vector<32x151xf32> to vector<32x25xf32>
    %cst_273 = arith.constant dense<0.000000e+00> : vector<32x5xf32>
    %462 = tpu.matmul %461, %440, %cst_273 {dimension_numbers = #tpu.dot_dimension_numbers<[1], [0], [0], [1], [0, 0, 1, 1], [], []>} : vector<32x25xf32>, vector<25x5xf32>, vector<32x5xf32> -> vector<32x5xf32>
    %c0_274 = arith.constant 0 : index
    %c0_275 = arith.constant 0 : index
    %c20 = arith.constant 20 : index
    %463 = vector.load %arg15[%c0_274, %c0_275, %c20] : memref<1x32x25xf32, #tpu.memory_space<vmem>>, vector<1x32x5xf32>
    %464 = vector.shape_cast %463 : vector<1x32x5xf32> to vector<32x5xf32>
    %465 = vector.shape_cast %462 : vector<32x5xf32> to vector<1x32x5xf32>
    tpu.vector_store %arg15[%c0_274, %c0_275, %c20], %465 {strides = array<i32>} : memref<1x32x25xf32, #tpu.memory_space<vmem>>, vector<1x32x5xf32>,
    %c0_276 = arith.constant 0 : index
    %c0_277 = arith.constant 0 : index
    %c0_278 = arith.constant 0 : index
    %466 = vector.load %arg15[%c0_276, %c0_277, %c0_278] : memref<1x32x25xf32, #tpu.memory_space<vmem>>, vector<1x32x7xf32>
    %467 = vector.shape_cast %466 : vector<1x32x7xf32> to vector<32x7xf32>
    %468 = arith.truncf %467 : vector<32x7xf32> to vector<32x7xbf16>
    %c0_279 = arith.constant 0 : index
    %c0_280 = arith.constant 0 : index
    %c0_281 = arith.constant 0 : index
    %469 = vector.load %arg8[%c0_279, %c0_280, %c0_281] : memref<16x32x32xbf16, #tpu.memory_space<vmem>>, vector<1x32x32xbf16>
    %470 = vector.shape_cast %469 : vector<1x32x32xbf16> to vector<32x32xbf16>
    %cst_282 = arith.constant dense<0.000000e+00> : vector<32x7xf32>
    %471 = tpu.matmul %470, %468, %cst_282 {dimension_numbers = #tpu.dot_dimension_numbers<[1], [0], [0], [1], [0, 0, 1, 1], [], []>} : vector<32x32xbf16>, vector<32x7xbf16>, vector<32x7xf32> -> vector<32x7xf32>
    %c0_283 = arith.constant 0 : index
    %c0_284 = arith.constant 0 : index
    %c1_285 = arith.constant 1 : index
    %472 = vector.load %arg15[%c0_283, %c0_284, %c1_285] : memref<1x32x25xf32, #tpu.memory_space<vmem>>, vector<1x32x7xf32>
    %473 = vector.shape_cast %472 : vector<1x32x7xf32> to vector<32x7xf32>
    %474 = arith.truncf %473 : vector<32x7xf32> to vector<32x7xbf16>
    %c1_286 = arith.constant 1 : index
    %c0_287 = arith.constant 0 : index
    %c0_288 = arith.constant 0 : index
    %475 = vector.load %arg8[%c1_286, %c0_287, %c0_288] : memref<16x32x32xbf16, #tpu.memory_space<vmem>>, vector<1x32x32xbf16>
    %476 = vector.shape_cast %475 : vector<1x32x32xbf16> to vector<32x32xbf16>
    %cst_289 = arith.constant dense<0.000000e+00> : vector<32x7xf32>
    %477 = tpu.matmul %476, %474, %cst_289 {dimension_numbers = #tpu.dot_dimension_numbers<[1], [0], [0], [1], [0, 0, 1, 1], [], []>} : vector<32x32xbf16>, vector<32x7xbf16>, vector<32x7xf32> -> vector<32x7xf32>
    %478 = arith.addf %471, %477 : vector<32x7xf32>
    %c0_290 = arith.constant 0 : index
    %c0_291 = arith.constant 0 : index
    %c2_292 = arith.constant 2 : index
    %479 = vector.load %arg15[%c0_290, %c0_291, %c2_292] : memref<1x32x25xf32, #tpu.memory_space<vmem>>, vector<1x32x7xf32>
    %480 = vector.shape_cast %479 : vector<1x32x7xf32> to vector<32x7xf32>
    %481 = arith.truncf %480 : vector<32x7xf32> to vector<32x7xbf16>
    %c2_293 = arith.constant 2 : index
    %c0_294 = arith.constant 0 : index
    %c0_295 = arith.constant 0 : index
    %482 = vector.load %arg8[%c2_293, %c0_294, %c0_295] : memref<16x32x32xbf16, #tpu.memory_space<vmem>>, vector<1x32x32xbf16>
    %483 = vector.shape_cast %482 : vector<1x32x32xbf16> to vector<32x32xbf16>
    %cst_296 = arith.constant dense<0.000000e+00> : vector<32x7xf32>
    %484 = tpu.matmul %483, %481, %cst_296 {dimension_numbers = #tpu.dot_dimension_numbers<[1], [0], [0], [1], [0, 0, 1, 1], [], []>} : vector<32x32xbf16>, vector<32x7xbf16>, vector<32x7xf32> -> vector<32x7xf32>
    %485 = arith.addf %478, %484 : vector<32x7xf32>
    %c0_297 = arith.constant 0 : index
    %c0_298 = arith.constant 0 : index
    %c3_299 = arith.constant 3 : index
    %486 = vector.load %arg15[%c0_297, %c0_298, %c3_299] : memref<1x32x25xf32, #tpu.memory_space<vmem>>, vector<1x32x7xf32>
    %487 = vector.shape_cast %486 : vector<1x32x7xf32> to vector<32x7xf32>
    %488 = arith.truncf %487 : vector<32x7xf32> to vector<32x7xbf16>
    %c3_300 = arith.constant 3 : index
    %c0_301 = arith.constant 0 : index
    %c0_302 = arith.constant 0 : index
    %489 = vector.load %arg8[%c3_300, %c0_301, %c0_302] : memref<16x32x32xbf16, #tpu.memory_space<vmem>>, vector<1x32x32xbf16>
    %490 = vector.shape_cast %489 : vector<1x32x32xbf16> to vector<32x32xbf16>
    %cst_303 = arith.constant dense<0.000000e+00> : vector<32x7xf32>
    %491 = tpu.matmul %490, %488, %cst_303 {dimension_numbers = #tpu.dot_dimension_numbers<[1], [0], [0], [1], [0, 0, 1, 1], [], []>} : vector<32x32xbf16>, vector<32x7xbf16>, vector<32x7xf32> -> vector<32x7xf32>
    %492 = arith.addf %485, %491 : vector<32x7xf32>
    %c0_304 = arith.constant 0 : index
    %c0_305 = arith.constant 0 : index
    %c5_306 = arith.constant 5 : index
    %493 = vector.load %arg15[%c0_304, %c0_305, %c5_306] : memref<1x32x25xf32, #tpu.memory_space<vmem>>, vector<1x32x7xf32>
    %494 = vector.shape_cast %493 : vector<1x32x7xf32> to vector<32x7xf32>
    %495 = arith.truncf %494 : vector<32x7xf32> to vector<32x7xbf16>
    %c4_307 = arith.constant 4 : index
    %c0_308 = arith.constant 0 : index
    %c0_309 = arith.constant 0 : index
    %496 = vector.load %arg8[%c4_307, %c0_308, %c0_309] : memref<16x32x32xbf16, #tpu.memory_space<vmem>>, vector<1x32x32xbf16>
    %497 = vector.shape_cast %496 : vector<1x32x32xbf16> to vector<32x32xbf16>
    %cst_310 = arith.constant dense<0.000000e+00> : vector<32x7xf32>
    %498 = tpu.matmul %497, %495, %cst_310 {dimension_numbers = #tpu.dot_dimension_numbers<[1], [0], [0], [1], [0, 0, 1, 1], [], []>} : vector<32x32xbf16>, vector<32x7xbf16>, vector<32x7xf32> -> vector<32x7xf32>
    %499 = arith.addf %492, %498 : vector<32x7xf32>
    %c0_311 = arith.constant 0 : index
    %c0_312 = arith.constant 0 : index
    %c6_313 = arith.constant 6 : index
    %500 = vector.load %arg15[%c0_311, %c0_312, %c6_313] : memref<1x32x25xf32, #tpu.memory_space<vmem>>, vector<1x32x7xf32>
    %501 = vector.shape_cast %500 : vector<1x32x7xf32> to vector<32x7xf32>
    %502 = arith.truncf %501 : vector<32x7xf32> to vector<32x7xbf16>
    %c5_314 = arith.constant 5 : index
    %c0_315 = arith.constant 0 : index
    %c0_316 = arith.constant 0 : index
    %503 = vector.load %arg8[%c5_314, %c0_315, %c0_316] : memref<16x32x32xbf16, #tpu.memory_space<vmem>>, vector<1x32x32xbf16>
    %504 = vector.shape_cast %503 : vector<1x32x32xbf16> to vector<32x32xbf16>
    %cst_317 = arith.constant dense<0.000000e+00> : vector<32x7xf32>
    %505 = tpu.matmul %504, %502, %cst_317 {dimension_numbers = #tpu.dot_dimension_numbers<[1], [0], [0], [1], [0, 0, 1, 1], [], []>} : vector<32x32xbf16>, vector<32x7xbf16>, vector<32x7xf32> -> vector<32x7xf32>
    %506 = arith.addf %499, %505 : vector<32x7xf32>
    %c0_318 = arith.constant 0 : index
    %c0_319 = arith.constant 0 : index
    %c7_320 = arith.constant 7 : index
    %507 = vector.load %arg15[%c0_318, %c0_319, %c7_320] : memref<1x32x25xf32, #tpu.memory_space<vmem>>, vector<1x32x7xf32>
    %508 = vector.shape_cast %507 : vector<1x32x7xf32> to vector<32x7xf32>
    %509 = arith.truncf %508 : vector<32x7xf32> to vector<32x7xbf16>
    %c6_321 = arith.constant 6 : index
    %c0_322 = arith.constant 0 : index
    %c0_323 = arith.constant 0 : index
    %510 = vector.load %arg8[%c6_321, %c0_322, %c0_323] : memref<16x32x32xbf16, #tpu.memory_space<vmem>>, vector<1x32x32xbf16>
    %511 = vector.shape_cast %510 : vector<1x32x32xbf16> to vector<32x32xbf16>
    %cst_324 = arith.constant dense<0.000000e+00> : vector<32x7xf32>
    %512 = tpu.matmul %511, %509, %cst_324 {dimension_numbers = #tpu.dot_dimension_numbers<[1], [0], [0], [1], [0, 0, 1, 1], [], []>} : vector<32x32xbf16>, vector<32x7xbf16>, vector<32x7xf32> -> vector<32x7xf32>
    %513 = arith.addf %506, %512 : vector<32x7xf32>
    %c0_325 = arith.constant 0 : index
    %c0_326 = arith.constant 0 : index
    %c8_327 = arith.constant 8 : index
    %514 = vector.load %arg15[%c0_325, %c0_326, %c8_327] : memref<1x32x25xf32, #tpu.memory_space<vmem>>, vector<1x32x7xf32>
    %515 = vector.shape_cast %514 : vector<1x32x7xf32> to vector<32x7xf32>
    %516 = arith.truncf %515 : vector<32x7xf32> to vector<32x7xbf16>
    %c7_328 = arith.constant 7 : index
    %c0_329 = arith.constant 0 : index
    %c0_330 = arith.constant 0 : index
    %517 = vector.load %arg8[%c7_328, %c0_329, %c0_330] : memref<16x32x32xbf16, #tpu.memory_space<vmem>>, vector<1x32x32xbf16>
    %518 = vector.shape_cast %517 : vector<1x32x32xbf16> to vector<32x32xbf16>
    %cst_331 = arith.constant dense<0.000000e+00> : vector<32x7xf32>
    %519 = tpu.matmul %518, %516, %cst_331 {dimension_numbers = #tpu.dot_dimension_numbers<[1], [0], [0], [1], [0, 0, 1, 1], [], []>} : vector<32x32xbf16>, vector<32x7xbf16>, vector<32x7xf32> -> vector<32x7xf32>
    %520 = arith.addf %513, %519 : vector<32x7xf32>
    %c0_332 = arith.constant 0 : index
    %c0_333 = arith.constant 0 : index
    %c10_334 = arith.constant 10 : index
    %521 = vector.load %arg15[%c0_332, %c0_333, %c10_334] : memref<1x32x25xf32, #tpu.memory_space<vmem>>, vector<1x32x7xf32>
    %522 = vector.shape_cast %521 : vector<1x32x7xf32> to vector<32x7xf32>
    %523 = arith.truncf %522 : vector<32x7xf32> to vector<32x7xbf16>
    %c8_335 = arith.constant 8 : index
    %c0_336 = arith.constant 0 : index
    %c0_337 = arith.constant 0 : index
    %524 = vector.load %arg8[%c8_335, %c0_336, %c0_337] : memref<16x32x32xbf16, #tpu.memory_space<vmem>>, vector<1x32x32xbf16>
    %525 = vector.shape_cast %524 : vector<1x32x32xbf16> to vector<32x32xbf16>
    %cst_338 = arith.constant dense<0.000000e+00> : vector<32x7xf32>
    %526 = tpu.matmul %525, %523, %cst_338 {dimension_numbers = #tpu.dot_dimension_numbers<[1], [0], [0], [1], [0, 0, 1, 1], [], []>} : vector<32x32xbf16>, vector<32x7xbf16>, vector<32x7xf32> -> vector<32x7xf32>
    %527 = arith.addf %520, %526 : vector<32x7xf32>
    %c0_339 = arith.constant 0 : index
    %c0_340 = arith.constant 0 : index
    %c11_341 = arith.constant 11 : index
    %528 = vector.load %arg15[%c0_339, %c0_340, %c11_341] : memref<1x32x25xf32, #tpu.memory_space<vmem>>, vector<1x32x7xf32>
    %529 = vector.shape_cast %528 : vector<1x32x7xf32> to vector<32x7xf32>
    %530 = arith.truncf %529 : vector<32x7xf32> to vector<32x7xbf16>
    %c9_342 = arith.constant 9 : index
    %c0_343 = arith.constant 0 : index
    %c0_344 = arith.constant 0 : index
    %531 = vector.load %arg8[%c9_342, %c0_343, %c0_344] : memref<16x32x32xbf16, #tpu.memory_space<vmem>>, vector<1x32x32xbf16>
    %532 = vector.shape_cast %531 : vector<1x32x32xbf16> to vector<32x32xbf16>
    %cst_345 = arith.constant dense<0.000000e+00> : vector<32x7xf32>
    %533 = tpu.matmul %532, %530, %cst_345 {dimension_numbers = #tpu.dot_dimension_numbers<[1], [0], [0], [1], [0, 0, 1, 1], [], []>} : vector<32x32xbf16>, vector<32x7xbf16>, vector<32x7xf32> -> vector<32x7xf32>
    %534 = arith.addf %527, %533 : vector<32x7xf32>
    %c0_346 = arith.constant 0 : index
    %c0_347 = arith.constant 0 : index
    %c12_348 = arith.constant 12 : index
    %535 = vector.load %arg15[%c0_346, %c0_347, %c12_348] : memref<1x32x25xf32, #tpu.memory_space<vmem>>, vector<1x32x7xf32>
    %536 = vector.shape_cast %535 : vector<1x32x7xf32> to vector<32x7xf32>
    %537 = arith.truncf %536 : vector<32x7xf32> to vector<32x7xbf16>
    %c10_349 = arith.constant 10 : index
    %c0_350 = arith.constant 0 : index
    %c0_351 = arith.constant 0 : index
    %538 = vector.load %arg8[%c10_349, %c0_350, %c0_351] : memref<16x32x32xbf16, #tpu.memory_space<vmem>>, vector<1x32x32xbf16>
    %539 = vector.shape_cast %538 : vector<1x32x32xbf16> to vector<32x32xbf16>
    %cst_352 = arith.constant dense<0.000000e+00> : vector<32x7xf32>
    %540 = tpu.matmul %539, %537, %cst_352 {dimension_numbers = #tpu.dot_dimension_numbers<[1], [0], [0], [1], [0, 0, 1, 1], [], []>} : vector<32x32xbf16>, vector<32x7xbf16>, vector<32x7xf32> -> vector<32x7xf32>
    %541 = arith.addf %534, %540 : vector<32x7xf32>
    %c0_353 = arith.constant 0 : index
    %c0_354 = arith.constant 0 : index
    %c13_355 = arith.constant 13 : index
    %542 = vector.load %arg15[%c0_353, %c0_354, %c13_355] : memref<1x32x25xf32, #tpu.memory_space<vmem>>, vector<1x32x7xf32>
    %543 = vector.shape_cast %542 : vector<1x32x7xf32> to vector<32x7xf32>
    %544 = arith.truncf %543 : vector<32x7xf32> to vector<32x7xbf16>
    %c11_356 = arith.constant 11 : index
    %c0_357 = arith.constant 0 : index
    %c0_358 = arith.constant 0 : index
    %545 = vector.load %arg8[%c11_356, %c0_357, %c0_358] : memref<16x32x32xbf16, #tpu.memory_space<vmem>>, vector<1x32x32xbf16>
    %546 = vector.shape_cast %545 : vector<1x32x32xbf16> to vector<32x32xbf16>
    %cst_359 = arith.constant dense<0.000000e+00> : vector<32x7xf32>
    %547 = tpu.matmul %546, %544, %cst_359 {dimension_numbers = #tpu.dot_dimension_numbers<[1], [0], [0], [1], [0, 0, 1, 1], [], []>} : vector<32x32xbf16>, vector<32x7xbf16>, vector<32x7xf32> -> vector<32x7xf32>
    %548 = arith.addf %541, %547 : vector<32x7xf32>
    %c0_360 = arith.constant 0 : index
    %c0_361 = arith.constant 0 : index
    %c15_362 = arith.constant 15 : index
    %549 = vector.load %arg15[%c0_360, %c0_361, %c15_362] : memref<1x32x25xf32, #tpu.memory_space<vmem>>, vector<1x32x7xf32>
    %550 = vector.shape_cast %549 : vector<1x32x7xf32> to vector<32x7xf32>
    %551 = arith.truncf %550 : vector<32x7xf32> to vector<32x7xbf16>
    %c12_363 = arith.constant 12 : index
    %c0_364 = arith.constant 0 : index
    %c0_365 = arith.constant 0 : index
    %552 = vector.load %arg8[%c12_363, %c0_364, %c0_365] : memref<16x32x32xbf16, #tpu.memory_space<vmem>>, vector<1x32x32xbf16>
    %553 = vector.shape_cast %552 : vector<1x32x32xbf16> to vector<32x32xbf16>
    %cst_366 = arith.constant dense<0.000000e+00> : vector<32x7xf32>
    %554 = tpu.matmul %553, %551, %cst_366 {dimension_numbers = #tpu.dot_dimension_numbers<[1], [0], [0], [1], [0, 0, 1, 1], [], []>} : vector<32x32xbf16>, vector<32x7xbf16>, vector<32x7xf32> -> vector<32x7xf32>
    %555 = arith.addf %548, %554 : vector<32x7xf32>
    %c0_367 = arith.constant 0 : index
    %c0_368 = arith.constant 0 : index
    %c16_369 = arith.constant 16 : index
    %556 = vector.load %arg15[%c0_367, %c0_368, %c16_369] : memref<1x32x25xf32, #tpu.memory_space<vmem>>, vector<1x32x7xf32>
    %557 = vector.shape_cast %556 : vector<1x32x7xf32> to vector<32x7xf32>
    %558 = arith.truncf %557 : vector<32x7xf32> to vector<32x7xbf16>
    %c13_370 = arith.constant 13 : index
    %c0_371 = arith.constant 0 : index
    %c0_372 = arith.constant 0 : index
    %559 = vector.load %arg8[%c13_370, %c0_371, %c0_372] : memref<16x32x32xbf16, #tpu.memory_space<vmem>>, vector<1x32x32xbf16>
    %560 = vector.shape_cast %559 : vector<1x32x32xbf16> to vector<32x32xbf16>
    %cst_373 = arith.constant dense<0.000000e+00> : vector<32x7xf32>
    %561 = tpu.matmul %560, %558, %cst_373 {dimension_numbers = #tpu.dot_dimension_numbers<[1], [0], [0], [1], [0, 0, 1, 1], [], []>} : vector<32x32xbf16>, vector<32x7xbf16>, vector<32x7xf32> -> vector<32x7xf32>
    %562 = arith.addf %555, %561 : vector<32x7xf32>
    %c0_374 = arith.constant 0 : index
    %c0_375 = arith.constant 0 : index
    %c17_376 = arith.constant 17 : index
    %563 = vector.load %arg15[%c0_374, %c0_375, %c17_376] : memref<1x32x25xf32, #tpu.memory_space<vmem>>, vector<1x32x7xf32>
    %564 = vector.shape_cast %563 : vector<1x32x7xf32> to vector<32x7xf32>
    %565 = arith.truncf %564 : vector<32x7xf32> to vector<32x7xbf16>
    %c14_377 = arith.constant 14 : index
    %c0_378 = arith.constant 0 : index
    %c0_379 = arith.constant 0 : index
    %566 = vector.load %arg8[%c14_377, %c0_378, %c0_379] : memref<16x32x32xbf16, #tpu.memory_space<vmem>>, vector<1x32x32xbf16>
    %567 = vector.shape_cast %566 : vector<1x32x32xbf16> to vector<32x32xbf16>
    %cst_380 = arith.constant dense<0.000000e+00> : vector<32x7xf32>
    %568 = tpu.matmul %567, %565, %cst_380 {dimension_numbers = #tpu.dot_dimension_numbers<[1], [0], [0], [1], [0, 0, 1, 1], [], []>} : vector<32x32xbf16>, vector<32x7xbf16>, vector<32x7xf32> -> vector<32x7xf32>
    %569 = arith.addf %562, %568 : vector<32x7xf32>
    %c0_381 = arith.constant 0 : index
    %c0_382 = arith.constant 0 : index
    %c18 = arith.constant 18 : index
    %570 = vector.load %arg15[%c0_381, %c0_382, %c18] : memref<1x32x25xf32, #tpu.memory_space<vmem>>, vector<1x32x7xf32>
    %571 = vector.shape_cast %570 : vector<1x32x7xf32> to vector<32x7xf32>
    %572 = arith.truncf %571 : vector<32x7xf32> to vector<32x7xbf16>
    %c15_383 = arith.constant 15 : index
    %c0_384 = arith.constant 0 : index
    %c0_385 = arith.constant 0 : index
    %573 = vector.load %arg8[%c15_383, %c0_384, %c0_385] : memref<16x32x32xbf16, #tpu.memory_space<vmem>>, vector<1x32x32xbf16>
    %574 = vector.shape_cast %573 : vector<1x32x32xbf16> to vector<32x32xbf16>
    %cst_386 = arith.constant dense<0.000000e+00> : vector<32x7xf32>
    %575 = tpu.matmul %574, %572, %cst_386 {dimension_numbers = #tpu.dot_dimension_numbers<[1], [0], [0], [1], [0, 0, 1, 1], [], []>} : vector<32x32xbf16>, vector<32x7xbf16>, vector<32x7xf32> -> vector<32x7xf32>
    %576 = arith.addf %569, %575 : vector<32x7xf32>
    %c0_387 = arith.constant 0 : index
    %c0_388 = arith.constant 0 : index
    %577 = vector.load %arg9[%c0_387, %c0_388] : memref<32x1xf32, #tpu.memory_space<vmem>>, vector<32x1xf32>
    %578 = vector.broadcast %577 : vector<32x1xf32> to vector<32x7xf32>
    %579 = arith.addf %576, %578 : vector<32x7xf32>
    %580 = tpu.iota {dimensions = array<i32: 1>} : vector<1x7xi32>
    %c2_i32_389 = arith.constant 2 : i32
    %581 = vector.broadcast %c2_i32_389 : i32 to vector<1x7xi32>
    %582 = arith.cmpi slt, %580, %581 : vector<1x7xi32>
    %c5_i32 = arith.constant 5 : i32
    %583 = vector.broadcast %c5_i32 : i32 to vector<1x7xi32>
    %584 = arith.cmpi sge, %580, %583 : vector<1x7xi32>
    %c7_i32 = arith.constant 7 : i32
    %585 = vector.broadcast %c7_i32 : i32 to vector<1x7xi32>
    %586 = arith.cmpi slt, %580, %585 : vector<1x7xi32>
    %587 = arith.andi %584, %586 : vector<1x7xi1>
    %588 = arith.ori %582, %587 : vector<1x7xi1>
    %cst_390 = arith.constant 0.000000e+00 : f32
    %589 = vector.shape_cast %588 : vector<1x7xi1> to vector<1x7xi1>
    %590 = vector.broadcast %589 : vector<1x7xi1> to vector<32x7xi1>
    %591 = vector.broadcast %cst_390 : f32 to vector<32x7xf32>
    %592 = arith.select %590, %579, %591 : vector<32x7xi1>, vector<32x7xf32>
    %cst_391 = arith.constant dense<0.000000e+00> : vector<32xf32>
    %593 = vector.multi_reduction <add>, %592, %cst_391 [1] : vector<32x7xf32> to vector<32xf32>
    %594 = vector.shape_cast %593 : vector<32xf32> to vector<32x1xf32>
    %cst_392 = arith.constant 2.500000e-01 : f32
    %595 = vector.broadcast %cst_392 : f32 to vector<32x1xf32>
    %596 = arith.mulf %594, %595 : vector<32x1xf32>
    %597 = vector.broadcast %596 : vector<32x1xf32> to vector<32x7xf32>
    %598 = arith.subf %579, %597 : vector<32x7xf32>
    %599 = arith.mulf %598, %598 : vector<32x7xf32>
    %cst_393 = arith.constant 0.000000e+00 : f32
    %600 = vector.shape_cast %588 : vector<1x7xi1> to vector<1x7xi1>
    %601 = vector.broadcast %600 : vector<1x7xi1> to vector<32x7xi1>
    %602 = vector.broadcast %cst_393 : f32 to vector<32x7xf32>
    %603 = arith.select %601, %599, %602 : vector<32x7xi1>, vector<32x7xf32>
    %cst_394 = arith.constant dense<0.000000e+00> : vector<32xf32>
    %604 = vector.multi_reduction <add>, %603, %cst_394 [1] : vector<32x7xf32> to vector<32xf32>
    %605 = vector.shape_cast %604 : vector<32xf32> to vector<32x1xf32>
    %cst_395 = arith.constant 2.500000e-01 : f32
    %606 = vector.broadcast %cst_395 : f32 to vector<32x1xf32>
    %607 = arith.mulf %605, %606 : vector<32x1xf32>
    %cst_396 = arith.constant 9.99999974E-6 : f32
    %608 = vector.broadcast %cst_396 : f32 to vector<32x1xf32>
    %609 = arith.addf %607, %608 : vector<32x1xf32>
    %610 = math.rsqrt %609 : vector<32x1xf32>
    %611 = vector.broadcast %610 : vector<32x1xf32> to vector<32x7xf32>
    %612 = arith.mulf %598, %611 : vector<32x7xf32>
    %c0_397 = arith.constant 0 : index
    %c0_398 = arith.constant 0 : index
    %613 = vector.load %arg10[%c0_397, %c0_398] : memref<32x1xf32, #tpu.memory_space<vmem>>, vector<32x1xf32>
    %614 = vector.broadcast %613 : vector<32x1xf32> to vector<32x7xf32>
    %615 = arith.mulf %612, %614 : vector<32x7xf32>
    %c0_399 = arith.constant 0 : index
    %c0_400 = arith.constant 0 : index
    %616 = vector.load %arg11[%c0_399, %c0_400] : memref<32x1xf32, #tpu.memory_space<vmem>>, vector<32x1xf32>
    %617 = vector.broadcast %616 : vector<32x1xf32> to vector<32x7xf32>
    %618 = arith.addf %615, %617 : vector<32x7xf32>
    %cst_401 = arith.constant 0.000000e+00 : f32
    %619 = vector.broadcast %cst_401 : f32 to vector<32x7xf32>
    %620 = arith.cmpf oge, %618, %619 : vector<32x7xf32>
    %cst_402 = arith.constant 2.000000e-01 : f32
    %621 = vector.broadcast %cst_402 : f32 to vector<32x7xf32>
    %622 = arith.mulf %621, %618 : vector<32x7xf32>
    %623 = arith.select %620, %618, %622 : vector<32x7xi1>, vector<32x7xf32>
    %624 = vector.extract_strided_slice %623 {offsets = [0, 0], sizes = [32, 2], strides = [1, 1]} : vector<32x7xf32> to vector<32x2xf32>
    %c0_403 = arith.constant 0 : index
    %c0_404 = arith.constant 0 : index
    %c0_405 = arith.constant 0 : index
    %625 = vector.load %arg16[%c0_403, %c0_404, %c0_405] : memref<1x32x4xf32, #tpu.memory_space<vmem>>, vector<1x32x2xf32>
    %626 = vector.shape_cast %625 : vector<1x32x2xf32> to vector<32x2xf32>
    %627 = vector.shape_cast %624 : vector<32x2xf32> to vector<1x32x2xf32>
    tpu.vector_store %arg16[%c0_403, %c0_404, %c0_405], %627 {strides = array<i32>} : memref<1x32x4xf32, #tpu.memory_space<vmem>>, vector<1x32x2xf32>,
    %628 = vector.extract_strided_slice %623 {offsets = [0, 5], sizes = [32, 2], strides = [1, 1]} : vector<32x7xf32> to vector<32x2xf32>
    %c0_406 = arith.constant 0 : index
    %c0_407 = arith.constant 0 : index
    %c2_408 = arith.constant 2 : index
    %629 = vector.load %arg16[%c0_406, %c0_407, %c2_408] : memref<1x32x4xf32, #tpu.memory_space<vmem>>, vector<1x32x2xf32>
    %630 = vector.shape_cast %629 : vector<1x32x2xf32> to vector<32x2xf32>
    %631 = vector.shape_cast %628 : vector<32x2xf32> to vector<1x32x2xf32>
    tpu.vector_store %arg16[%c0_406, %c0_407, %c2_408], %631 {strides = array<i32>} : memref<1x32x4xf32, #tpu.memory_space<vmem>>, vector<1x32x2xf32>,
    %c0_409 = arith.constant 0 : index
    %c0_410 = arith.constant 0 : index
    %c0_411 = arith.constant 0 : index
    %632 = vector.load %arg16[%c0_409, %c0_410, %c0_411] : memref<1x32x4xf32, #tpu.memory_space<vmem>>, vector<1x32x4xf32>
    %633 = vector.shape_cast %632 : vector<1x32x4xf32> to vector<32x4xf32>
    %c0_412 = arith.constant 0 : index
    %c0_413 = arith.constant 0 : index
    %634 = vector.load %arg12[%c0_412, %c0_413] : memref<32x1xf32, #tpu.memory_space<vmem>>, vector<32x1xf32>
    %635 = vector.broadcast %634 : vector<32x1xf32> to vector<32x4xf32>
    %636 = arith.mulf %633, %635 : vector<32x4xf32>
    %cst_414 = arith.constant dense<0.000000e+00> : vector<4xf32>
    %637 = vector.multi_reduction <add>, %636, %cst_414 [0] : vector<32x4xf32> to vector<4xf32>
    %638 = vector.shape_cast %637 : vector<4xf32> to vector<1x4xf32>
    %c0_415 = arith.constant 0 : index
    %c0_416 = arith.constant 0 : index
    %639 = vector.load %arg13[%c0_415, %c0_416] : memref<1x1xf32, #tpu.memory_space<vmem>>, vector<1x1xf32>
    %640 = vector.broadcast %639 : vector<1x1xf32> to vector<1x4xf32>
    %641 = arith.addf %638, %640 : vector<1x4xf32>
    %c0_417 = arith.constant 0 : index
    %c0_418 = arith.constant 0 : index
    %c0_419 = arith.constant 0 : index
    %642 = vector.load %arg17[%c0_417, %c0_418, %c0_419] : memref<1x1x4xf32, #tpu.memory_space<vmem>>, vector<1x1x4xf32>
    %643 = vector.shape_cast %642 : vector<1x1x4xf32> to vector<1x4xf32>
    %644 = vector.shape_cast %641 : vector<1x4xf32> to vector<1x1x4xf32>
    tpu.vector_store %arg17[%c0_417, %c0_418, %c0_419], %644 {strides = array<i32>} : memref<1x1x4xf32, #tpu.memory_space<vmem>>, vector<1x1x4xf32>,
    return
  }
  func.func @transform_0(%arg0: i32) -> (i32, i32, i32) {
    %c0_i32 = arith.constant 0 : i32
    %c0_i32_0 = arith.constant 0 : i32
    %c0_i32_1 = arith.constant 0 : i32
    return %arg0, %c0_i32, %c0_i32_0 : i32, i32, i32
  }
  func.func @transform_1(%arg0: i32) -> (i32, i32, i32) {
    %c0_i32 = arith.constant 0 : i32
    %c0_i32_0 = arith.constant 0 : i32
    %c0_i32_1 = arith.constant 0 : i32
    %c0_i32_2 = arith.constant 0 : i32
    return %c0_i32, %c0_i32_0, %c0_i32_1 : i32, i32, i32
  }
  func.func @transform_2(%arg0: i32) -> (i32, i32) {
    %c0_i32 = arith.constant 0 : i32
    %c0_i32_0 = arith.constant 0 : i32
    %c0_i32_1 = arith.constant 0 : i32
    return %c0_i32, %c0_i32_0 : i32, i32
  }
  func.func @transform_3(%arg0: i32) -> (i32, i32, i32) {
    %c0_i32 = arith.constant 0 : i32
    %c0_i32_0 = arith.constant 0 : i32
    %c0_i32_1 = arith.constant 0 : i32
    %c0_i32_2 = arith.constant 0 : i32
    return %c0_i32, %c0_i32_0, %c0_i32_1 : i32, i32, i32
  }
  func.func @transform_4(%arg0: i32) -> (i32, i32) {
    %c0_i32 = arith.constant 0 : i32
    %c0_i32_0 = arith.constant 0 : i32
    %c0_i32_1 = arith.constant 0 : i32
    return %c0_i32, %c0_i32_0 : i32, i32
  }
  func.func @transform_5(%arg0: i32) -> (i32, i32) {
    %c0_i32 = arith.constant 0 : i32
    %c0_i32_0 = arith.constant 0 : i32
    %c0_i32_1 = arith.constant 0 : i32
    return %c0_i32, %c0_i32_0 : i32, i32
  }
  func.func @transform_6(%arg0: i32) -> (i32, i32) {
    %c0_i32 = arith.constant 0 : i32
    %c0_i32_0 = arith.constant 0 : i32
    %c0_i32_1 = arith.constant 0 : i32
    return %c0_i32, %c0_i32_0 : i32, i32
  }
  func.func @transform_7(%arg0: i32) -> (i32, i32, i32) {
    %c0_i32 = arith.constant 0 : i32
    %c0_i32_0 = arith.constant 0 : i32
    %c0_i32_1 = arith.constant 0 : i32
    %c0_i32_2 = arith.constant 0 : i32
    return %c0_i32, %c0_i32_0, %c0_i32_1 : i32, i32, i32
  }
  func.func @transform_8(%arg0: i32) -> (i32, i32) {
    %c0_i32 = arith.constant 0 : i32
    %c0_i32_0 = arith.constant 0 : i32
    %c0_i32_1 = arith.constant 0 : i32
    return %c0_i32, %c0_i32_0 : i32, i32
  }
  func.func @transform_9(%arg0: i32) -> (i32, i32) {
    %c0_i32 = arith.constant 0 : i32
    %c0_i32_0 = arith.constant 0 : i32
    %c0_i32_1 = arith.constant 0 : i32
    return %c0_i32, %c0_i32_0 : i32, i32
  }
  func.func @transform_10(%arg0: i32) -> (i32, i32) {
    %c0_i32 = arith.constant 0 : i32
    %c0_i32_0 = arith.constant 0 : i32
    %c0_i32_1 = arith.constant 0 : i32
    return %c0_i32, %c0_i32_0 : i32, i32
  }
  func.func @transform_11(%arg0: i32) -> (i32, i32) {
    %c0_i32 = arith.constant 0 : i32
    %c0_i32_0 = arith.constant 0 : i32
    %c0_i32_1 = arith.constant 0 : i32
    return %c0_i32, %c0_i32_0 : i32, i32
  }
  func.func @transform_12(%arg0: i32) -> (i32, i32) {
    %c0_i32 = arith.constant 0 : i32
    %c0_i32_0 = arith.constant 0 : i32
    %c0_i32_1 = arith.constant 0 : i32
    return %c0_i32, %c0_i32_0 : i32, i32
  }
  func.func @transform_13(%arg0: i32) -> (i32, i32, i32) {
    %c0_i32 = arith.constant 0 : i32
    %c0_i32_0 = arith.constant 0 : i32
    %c0_i32_1 = arith.constant 0 : i32
    return %arg0, %c0_i32, %c0_i32_0 : i32, i32, i32
  }
  func.func @transform_14(%arg0: i32) -> (i32, i32, i32) {
    %c0_i32 = arith.constant 0 : i32
    %c0_i32_0 = arith.constant 0 : i32
    %c0_i32_1 = arith.constant 0 : i32
    return %arg0, %c0_i32, %c0_i32_0 : i32, i32, i32
  }
  func.func @transform_15(%arg0: i32) -> (i32, i32, i32) {
    %c0_i32 = arith.constant 0 : i32
    %c0_i32_0 = arith.constant 0 : i32
    %c0_i32_1 = arith.constant 0 : i32
    return %arg0, %c0_i32, %c0_i32_0 : i32, i32, i32
  }
  func.func @transform_16(%arg0: i32) -> (i32, i32, i32) {
    %c0_i32 = arith.constant 0 : i32
    %c0_i32_0 = arith.constant 0 : i32
    %c0_i32_1 = arith.constant 0 : i32
    return %arg0, %c0_i32, %c0_i32_0 : i32, i32, i32
  }
}

</mosaic_0001>

<llo_original>
// kernel: tpu_custom_call.1
$region0: #{tpu_custom_call.1}
  #allocation0 [shape = 'u32[]', space=smem, size = 0x4, offset = 0x4, fixed_abs, tag = 'smem constant byte address 0x4 - core index']
  #allocation1 [shape = 'u32[72,128]{1,0:T(1,128)}', space=vmem, size = 0x9000, scoped, tag = 'internal scratch']
  #allocation2 [shape = 'f32[1,1]{1,0:T(1,128)S(1)}', space=vmem, size = 0x200, scoped, tag = 'scoped memory for tpu_custom_call.1']
  %s0 = inlined_call_operand.vmem [shape: f32[2,3,1024], index: 0, kind: input, shape index: {}]
  %s1 = inlined_call_operand.vmem [shape: bf16[16,16,3], index: 1, kind: input, shape index: {}]
  %s2 = inlined_call_operand.vmem [shape: f32[16,1], index: 2, kind: input, shape index: {}]
  %s3 = inlined_call_operand.vmem [shape: bf16[16,32,16], index: 3, kind: input, shape index: {}]
  %s4 = inlined_call_operand.vmem [shape: f32[32,1], index: 4, kind: input, shape index: {}]
  %s5 = inlined_call_operand.vmem [shape: f32[32,1], index: 5, kind: input, shape index: {}]
  %s6 = inlined_call_operand.vmem [shape: f32[32,1], index: 6, kind: input, shape index: {}]
  %s7 = inlined_call_operand.vmem [shape: bf16[16,32,32], index: 7, kind: input, shape index: {}]
  %s8 = inlined_call_operand.vmem [shape: f32[32,1], index: 8, kind: input, shape index: {}]
  %s9 = inlined_call_operand.vmem [shape: f32[32,1], index: 9, kind: input, shape index: {}]
  %s10 = inlined_call_operand.vmem [shape: f32[32,1], index: 10, kind: input, shape index: {}]
  %s11 = inlined_call_operand.vmem [shape: f32[32,1], index: 11, kind: input, shape index: {}]
  %s12 = inlined_call_operand.<no memory space> [shape: f32[1,1], index: 12, kind: input, shape index: {}]
  %s13 = inlined_call_operand.hbm [shape: f32[2,16,196], index: 13, kind: output, shape index: {0}]
  %s14 = inlined_call_operand.vmem [shape: f32[2,32,25], index: 14, kind: output, shape index: {1}]
  %s15 = inlined_call_operand.vmem [shape: f32[2,32,4], index: 15, kind: output, shape index: {2}]
  %s16 = inlined_call_operand.hbm [shape: f32[2,1,4], index: 16, kind: output, shape index: {3}]
  %17 = xla_tuple %s13, %s14, %s15, %s16
  %s18 = sld [smem:[#allocation0]]
  $region109: #{tpu_custom_call.1} parent=0
    _
  %s20 = ssub.s32 1, %s18
  %s21 = scalar_select 0, %s20, %s18
  %v22 = vstv %s12
  %23 = vst [vmem:[#allocation2] sm:$0x1] %v22
  $region1: #{tpu_custom_call.1} parent=0
    #allocation3 [shape = 'u8[32768]{0}', space=vmem, size = 0x8000, scoped, tag = 'output window, operand 0']
    #allocation4 [shape = 's32[2]{0}', space=sflag, size = 0x8, scoped, tag = 'scoped memory for tpu_custom_call.1']
    #allocation5 [shape = 'u8[1024]{0}', space=vmem, size = 0x400, scoped, tag = 'output window, operand 3']
    #allocation6 [shape = 's32[2]{0}', space=sflag, size = 0x8, scoped, tag = 'scoped memory for tpu_custom_call.1']
    %24 = vsyncpa [#allocation4], 0
    %s25 = scalar_lea.sflag [#allocation4], 1
    %26 = vsyncpa %s25, 0
    %27 = vsyncpa [#allocation6], 0
    %s28 = scalar_lea.sflag [#allocation6], 1
    %29 = vsyncpa %s28, 0
    loop: start=0, step=1, limit=4
    $region2: #{tpu_custom_call.1} parent=1 // loop_pre_header
      _
    $region3: #{tpu_custom_call.1} parent=1 // loop_header
      %s31 = sphi 0, %s35
      %p32 = scmp.ge.s32.totalorder %s31, 4
      %s41 = sphi 0, %s43
      %s44 = sphi 0, %s41
      %s45 = sphi 0, %s44
      %s61 = sphi 0, %s45
      %s65 = sphi 0, %s65
      %s67 = sphi 0, %s65
      %s68 = sphi 0, %s67
      %s82 = sphi 0, %s68
      %s86 = sphi 0, %s86
      %s88 = sphi 0, %s86
      %s89 = sphi 0, %s88
      %s103 = sphi 0, %s89
      %s107 = sphi 0, %s107
      %s109 = sphi 0, %s107
      %s110 = sphi 0, %s109
      %s124 = sphi 0, %s110
      %s128 = sphi 0, %s128
      %s130 = sphi 0, %s128
      %s131 = sphi 0, %s130
      %s145 = sphi 0, %s131
      %s149 = sphi 0, %s149
      %s151 = sphi 0, %s149
      %s152 = sphi 0, %s151
      %s166 = sphi 0, %s152
      %s170 = sphi 0, %s170
      %s172 = sphi 0, %s170
      %s173 = sphi 0, %s172
      %s187 = sphi 0, %s173
      %s191 = sphi 0, %s191
      %s193 = sphi 0, %s191
      %s194 = sphi 0, %s193
      %s208 = sphi 0, %s194
      %s212 = sphi 0, %s212
      %s214 = sphi 0, %s212
      %s215 = sphi 0, %s214
      %s229 = sphi 0, %s215
      %s233 = sphi 0, %s233
      %s235 = sphi 0, %s233
      %s236 = sphi 0, %s235
      %s250 = sphi 0, %s236
      %s254 = sphi 0, %s254
      %s256 = sphi 0, %s254
      %s257 = sphi 0, %s256
      %s271 = sphi 0, %s257
      %s275 = sphi 0, %s275
      %s277 = sphi 0, %s275
      %s278 = sphi 0, %s277
      %s292 = sphi 0, %s278
      %s296 = sphi 0, %s296
      %s298 = sphi 0, %s296
      %s299 = sphi 0, %s298
      %s313 = sphi 0, %s299
      %s319 = sphi 0, %s321
      %s322 = sphi 0, %s319
      %s323 = sphi 0, %s322
      %s339 = sphi 0, %s323
      %s345 = sphi 0, %s347
      %s348 = sphi 0, %s345
      %s349 = sphi 0, %s348
      %s365 = sphi 0, %s349
      %s371 = sphi 0, %s373
      %s374 = sphi 0, %s371
      %s375 = sphi 0, %s374
      %s391 = sphi 0, %s375
      %s397 = sphi 0, %s399
      %s400 = sphi 0, %s397
      %s401 = sphi 0, %s400
      %s417 = sphi 0, %s401
    $region4: #{tpu_custom_call.1} parent=1 // loop_header_branch
      %34 = sbr.rel (%p32) target = $region8
    $region5: #{tpu_custom_call.1} parent=1 // loop_body
      %s36 = ssub.s32 %s31, 1
      %s37 = ssub.s32 %s31, 2
      %s38 = sadd.s32 %s31, 1
      %s39 = ssub.s32 %s31, %s38
      %p40 = scmp.eq.s32.totalorder %s39, 0
      %s42 = sadd.s32 %s41, 1
      %s43 = scalar_select %p40, %s41, %s42
      %p46 = pneg %p40
      %p47 = scmp.eq.s32.totalorder %s31, 1
      %p48 = por %p46, %p47
      %p49 = scmp.ne.s32.totalorder %s41, %s44
      %p50 = scmp.eq.s32.totalorder %s31, 0
      %p51 = por %p49, %p50
      %p52 = scmp.ne.s32.totalorder %s41, %s44
      %p53 = scmp.eq.s32.totalorder %s36, 1
      %p54 = por %p52, %p53
      %p55 = scmp.ne.s32.totalorder %s44, %s45
      %p56 = scmp.eq.s32.totalorder %s36, 0
      %p57 = por %p55, %p56
      %p58 = scmp.ne.s32.totalorder %s44, %s45
      %p59 = scmp.eq.s32.totalorder %s37, 1
      %p60 = por %p58, %p59
      %p62 = scmp.ne.s32.totalorder %s45, %s61
      %p63 = scmp.eq.s32.totalorder %s37, 0
      %p64 = por %p62, %p63
      %s66 = sadd.s32 %s65, 1
      %p69 = scmp.eq.s32.totalorder %s31, 1
      %p70 = scmp.ne.s32.totalorder %s65, %s67
      %p71 = scmp.eq.s32.totalorder %s31, 0
      %p72 = por %p70, %p71
      %p73 = scmp.ne.s32.totalorder %s65, %s67
      %p74 = scmp.eq.s32.totalorder %s36, 1
      %p75 = por %p73, %p74
      %p76 = scmp.ne.s32.totalorder %s67, %s68
      %p77 = scmp.eq.s32.totalorder %s36, 0
      %p78 = por %p76, %p77
      %p79 = scmp.ne.s32.totalorder %s67, %s68
      %p80 = scmp.eq.s32.totalorder %s37, 1
      %p81 = por %p79, %p80
      %p83 = scmp.ne.s32.totalorder %s68, %s82
      %p84 = scmp.eq.s32.totalorder %s37, 0
      %p85 = por %p83, %p84
      %s87 = sadd.s32 %s86, 1
      %p90 = scmp.eq.s32.totalorder %s31, 1
      %p91 = scmp.ne.s32.totalorder %s86, %s88
      %p92 = scmp.eq.s32.totalorder %s31, 0
      %p93 = por %p91, %p92
      %p94 = scmp.ne.s32.totalorder %s86, %s88
      %p95 = scmp.eq.s32.totalorder %s36, 1
      %p96 = por %p94, %p95
      %p97 = scmp.ne.s32.totalorder %s88, %s89
      %p98 = scmp.eq.s32.totalorder %s36, 0
      %p99 = por %p97, %p98
      %p100 = scmp.ne.s32.totalorder %s88, %s89
      %p101 = scmp.eq.s32.totalorder %s37, 1
      %p102 = por %p100, %p101
      %p104 = scmp.ne.s32.totalorder %s89, %s103
      %p105 = scmp.eq.s32.totalorder %s37, 0
      %p106 = por %p104, %p105
      %s108 = sadd.s32 %s107, 1
      %p111 = scmp.eq.s32.totalorder %s31, 1
      %p112 = scmp.ne.s32.totalorder %s107, %s109
      %p113 = scmp.eq.s32.totalorder %s31, 0
      %p114 = por %p112, %p113
      %p115 = scmp.ne.s32.totalorder %s107, %s109
      %p116 = scmp.eq.s32.totalorder %s36, 1
      %p117 = por %p115, %p116
      %p118 = scmp.ne.s32.totalorder %s109, %s110
      %p119 = scmp.eq.s32.totalorder %s36, 0
      %p120 = por %p118, %p119
      %p121 = scmp.ne.s32.totalorder %s109, %s110
      %p122 = scmp.eq.s32.totalorder %s37, 1
      %p123 = por %p121, %p122
      %p125 = scmp.ne.s32.totalorder %s110, %s124
      %p126 = scmp.eq.s32.totalorder %s37, 0
      %p127 = por %p125, %p126
      %s129 = sadd.s32 %s128, 1
      %p132 = scmp.eq.s32.totalorder %s31, 1
      %p133 = scmp.ne.s32.totalorder %s128, %s130
      %p134 = scmp.eq.s32.totalorder %s31, 0
      %p135 = por %p133, %p134
      %p136 = scmp.ne.s32.totalorder %s128, %s130
      %p137 = scmp.eq.s32.totalorder %s36, 1
      %p138 = por %p136, %p137
      %p139 = scmp.ne.s32.totalorder %s130, %s131
      %p140 = scmp.eq.s32.totalorder %s36, 0
      %p141 = por %p139, %p140
      %p142 = scmp.ne.s32.totalorder %s130, %s131
      %p143 = scmp.eq.s32.totalorder %s37, 1
      %p144 = por %p142, %p143
      %p146 = scmp.ne.s32.totalorder %s131, %s145
      %p147 = scmp.eq.s32.totalorder %s37, 0
      %p148 = por %p146, %p147
      %s150 = sadd.s32 %s149, 1
      %p153 = scmp.eq.s32.totalorder %s31, 1
      %p154 = scmp.ne.s32.totalorder %s149, %s151
      %p155 = scmp.eq.s32.totalorder %s31, 0
      %p156 = por %p154, %p155
      %p157 = scmp.ne.s32.totalorder %s149, %s151
      %p158 = scmp.eq.s32.totalorder %s36, 1
      %p159 = por %p157, %p158
      %p160 = scmp.ne.s32.totalorder %s151, %s152
      %p161 = scmp.eq.s32.totalorder %s36, 0
      %p162 = por %p160, %p161
      %p163 = scmp.ne.s32.totalorder %s151, %s152
      %p164 = scmp.eq.s32.totalorder %s37, 1
      %p165 = por %p163, %p164
      %p167 = scmp.ne.s32.totalorder %s152, %s166
      %p168 = scmp.eq.s32.totalorder %s37, 0
      %p169 = por %p167, %p168
      %s171 = sadd.s32 %s170, 1
      %p174 = scmp.eq.s32.totalorder %s31, 1
      %p175 = scmp.ne.s32.totalorder %s170, %s172
      %p176 = scmp.eq.s32.totalorder %s31, 0
      %p177 = por %p175, %p176
      %p178 = scmp.ne.s32.totalorder %s170, %s172
      %p179 = scmp.eq.s32.totalorder %s36, 1
      %p180 = por %p178, %p179
      %p181 = scmp.ne.s32.totalorder %s172, %s173
      %p182 = scmp.eq.s32.totalorder %s36, 0
      %p183 = por %p181, %p182
      %p184 = scmp.ne.s32.totalorder %s172, %s173
      %p185 = scmp.eq.s32.totalorder %s37, 1
      %p186 = por %p184, %p185
      %p188 = scmp.ne.s32.totalorder %s173, %s187
      %p189 = scmp.eq.s32.totalorder %s37, 0
      %p190 = por %p188, %p189
      %s192 = sadd.s32 %s191, 1
      %p195 = scmp.eq.s32.totalorder %s31, 1
      %p196 = scmp.ne.s32.totalorder %s191, %s193
      %p197 = scmp.eq.s32.totalorder %s31, 0
      %p198 = por %p196, %p197
      %p199 = scmp.ne.s32.totalorder %s191, %s193
      %p200 = scmp.eq.s32.totalorder %s36, 1
      %p201 = por %p199, %p200
      %p202 = scmp.ne.s32.totalorder %s193, %s194
      %p203 = scmp.eq.s32.totalorder %s36, 0
      %p204 = por %p202, %p203
      %p205 = scmp.ne.s32.totalorder %s193, %s194
      %p206 = scmp.eq.s32.totalorder %s37, 1
      %p207 = por %p205, %p206
      %p209 = scmp.ne.s32.totalorder %s194, %s208
      %p210 = scmp.eq.s32.totalorder %s37, 0
      %p211 = por %p209, %p210
      %s213 = sadd.s32 %s212, 1
      %p216 = scmp.eq.s32.totalorder %s31, 1
      %p217 = scmp.ne.s32.totalorder %s212, %s214
      %p218 = scmp.eq.s32.totalorder %s31, 0
      %p219 = por %p217, %p218
      %p220 = scmp.ne.s32.totalorder %s212, %s214
      %p221 = scmp.eq.s32.totalorder %s36, 1
      %p222 = por %p220, %p221
      %p223 = scmp.ne.s32.totalorder %s214, %s215
      %p224 = scmp.eq.s32.totalorder %s36, 0
      %p225 = por %p223, %p224
      %p226 = scmp.ne.s32.totalorder %s214, %s215
      %p227 = scmp.eq.s32.totalorder %s37, 1
      %p228 = por %p226, %p227
      %p230 = scmp.ne.s32.totalorder %s215, %s229
      %p231 = scmp.eq.s32.totalorder %s37, 0
      %p232 = por %p230, %p231
      %s234 = sadd.s32 %s233, 1
      %p237 = scmp.eq.s32.totalorder %s31, 1
      %p238 = scmp.ne.s32.totalorder %s233, %s235
      %p239 = scmp.eq.s32.totalorder %s31, 0
      %p240 = por %p238, %p239
      %p241 = scmp.ne.s32.totalorder %s233, %s235
      %p242 = scmp.eq.s32.totalorder %s36, 1
      %p243 = por %p241, %p242
      %p244 = scmp.ne.s32.totalorder %s235, %s236
      %p245 = scmp.eq.s32.totalorder %s36, 0
      %p246 = por %p244, %p245
      %p247 = scmp.ne.s32.totalorder %s235, %s236
      %p248 = scmp.eq.s32.totalorder %s37, 1
      %p249 = por %p247, %p248
      %p251 = scmp.ne.s32.totalorder %s236, %s250
      %p252 = scmp.eq.s32.totalorder %s37, 0
      %p253 = por %p251, %p252
      %s255 = sadd.s32 %s254, 1
      %p258 = scmp.eq.s32.totalorder %s31, 1
      %p259 = scmp.ne.s32.totalorder %s254, %s256
      %p260 = scmp.eq.s32.totalorder %s31, 0
      %p261 = por %p259, %p260
      %p262 = scmp.ne.s32.totalorder %s254, %s256
      %p263 = scmp.eq.s32.totalorder %s36, 1
      %p264 = por %p262, %p263
      %p265 = scmp.ne.s32.totalorder %s256, %s257
      %p266 = scmp.eq.s32.totalorder %s36, 0
      %p267 = por %p265, %p266
      %p268 = scmp.ne.s32.totalorder %s256, %s257
      %p269 = scmp.eq.s32.totalorder %s37, 1
      %p270 = por %p268, %p269
      %p272 = scmp.ne.s32.totalorder %s257, %s271
      %p273 = scmp.eq.s32.totalorder %s37, 0
      %p274 = por %p272, %p273
      %s276 = sadd.s32 %s275, 1
      %p279 = scmp.eq.s32.totalorder %s31, 1
      %p280 = scmp.ne.s32.totalorder %s275, %s277
      %p281 = scmp.eq.s32.totalorder %s31, 0
      %p282 = por %p280, %p281
      %p283 = scmp.ne.s32.totalorder %s275, %s277
      %p284 = scmp.eq.s32.totalorder %s36, 1
      %p285 = por %p283, %p284
      %p286 = scmp.ne.s32.totalorder %s277, %s278
      %p287 = scmp.eq.s32.totalorder %s36, 0
      %p288 = por %p286, %p287
      %p289 = scmp.ne.s32.totalorder %s277, %s278
      %p290 = scmp.eq.s32.totalorder %s37, 1
      %p291 = por %p289, %p290
      %p293 = scmp.ne.s32.totalorder %s278, %s292
      %p294 = scmp.eq.s32.totalorder %s37, 0
      %p295 = por %p293, %p294
      %s297 = sadd.s32 %s296, 1
      %p300 = scmp.eq.s32.totalorder %s31, 1
      %p301 = scmp.ne.s32.totalorder %s296, %s298
      %p302 = scmp.eq.s32.totalorder %s31, 0
      %p303 = por %p301, %p302
      %p304 = scmp.ne.s32.totalorder %s296, %s298
      %p305 = scmp.eq.s32.totalorder %s36, 1
      %p306 = por %p304, %p305
      %p307 = scmp.ne.s32.totalorder %s298, %s299
      %p308 = scmp.eq.s32.totalorder %s36, 0
      %p309 = por %p307, %p308
      %p310 = scmp.ne.s32.totalorder %s298, %s299
      %p311 = scmp.eq.s32.totalorder %s37, 1
      %p312 = por %p310, %p311
      %p314 = scmp.ne.s32.totalorder %s299, %s313
      %p315 = scmp.eq.s32.totalorder %s37, 0
      %p316 = por %p314, %p315
      %s317 = ssub.s32 %s31, %s38
      %p318 = scmp.eq.s32.totalorder %s317, 0
      %s320 = sadd.s32 %s319, 1
      %s321 = scalar_select %p318, %s319, %s320
      %p324 = pneg %p318
      %p325 = scmp.eq.s32.totalorder %s31, 1
      %p326 = por %p324, %p325
      %p327 = scmp.ne.s32.totalorder %s319, %s322
      %p328 = scmp.eq.s32.totalorder %s31, 0
      %p329 = por %p327, %p328
      %p330 = scmp.ne.s32.totalorder %s319, %s322
      %p331 = scmp.eq.s32.totalorder %s36, 1
      %p332 = por %p330, %p331
      %p333 = scmp.ne.s32.totalorder %s322, %s323
      %p334 = scmp.eq.s32.totalorder %s36, 0
      %p335 = por %p333, %p334
      %p336 = scmp.ne.s32.totalorder %s322, %s323
      %p337 = scmp.eq.s32.totalorder %s37, 1
      %p338 = por %p336, %p337
      %p340 = scmp.ne.s32.totalorder %s323, %s339
      %p341 = scmp.eq.s32.totalorder %s37, 0
      %p342 = por %p340, %p341
      %s343 = ssub.s32 %s31, %s38
      %p344 = scmp.eq.s32.totalorder %s343, 0
      %s346 = sadd.s32 %s345, 1
      %s347 = scalar_select %p344, %s345, %s346
      %p350 = pneg %p344
      %p351 = scmp.eq.s32.totalorder %s31, 1
      %p352 = por %p350, %p351
      %p353 = scmp.ne.s32.totalorder %s345, %s348
      %p354 = scmp.eq.s32.totalorder %s31, 0
      %p355 = por %p353, %p354
      %p356 = scmp.ne.s32.totalorder %s345, %s348
      %p357 = scmp.eq.s32.totalorder %s36, 1
      %p358 = por %p356, %p357
      %p359 = scmp.ne.s32.totalorder %s348, %s349
      %p360 = scmp.eq.s32.totalorder %s36, 0
      %p361 = por %p359, %p360
      %p362 = scmp.ne.s32.totalorder %s348, %s349
      %p363 = scmp.eq.s32.totalorder %s37, 1
      %p364 = por %p362, %p363
      %p366 = scmp.ne.s32.totalorder %s349, %s365
      %p367 = scmp.eq.s32.totalorder %s37, 0
      %p368 = por %p366, %p367
      %s369 = ssub.s32 %s31, %s38
      %p370 = scmp.eq.s32.totalorder %s369, 0
      %s372 = sadd.s32 %s371, 1
      %s373 = scalar_select %p370, %s371, %s372
      %p376 = pneg %p370
      %p377 = scmp.eq.s32.totalorder %s31, 1
      %p378 = por %p376, %p377
      %p379 = scmp.ne.s32.totalorder %s371, %s374
      %p380 = scmp.eq.s32.totalorder %s31, 0
      %p381 = por %p379, %p380
      %p382 = scmp.ne.s32.totalorder %s371, %s374
      %p383 = scmp.eq.s32.totalorder %s36, 1
      %p384 = por %p382, %p383
      %p385 = scmp.ne.s32.totalorder %s374, %s375
      %p386 = scmp.eq.s32.totalorder %s36, 0
      %p387 = por %p385, %p386
      %p388 = scmp.ne.s32.totalorder %s374, %s375
      %p389 = scmp.eq.s32.totalorder %s37, 1
      %p390 = por %p388, %p389
      %p392 = scmp.ne.s32.totalorder %s375, %s391
      %p393 = scmp.eq.s32.totalorder %s37, 0
      %p394 = por %p392, %p393
      %s395 = ssub.s32 %s31, %s38
      %p396 = scmp.eq.s32.totalorder %s395, 0
      %s398 = sadd.s32 %s397, 1
      %s399 = scalar_select %p396, %s397, %s398
      %p402 = pneg %p396
      %p403 = scmp.eq.s32.totalorder %s31, 1
      %p404 = por %p402, %p403
      %p405 = scmp.ne.s32.totalorder %s397, %s400
      %p406 = scmp.eq.s32.totalorder %s31, 0
      %p407 = por %p405, %p406
      %p408 = scmp.ne.s32.totalorder %s397, %s400
      %p409 = scmp.eq.s32.totalorder %s36, 1
      %p410 = por %p408, %p409
      %p411 = scmp.ne.s32.totalorder %s400, %s401
      %p412 = scmp.eq.s32.totalorder %s36, 0
      %p413 = por %p411, %p412
      %p414 = scmp.ne.s32.totalorder %s400, %s401
      %p415 = scmp.eq.s32.totalorder %s37, 1
      %p416 = por %p414, %p415
      %p418 = scmp.ne.s32.totalorder %s401, %s417
      %p419 = scmp.eq.s32.totalorder %s37, 0
      %p420 = por %p418, %p419
      %p421 = scmp.le.s32.totalorder 1, %s31
      %p422 = scmp.lt.s32.totalorder %s31, 3
      %p423 = pnand %p421, %p422
      %p424 = pneg %p423
      // Predicated region
      $region9: #{tpu_custom_call.1} parent=5 // pred_check
        _
      $region10: #{tpu_custom_call.1} parent=5 // pred_check_branch
        %426 = sbr.rel (%p423) target = $region12
      $region11: #{tpu_custom_call.1} parent=5 // pred_region
        %s427 = ssub.s32 %s31, 1
        // Predicated region
        $region13: #{tpu_custom_call.1} parent=11 // pred_check
          %p428 = pneg %p78
        $region14: #{tpu_custom_call.1} parent=11 // pred_check_branch
          %430 = sbr.rel (%p428) target = $region16
        $region15: #{tpu_custom_call.1} parent=11 // pred_region
          _
        $region16: #{tpu_custom_call.1} parent=11 // pred_fallthru
          _
        // Predicated region
        $region17: #{tpu_custom_call.1} parent=11 // pred_check
          %p431 = pneg %p99
        $region18: #{tpu_custom_call.1} parent=11 // pred_check_branch
          %433 = sbr.rel (%p431) target = $region20
        $region19: #{tpu_custom_call.1} parent=11 // pred_region
          _
        $region20: #{tpu_custom_call.1} parent=11 // pred_fallthru
          _
        // Predicated region
        $region21: #{tpu_custom_call.1} parent=11 // pred_check
          %p434 = pneg %p120
        $region22: #{tpu_custom_call.1} parent=11 // pred_check_branch
          %436 = sbr.rel (%p434) target = $region24
        $region23: #{tpu_custom_call.1} parent=11 // pred_region
          _
        $region24: #{tpu_custom_call.1} parent=11 // pred_fallthru
          _
        // Predicated region
        $region25: #{tpu_custom_call.1} parent=11 // pred_check
          %p437 = pneg %p141
        $region26: #{tpu_custom_call.1} parent=11 // pred_check_branch
          %439 = sbr.rel (%p437) target = $region28
        $region27: #{tpu_custom_call.1} parent=11 // pred_region
          _
        $region28: #{tpu_custom_call.1} parent=11 // pred_fallthru
          _
        // Predicated region
        $region29: #{tpu_custom_call.1} parent=11 // pred_check
          %p440 = pneg %p162
        $region30: #{tpu_custom_call.1} parent=11 // pred_check_branch
          %442 = sbr.rel (%p440) target = $region32
        $region31: #{tpu_custom_call.1} parent=11 // pred_region
          _
        $region32: #{tpu_custom_call.1} parent=11 // pred_fallthru
          _
        // Predicated region
        $region33: #{tpu_custom_call.1} parent=11 // pred_check
          %p443 = pneg %p183
        $region34: #{tpu_custom_call.1} parent=11 // pred_check_branch
          %445 = sbr.rel (%p443) target = $region36
        $region35: #{tpu_custom_call.1} parent=11 // pred_region
          _
        $region36: #{tpu_custom_call.1} parent=11 // pred_fallthru
          _
        // Predicated region
        $region37: #{tpu_custom_call.1} parent=11 // pred_check
          %p446 = pneg %p204
        $region38: #{tpu_custom_call.1} parent=11 // pred_check_branch
          %448 = sbr.rel (%p446) target = $region40
        $region39: #{tpu_custom_call.1} parent=11 // pred_region
          _
        $region40: #{tpu_custom_call.1} parent=11 // pred_fallthru
          _
        // Predicated region
        $region41: #{tpu_custom_call.1} parent=11 // pred_check
          %p449 = pneg %p225
        $region42: #{tpu_custom_call.1} parent=11 // pred_check_branch
          %451 = sbr.rel (%p449) target = $region44
        $region43: #{tpu_custom_call.1} parent=11 // pred_region
          _
        $region44: #{tpu_custom_call.1} parent=11 // pred_fallthru
          _
        // Predicated region
        $region45: #{tpu_custom_call.1} parent=11 // pred_check
          %p452 = pneg %p246
        $region46: #{tpu_custom_call.1} parent=11 // pred_check_branch
          %454 = sbr.rel (%p452) target = $region48
        $region47: #{tpu_custom_call.1} parent=11 // pred_region
          _
        $region48: #{tpu_custom_call.1} parent=11 // pred_fallthru
          _
        // Predicated region
        $region49: #{tpu_custom_call.1} parent=11 // pred_check
          %p455 = pneg %p267
        $region50: #{tpu_custom_call.1} parent=11 // pred_check_branch
          %457 = sbr.rel (%p455) target = $region52
        $region51: #{tpu_custom_call.1} parent=11 // pred_region
          _
        $region52: #{tpu_custom_call.1} parent=11 // pred_fallthru
          _
        // Predicated region
        $region53: #{tpu_custom_call.1} parent=11 // pred_check
          %p458 = pneg %p288
        $region54: #{tpu_custom_call.1} parent=11 // pred_check_branch
          %460 = sbr.rel (%p458) target = $region56
        $region55: #{tpu_custom_call.1} parent=11 // pred_region
          _
        $region56: #{tpu_custom_call.1} parent=11 // pred_fallthru
          _
        // Predicated region
        $region57: #{tpu_custom_call.1} parent=11 // pred_check
          %p461 = pneg %p309
        $region58: #{tpu_custom_call.1} parent=11 // pred_check_branch
          %463 = sbr.rel (%p461) target = $region60
        $region59: #{tpu_custom_call.1} parent=11 // pred_region
          _
        $region60: #{tpu_custom_call.1} parent=11 // pred_fallthru
          _
      $region12: #{tpu_custom_call.1} parent=5 // pred_fallthru
        _
      %p464 = scmp.lt.s32.totalorder %s31, 2
      // Predicated region
      $region61: #{tpu_custom_call.1} parent=5 // pred_check
        %p465 = pneg %p464
      $region62: #{tpu_custom_call.1} parent=5 // pred_check_branch
        %467 = sbr.rel (%p465) target = $region64
      $region63: #{tpu_custom_call.1} parent=5 // pred_region
        // Predicated region
        $region65: #{tpu_custom_call.1} parent=63 // pred_check
          %p468 = pneg %p51
        $region66: #{tpu_custom_call.1} parent=63 // pred_check_branch
          %470 = sbr.rel (%p468) target = $region68
        $region67: #{tpu_custom_call.1} parent=63 // pred_region
          %p471 = scmp.lt.s32.totalorder %s31, 1
          %s472 = scalar_select %p471, %s31, 1
          %s473 = smul.addr %s472, 8
          %s474 = smul.addr %s473, 4
          %s475 = scalar_lea.vmem %s0, %s474
        $region68: #{tpu_custom_call.1} parent=63 // pred_fallthru
          _
      $region64: #{tpu_custom_call.1} parent=5 // pred_fallthru
        _
      %p476 = scmp.le.s32.totalorder 1, %s31
      %p477 = scmp.lt.s32.totalorder %s31, 3
      %p478 = pnand %p476, %p477
      %p479 = pneg %p478
      // Predicated region
      $region69: #{tpu_custom_call.1} parent=5 // pred_check
        _
      $region70: #{tpu_custom_call.1} parent=5 // pred_check_branch
        %481 = sbr.rel (%p478) target = $region72
      $region71: #{tpu_custom_call.1} parent=5 // pred_region
        %s482 = ssub.s32 %s31, 1
        %p483 = scmp.lt.s32.totalorder %s36, 1
        %s484 = scalar_select %p483, %s36, 1
        %s485 = smul.addr %s484, 8
        %s486 = smul.addr %s485, 4
        %s487 = scalar_lea.vmem %s0, %s486
        %p488 = pneg %p57
        %p489 = pneg %p54
        %p490 = pneg %p78
        %p491 = pneg %p75
        %p492 = pneg %p99
        %p493 = pneg %p96
        %p494 = pneg %p120
        %p495 = pneg %p117
        %p496 = pneg %p141
        %p497 = pneg %p138
        %p498 = pneg %p162
        %p499 = pneg %p159
        %p500 = pneg %p183
        %p501 = pneg %p180
        %p502 = pneg %p204
        %p503 = pneg %p201
        %p504 = pneg %p225
        %p505 = pneg %p222
        %p506 = pneg %p246
        %p507 = pneg %p243
        %p508 = pneg %p267
        %p509 = pneg %p264
        %p510 = pneg %p288
        %p511 = pneg %p285
        %p512 = pneg %p309
        %p513 = pneg %p306
        %p514 = pneg %p335
        %p515 = pneg %p332
        %s516 = sand.u32 %s322, 1
        %s517 = scalar_lea.sflag [#allocation4], %s516
        %s518 = sand.u32 %s322, 1
        %s519 = smul.addr %s518, 32
        %s520 = scalar_lea.vmem [#allocation3], %s519
        %p521 = pneg %p361
        %p522 = pneg %p358
        %p523 = scmp.lt.s32.totalorder %s36, 1
        %s524 = scalar_select %p523, %s36, 1
        %s525 = smul.addr %s524, 4
        %s526 = smul.addr %s525, 8
        %s527 = scalar_lea.vmem %s14, %s526
        %p528 = pneg %p387
        %p529 = pneg %p384
        %p530 = scmp.lt.s32.totalorder %s36, 1
        %s531 = scalar_select %p530, %s36, 1
        %s532 = smul.addr %s531, 4
        %s533 = smul.addr %s532, 8
        %s534 = scalar_lea.vmem %s15, %s533
        %p535 = pneg %p413
        %p536 = pneg %p410
        %s537 = sand.u32 %s400, 1
        %s538 = scalar_lea.sflag [#allocation6], %s537
        %s539 = sand.u32 %s400, 1
        %s540 = scalar_lea.vmem [#allocation5], %s539
        %p541 = scmp.lt.s32.totalorder %s36, 1
        %s542 = scalar_select %p541, %s36, 1
        %s543 = smul.addr %s542, 8
        %s544 = smul.addr %s543, 4
        %s545 = scalar_lea.vmem %s0, %s544
        %p546 = scmp.lt.s32.totalorder %s36, 1
        %s547 = scalar_select %p546, %s36, 1
        %s548 = smul.addr %s547, 4
        %s549 = smul.addr %s548, 8
        %s550 = scalar_lea.vmem %s14, %s549
        %p551 = scmp.lt.s32.totalorder %s36, 1
        %s552 = scalar_select %p551, %s36, 1
        %s553 = smul.addr %s552, 4
        %s554 = smul.addr %s553, 8
        %s555 = scalar_lea.vmem %s15, %s554
        %v557 = vld [vmem:[%s545] sm:$0x77]
        %v558 = vld [vmem:[%s545 + $0x8] sm:$0x77]
        %v559 = vld [vmem:[%s545 + $0x10] sm:$0x77]
        %v560 = vld [vmem:[%s545 + $0x18] sm:$0x77]
        %565 = vst [vmem:[#allocation1] ss:$2 sm:$0xff] %v557
        %s566 = scalar_lea.vmem [#allocation1], 16
        %567 = vst [vmem:[%s566] ss:$2 sm:$0xff] %v558
        %s568 = scalar_lea.vmem [#allocation1], 32
        %569 = vst [vmem:[%s568] ss:$2 sm:$0xff] %v559
        %s570 = scalar_lea.vmem [#allocation1], 48
        %571 = vst [vmem:[%s570] ss:$2 sm:$0xff] %v560
        %v572 = vld.sshfl [vmem:[#allocation1] sm:$0xff pattern:$0x75316420]
        %v573 = vld.sshfl [vmem:[#allocation1 + $0x8] sm:$0xff pattern:$0x75316420]
        %v574 = vld.sshfl [vmem:[#allocation1 + $0x10] sm:$0xff pattern:$0x75316420]
        %v575 = vld.sshfl [vmem:[#allocation1 + $0x18] sm:$0xff pattern:$0x75316420]
        %v576 = vld.sshfl [vmem:[#allocation1 + $0x20] sm:$0xff pattern:$0x75316420]
        %v577 = vld.sshfl [vmem:[#allocation1 + $0x28] sm:$0xff pattern:$0x75316420]
        %v578 = vld.sshfl [vmem:[#allocation1 + $0x30] sm:$0xff pattern:$0x75316420]
        %v586 = vpack.c.bf16 %v572, %v572
        %v587 = vpack.c.bf16 %v573, %v573
        %v588 = vpack.c.bf16 %v574, %v574
        %v589 = vpack.c.bf16 %v575, %v575
        %v590 = vpack.c.bf16 %v576, %v576
        %v591 = vpack.c.bf16 %v577, %v577
        %v592 = vpack.c.bf16 %v578, %v578
        %v593 = vld [vmem:[%s1] sm:$0xf]
        %v594 = vld [vmem:[%s1 + $0x4] sm:$0xf]
        %v595 = vld [vmem:[%s545] sm:$0x77]
        %v596 = vld [vmem:[%s545 + $0x8] sm:$0x77]
        %v597 = vld [vmem:[%s545 + $0x10] sm:$0x77]
        %v598 = vld [vmem:[%s545 + $0x18] sm:$0x77]
        %603 = vst [vmem:[#allocation1] ss:$2 sm:$0xff] %v595
        %s604 = scalar_lea.vmem [#allocation1], 16
        %605 = vst [vmem:[%s604] ss:$2 sm:$0xff] %v596
        %s606 = scalar_lea.vmem [#allocation1], 32
        %607 = vst [vmem:[%s606] ss:$2 sm:$0xff] %v597
        %s608 = scalar_lea.vmem [#allocation1], 48
        %609 = vst [vmem:[%s608] ss:$2 sm:$0xff] %v598
        %v610 = vld.sshfl [vmem:[#allocation1] sm:$0xff pattern:$0x75316420]
        %v611 = vld.sshfl [vmem:[#allocation1 + $0x8] sm:$0xff pattern:$0x75316420]
        %v612 = vld.sshfl [vmem:[#allocation1 + $0x10] sm:$0xff pattern:$0x75316420]
        %v613 = vld.sshfl [vmem:[#allocation1 + $0x18] sm:$0xff pattern:$0x75316420]
        %v614 = vld.sshfl [vmem:[#allocation1 + $0x20] sm:$0xff pattern:$0x75316420]
        %v615 = vld.sshfl [vmem:[#allocation1 + $0x28] sm:$0xff pattern:$0x75316420]
        %v616 = vld.sshfl [vmem:[#allocation1 + $0x30] sm:$0xff pattern:$0x75316420]
        %v617 = vld.sshfl [vmem:[#allocation1 + $0x38] sm:$0xff pattern:$0x75316420]
        %v626 = vpack.c.bf16 %v610, %v610
        %v627 = vpack.c.bf16 %v611, %v611
        %v628 = vpack.c.bf16 %v612, %v612
        %v629 = vpack.c.bf16 %v613, %v613
        %v630 = vpack.c.bf16 %v614, %v614
        %v631 = vpack.c.bf16 %v615, %v615
        %v632 = vpack.c.bf16 %v616, %v616
        %v633 = vpack.c.bf16 %v617, %v617
        %s634 = scalar_lea.vmem %s1, 8
        %v635 = vld [vmem:[%s634] sm:$0xf]
        %v636 = vld [vmem:[%s634 + $0x4] sm:$0xf]
        %v639 = vunpack.c.l.b16 %v635
        %v640 = vunpack.c.l.b16 %v636
        %v641 = vpack.c.b16 %v640, %v639
        %650 = vrot.lane.b32.xlu0 %v626, 127
        %v651 = vpop.permute.xlu0 %650
        %652 = vrot.lane.b32.xlu0 %v627, 127
        %v653 = vpop.permute.xlu0 %652
        %654 = vrot.lane.b32.xlu0 %v628, 127
        %v655 = vpop.permute.xlu0 %654
        %656 = vrot.lane.b32.xlu0 %v629, 127
        %v657 = vpop.permute.xlu0 %656
        %658 = vrot.lane.b32.xlu0 %v630, 127
        %v659 = vpop.permute.xlu0 %658
        %660 = vrot.lane.b32.xlu0 %v631, 127
        %v661 = vpop.permute.xlu0 %660
        %662 = vrot.lane.b32.xlu0 %v632, 127
        %v663 = vpop.permute.xlu0 %662
        %664 = vrot.lane.b32.xlu0 %v633, 127
        %v665 = vpop.permute.xlu0 %664
        %vm666 = vcmask 1039360
        %v667 = vsel %vm666, %v651, %v653
        %v668 = vsel %vm666, %v653, %v655
        %v669 = vsel %vm666, %v655, %v657
        %v670 = vsel %vm666, %v657, %v659
        %v671 = vsel %vm666, %v659, %v661
        %v672 = vsel %vm666, %v661, %v663
        %v673 = vsel %vm666, %v663, %v665
        %vm674 = vcmask 23552
        %v676 = vsel %vm674, %v641, 0
        %vm678 = vcmask 1040384
        %vm679 = vcmask 1041408
        %v680 = vsel %vm678, 4294967295, 65535
        %v681 = vsel %vm679, %v680, 0
        %v683 = vand.u32 %v667, %v681
        %v686 = vand.u32 %v668, %v681
        %v689 = vand.u32 %v669, %v681
        %v692 = vand.u32 %v670, %v681
        %v695 = vand.u32 %v671, %v681
        %v698 = vand.u32 %v672, %v681
        %v701 = vand.u32 %v673, %v681
        %703 = vmatpush.bf16.msra.mxu0 0
        %704 = vmatpush.bf16.msra.mxu0 0
        %705 = vmatpush.bf16.msra.mxu0 0
        %706 = vmatpush.bf16.msra.mxu0 0
        %707 = vmatpush.bf16.msra.mxu0 0
        %708 = vmatpush.bf16.msra.mxu0 0
        %709 = vmatpush.bf16.msra.mxu0 0
        %710 = vmatpush.bf16.msra.mxu0 %v683
        %711 = vmatmul.bf16.gmra.mxu0 %v676
        %v712 = vpop.f32.mrf.mxu0
        %v713 = vadd.f32 0.0, %v712
        %v714 = vpop.f32.mrf.mxu0
        %v715 = vadd.f32 0.0, %v714
        %716 = vdwg.mxu0
        %717 = vmatpush.bf16.msra.mxu0 0
        %718 = vmatpush.bf16.msra.mxu0 0
        %719 = vmatpush.bf16.msra.mxu0 0
        %720 = vmatpush.bf16.msra.mxu0 0
        %721 = vmatpush.bf16.msra.mxu0 0
        %722 = vmatpush.bf16.msra.mxu0 0
        %723 = vmatpush.bf16.msra.mxu0 0
        %724 = vmatpush.bf16.msra.mxu0 %v686
        %725 = vmatmul.bf16.gmra.mxu0 %v676
        %v726 = vpop.f32.mrf.mxu0
        %v727 = vadd.f32 0.0, %v726
        %v728 = vpop.f32.mrf.mxu0
        %v729 = vadd.f32 0.0, %v728
        %730 = vdwg.mxu0
        %731 = vmatpush.bf16.msra.mxu0 0
        %732 = vmatpush.bf16.msra.mxu0 0
        %733 = vmatpush.bf16.msra.mxu0 0
        %734 = vmatpush.bf16.msra.mxu0 0
        %735 = vmatpush.bf16.msra.mxu0 0
        %736 = vmatpush.bf16.msra.mxu0 0
        %737 = vmatpush.bf16.msra.mxu0 0
        %738 = vmatpush.bf16.msra.mxu0 %v689
        %739 = vmatmul.bf16.gmra.mxu0 %v676
        %v740 = vpop.f32.mrf.mxu0
        %v741 = vadd.f32 0.0, %v740
        %v742 = vpop.f32.mrf.mxu0
        %v743 = vadd.f32 0.0, %v742
        %744 = vdwg.mxu0
        %745 = vmatpush.bf16.msra.mxu0 0
        %746 = vmatpush.bf16.msra.mxu0 0
        %747 = vmatpush.bf16.msra.mxu0 0
        %748 = vmatpush.bf16.msra.mxu0 0
        %749 = vmatpush.bf16.msra.mxu0 0
        %750 = vmatpush.bf16.msra.mxu0 0
        %751 = vmatpush.bf16.msra.mxu0 0
        %752 = vmatpush.bf16.msra.mxu0 %v692
        %753 = vmatmul.bf16.gmra.mxu0 %v676
        %v754 = vpop.f32.mrf.mxu0
        %v755 = vadd.f32 0.0, %v754
        %v756 = vpop.f32.mrf.mxu0
        %v757 = vadd.f32 0.0, %v756
        %758 = vdwg.mxu0
        %759 = vmatpush.bf16.msra.mxu0 0
        %760 = vmatpush.bf16.msra.mxu0 0
        %761 = vmatpush.bf16.msra.mxu0 0
        %762 = vmatpush.bf16.msra.mxu0 0
        %763 = vmatpush.bf16.msra.mxu0 0
        %764 = vmatpush.bf16.msra.mxu0 0
        %765 = vmatpush.bf16.msra.mxu0 0
        %766 = vmatpush.bf16.msra.mxu0 %v695
        %767 = vmatmul.bf16.gmra.mxu0 %v676
        %v768 = vpop.f32.mrf.mxu0
        %v769 = vadd.f32 0.0, %v768
        %v770 = vpop.f32.mrf.mxu0
        %v771 = vadd.f32 0.0, %v770
        %772 = vdwg.mxu0
        %773 = vmatpush.bf16.msra.mxu0 0
        %774 = vmatpush.bf16.msra.mxu0 0
        %775 = vmatpush.bf16.msra.mxu0 0
        %776 = vmatpush.bf16.msra.mxu0 0
        %777 = vmatpush.bf16.msra.mxu0 0
        %778 = vmatpush.bf16.msra.mxu0 0
        %779 = vmatpush.bf16.msra.mxu0 0
        %780 = vmatpush.bf16.msra.mxu0 %v698
        %781 = vmatmul.bf16.gmra.mxu0 %v676
        %v782 = vpop.f32.mrf.mxu0
        %v783 = vadd.f32 0.0, %v782
        %v784 = vpop.f32.mrf.mxu0
        %v785 = vadd.f32 0.0, %v784
        %786 = vdwg.mxu0
        %787 = vmatpush.bf16.msra.mxu0 0
        %788 = vmatpush.bf16.msra.mxu0 0
        %789 = vmatpush.bf16.msra.mxu0 0
        %790 = vmatpush.bf16.msra.mxu0 0
        %791 = vmatpush.bf16.msra.mxu0 0
        %792 = vmatpush.bf16.msra.mxu0 0
        %793 = vmatpush.bf16.msra.mxu0 0
        %794 = vmatpush.bf16.msra.mxu0 %v701
        %795 = vmatmul.bf16.gmra.mxu0 %v676
        %v796 = vpop.f32.mrf.mxu0
        %v797 = vadd.f32 0.0, %v796
        %v798 = vpop.f32.mrf.mxu0
        %v799 = vadd.f32 0.0, %v798
        %800 = vdwg.mxu0
        %v803 = vunpack.c.l.b16 %v593
        %v804 = vunpack.c.l.b16 %v594
        %v805 = vpack.c.b16 %v804, %v803
        %v807 = vsel %vm674, %v805, 0
        %v810 = vand.u32 %v586, %v681
        %v813 = vand.u32 %v587, %v681
        %v816 = vand.u32 %v588, %v681
        %v819 = vand.u32 %v589, %v681
        %v822 = vand.u32 %v590, %v681
        %v825 = vand.u32 %v591, %v681
        %v828 = vand.u32 %v592, %v681
        %830 = vmatpush.bf16.msra.mxu0 0
        %831 = vmatpush.bf16.msra.mxu0 0
        %832 = vmatpush.bf16.msra.mxu0 0
        %833 = vmatpush.bf16.msra.mxu0 0
        %834 = vmatpush.bf16.msra.mxu0 0
        %835 = vmatpush.bf16.msra.mxu0 0
        %836 = vmatpush.bf16.msra.mxu0 0
        %837 = vmatpush.bf16.msra.mxu0 %v810
        %838 = vmatmul.bf16.gmra.mxu0 %v807
        %v839 = vpop.f32.mrf.mxu0
        %v840 = vadd.f32 %v713, %v839
        %v841 = vpop.f32.mrf.mxu0
        %v842 = vadd.f32 %v715, %v841
        %843 = vdwg.mxu0
        %844 = vmatpush.bf16.msra.mxu0 0
        %845 = vmatpush.bf16.msra.mxu0 0
        %846 = vmatpush.bf16.msra.mxu0 0
        %847 = vmatpush.bf16.msra.mxu0 0
        %848 = vmatpush.bf16.msra.mxu0 0
        %849 = vmatpush.bf16.msra.mxu0 0
        %850 = vmatpush.bf16.msra.mxu0 0
        %851 = vmatpush.bf16.msra.mxu0 %v813
        %852 = vmatmul.bf16.gmra.mxu0 %v807
        %v853 = vpop.f32.mrf.mxu0
        %v854 = vadd.f32 %v727, %v853
        %v855 = vpop.f32.mrf.mxu0
        %v856 = vadd.f32 %v729, %v855
        %857 = vdwg.mxu0
        %858 = vmatpush.bf16.msra.mxu0 0
        %859 = vmatpush.bf16.msra.mxu0 0
        %860 = vmatpush.bf16.msra.mxu0 0
        %861 = vmatpush.bf16.msra.mxu0 0
        %862 = vmatpush.bf16.msra.mxu0 0
        %863 = vmatpush.bf16.msra.mxu0 0
        %864 = vmatpush.bf16.msra.mxu0 0
        %865 = vmatpush.bf16.msra.mxu0 %v816
        %866 = vmatmul.bf16.gmra.mxu0 %v807
        %v867 = vpop.f32.mrf.mxu0
        %v868 = vadd.f32 %v741, %v867
        %v869 = vpop.f32.mrf.mxu0
        %v870 = vadd.f32 %v743, %v869
        %871 = vdwg.mxu0
        %872 = vmatpush.bf16.msra.mxu0 0
        %873 = vmatpush.bf16.msra.mxu0 0
        %874 = vmatpush.bf16.msra.mxu0 0
        %875 = vmatpush.bf16.msra.mxu0 0
        %876 = vmatpush.bf16.msra.mxu0 0
        %877 = vmatpush.bf16.msra.mxu0 0
        %878 = vmatpush.bf16.msra.mxu0 0
        %879 = vmatpush.bf16.msra.mxu0 %v819
        %880 = vmatmul.bf16.gmra.mxu0 %v807
        %v881 = vpop.f32.mrf.mxu0
        %v882 = vadd.f32 %v755, %v881
        %v883 = vpop.f32.mrf.mxu0
        %v884 = vadd.f32 %v757, %v883
        %885 = vdwg.mxu0
        %886 = vmatpush.bf16.msra.mxu0 0
        %887 = vmatpush.bf16.msra.mxu0 0
        %888 = vmatpush.bf16.msra.mxu0 0
        %889 = vmatpush.bf16.msra.mxu0 0
        %890 = vmatpush.bf16.msra.mxu0 0
        %891 = vmatpush.bf16.msra.mxu0 0
        %892 = vmatpush.bf16.msra.mxu0 0
        %893 = vmatpush.bf16.msra.mxu0 %v822
        %894 = vmatmul.bf16.gmra.mxu0 %v807
        %v895 = vpop.f32.mrf.mxu0
        %v896 = vadd.f32 %v769, %v895
        %v897 = vpop.f32.mrf.mxu0
        %v898 = vadd.f32 %v771, %v897
        %899 = vdwg.mxu0
        %900 = vmatpush.bf16.msra.mxu0 0
        %901 = vmatpush.bf16.msra.mxu0 0
        %902 = vmatpush.bf16.msra.mxu0 0
        %903 = vmatpush.bf16.msra.mxu0 0
        %904 = vmatpush.bf16.msra.mxu0 0
        %905 = vmatpush.bf16.msra.mxu0 0
        %906 = vmatpush.bf16.msra.mxu0 0
        %907 = vmatpush.bf16.msra.mxu0 %v825
        %908 = vmatmul.bf16.gmra.mxu0 %v807
        %v909 = vpop.f32.mrf.mxu0
        %v910 = vadd.f32 %v783, %v909
        %v911 = vpop.f32.mrf.mxu0
        %v912 = vadd.f32 %v785, %v911
        %913 = vdwg.mxu0
        %914 = vmatpush.bf16.msra.mxu0 0
        %915 = vmatpush.bf16.msra.mxu0 0
        %916 = vmatpush.bf16.msra.mxu0 0
        %917 = vmatpush.bf16.msra.mxu0 0
        %918 = vmatpush.bf16.msra.mxu0 0
        %919 = vmatpush.bf16.msra.mxu0 0
        %920 = vmatpush.bf16.msra.mxu0 0
        %921 = vmatpush.bf16.msra.mxu0 %v828
        %922 = vmatmul.bf16.gmra.mxu0 %v807
        %v923 = vpop.f32.mrf.mxu0
        %v924 = vadd.f32 %v797, %v923
        %v925 = vpop.f32.mrf.mxu0
        %v926 = vadd.f32 %v799, %v925
        %927 = vdwg.mxu0
        %v928 = vld [vmem:[%s545] sm:$0x77]
        %v929 = vld [vmem:[%s545 + $0x8] sm:$0x77]
        %v930 = vld [vmem:[%s545 + $0x10] sm:$0x77]
        %v931 = vld [vmem:[%s545 + $0x18] sm:$0x77]
        %936 = vst [vmem:[#allocation1] ss:$2 sm:$0xff] %v928
        %s937 = scalar_lea.vmem [#allocation1], 16
        %938 = vst [vmem:[%s937] ss:$2 sm:$0xff] %v929
        %s939 = scalar_lea.vmem [#allocation1], 32
        %940 = vst [vmem:[%s939] ss:$2 sm:$0xff] %v930
        %s941 = scalar_lea.vmem [#allocation1], 48
        %942 = vst [vmem:[%s941] ss:$2 sm:$0xff] %v931
        %v943 = vld.sshfl [vmem:[#allocation1] sm:$0xff pattern:$0x75316420]
        %v944 = vld.sshfl [vmem:[#allocation1 + $0x8] sm:$0xff pattern:$0x75316420]
        %v945 = vld.sshfl [vmem:[#allocation1 + $0x10] sm:$0xff pattern:$0x75316420]
        %v946 = vld.sshfl [vmem:[#allocation1 + $0x18] sm:$0xff pattern:$0x75316420]
        %v947 = vld.sshfl [vmem:[#allocation1 + $0x20] sm:$0xff pattern:$0x75316420]
        %v948 = vld.sshfl [vmem:[#allocation1 + $0x28] sm:$0xff pattern:$0x75316420]
        %v949 = vld.sshfl [vmem:[#allocation1 + $0x30] sm:$0xff pattern:$0x75316420]
        %v950 = vld.sshfl [vmem:[#allocation1 + $0x38] sm:$0xff pattern:$0x75316420]
        %v959 = vpack.c.bf16 %v943, %v943
        %v960 = vpack.c.bf16 %v944, %v944
        %v961 = vpack.c.bf16 %v945, %v945
        %v962 = vpack.c.bf16 %v946, %v946
        %v963 = vpack.c.bf16 %v947, %v947
        %v964 = vpack.c.bf16 %v948, %v948
        %v965 = vpack.c.bf16 %v949, %v949
        %v966 = vpack.c.bf16 %v950, %v950
        %s967 = scalar_lea.vmem %s1, 16
        %v968 = vld [vmem:[%s967] sm:$0xf]
        %v969 = vld [vmem:[%s967 + $0x4] sm:$0xf]
        %v972 = vunpack.c.l.b16 %v968
        %v973 = vunpack.c.l.b16 %v969
        %v974 = vpack.c.b16 %v973, %v972
        %983 = vrot.lane.b32.xlu0 %v959, 126
        %v984 = vpop.permute.xlu0 %983
        %985 = vrot.lane.b32.xlu0 %v960, 126
        %v986 = vpop.permute.xlu0 %985
        %987 = vrot.lane.b32.xlu0 %v961, 126
        %v988 = vpop.permute.xlu0 %987
        %989 = vrot.lane.b32.xlu0 %v962, 126
        %v990 = vpop.permute.xlu0 %989
        %991 = vrot.lane.b32.xlu0 %v963, 126
        %v992 = vpop.permute.xlu0 %991
        %993 = vrot.lane.b32.xlu0 %v964, 126
        %v994 = vpop.permute.xlu0 %993
        %995 = vrot.lane.b32.xlu0 %v965, 126
        %v996 = vpop.permute.xlu0 %995
        %997 = vrot.lane.b32.xlu0 %v966, 126
        %v998 = vpop.permute.xlu0 %997
        %vm999 = vcmask 1031168
        %v1000 = vsel %vm999, %v984, %v986
        %v1001 = vsel %vm999, %v986, %v988
        %v1002 = vsel %vm999, %v988, %v990
        %v1003 = vsel %vm999, %v990, %v992
        %v1004 = vsel %vm999, %v992, %v994
        %v1005 = vsel %vm999, %v994, %v996
        %v1006 = vsel %vm999, %v996, %v998
        %v1008 = vsel %vm674, %v974, 0
        %v1011 = vand.u32 %v1000, %v681
        %v1014 = vand.u32 %v1001, %v681
        %v1017 = vand.u32 %v1002, %v681
        %v1020 = vand.u32 %v1003, %v681
        %v1023 = vand.u32 %v1004, %v681
        %v1026 = vand.u32 %v1005, %v681
        %v1029 = vand.u32 %v1006, %v681
        %1031 = vmatpush.bf16.msra.mxu0 0
        %1032 = vmatpush.bf16.msra.mxu0 0
        %1033 = vmatpush.bf16.msra.mxu0 0
        %1034 = vmatpush.bf16.msra.mxu0 0
        %1035 = vmatpush.bf16.msra.mxu0 0
        %1036 = vmatpush.bf16.msra.mxu0 0
        %1037 = vmatpush.bf16.msra.mxu0 0
        %1038 = vmatpush.bf16.msra.mxu0 %v1011
        %1039 = vmatmul.bf16.gmra.mxu0 %v1008
        %v1040 = vpop.f32.mrf.mxu0
        %v1041 = vadd.f32 0.0, %v1040
        %v1042 = vpop.f32.mrf.mxu0
        %v1043 = vadd.f32 0.0, %v1042
        %1044 = vdwg.mxu0
        %1045 = vmatpush.bf16.msra.mxu0 0
        %1046 = vmatpush.bf16.msra.mxu0 0
        %1047 = vmatpush.bf16.msra.mxu0 0
        %1048 = vmatpush.bf16.msra.mxu0 0
        %1049 = vmatpush.bf16.msra.mxu0 0
        %1050 = vmatpush.bf16.msra.mxu0 0
        %1051 = vmatpush.bf16.msra.mxu0 0
        %1052 = vmatpush.bf16.msra.mxu0 %v1014
        %1053 = vmatmul.bf16.gmra.mxu0 %v1008
        %v1054 = vpop.f32.mrf.mxu0
        %v1055 = vadd.f32 0.0, %v1054
        %v1056 = vpop.f32.mrf.mxu0
        %v1057 = vadd.f32 0.0, %v1056
        %1058 = vdwg.mxu0
        %1059 = vmatpush.bf16.msra.mxu0 0
        %1060 = vmatpush.bf16.msra.mxu0 0
        %1061 = vmatpush.bf16.msra.mxu0 0
        %1062 = vmatpush.bf16.msra.mxu0 0
        %1063 = vmatpush.bf16.msra.mxu0 0
        %1064 = vmatpush.bf16.msra.mxu0 0
        %1065 = vmatpush.bf16.msra.mxu0 0
        %1066 = vmatpush.bf16.msra.mxu0 %v1017
        %1067 = vmatmul.bf16.gmra.mxu0 %v1008
        %v1068 = vpop.f32.mrf.mxu0
        %v1069 = vadd.f32 0.0, %v1068
        %v1070 = vpop.f32.mrf.mxu0
        %v1071 = vadd.f32 0.0, %v1070
        %1072 = vdwg.mxu0
        %1073 = vmatpush.bf16.msra.mxu0 0
        %1074 = vmatpush.bf16.msra.mxu0 0
        %1075 = vmatpush.bf16.msra.mxu0 0
        %1076 = vmatpush.bf16.msra.mxu0 0
        %1077 = vmatpush.bf16.msra.mxu0 0
        %1078 = vmatpush.bf16.msra.mxu0 0
        %1079 = vmatpush.bf16.msra.mxu0 0
        %1080 = vmatpush.bf16.msra.mxu0 %v1020
        %1081 = vmatmul.bf16.gmra.mxu0 %v1008
        %v1082 = vpop.f32.mrf.mxu0
        %v1083 = vadd.f32 0.0, %v1082
        %v1084 = vpop.f32.mrf.mxu0
        %v1085 = vadd.f32 0.0, %v1084
        %1086 = vdwg.mxu0
        %1087 = vmatpush.bf16.msra.mxu0 0
        %1088 = vmatpush.bf16.msra.mxu0 0
        %1089 = vmatpush.bf16.msra.mxu0 0
        %1090 = vmatpush.bf16.msra.mxu0 0
        %1091 = vmatpush.bf16.msra.mxu0 0
        %1092 = vmatpush.bf16.msra.mxu0 0
        %1093 = vmatpush.bf16.msra.mxu0 0
        %1094 = vmatpush.bf16.msra.mxu0 %v1023
        %1095 = vmatmul.bf16.gmra.mxu0 %v1008
        %v1096 = vpop.f32.mrf.mxu0
        %v1097 = vadd.f32 0.0, %v1096
        %v1098 = vpop.f32.mrf.mxu0
        %v1099 = vadd.f32 0.0, %v1098
        %1100 = vdwg.mxu0
        %1101 = vmatpush.bf16.msra.mxu0 0
        %1102 = vmatpush.bf16.msra.mxu0 0
        %1103 = vmatpush.bf16.msra.mxu0 0
        %1104 = vmatpush.bf16.msra.mxu0 0
        %1105 = vmatpush.bf16.msra.mxu0 0
        %1106 = vmatpush.bf16.msra.mxu0 0
        %1107 = vmatpush.bf16.msra.mxu0 0
        %1108 = vmatpush.bf16.msra.mxu0 %v1026
        %1109 = vmatmul.bf16.gmra.mxu0 %v1008
        %v1110 = vpop.f32.mrf.mxu0
        %v1111 = vadd.f32 0.0, %v1110
        %v1112 = vpop.f32.mrf.mxu0
        %v1113 = vadd.f32 0.0, %v1112
        %1114 = vdwg.mxu0
        %1115 = vmatpush.bf16.msra.mxu0 0
        %1116 = vmatpush.bf16.msra.mxu0 0
        %1117 = vmatpush.bf16.msra.mxu0 0
        %1118 = vmatpush.bf16.msra.mxu0 0
        %1119 = vmatpush.bf16.msra.mxu0 0
        %1120 = vmatpush.bf16.msra.mxu0 0
        %1121 = vmatpush.bf16.msra.mxu0 0
        %1122 = vmatpush.bf16.msra.mxu0 %v1029
        %1123 = vmatmul.bf16.gmra.mxu0 %v1008
        %v1124 = vpop.f32.mrf.mxu0
        %v1125 = vadd.f32 0.0, %v1124
        %v1126 = vpop.f32.mrf.mxu0
        %v1127 = vadd.f32 0.0, %v1126
        %1128 = vdwg.mxu0
        %v1129 = vadd.f32 %v840, %v1041
        %v1130 = vadd.f32 %v854, %v1055
        %v1131 = vadd.f32 %v868, %v1069
        %v1132 = vadd.f32 %v882, %v1083
        %v1133 = vadd.f32 %v896, %v1097
        %v1134 = vadd.f32 %v910, %v1111
        %v1135 = vadd.f32 %v924, %v1125
        %v1136 = vadd.f32 %v842, %v1043
        %v1137 = vadd.f32 %v856, %v1057
        %v1138 = vadd.f32 %v870, %v1071
        %v1139 = vadd.f32 %v884, %v1085
        %v1140 = vadd.f32 %v898, %v1099
        %v1141 = vadd.f32 %v912, %v1113
        %v1142 = vadd.f32 %v926, %v1127
        %v1143 = vld [vmem:[%s545] sm:$0x77]
        %v1144 = vld [vmem:[%s545 + $0x8] sm:$0x77]
        %v1145 = vld [vmem:[%s545 + $0x10] sm:$0x77]
        %v1146 = vld [vmem:[%s545 + $0x18] sm:$0x77]
        %1151 = vst [vmem:[#allocation1] ss:$2 sm:$0xff] %v1143
        %s1152 = scalar_lea.vmem [#allocation1], 16
        %1153 = vst [vmem:[%s1152] ss:$2 sm:$0xff] %v1144
        %s1154 = scalar_lea.vmem [#allocation1], 32
        %1155 = vst [vmem:[%s1154] ss:$2 sm:$0xff] %v1145
        %s1156 = scalar_lea.vmem [#allocation1], 48
        %1157 = vst [vmem:[%s1156] ss:$2 sm:$0xff] %v1146
        %v1158 = vld.sshfl [vmem:[#allocation1] sm:$0xff pattern:$0x75316420]
        %v1159 = vld.sshfl [vmem:[#allocation1 + $0x8] sm:$0xff pattern:$0x75316420]
        %v1160 = vld.sshfl [vmem:[#allocation1 + $0x10] sm:$0xff pattern:$0x75316420]
        %v1161 = vld.sshfl [vmem:[#allocation1 + $0x18] sm:$0xff pattern:$0x75316420]
        %v1162 = vld.sshfl [vmem:[#allocation1 + $0x20] sm:$0xff pattern:$0x75316420]
        %v1163 = vld.sshfl [vmem:[#allocation1 + $0x28] sm:$0xff pattern:$0x75316420]
        %v1164 = vld.sshfl [vmem:[#allocation1 + $0x30] sm:$0xff pattern:$0x75316420]
        %v1165 = vld.sshfl [vmem:[#allocation1 + $0x38] sm:$0xff pattern:$0x75316420]
        %v1174 = vpack.c.bf16 %v1158, %v1158
        %v1175 = vpack.c.bf16 %v1159, %v1159
        %v1176 = vpack.c.bf16 %v1160, %v1160
        %v1177 = vpack.c.bf16 %v1161, %v1161
        %v1178 = vpack.c.bf16 %v1162, %v1162
        %v1179 = vpack.c.bf16 %v1163, %v1163
        %v1180 = vpack.c.bf16 %v1164, %v1164
        %v1181 = vpack.c.bf16 %v1165, %v1165
        %s1182 = scalar_lea.vmem %s1, 24
        %v1183 = vld [vmem:[%s1182] sm:$0xf]
        %v1184 = vld [vmem:[%s1182 + $0x4] sm:$0xf]
        %v1187 = vunpack.c.l.b16 %v1183
        %v1188 = vunpack.c.l.b16 %v1184
        %v1189 = vpack.c.b16 %v1188, %v1187
        %1198 = vrot.lane.b32.xlu0 %v1174, 125
        %v1199 = vpop.permute.xlu0 %1198
        %1200 = vrot.lane.b32.xlu0 %v1175, 125
        %v1201 = vpop.permute.xlu0 %1200
        %1202 = vrot.lane.b32.xlu0 %v1176, 125
        %v1203 = vpop.permute.xlu0 %1202
        %1204 = vrot.lane.b32.xlu0 %v1177, 125
        %v1205 = vpop.permute.xlu0 %1204
        %1206 = vrot.lane.b32.xlu0 %v1178, 125
        %v1207 = vpop.permute.xlu0 %1206
        %1208 = vrot.lane.b32.xlu0 %v1179, 125
        %v1209 = vpop.permute.xlu0 %1208
        %1210 = vrot.lane.b32.xlu0 %v1180, 125
        %v1211 = vpop.permute.xlu0 %1210
        %1212 = vrot.lane.b32.xlu0 %v1181, 125
        %v1213 = vpop.permute.xlu0 %1212
        %vm1214 = vcmask 1022976
        %v1215 = vsel %vm1214, %v1199, %v1201
        %v1216 = vsel %vm1214, %v1201, %v1203
        %v1217 = vsel %vm1214, %v1203, %v1205
        %v1218 = vsel %vm1214, %v1205, %v1207
        %v1219 = vsel %vm1214, %v1207, %v1209
        %v1220 = vsel %vm1214, %v1209, %v1211
        %v1221 = vsel %vm1214, %v1211, %v1213
        %v1223 = vsel %vm674, %v1189, 0
        %v1226 = vand.u32 %v1215, %v681
        %v1229 = vand.u32 %v1216, %v681
        %v1232 = vand.u32 %v1217, %v681
        %v1235 = vand.u32 %v1218, %v681
        %v1238 = vand.u32 %v1219, %v681
        %v1241 = vand.u32 %v1220, %v681
        %v1244 = vand.u32 %v1221, %v681
        %1246 = vmatpush.bf16.msra.mxu0 0
        %1247 = vmatpush.bf16.msra.mxu0 0
        %1248 = vmatpush.bf16.msra.mxu0 0
        %1249 = vmatpush.bf16.msra.mxu0 0
        %1250 = vmatpush.bf16.msra.mxu0 0
        %1251 = vmatpush.bf16.msra.mxu0 0
        %1252 = vmatpush.bf16.msra.mxu0 0
        %1253 = vmatpush.bf16.msra.mxu0 %v1226
        %1254 = vmatmul.bf16.gmra.mxu0 %v1223
        %v1255 = vpop.f32.mrf.mxu0
        %v1256 = vadd.f32 0.0, %v1255
        %v1257 = vpop.f32.mrf.mxu0
        %v1258 = vadd.f32 0.0, %v1257
        %1259 = vdwg.mxu0
        %1260 = vmatpush.bf16.msra.mxu0 0
        %1261 = vmatpush.bf16.msra.mxu0 0
        %1262 = vmatpush.bf16.msra.mxu0 0
        %1263 = vmatpush.bf16.msra.mxu0 0
        %1264 = vmatpush.bf16.msra.mxu0 0
        %1265 = vmatpush.bf16.msra.mxu0 0
        %1266 = vmatpush.bf16.msra.mxu0 0
        %1267 = vmatpush.bf16.msra.mxu0 %v1229
        %1268 = vmatmul.bf16.gmra.mxu0 %v1223
        %v1269 = vpop.f32.mrf.mxu0
        %v1270 = vadd.f32 0.0, %v1269
        %v1271 = vpop.f32.mrf.mxu0
        %v1272 = vadd.f32 0.0, %v1271
        %1273 = vdwg.mxu0
        %1274 = vmatpush.bf16.msra.mxu0 0
        %1275 = vmatpush.bf16.msra.mxu0 0
        %1276 = vmatpush.bf16.msra.mxu0 0
        %1277 = vmatpush.bf16.msra.mxu0 0
        %1278 = vmatpush.bf16.msra.mxu0 0
        %1279 = vmatpush.bf16.msra.mxu0 0
        %1280 = vmatpush.bf16.msra.mxu0 0
        %1281 = vmatpush.bf16.msra.mxu0 %v1232
        %1282 = vmatmul.bf16.gmra.mxu0 %v1223
        %v1283 = vpop.f32.mrf.mxu0
        %v1284 = vadd.f32 0.0, %v1283
        %v1285 = vpop.f32.mrf.mxu0
        %v1286 = vadd.f32 0.0, %v1285
        %1287 = vdwg.mxu0
        %1288 = vmatpush.bf16.msra.mxu0 0
        %1289 = vmatpush.bf16.msra.mxu0 0
        %1290 = vmatpush.bf16.msra.mxu0 0
        %1291 = vmatpush.bf16.msra.mxu0 0
        %1292 = vmatpush.bf16.msra.mxu0 0
        %1293 = vmatpush.bf16.msra.mxu0 0
        %1294 = vmatpush.bf16.msra.mxu0 0
        %1295 = vmatpush.bf16.msra.mxu0 %v1235
        %1296 = vmatmul.bf16.gmra.mxu0 %v1223
        %v1297 = vpop.f32.mrf.mxu0
        %v1298 = vadd.f32 0.0, %v1297
        %v1299 = vpop.f32.mrf.mxu0
        %v1300 = vadd.f32 0.0, %v1299
        %1301 = vdwg.mxu0
        %1302 = vmatpush.bf16.msra.mxu0 0
        %1303 = vmatpush.bf16.msra.mxu0 0
        %1304 = vmatpush.bf16.msra.mxu0 0
        %1305 = vmatpush.bf16.msra.mxu0 0
        %1306 = vmatpush.bf16.msra.mxu0 0
        %1307 = vmatpush.bf16.msra.mxu0 0
        %1308 = vmatpush.bf16.msra.mxu0 0
        %1309 = vmatpush.bf16.msra.mxu0 %v1238
        %1310 = vmatmul.bf16.gmra.mxu0 %v1223
        %v1311 = vpop.f32.mrf.mxu0
        %v1312 = vadd.f32 0.0, %v1311
        %v1313 = vpop.f32.mrf.mxu0
        %v1314 = vadd.f32 0.0, %v1313
        %1315 = vdwg.mxu0
        %1316 = vmatpush.bf16.msra.mxu0 0
        %1317 = vmatpush.bf16.msra.mxu0 0
        %1318 = vmatpush.bf16.msra.mxu0 0
        %1319 = vmatpush.bf16.msra.mxu0 0
        %1320 = vmatpush.bf16.msra.mxu0 0
        %1321 = vmatpush.bf16.msra.mxu0 0
        %1322 = vmatpush.bf16.msra.mxu0 0
        %1323 = vmatpush.bf16.msra.mxu0 %v1241
        %1324 = vmatmul.bf16.gmra.mxu0 %v1223
        %v1325 = vpop.f32.mrf.mxu0
        %v1326 = vadd.f32 0.0, %v1325
        %v1327 = vpop.f32.mrf.mxu0
        %v1328 = vadd.f32 0.0, %v1327
        %1329 = vdwg.mxu0
        %1330 = vmatpush.bf16.msra.mxu0 0
        %1331 = vmatpush.bf16.msra.mxu0 0
        %1332 = vmatpush.bf16.msra.mxu0 0
        %1333 = vmatpush.bf16.msra.mxu0 0
        %1334 = vmatpush.bf16.msra.mxu0 0
        %1335 = vmatpush.bf16.msra.mxu0 0
        %1336 = vmatpush.bf16.msra.mxu0 0
        %1337 = vmatpush.bf16.msra.mxu0 %v1244
        %1338 = vmatmul.bf16.gmra.mxu0 %v1223
        %v1339 = vpop.f32.mrf.mxu0
        %v1340 = vadd.f32 0.0, %v1339
        %v1341 = vpop.f32.mrf.mxu0
        %v1342 = vadd.f32 0.0, %v1341
        %1343 = vdwg.mxu0
        %v1344 = vadd.f32 %v1129, %v1256
        %v1345 = vadd.f32 %v1130, %v1270
        %v1346 = vadd.f32 %v1131, %v1284
        %v1347 = vadd.f32 %v1132, %v1298
        %v1348 = vadd.f32 %v1133, %v1312
        %v1349 = vadd.f32 %v1134, %v1326
        %v1350 = vadd.f32 %v1135, %v1340
        %v1351 = vadd.f32 %v1136, %v1258
        %v1352 = vadd.f32 %v1137, %v1272
        %v1353 = vadd.f32 %v1138, %v1286
        %v1354 = vadd.f32 %v1139, %v1300
        %v1355 = vadd.f32 %v1140, %v1314
        %v1356 = vadd.f32 %v1141, %v1328
        %v1357 = vadd.f32 %v1142, %v1342
        %v1358 = vld [vmem:[%s545] sm:$0x77]
        %v1359 = vld [vmem:[%s545 + $0x8] sm:$0x77]
        %v1360 = vld [vmem:[%s545 + $0x10] sm:$0x77]
        %v1361 = vld [vmem:[%s545 + $0x18] sm:$0x77]
        %1366 = vst [vmem:[#allocation1] ss:$2 sm:$0xff] %v1358
        %s1367 = scalar_lea.vmem [#allocation1], 16
        %1368 = vst [vmem:[%s1367] ss:$2 sm:$0xff] %v1359
        %s1369 = scalar_lea.vmem [#allocation1], 32
        %1370 = vst [vmem:[%s1369] ss:$2 sm:$0xff] %v1360
        %s1371 = scalar_lea.vmem [#allocation1], 48
        %1372 = vst [vmem:[%s1371] ss:$2 sm:$0xff] %v1361
        %v1373 = vld.sshfl [vmem:[#allocation1] sm:$0xff pattern:$0x75316420]
        %v1374 = vld.sshfl [vmem:[#allocation1 + $0x8] sm:$0xff pattern:$0x75316420]
        %v1375 = vld.sshfl [vmem:[#allocation1 + $0x10] sm:$0xff pattern:$0x75316420]
        %v1376 = vld.sshfl [vmem:[#allocation1 + $0x18] sm:$0xff pattern:$0x75316420]
        %v1377 = vld.sshfl [vmem:[#allocation1 + $0x20] sm:$0xff pattern:$0x75316420]
        %v1378 = vld.sshfl [vmem:[#allocation1 + $0x28] sm:$0xff pattern:$0x75316420]
        %v1379 = vld.sshfl [vmem:[#allocation1 + $0x30] sm:$0xff pattern:$0x75316420]
        %v1380 = vld.sshfl [vmem:[#allocation1 + $0x38] sm:$0xff pattern:$0x75316420]
        %v1389 = vpack.c.bf16 %v1373, %v1373
        %v1390 = vpack.c.bf16 %v1374, %v1374
        %v1391 = vpack.c.bf16 %v1375, %v1375
        %v1392 = vpack.c.bf16 %v1376, %v1376
        %v1393 = vpack.c.bf16 %v1377, %v1377
        %v1394 = vpack.c.bf16 %v1378, %v1378
        %v1395 = vpack.c.bf16 %v1379, %v1379
        %v1396 = vpack.c.bf16 %v1380, %v1380
        %s1397 = scalar_lea.vmem %s1, 32
        %v1398 = vld [vmem:[%s1397] sm:$0xf]
        %v1399 = vld [vmem:[%s1397 + $0x4] sm:$0xf]
        %v1402 = vunpack.c.l.b16 %v1398
        %v1403 = vunpack.c.l.b16 %v1399
        %v1404 = vpack.c.b16 %v1403, %v1402
        %1413 = vrot.lane.b32.xlu0 %v1389, 96
        %v1414 = vpop.permute.xlu0 %1413
        %1415 = vrot.lane.b32.xlu0 %v1390, 96
        %v1416 = vpop.permute.xlu0 %1415
        %1417 = vrot.lane.b32.xlu0 %v1391, 96
        %v1418 = vpop.permute.xlu0 %1417
        %1419 = vrot.lane.b32.xlu0 %v1392, 96
        %v1420 = vpop.permute.xlu0 %1419
        %1421 = vrot.lane.b32.xlu0 %v1393, 96
        %v1422 = vpop.permute.xlu0 %1421
        %1423 = vrot.lane.b32.xlu0 %v1394, 96
        %v1424 = vpop.permute.xlu0 %1423
        %1425 = vrot.lane.b32.xlu0 %v1395, 96
        %v1426 = vpop.permute.xlu0 %1425
        %1427 = vrot.lane.b32.xlu0 %v1396, 96
        %v1428 = vpop.permute.xlu0 %1427
        %vm1429 = vcmask 785408
        %v1430 = vsel %vm1429, %v1414, %v1416
        %v1431 = vsel %vm1429, %v1416, %v1418
        %v1432 = vsel %vm1429, %v1418, %v1420
        %v1433 = vsel %vm1429, %v1420, %v1422
        %v1434 = vsel %vm1429, %v1422, %v1424
        %v1435 = vsel %vm1429, %v1424, %v1426
        %v1436 = vsel %vm1429, %v1426, %v1428
        %v1438 = vsel %vm674, %v1404, 0
        %v1441 = vand.u32 %v1430, %v681
        %v1444 = vand.u32 %v1431, %v681
        %v1447 = vand.u32 %v1432, %v681
        %v1450 = vand.u32 %v1433, %v681
        %v1453 = vand.u32 %v1434, %v681
        %v1456 = vand.u32 %v1435, %v681
        %v1459 = vand.u32 %v1436, %v681
        %1461 = vmatpush.bf16.msra.mxu0 0
        %1462 = vmatpush.bf16.msra.mxu0 0
        %1463 = vmatpush.bf16.msra.mxu0 0
        %1464 = vmatpush.bf16.msra.mxu0 0
        %1465 = vmatpush.bf16.msra.mxu0 0
        %1466 = vmatpush.bf16.msra.mxu0 0
        %1467 = vmatpush.bf16.msra.mxu0 0
        %1468 = vmatpush.bf16.msra.mxu0 %v1441
        %1469 = vmatmul.bf16.gmra.mxu0 %v1438
        %v1470 = vpop.f32.mrf.mxu0
        %v1471 = vadd.f32 0.0, %v1470
        %v1472 = vpop.f32.mrf.mxu0
        %v1473 = vadd.f32 0.0, %v1472
        %1474 = vdwg.mxu0
        %1475 = vmatpush.bf16.msra.mxu0 0
        %1476 = vmatpush.bf16.msra.mxu0 0
        %1477 = vmatpush.bf16.msra.mxu0 0
        %1478 = vmatpush.bf16.msra.mxu0 0
        %1479 = vmatpush.bf16.msra.mxu0 0
        %1480 = vmatpush.bf16.msra.mxu0 0
        %1481 = vmatpush.bf16.msra.mxu0 0
        %1482 = vmatpush.bf16.msra.mxu0 %v1444
        %1483 = vmatmul.bf16.gmra.mxu0 %v1438
        %v1484 = vpop.f32.mrf.mxu0
        %v1485 = vadd.f32 0.0, %v1484
        %v1486 = vpop.f32.mrf.mxu0
        %v1487 = vadd.f32 0.0, %v1486
        %1488 = vdwg.mxu0
        %1489 = vmatpush.bf16.msra.mxu0 0
        %1490 = vmatpush.bf16.msra.mxu0 0
        %1491 = vmatpush.bf16.msra.mxu0 0
        %1492 = vmatpush.bf16.msra.mxu0 0
        %1493 = vmatpush.bf16.msra.mxu0 0
        %1494 = vmatpush.bf16.msra.mxu0 0
        %1495 = vmatpush.bf16.msra.mxu0 0
        %1496 = vmatpush.bf16.msra.mxu0 %v1447
        %1497 = vmatmul.bf16.gmra.mxu0 %v1438
        %v1498 = vpop.f32.mrf.mxu0
        %v1499 = vadd.f32 0.0, %v1498
        %v1500 = vpop.f32.mrf.mxu0
        %v1501 = vadd.f32 0.0, %v1500
        %1502 = vdwg.mxu0
        %1503 = vmatpush.bf16.msra.mxu0 0
        %1504 = vmatpush.bf16.msra.mxu0 0
        %1505 = vmatpush.bf16.msra.mxu0 0
        %1506 = vmatpush.bf16.msra.mxu0 0
        %1507 = vmatpush.bf16.msra.mxu0 0
        %1508 = vmatpush.bf16.msra.mxu0 0
        %1509 = vmatpush.bf16.msra.mxu0 0
        %1510 = vmatpush.bf16.msra.mxu0 %v1450
        %1511 = vmatmul.bf16.gmra.mxu0 %v1438
        %v1512 = vpop.f32.mrf.mxu0
        %v1513 = vadd.f32 0.0, %v1512
        %v1514 = vpop.f32.mrf.mxu0
        %v1515 = vadd.f32 0.0, %v1514
        %1516 = vdwg.mxu0
        %1517 = vmatpush.bf16.msra.mxu0 0
        %1518 = vmatpush.bf16.msra.mxu0 0
        %1519 = vmatpush.bf16.msra.mxu0 0
        %1520 = vmatpush.bf16.msra.mxu0 0
        %1521 = vmatpush.bf16.msra.mxu0 0
        %1522 = vmatpush.bf16.msra.mxu0 0
        %1523 = vmatpush.bf16.msra.mxu0 0
        %1524 = vmatpush.bf16.msra.mxu0 %v1453
        %1525 = vmatmul.bf16.gmra.mxu0 %v1438
        %v1526 = vpop.f32.mrf.mxu0
        %v1527 = vadd.f32 0.0, %v1526
        %v1528 = vpop.f32.mrf.mxu0
        %v1529 = vadd.f32 0.0, %v1528
        %1530 = vdwg.mxu0
        %1531 = vmatpush.bf16.msra.mxu0 0
        %1532 = vmatpush.bf16.msra.mxu0 0
        %1533 = vmatpush.bf16.msra.mxu0 0
        %1534 = vmatpush.bf16.msra.mxu0 0
        %1535 = vmatpush.bf16.msra.mxu0 0
        %1536 = vmatpush.bf16.msra.mxu0 0
        %1537 = vmatpush.bf16.msra.mxu0 0
        %1538 = vmatpush.bf16.msra.mxu0 %v1456
        %1539 = vmatmul.bf16.gmra.mxu0 %v1438
        %v1540 = vpop.f32.mrf.mxu0
        %v1541 = vadd.f32 0.0, %v1540
        %v1542 = vpop.f32.mrf.mxu0
        %v1543 = vadd.f32 0.0, %v1542
        %1544 = vdwg.mxu0
        %1545 = vmatpush.bf16.msra.mxu0 0
        %1546 = vmatpush.bf16.msra.mxu0 0
        %1547 = vmatpush.bf16.msra.mxu0 0
        %1548 = vmatpush.bf16.msra.mxu0 0
        %1549 = vmatpush.bf16.msra.mxu0 0
        %1550 = vmatpush.bf16.msra.mxu0 0
        %1551 = vmatpush.bf16.msra.mxu0 0
        %1552 = vmatpush.bf16.msra.mxu0 %v1459
        %1553 = vmatmul.bf16.gmra.mxu0 %v1438
        %v1554 = vpop.f32.mrf.mxu0
        %v1555 = vadd.f32 0.0, %v1554
        %v1556 = vpop.f32.mrf.mxu0
        %v1557 = vadd.f32 0.0, %v1556
        %1558 = vdwg.mxu0
        %v1559 = vadd.f32 %v1344, %v1471
        %v1560 = vadd.f32 %v1345, %v1485
        %v1561 = vadd.f32 %v1346, %v1499
        %v1562 = vadd.f32 %v1347, %v1513
        %v1563 = vadd.f32 %v1348, %v1527
        %v1564 = vadd.f32 %v1349, %v1541
        %v1565 = vadd.f32 %v1350, %v1555
        %v1566 = vadd.f32 %v1351, %v1473
        %v1567 = vadd.f32 %v1352, %v1487
        %v1568 = vadd.f32 %v1353, %v1501
        %v1569 = vadd.f32 %v1354, %v1515
        %v1570 = vadd.f32 %v1355, %v1529
        %v1571 = vadd.f32 %v1356, %v1543
        %v1572 = vadd.f32 %v1357, %v1557
        %v1573 = vld [vmem:[%s545] sm:$0x77]
        %v1574 = vld [vmem:[%s545 + $0x8] sm:$0x77]
        %v1575 = vld [vmem:[%s545 + $0x10] sm:$0x77]
        %v1576 = vld [vmem:[%s545 + $0x18] sm:$0x77]
        %1581 = vst [vmem:[#allocation1] ss:$2 sm:$0xff] %v1573
        %s1582 = scalar_lea.vmem [#allocation1], 16
        %1583 = vst [vmem:[%s1582] ss:$2 sm:$0xff] %v1574
        %s1584 = scalar_lea.vmem [#allocation1], 32
        %1585 = vst [vmem:[%s1584] ss:$2 sm:$0xff] %v1575
        %s1586 = scalar_lea.vmem [#allocation1], 48
        %1587 = vst [vmem:[%s1586] ss:$2 sm:$0xff] %v1576
        %v1588 = vld.sshfl [vmem:[#allocation1] sm:$0xff pattern:$0x75316420]
        %v1589 = vld.sshfl [vmem:[#allocation1 + $0x8] sm:$0xff pattern:$0x75316420]
        %v1590 = vld.sshfl [vmem:[#allocation1 + $0x10] sm:$0xff pattern:$0x75316420]
        %v1591 = vld.sshfl [vmem:[#allocation1 + $0x18] sm:$0xff pattern:$0x75316420]
        %v1592 = vld.sshfl [vmem:[#allocation1 + $0x20] sm:$0xff pattern:$0x75316420]
        %v1593 = vld.sshfl [vmem:[#allocation1 + $0x28] sm:$0xff pattern:$0x75316420]
        %v1594 = vld.sshfl [vmem:[#allocation1 + $0x30] sm:$0xff pattern:$0x75316420]
        %v1595 = vld.sshfl [vmem:[#allocation1 + $0x38] sm:$0xff pattern:$0x75316420]
        %v1604 = vpack.c.bf16 %v1588, %v1588
        %v1605 = vpack.c.bf16 %v1589, %v1589
        %v1606 = vpack.c.bf16 %v1590, %v1590
        %v1607 = vpack.c.bf16 %v1591, %v1591
        %v1608 = vpack.c.bf16 %v1592, %v1592
        %v1609 = vpack.c.bf16 %v1593, %v1593
        %v1610 = vpack.c.bf16 %v1594, %v1594
        %v1611 = vpack.c.bf16 %v1595, %v1595
        %s1612 = scalar_lea.vmem %s1, 40
        %v1613 = vld [vmem:[%s1612] sm:$0xf]
        %v1614 = vld [vmem:[%s1612 + $0x4] sm:$0xf]
        %v1617 = vunpack.c.l.b16 %v1613
        %v1618 = vunpack.c.l.b16 %v1614
        %v1619 = vpack.c.b16 %v1618, %v1617
        %1628 = vrot.lane.b32.xlu0 %v1604, 95
        %v1629 = vpop.permute.xlu0 %1628
        %1630 = vrot.lane.b32.xlu0 %v1605, 95
        %v1631 = vpop.permute.xlu0 %1630
        %1632 = vrot.lane.b32.xlu0 %v1606, 95
        %v1633 = vpop.permute.xlu0 %1632
        %1634 = vrot.lane.b32.xlu0 %v1607, 95
        %v1635 = vpop.permute.xlu0 %1634
        %1636 = vrot.lane.b32.xlu0 %v1608, 95
        %v1637 = vpop.permute.xlu0 %1636
        %1638 = vrot.lane.b32.xlu0 %v1609, 95
        %v1639 = vpop.permute.xlu0 %1638
        %1640 = vrot.lane.b32.xlu0 %v1610, 95
        %v1641 = vpop.permute.xlu0 %1640
        %1642 = vrot.lane.b32.xlu0 %v1611, 95
        %v1643 = vpop.permute.xlu0 %1642
        %vm1644 = vcmask 777216
        %v1645 = vsel %vm1644, %v1629, %v1631
        %v1646 = vsel %vm1644, %v1631, %v1633
        %v1647 = vsel %vm1644, %v1633, %v1635
        %v1648 = vsel %vm1644, %v1635, %v1637
        %v1649 = vsel %vm1644, %v1637, %v1639
        %v1650 = vsel %vm1644, %v1639, %v1641
        %v1651 = vsel %vm1644, %v1641, %v1643
        %v1653 = vsel %vm674, %v1619, 0
        %v1656 = vand.u32 %v1645, %v681
        %v1659 = vand.u32 %v1646, %v681
        %v1662 = vand.u32 %v1647, %v681
        %v1665 = vand.u32 %v1648, %v681
        %v1668 = vand.u32 %v1649, %v681
        %v1671 = vand.u32 %v1650, %v681
        %v1674 = vand.u32 %v1651, %v681
        %1676 = vmatpush.bf16.msra.mxu0 0
        %1677 = vmatpush.bf16.msra.mxu0 0
        %1678 = vmatpush.bf16.msra.mxu0 0
        %1679 = vmatpush.bf16.msra.mxu0 0
        %1680 = vmatpush.bf16.msra.mxu0 0
        %1681 = vmatpush.bf16.msra.mxu0 0
        %1682 = vmatpush.bf16.msra.mxu0 0
        %1683 = vmatpush.bf16.msra.mxu0 %v1656
        %1684 = vmatmul.bf16.gmra.mxu0 %v1653
        %v1685 = vpop.f32.mrf.mxu0
        %v1686 = vadd.f32 0.0, %v1685
        %v1687 = vpop.f32.mrf.mxu0
        %v1688 = vadd.f32 0.0, %v1687
        %1689 = vdwg.mxu0
        %1690 = vmatpush.bf16.msra.mxu0 0
        %1691 = vmatpush.bf16.msra.mxu0 0
        %1692 = vmatpush.bf16.msra.mxu0 0
        %1693 = vmatpush.bf16.msra.mxu0 0
        %1694 = vmatpush.bf16.msra.mxu0 0
        %1695 = vmatpush.bf16.msra.mxu0 0
        %1696 = vmatpush.bf16.msra.mxu0 0
        %1697 = vmatpush.bf16.msra.mxu0 %v1659
        %1698 = vmatmul.bf16.gmra.mxu0 %v1653
        %v1699 = vpop.f32.mrf.mxu0
        %v1700 = vadd.f32 0.0, %v1699
        %v1701 = vpop.f32.mrf.mxu0
        %v1702 = vadd.f32 0.0, %v1701
        %1703 = vdwg.mxu0
        %1704 = vmatpush.bf16.msra.mxu0 0
        %1705 = vmatpush.bf16.msra.mxu0 0
        %1706 = vmatpush.bf16.msra.mxu0 0
        %1707 = vmatpush.bf16.msra.mxu0 0
        %1708 = vmatpush.bf16.msra.mxu0 0
        %1709 = vmatpush.bf16.msra.mxu0 0
        %1710 = vmatpush.bf16.msra.mxu0 0
        %1711 = vmatpush.bf16.msra.mxu0 %v1662
        %1712 = vmatmul.bf16.gmra.mxu0 %v1653
        %v1713 = vpop.f32.mrf.mxu0
        %v1714 = vadd.f32 0.0, %v1713
        %v1715 = vpop.f32.mrf.mxu0
        %v1716 = vadd.f32 0.0, %v1715
        %1717 = vdwg.mxu0
        %1718 = vmatpush.bf16.msra.mxu0 0
        %1719 = vmatpush.bf16.msra.mxu0 0
        %1720 = vmatpush.bf16.msra.mxu0 0
        %1721 = vmatpush.bf16.msra.mxu0 0
        %1722 = vmatpush.bf16.msra.mxu0 0
        %1723 = vmatpush.bf16.msra.mxu0 0
        %1724 = vmatpush.bf16.msra.mxu0 0
        %1725 = vmatpush.bf16.msra.mxu0 %v1665
        %1726 = vmatmul.bf16.gmra.mxu0 %v1653
        %v1727 = vpop.f32.mrf.mxu0
        %v1728 = vadd.f32 0.0, %v1727
        %v1729 = vpop.f32.mrf.mxu0
        %v1730 = vadd.f32 0.0, %v1729
        %1731 = vdwg.mxu0
        %1732 = vmatpush.bf16.msra.mxu0 0
        %1733 = vmatpush.bf16.msra.mxu0 0
        %1734 = vmatpush.bf16.msra.mxu0 0
        %1735 = vmatpush.bf16.msra.mxu0 0
        %1736 = vmatpush.bf16.msra.mxu0 0
        %1737 = vmatpush.bf16.msra.mxu0 0
        %1738 = vmatpush.bf16.msra.mxu0 0
        %1739 = vmatpush.bf16.msra.mxu0 %v1668
        %1740 = vmatmul.bf16.gmra.mxu0 %v1653
        %v1741 = vpop.f32.mrf.mxu0
        %v1742 = vadd.f32 0.0, %v1741
        %v1743 = vpop.f32.mrf.mxu0
        %v1744 = vadd.f32 0.0, %v1743
        %1745 = vdwg.mxu0
        %1746 = vmatpush.bf16.msra.mxu0 0
        %1747 = vmatpush.bf16.msra.mxu0 0
        %1748 = vmatpush.bf16.msra.mxu0 0
        %1749 = vmatpush.bf16.msra.mxu0 0
        %1750 = vmatpush.bf16.msra.mxu0 0
        %1751 = vmatpush.bf16.msra.mxu0 0
        %1752 = vmatpush.bf16.msra.mxu0 0
        %1753 = vmatpush.bf16.msra.mxu0 %v1671
        %1754 = vmatmul.bf16.gmra.mxu0 %v1653
        %v1755 = vpop.f32.mrf.mxu0
        %v1756 = vadd.f32 0.0, %v1755
        %v1757 = vpop.f32.mrf.mxu0
        %v1758 = vadd.f32 0.0, %v1757
        %1759 = vdwg.mxu0
        %1760 = vmatpush.bf16.msra.mxu0 0
        %1761 = vmatpush.bf16.msra.mxu0 0
        %1762 = vmatpush.bf16.msra.mxu0 0
        %1763 = vmatpush.bf16.msra.mxu0 0
        %1764 = vmatpush.bf16.msra.mxu0 0
        %1765 = vmatpush.bf16.msra.mxu0 0
        %1766 = vmatpush.bf16.msra.mxu0 0
        %1767 = vmatpush.bf16.msra.mxu0 %v1674
        %1768 = vmatmul.bf16.gmra.mxu0 %v1653
        %v1769 = vpop.f32.mrf.mxu0
        %v1770 = vadd.f32 0.0, %v1769
        %v1771 = vpop.f32.mrf.mxu0
        %v1772 = vadd.f32 0.0, %v1771
        %1773 = vdwg.mxu0
        %v1774 = vadd.f32 %v1559, %v1686
        %v1775 = vadd.f32 %v1560, %v1700
        %v1776 = vadd.f32 %v1561, %v1714
        %v1777 = vadd.f32 %v1562, %v1728
        %v1778 = vadd.f32 %v1563, %v1742
        %v1779 = vadd.f32 %v1564, %v1756
        %v1780 = vadd.f32 %v1565, %v1770
        %v1781 = vadd.f32 %v1566, %v1688
        %v1782 = vadd.f32 %v1567, %v1702
        %v1783 = vadd.f32 %v1568, %v1716
        %v1784 = vadd.f32 %v1569, %v1730
        %v1785 = vadd.f32 %v1570, %v1744
        %v1786 = vadd.f32 %v1571, %v1758
        %v1787 = vadd.f32 %v1572, %v1772
        %v1788 = vld [vmem:[%s545] sm:$0x77]
        %v1789 = vld [vmem:[%s545 + $0x8] sm:$0x77]
        %v1790 = vld [vmem:[%s545 + $0x10] sm:$0x77]
        %v1791 = vld [vmem:[%s545 + $0x18] sm:$0x77]
        %1796 = vst [vmem:[#allocation1] ss:$2 sm:$0xff] %v1788
        %s1797 = scalar_lea.vmem [#allocation1], 16
        %1798 = vst [vmem:[%s1797] ss:$2 sm:$0xff] %v1789
        %s1799 = scalar_lea.vmem [#allocation1], 32
        %1800 = vst [vmem:[%s1799] ss:$2 sm:$0xff] %v1790
        %s1801 = scalar_lea.vmem [#allocation1], 48
        %1802 = vst [vmem:[%s1801] ss:$2 sm:$0xff] %v1791
        %v1803 = vld.sshfl [vmem:[#allocation1] sm:$0xff pattern:$0x75316420]
        %v1804 = vld.sshfl [vmem:[#allocation1 + $0x8] sm:$0xff pattern:$0x75316420]
        %v1805 = vld.sshfl [vmem:[#allocation1 + $0x10] sm:$0xff pattern:$0x75316420]
        %v1806 = vld.sshfl [vmem:[#allocation1 + $0x18] sm:$0xff pattern:$0x75316420]
        %v1807 = vld.sshfl [vmem:[#allocation1 + $0x20] sm:$0xff pattern:$0x75316420]
        %v1808 = vld.sshfl [vmem:[#allocation1 + $0x28] sm:$0xff pattern:$0x75316420]
        %v1809 = vld.sshfl [vmem:[#allocation1 + $0x30] sm:$0xff pattern:$0x75316420]
        %v1810 = vld.sshfl [vmem:[#allocation1 + $0x38] sm:$0xff pattern:$0x75316420]
        %v1819 = vpack.c.bf16 %v1803, %v1803
        %v1820 = vpack.c.bf16 %v1804, %v1804
        %v1821 = vpack.c.bf16 %v1805, %v1805
        %v1822 = vpack.c.bf16 %v1806, %v1806
        %v1823 = vpack.c.bf16 %v1807, %v1807
        %v1824 = vpack.c.bf16 %v1808, %v1808
        %v1825 = vpack.c.bf16 %v1809, %v1809
        %v1826 = vpack.c.bf16 %v1810, %v1810
        %s1827 = scalar_lea.vmem %s1, 48
        %v1828 = vld [vmem:[%s1827] sm:$0xf]
        %v1829 = vld [vmem:[%s1827 + $0x4] sm:$0xf]
        %v1832 = vunpack.c.l.b16 %v1828
        %v1833 = vunpack.c.l.b16 %v1829
        %v1834 = vpack.c.b16 %v1833, %v1832
        %1843 = vrot.lane.b32.xlu0 %v1819, 94
        %v1844 = vpop.permute.xlu0 %1843
        %1845 = vrot.lane.b32.xlu0 %v1820, 94
        %v1846 = vpop.permute.xlu0 %1845
        %1847 = vrot.lane.b32.xlu0 %v1821, 94
        %v1848 = vpop.permute.xlu0 %1847
        %1849 = vrot.lane.b32.xlu0 %v1822, 94
        %v1850 = vpop.permute.xlu0 %1849
        %1851 = vrot.lane.b32.xlu0 %v1823, 94
        %v1852 = vpop.permute.xlu0 %1851
        %1853 = vrot.lane.b32.xlu0 %v1824, 94
        %v1854 = vpop.permute.xlu0 %1853
        %1855 = vrot.lane.b32.xlu0 %v1825, 94
        %v1856 = vpop.permute.xlu0 %1855
        %1857 = vrot.lane.b32.xlu0 %v1826, 94
        %v1858 = vpop.permute.xlu0 %1857
        %vm1859 = vcmask 769024
        %v1860 = vsel %vm1859, %v1844, %v1846
        %v1861 = vsel %vm1859, %v1846, %v1848
        %v1862 = vsel %vm1859, %v1848, %v1850
        %v1863 = vsel %vm1859, %v1850, %v1852
        %v1864 = vsel %vm1859, %v1852, %v1854
        %v1865 = vsel %vm1859, %v1854, %v1856
        %v1866 = vsel %vm1859, %v1856, %v1858
        %v1868 = vsel %vm674, %v1834, 0
        %v1871 = vand.u32 %v1860, %v681
        %v1874 = vand.u32 %v1861, %v681
        %v1877 = vand.u32 %v1862, %v681
        %v1880 = vand.u32 %v1863, %v681
        %v1883 = vand.u32 %v1864, %v681
        %v1886 = vand.u32 %v1865, %v681
        %v1889 = vand.u32 %v1866, %v681
        %1891 = vmatpush.bf16.msra.mxu0 0
        %1892 = vmatpush.bf16.msra.mxu0 0
        %1893 = vmatpush.bf16.msra.mxu0 0
        %1894 = vmatpush.bf16.msra.mxu0 0
        %1895 = vmatpush.bf16.msra.mxu0 0
        %1896 = vmatpush.bf16.msra.mxu0 0
        %1897 = vmatpush.bf16.msra.mxu0 0
        %1898 = vmatpush.bf16.msra.mxu0 %v1871
        %1899 = vmatmul.bf16.gmra.mxu0 %v1868
        %v1900 = vpop.f32.mrf.mxu0
        %v1901 = vadd.f32 0.0, %v1900
        %v1902 = vpop.f32.mrf.mxu0
        %v1903 = vadd.f32 0.0, %v1902
        %1904 = vdwg.mxu0
        %1905 = vmatpush.bf16.msra.mxu0 0
        %1906 = vmatpush.bf16.msra.mxu0 0
        %1907 = vmatpush.bf16.msra.mxu0 0
        %1908 = vmatpush.bf16.msra.mxu0 0
        %1909 = vmatpush.bf16.msra.mxu0 0
        %1910 = vmatpush.bf16.msra.mxu0 0
        %1911 = vmatpush.bf16.msra.mxu0 0
        %1912 = vmatpush.bf16.msra.mxu0 %v1874
        %1913 = vmatmul.bf16.gmra.mxu0 %v1868
        %v1914 = vpop.f32.mrf.mxu0
        %v1915 = vadd.f32 0.0, %v1914
        %v1916 = vpop.f32.mrf.mxu0
        %v1917 = vadd.f32 0.0, %v1916
        %1918 = vdwg.mxu0
        %1919 = vmatpush.bf16.msra.mxu0 0
        %1920 = vmatpush.bf16.msra.mxu0 0
        %1921 = vmatpush.bf16.msra.mxu0 0
        %1922 = vmatpush.bf16.msra.mxu0 0
        %1923 = vmatpush.bf16.msra.mxu0 0
        %1924 = vmatpush.bf16.msra.mxu0 0
        %1925 = vmatpush.bf16.msra.mxu0 0
        %1926 = vmatpush.bf16.msra.mxu0 %v1877
        %1927 = vmatmul.bf16.gmra.mxu0 %v1868
        %v1928 = vpop.f32.mrf.mxu0
        %v1929 = vadd.f32 0.0, %v1928
        %v1930 = vpop.f32.mrf.mxu0
        %v1931 = vadd.f32 0.0, %v1930
        %1932 = vdwg.mxu0
        %1933 = vmatpush.bf16.msra.mxu0 0
        %1934 = vmatpush.bf16.msra.mxu0 0
        %1935 = vmatpush.bf16.msra.mxu0 0
        %1936 = vmatpush.bf16.msra.mxu0 0
        %1937 = vmatpush.bf16.msra.mxu0 0
        %1938 = vmatpush.bf16.msra.mxu0 0
        %1939 = vmatpush.bf16.msra.mxu0 0
        %1940 = vmatpush.bf16.msra.mxu0 %v1880
        %1941 = vmatmul.bf16.gmra.mxu0 %v1868
        %v1942 = vpop.f32.mrf.mxu0
        %v1943 = vadd.f32 0.0, %v1942
        %v1944 = vpop.f32.mrf.mxu0
        %v1945 = vadd.f32 0.0, %v1944
        %1946 = vdwg.mxu0
        %1947 = vmatpush.bf16.msra.mxu0 0
        %1948 = vmatpush.bf16.msra.mxu0 0
        %1949 = vmatpush.bf16.msra.mxu0 0
        %1950 = vmatpush.bf16.msra.mxu0 0
        %1951 = vmatpush.bf16.msra.mxu0 0
        %1952 = vmatpush.bf16.msra.mxu0 0
        %1953 = vmatpush.bf16.msra.mxu0 0
        %1954 = vmatpush.bf16.msra.mxu0 %v1883
        %1955 = vmatmul.bf16.gmra.mxu0 %v1868
        %v1956 = vpop.f32.mrf.mxu0
        %v1957 = vadd.f32 0.0, %v1956
        %v1958 = vpop.f32.mrf.mxu0
        %v1959 = vadd.f32 0.0, %v1958
        %1960 = vdwg.mxu0
        %1961 = vmatpush.bf16.msra.mxu0 0
        %1962 = vmatpush.bf16.msra.mxu0 0
        %1963 = vmatpush.bf16.msra.mxu0 0
        %1964 = vmatpush.bf16.msra.mxu0 0
        %1965 = vmatpush.bf16.msra.mxu0 0
        %1966 = vmatpush.bf16.msra.mxu0 0
        %1967 = vmatpush.bf16.msra.mxu0 0
        %1968 = vmatpush.bf16.msra.mxu0 %v1886
        %1969 = vmatmul.bf16.gmra.mxu0 %v1868
        %v1970 = vpop.f32.mrf.mxu0
        %v1971 = vadd.f32 0.0, %v1970
        %v1972 = vpop.f32.mrf.mxu0
        %v1973 = vadd.f32 0.0, %v1972
        %1974 = vdwg.mxu0
        %1975 = vmatpush.bf16.msra.mxu0 0
        %1976 = vmatpush.bf16.msra.mxu0 0
        %1977 = vmatpush.bf16.msra.mxu0 0
        %1978 = vmatpush.bf16.msra.mxu0 0
        %1979 = vmatpush.bf16.msra.mxu0 0
        %1980 = vmatpush.bf16.msra.mxu0 0
        %1981 = vmatpush.bf16.msra.mxu0 0
        %1982 = vmatpush.bf16.msra.mxu0 %v1889
        %1983 = vmatmul.bf16.gmra.mxu0 %v1868
        %v1984 = vpop.f32.mrf.mxu0
        %v1985 = vadd.f32 0.0, %v1984
        %v1986 = vpop.f32.mrf.mxu0
        %v1987 = vadd.f32 0.0, %v1986
        %1988 = vdwg.mxu0
        %v1989 = vadd.f32 %v1774, %v1901
        %v1990 = vadd.f32 %v1775, %v1915
        %v1991 = vadd.f32 %v1776, %v1929
        %v1992 = vadd.f32 %v1777, %v1943
        %v1993 = vadd.f32 %v1778, %v1957
        %v1994 = vadd.f32 %v1779, %v1971
        %v1995 = vadd.f32 %v1780, %v1985
        %v1996 = vadd.f32 %v1781, %v1903
        %v1997 = vadd.f32 %v1782, %v1917
        %v1998 = vadd.f32 %v1783, %v1931
        %v1999 = vadd.f32 %v1784, %v1945
        %v2000 = vadd.f32 %v1785, %v1959
        %v2001 = vadd.f32 %v1786, %v1973
        %v2002 = vadd.f32 %v1787, %v1987
        %v2003 = vld [vmem:[%s545] sm:$0x77]
        %v2004 = vld [vmem:[%s545 + $0x8] sm:$0x77]
        %v2005 = vld [vmem:[%s545 + $0x10] sm:$0x77]
        %v2006 = vld [vmem:[%s545 + $0x18] sm:$0x77]
        %2011 = vst [vmem:[#allocation1] ss:$2 sm:$0xff] %v2003
        %s2012 = scalar_lea.vmem [#allocation1], 16
        %2013 = vst [vmem:[%s2012] ss:$2 sm:$0xff] %v2004
        %s2014 = scalar_lea.vmem [#allocation1], 32
        %2015 = vst [vmem:[%s2014] ss:$2 sm:$0xff] %v2005
        %s2016 = scalar_lea.vmem [#allocation1], 48
        %2017 = vst [vmem:[%s2016] ss:$2 sm:$0xff] %v2006
        %v2018 = vld.sshfl [vmem:[#allocation1] sm:$0xff pattern:$0x75316420]
        %v2019 = vld.sshfl [vmem:[#allocation1 + $0x8] sm:$0xff pattern:$0x75316420]
        %v2020 = vld.sshfl [vmem:[#allocation1 + $0x10] sm:$0xff pattern:$0x75316420]
        %v2021 = vld.sshfl [vmem:[#allocation1 + $0x18] sm:$0xff pattern:$0x75316420]
        %v2022 = vld.sshfl [vmem:[#allocation1 + $0x20] sm:$0xff pattern:$0x75316420]
        %v2023 = vld.sshfl [vmem:[#allocation1 + $0x28] sm:$0xff pattern:$0x75316420]
        %v2024 = vld.sshfl [vmem:[#allocation1 + $0x30] sm:$0xff pattern:$0x75316420]
        %v2025 = vld.sshfl [vmem:[#allocation1 + $0x38] sm:$0xff pattern:$0x75316420]
        %v2034 = vpack.c.bf16 %v2018, %v2018
        %v2035 = vpack.c.bf16 %v2019, %v2019
        %v2036 = vpack.c.bf16 %v2020, %v2020
        %v2037 = vpack.c.bf16 %v2021, %v2021
        %v2038 = vpack.c.bf16 %v2022, %v2022
        %v2039 = vpack.c.bf16 %v2023, %v2023
        %v2040 = vpack.c.bf16 %v2024, %v2024
        %v2041 = vpack.c.bf16 %v2025, %v2025
        %s2042 = scalar_lea.vmem %s1, 56
        %v2043 = vld [vmem:[%s2042] sm:$0xf]
        %v2044 = vld [vmem:[%s2042 + $0x4] sm:$0xf]
        %v2047 = vunpack.c.l.b16 %v2043
        %v2048 = vunpack.c.l.b16 %v2044
        %v2049 = vpack.c.b16 %v2048, %v2047
        %2058 = vrot.lane.b32.xlu0 %v2034, 93
        %v2059 = vpop.permute.xlu0 %2058
        %2060 = vrot.lane.b32.xlu0 %v2035, 93
        %v2061 = vpop.permute.xlu0 %2060
        %2062 = vrot.lane.b32.xlu0 %v2036, 93
        %v2063 = vpop.permute.xlu0 %2062
        %2064 = vrot.lane.b32.xlu0 %v2037, 93
        %v2065 = vpop.permute.xlu0 %2064
        %2066 = vrot.lane.b32.xlu0 %v2038, 93
        %v2067 = vpop.permute.xlu0 %2066
        %2068 = vrot.lane.b32.xlu0 %v2039, 93
        %v2069 = vpop.permute.xlu0 %2068
        %2070 = vrot.lane.b32.xlu0 %v2040, 93
        %v2071 = vpop.permute.xlu0 %2070
        %2072 = vrot.lane.b32.xlu0 %v2041, 93
        %v2073 = vpop.permute.xlu0 %2072
        %vm2074 = vcmask 760832
        %v2075 = vsel %vm2074, %v2059, %v2061
        %v2076 = vsel %vm2074, %v2061, %v2063
        %v2077 = vsel %vm2074, %v2063, %v2065
        %v2078 = vsel %vm2074, %v2065, %v2067
        %v2079 = vsel %vm2074, %v2067, %v2069
        %v2080 = vsel %vm2074, %v2069, %v2071
        %v2081 = vsel %vm2074, %v2071, %v2073
        %v2083 = vsel %vm674, %v2049, 0
        %v2086 = vand.u32 %v2075, %v681
        %v2089 = vand.u32 %v2076, %v681
        %v2092 = vand.u32 %v2077, %v681
        %v2095 = vand.u32 %v2078, %v681
        %v2098 = vand.u32 %v2079, %v681
        %v2101 = vand.u32 %v2080, %v681
        %v2104 = vand.u32 %v2081, %v681
        %2106 = vmatpush.bf16.msra.mxu0 0
        %2107 = vmatpush.bf16.msra.mxu0 0
        %2108 = vmatpush.bf16.msra.mxu0 0
        %2109 = vmatpush.bf16.msra.mxu0 0
        %2110 = vmatpush.bf16.msra.mxu0 0
        %2111 = vmatpush.bf16.msra.mxu0 0
        %2112 = vmatpush.bf16.msra.mxu0 0
        %2113 = vmatpush.bf16.msra.mxu0 %v2086
        %2114 = vmatmul.bf16.gmra.mxu0 %v2083
        %v2115 = vpop.f32.mrf.mxu0
        %v2116 = vadd.f32 0.0, %v2115
        %v2117 = vpop.f32.mrf.mxu0
        %v2118 = vadd.f32 0.0, %v2117
        %2119 = vdwg.mxu0
        %2120 = vmatpush.bf16.msra.mxu0 0
        %2121 = vmatpush.bf16.msra.mxu0 0
        %2122 = vmatpush.bf16.msra.mxu0 0
        %2123 = vmatpush.bf16.msra.mxu0 0
        %2124 = vmatpush.bf16.msra.mxu0 0
        %2125 = vmatpush.bf16.msra.mxu0 0
        %2126 = vmatpush.bf16.msra.mxu0 0
        %2127 = vmatpush.bf16.msra.mxu0 %v2089
        %2128 = vmatmul.bf16.gmra.mxu0 %v2083
        %v2129 = vpop.f32.mrf.mxu0
        %v2130 = vadd.f32 0.0, %v2129
        %v2131 = vpop.f32.mrf.mxu0
        %v2132 = vadd.f32 0.0, %v2131
        %2133 = vdwg.mxu0
        %2134 = vmatpush.bf16.msra.mxu0 0
        %2135 = vmatpush.bf16.msra.mxu0 0
        %2136 = vmatpush.bf16.msra.mxu0 0
        %2137 = vmatpush.bf16.msra.mxu0 0
        %2138 = vmatpush.bf16.msra.mxu0 0
        %2139 = vmatpush.bf16.msra.mxu0 0
        %2140 = vmatpush.bf16.msra.mxu0 0
        %2141 = vmatpush.bf16.msra.mxu0 %v2092
        %2142 = vmatmul.bf16.gmra.mxu0 %v2083
        %v2143 = vpop.f32.mrf.mxu0
        %v2144 = vadd.f32 0.0, %v2143
        %v2145 = vpop.f32.mrf.mxu0
        %v2146 = vadd.f32 0.0, %v2145
        %2147 = vdwg.mxu0
        %2148 = vmatpush.bf16.msra.mxu0 0
        %2149 = vmatpush.bf16.msra.mxu0 0
        %2150 = vmatpush.bf16.msra.mxu0 0
        %2151 = vmatpush.bf16.msra.mxu0 0
        %2152 = vmatpush.bf16.msra.mxu0 0
        %2153 = vmatpush.bf16.msra.mxu0 0
        %2154 = vmatpush.bf16.msra.mxu0 0
        %2155 = vmatpush.bf16.msra.mxu0 %v2095
        %2156 = vmatmul.bf16.gmra.mxu0 %v2083
        %v2157 = vpop.f32.mrf.mxu0
        %v2158 = vadd.f32 0.0, %v2157
        %v2159 = vpop.f32.mrf.mxu0
        %v2160 = vadd.f32 0.0, %v2159
        %2161 = vdwg.mxu0
        %2162 = vmatpush.bf16.msra.mxu0 0
        %2163 = vmatpush.bf16.msra.mxu0 0
        %2164 = vmatpush.bf16.msra.mxu0 0
        %2165 = vmatpush.bf16.msra.mxu0 0
        %2166 = vmatpush.bf16.msra.mxu0 0
        %2167 = vmatpush.bf16.msra.mxu0 0
        %2168 = vmatpush.bf16.msra.mxu0 0
        %2169 = vmatpush.bf16.msra.mxu0 %v2098
        %2170 = vmatmul.bf16.gmra.mxu0 %v2083
        %v2171 = vpop.f32.mrf.mxu0
        %v2172 = vadd.f32 0.0, %v2171
        %v2173 = vpop.f32.mrf.mxu0
        %v2174 = vadd.f32 0.0, %v2173
        %2175 = vdwg.mxu0
        %2176 = vmatpush.bf16.msra.mxu0 0
        %2177 = vmatpush.bf16.msra.mxu0 0
        %2178 = vmatpush.bf16.msra.mxu0 0
        %2179 = vmatpush.bf16.msra.mxu0 0
        %2180 = vmatpush.bf16.msra.mxu0 0
        %2181 = vmatpush.bf16.msra.mxu0 0
        %2182 = vmatpush.bf16.msra.mxu0 0
        %2183 = vmatpush.bf16.msra.mxu0 %v2101
        %2184 = vmatmul.bf16.gmra.mxu0 %v2083
        %v2185 = vpop.f32.mrf.mxu0
        %v2186 = vadd.f32 0.0, %v2185
        %v2187 = vpop.f32.mrf.mxu0
        %v2188 = vadd.f32 0.0, %v2187
        %2189 = vdwg.mxu0
        %2190 = vmatpush.bf16.msra.mxu0 0
        %2191 = vmatpush.bf16.msra.mxu0 0
        %2192 = vmatpush.bf16.msra.mxu0 0
        %2193 = vmatpush.bf16.msra.mxu0 0
        %2194 = vmatpush.bf16.msra.mxu0 0
        %2195 = vmatpush.bf16.msra.mxu0 0
        %2196 = vmatpush.bf16.msra.mxu0 0
        %2197 = vmatpush.bf16.msra.mxu0 %v2104
        %2198 = vmatmul.bf16.gmra.mxu0 %v2083
        %v2199 = vpop.f32.mrf.mxu0
        %v2200 = vadd.f32 0.0, %v2199
        %v2201 = vpop.f32.mrf.mxu0
        %v2202 = vadd.f32 0.0, %v2201
        %2203 = vdwg.mxu0
        %v2204 = vadd.f32 %v1989, %v2116
        %v2205 = vadd.f32 %v1990, %v2130
        %v2206 = vadd.f32 %v1991, %v2144
        %v2207 = vadd.f32 %v1992, %v2158
        %v2208 = vadd.f32 %v1993, %v2172
        %v2209 = vadd.f32 %v1994, %v2186
        %v2210 = vadd.f32 %v1995, %v2200
        %v2211 = vadd.f32 %v1996, %v2118
        %v2212 = vadd.f32 %v1997, %v2132
        %v2213 = vadd.f32 %v1998, %v2146
        %v2214 = vadd.f32 %v1999, %v2160
        %v2215 = vadd.f32 %v2000, %v2174
        %v2216 = vadd.f32 %v2001, %v2188
        %v2217 = vadd.f32 %v2002, %v2202
        %v2218 = vld [vmem:[%s545] sm:$0x77]
        %v2219 = vld [vmem:[%s545 + $0x8] sm:$0x77]
        %v2220 = vld [vmem:[%s545 + $0x10] sm:$0x77]
        %v2221 = vld [vmem:[%s545 + $0x18] sm:$0x77]
        %2226 = vst [vmem:[#allocation1] ss:$2 sm:$0xff] %v2218
        %s2227 = scalar_lea.vmem [#allocation1], 16
        %2228 = vst [vmem:[%s2227] ss:$2 sm:$0xff] %v2219
        %s2229 = scalar_lea.vmem [#allocation1], 32
        %2230 = vst [vmem:[%s2229] ss:$2 sm:$0xff] %v2220
        %s2231 = scalar_lea.vmem [#allocation1], 48
        %2232 = vst [vmem:[%s2231] ss:$2 sm:$0xff] %v2221
        %v2233 = vld.sshfl [vmem:[#allocation1] sm:$0xff pattern:$0x75316420]
        %v2234 = vld.sshfl [vmem:[#allocation1 + $0x8] sm:$0xff pattern:$0x75316420]
        %v2235 = vld.sshfl [vmem:[#allocation1 + $0x10] sm:$0xff pattern:$0x75316420]
        %v2236 = vld.sshfl [vmem:[#allocation1 + $0x18] sm:$0xff pattern:$0x75316420]
        %v2237 = vld.sshfl [vmem:[#allocation1 + $0x20] sm:$0xff pattern:$0x75316420]
        %v2238 = vld.sshfl [vmem:[#allocation1 + $0x28] sm:$0xff pattern:$0x75316420]
        %v2239 = vld.sshfl [vmem:[#allocation1 + $0x30] sm:$0xff pattern:$0x75316420]
        %v2240 = vld.sshfl [vmem:[#allocation1 + $0x38] sm:$0xff pattern:$0x75316420]
        %v2249 = vpack.c.bf16 %v2233, %v2233
        %v2250 = vpack.c.bf16 %v2234, %v2234
        %v2251 = vpack.c.bf16 %v2235, %v2235
        %v2252 = vpack.c.bf16 %v2236, %v2236
        %v2253 = vpack.c.bf16 %v2237, %v2237
        %v2254 = vpack.c.bf16 %v2238, %v2238
        %v2255 = vpack.c.bf16 %v2239, %v2239
        %v2256 = vpack.c.bf16 %v2240, %v2240
        %s2257 = scalar_lea.vmem %s1, 64
        %v2258 = vld [vmem:[%s2257] sm:$0xf]
        %v2259 = vld [vmem:[%s2257 + $0x4] sm:$0xf]
        %v2262 = vunpack.c.l.b16 %v2258
        %v2263 = vunpack.c.l.b16 %v2259
        %v2264 = vpack.c.b16 %v2263, %v2262
        %2273 = vrot.lane.b32.xlu0 %v2249, 64
        %v2274 = vpop.permute.xlu0 %2273
        %2275 = vrot.lane.b32.xlu0 %v2250, 64
        %v2276 = vpop.permute.xlu0 %2275
        %2277 = vrot.lane.b32.xlu0 %v2251, 64
        %v2278 = vpop.permute.xlu0 %2277
        %2279 = vrot.lane.b32.xlu0 %v2252, 64
        %v2280 = vpop.permute.xlu0 %2279
        %2281 = vrot.lane.b32.xlu0 %v2253, 64
        %v2282 = vpop.permute.xlu0 %2281
        %2283 = vrot.lane.b32.xlu0 %v2254, 64
        %v2284 = vpop.permute.xlu0 %2283
        %2285 = vrot.lane.b32.xlu0 %v2255, 64
        %v2286 = vpop.permute.xlu0 %2285
        %2287 = vrot.lane.b32.xlu0 %v2256, 64
        %v2288 = vpop.permute.xlu0 %2287
        %vm2289 = vcmask 523264
        %v2290 = vsel %vm2289, %v2274, %v2276
        %v2291 = vsel %vm2289, %v2276, %v2278
        %v2292 = vsel %vm2289, %v2278, %v2280
        %v2293 = vsel %vm2289, %v2280, %v2282
        %v2294 = vsel %vm2289, %v2282, %v2284
        %v2295 = vsel %vm2289, %v2284, %v2286
        %v2296 = vsel %vm2289, %v2286, %v2288
        %v2298 = vsel %vm674, %v2264, 0
        %v2301 = vand.u32 %v2290, %v681
        %v2304 = vand.u32 %v2291, %v681
        %v2307 = vand.u32 %v2292, %v681
        %v2310 = vand.u32 %v2293, %v681
        %v2313 = vand.u32 %v2294, %v681
        %v2316 = vand.u32 %v2295, %v681
        %v2319 = vand.u32 %v2296, %v681
        %2321 = vmatpush.bf16.msra.mxu0 0
        %2322 = vmatpush.bf16.msra.mxu0 0
        %2323 = vmatpush.bf16.msra.mxu0 0
        %2324 = vmatpush.bf16.msra.mxu0 0
        %2325 = vmatpush.bf16.msra.mxu0 0
        %2326 = vmatpush.bf16.msra.mxu0 0
        %2327 = vmatpush.bf16.msra.mxu0 0
        %2328 = vmatpush.bf16.msra.mxu0 %v2301
        %2329 = vmatmul.bf16.gmra.mxu0 %v2298
        %v2330 = vpop.f32.mrf.mxu0
        %v2331 = vadd.f32 0.0, %v2330
        %v2332 = vpop.f32.mrf.mxu0
        %v2333 = vadd.f32 0.0, %v2332
        %2334 = vdwg.mxu0
        %2335 = vmatpush.bf16.msra.mxu0 0
        %2336 = vmatpush.bf16.msra.mxu0 0
        %2337 = vmatpush.bf16.msra.mxu0 0
        %2338 = vmatpush.bf16.msra.mxu0 0
        %2339 = vmatpush.bf16.msra.mxu0 0
        %2340 = vmatpush.bf16.msra.mxu0 0
        %2341 = vmatpush.bf16.msra.mxu0 0
        %2342 = vmatpush.bf16.msra.mxu0 %v2304
        %2343 = vmatmul.bf16.gmra.mxu0 %v2298
        %v2344 = vpop.f32.mrf.mxu0
        %v2345 = vadd.f32 0.0, %v2344
        %v2346 = vpop.f32.mrf.mxu0
        %v2347 = vadd.f32 0.0, %v2346
        %2348 = vdwg.mxu0
        %2349 = vmatpush.bf16.msra.mxu0 0
        %2350 = vmatpush.bf16.msra.mxu0 0
        %2351 = vmatpush.bf16.msra.mxu0 0
        %2352 = vmatpush.bf16.msra.mxu0 0
        %2353 = vmatpush.bf16.msra.mxu0 0
        %2354 = vmatpush.bf16.msra.mxu0 0
        %2355 = vmatpush.bf16.msra.mxu0 0
        %2356 = vmatpush.bf16.msra.mxu0 %v2307
        %2357 = vmatmul.bf16.gmra.mxu0 %v2298
        %v2358 = vpop.f32.mrf.mxu0
        %v2359 = vadd.f32 0.0, %v2358
        %v2360 = vpop.f32.mrf.mxu0
        %v2361 = vadd.f32 0.0, %v2360
        %2362 = vdwg.mxu0
        %2363 = vmatpush.bf16.msra.mxu0 0
        %2364 = vmatpush.bf16.msra.mxu0 0
        %2365 = vmatpush.bf16.msra.mxu0 0
        %2366 = vmatpush.bf16.msra.mxu0 0
        %2367 = vmatpush.bf16.msra.mxu0 0
        %2368 = vmatpush.bf16.msra.mxu0 0
        %2369 = vmatpush.bf16.msra.mxu0 0
        %2370 = vmatpush.bf16.msra.mxu0 %v2310
        %2371 = vmatmul.bf16.gmra.mxu0 %v2298
        %v2372 = vpop.f32.mrf.mxu0
        %v2373 = vadd.f32 0.0, %v2372
        %v2374 = vpop.f32.mrf.mxu0
        %v2375 = vadd.f32 0.0, %v2374
        %2376 = vdwg.mxu0
        %2377 = vmatpush.bf16.msra.mxu0 0
        %2378 = vmatpush.bf16.msra.mxu0 0
        %2379 = vmatpush.bf16.msra.mxu0 0
        %2380 = vmatpush.bf16.msra.mxu0 0
        %2381 = vmatpush.bf16.msra.mxu0 0
        %2382 = vmatpush.bf16.msra.mxu0 0
        %2383 = vmatpush.bf16.msra.mxu0 0
        %2384 = vmatpush.bf16.msra.mxu0 %v2313
        %2385 = vmatmul.bf16.gmra.mxu0 %v2298
        %v2386 = vpop.f32.mrf.mxu0
        %v2387 = vadd.f32 0.0, %v2386
        %v2388 = vpop.f32.mrf.mxu0
        %v2389 = vadd.f32 0.0, %v2388
        %2390 = vdwg.mxu0
        %2391 = vmatpush.bf16.msra.mxu0 0
        %2392 = vmatpush.bf16.msra.mxu0 0
        %2393 = vmatpush.bf16.msra.mxu0 0
        %2394 = vmatpush.bf16.msra.mxu0 0
        %2395 = vmatpush.bf16.msra.mxu0 0
        %2396 = vmatpush.bf16.msra.mxu0 0
        %2397 = vmatpush.bf16.msra.mxu0 0
        %2398 = vmatpush.bf16.msra.mxu0 %v2316
        %2399 = vmatmul.bf16.gmra.mxu0 %v2298
        %v2400 = vpop.f32.mrf.mxu0
        %v2401 = vadd.f32 0.0, %v2400
        %v2402 = vpop.f32.mrf.mxu0
        %v2403 = vadd.f32 0.0, %v2402
        %2404 = vdwg.mxu0
        %2405 = vmatpush.bf16.msra.mxu0 0
        %2406 = vmatpush.bf16.msra.mxu0 0
        %2407 = vmatpush.bf16.msra.mxu0 0
        %2408 = vmatpush.bf16.msra.mxu0 0
        %2409 = vmatpush.bf16.msra.mxu0 0
        %2410 = vmatpush.bf16.msra.mxu0 0
        %2411 = vmatpush.bf16.msra.mxu0 0
        %2412 = vmatpush.bf16.msra.mxu0 %v2319
        %2413 = vmatmul.bf16.gmra.mxu0 %v2298
        %v2414 = vpop.f32.mrf.mxu0
        %v2415 = vadd.f32 0.0, %v2414
        %v2416 = vpop.f32.mrf.mxu0
        %v2417 = vadd.f32 0.0, %v2416
        %2418 = vdwg.mxu0
        %v2419 = vadd.f32 %v2204, %v2331
        %v2420 = vadd.f32 %v2205, %v2345
        %v2421 = vadd.f32 %v2206, %v2359
        %v2422 = vadd.f32 %v2207, %v2373
        %v2423 = vadd.f32 %v2208, %v2387
        %v2424 = vadd.f32 %v2209, %v2401
        %v2425 = vadd.f32 %v2210, %v2415
        %v2426 = vadd.f32 %v2211, %v2333
        %v2427 = vadd.f32 %v2212, %v2347
        %v2428 = vadd.f32 %v2213, %v2361
        %v2429 = vadd.f32 %v2214, %v2375
        %v2430 = vadd.f32 %v2215, %v2389
        %v2431 = vadd.f32 %v2216, %v2403
        %v2432 = vadd.f32 %v2217, %v2417
        %v2433 = vld [vmem:[%s545] sm:$0x77]
        %v2434 = vld [vmem:[%s545 + $0x8] sm:$0x77]
        %v2435 = vld [vmem:[%s545 + $0x10] sm:$0x77]
        %v2436 = vld [vmem:[%s545 + $0x18] sm:$0x77]
        %2441 = vst [vmem:[#allocation1] ss:$2 sm:$0xff] %v2433
        %s2442 = scalar_lea.vmem [#allocation1], 16
        %2443 = vst [vmem:[%s2442] ss:$2 sm:$0xff] %v2434
        %s2444 = scalar_lea.vmem [#allocation1], 32
        %2445 = vst [vmem:[%s2444] ss:$2 sm:$0xff] %v2435
        %s2446 = scalar_lea.vmem [#allocation1], 48
        %2447 = vst [vmem:[%s2446] ss:$2 sm:$0xff] %v2436
        %v2448 = vld.sshfl [vmem:[#allocation1] sm:$0xff pattern:$0x75316420]
        %v2449 = vld.sshfl [vmem:[#allocation1 + $0x8] sm:$0xff pattern:$0x75316420]
        %v2450 = vld.sshfl [vmem:[#allocation1 + $0x10] sm:$0xff pattern:$0x75316420]
        %v2451 = vld.sshfl [vmem:[#allocation1 + $0x18] sm:$0xff pattern:$0x75316420]
        %v2452 = vld.sshfl [vmem:[#allocation1 + $0x20] sm:$0xff pattern:$0x75316420]
        %v2453 = vld.sshfl [vmem:[#allocation1 + $0x28] sm:$0xff pattern:$0x75316420]
        %v2454 = vld.sshfl [vmem:[#allocation1 + $0x30] sm:$0xff pattern:$0x75316420]
        %v2455 = vld.sshfl [vmem:[#allocation1 + $0x38] sm:$0xff pattern:$0x75316420]
        %v2464 = vpack.c.bf16 %v2448, %v2448
        %v2465 = vpack.c.bf16 %v2449, %v2449
        %v2466 = vpack.c.bf16 %v2450, %v2450
        %v2467 = vpack.c.bf16 %v2451, %v2451
        %v2468 = vpack.c.bf16 %v2452, %v2452
        %v2469 = vpack.c.bf16 %v2453, %v2453
        %v2470 = vpack.c.bf16 %v2454, %v2454
        %v2471 = vpack.c.bf16 %v2455, %v2455
        %s2472 = scalar_lea.vmem %s1, 72
        %v2473 = vld [vmem:[%s2472] sm:$0xf]
        %v2474 = vld [vmem:[%s2472 + $0x4] sm:$0xf]
        %v2477 = vunpack.c.l.b16 %v2473
        %v2478 = vunpack.c.l.b16 %v2474
        %v2479 = vpack.c.b16 %v2478, %v2477
        %2488 = vrot.lane.b32.xlu0 %v2464, 63
        %v2489 = vpop.permute.xlu0 %2488
        %2490 = vrot.lane.b32.xlu0 %v2465, 63
        %v2491 = vpop.permute.xlu0 %2490
        %2492 = vrot.lane.b32.xlu0 %v2466, 63
        %v2493 = vpop.permute.xlu0 %2492
        %2494 = vrot.lane.b32.xlu0 %v2467, 63
        %v2495 = vpop.permute.xlu0 %2494
        %2496 = vrot.lane.b32.xlu0 %v2468, 63
        %v2497 = vpop.permute.xlu0 %2496
        %2498 = vrot.lane.b32.xlu0 %v2469, 63
        %v2499 = vpop.permute.xlu0 %2498
        %2500 = vrot.lane.b32.xlu0 %v2470, 63
        %v2501 = vpop.permute.xlu0 %2500
        %2502 = vrot.lane.b32.xlu0 %v2471, 63
        %v2503 = vpop.permute.xlu0 %2502
        %vm2504 = vcmask 515072
        %v2505 = vsel %vm2504, %v2489, %v2491
        %v2506 = vsel %vm2504, %v2491, %v2493
        %v2507 = vsel %vm2504, %v2493, %v2495
        %v2508 = vsel %vm2504, %v2495, %v2497
        %v2509 = vsel %vm2504, %v2497, %v2499
        %v2510 = vsel %vm2504, %v2499, %v2501
        %v2511 = vsel %vm2504, %v2501, %v2503
        %v2513 = vsel %vm674, %v2479, 0
        %v2516 = vand.u32 %v2505, %v681
        %v2519 = vand.u32 %v2506, %v681
        %v2522 = vand.u32 %v2507, %v681
        %v2525 = vand.u32 %v2508, %v681
        %v2528 = vand.u32 %v2509, %v681
        %v2531 = vand.u32 %v2510, %v681
        %v2534 = vand.u32 %v2511, %v681
        %2536 = vmatpush.bf16.msra.mxu0 0
        %2537 = vmatpush.bf16.msra.mxu0 0
        %2538 = vmatpush.bf16.msra.mxu0 0
        %2539 = vmatpush.bf16.msra.mxu0 0
        %2540 = vmatpush.bf16.msra.mxu0 0
        %2541 = vmatpush.bf16.msra.mxu0 0
        %2542 = vmatpush.bf16.msra.mxu0 0
        %2543 = vmatpush.bf16.msra.mxu0 %v2516
        %2544 = vmatmul.bf16.gmra.mxu0 %v2513
        %v2545 = vpop.f32.mrf.mxu0
        %v2546 = vadd.f32 0.0, %v2545
        %v2547 = vpop.f32.mrf.mxu0
        %v2548 = vadd.f32 0.0, %v2547
        %2549 = vdwg.mxu0
        %2550 = vmatpush.bf16.msra.mxu0 0
        %2551 = vmatpush.bf16.msra.mxu0 0
        %2552 = vmatpush.bf16.msra.mxu0 0
        %2553 = vmatpush.bf16.msra.mxu0 0
        %2554 = vmatpush.bf16.msra.mxu0 0
        %2555 = vmatpush.bf16.msra.mxu0 0
        %2556 = vmatpush.bf16.msra.mxu0 0
        %2557 = vmatpush.bf16.msra.mxu0 %v2519
        %2558 = vmatmul.bf16.gmra.mxu0 %v2513
        %v2559 = vpop.f32.mrf.mxu0
        %v2560 = vadd.f32 0.0, %v2559
        %v2561 = vpop.f32.mrf.mxu0
        %v2562 = vadd.f32 0.0, %v2561
        %2563 = vdwg.mxu0
        %2564 = vmatpush.bf16.msra.mxu0 0
        %2565 = vmatpush.bf16.msra.mxu0 0
        %2566 = vmatpush.bf16.msra.mxu0 0
        %2567 = vmatpush.bf16.msra.mxu0 0
        %2568 = vmatpush.bf16.msra.mxu0 0
        %2569 = vmatpush.bf16.msra.mxu0 0
        %2570 = vmatpush.bf16.msra.mxu0 0
        %2571 = vmatpush.bf16.msra.mxu0 %v2522
        %2572 = vmatmul.bf16.gmra.mxu0 %v2513
        %v2573 = vpop.f32.mrf.mxu0
        %v2574 = vadd.f32 0.0, %v2573
        %v2575 = vpop.f32.mrf.mxu0
        %v2576 = vadd.f32 0.0, %v2575
        %2577 = vdwg.mxu0
        %2578 = vmatpush.bf16.msra.mxu0 0
        %2579 = vmatpush.bf16.msra.mxu0 0
        %2580 = vmatpush.bf16.msra.mxu0 0
        %2581 = vmatpush.bf16.msra.mxu0 0
        %2582 = vmatpush.bf16.msra.mxu0 0
        %2583 = vmatpush.bf16.msra.mxu0 0
        %2584 = vmatpush.bf16.msra.mxu0 0
        %2585 = vmatpush.bf16.msra.mxu0 %v2525
        %2586 = vmatmul.bf16.gmra.mxu0 %v2513
        %v2587 = vpop.f32.mrf.mxu0
        %v2588 = vadd.f32 0.0, %v2587
        %v2589 = vpop.f32.mrf.mxu0
        %v2590 = vadd.f32 0.0, %v2589
        %2591 = vdwg.mxu0
        %2592 = vmatpush.bf16.msra.mxu0 0
        %2593 = vmatpush.bf16.msra.mxu0 0
        %2594 = vmatpush.bf16.msra.mxu0 0
        %2595 = vmatpush.bf16.msra.mxu0 0
        %2596 = vmatpush.bf16.msra.mxu0 0
        %2597 = vmatpush.bf16.msra.mxu0 0
        %2598 = vmatpush.bf16.msra.mxu0 0
        %2599 = vmatpush.bf16.msra.mxu0 %v2528
        %2600 = vmatmul.bf16.gmra.mxu0 %v2513
        %v2601 = vpop.f32.mrf.mxu0
        %v2602 = vadd.f32 0.0, %v2601
        %v2603 = vpop.f32.mrf.mxu0
        %v2604 = vadd.f32 0.0, %v2603
        %2605 = vdwg.mxu0
        %2606 = vmatpush.bf16.msra.mxu0 0
        %2607 = vmatpush.bf16.msra.mxu0 0
        %2608 = vmatpush.bf16.msra.mxu0 0
        %2609 = vmatpush.bf16.msra.mxu0 0
        %2610 = vmatpush.bf16.msra.mxu0 0
        %2611 = vmatpush.bf16.msra.mxu0 0
        %2612 = vmatpush.bf16.msra.mxu0 0
        %2613 = vmatpush.bf16.msra.mxu0 %v2531
        %2614 = vmatmul.bf16.gmra.mxu0 %v2513
        %v2615 = vpop.f32.mrf.mxu0
        %v2616 = vadd.f32 0.0, %v2615
        %v2617 = vpop.f32.mrf.mxu0
        %v2618 = vadd.f32 0.0, %v2617
        %2619 = vdwg.mxu0
        %2620 = vmatpush.bf16.msra.mxu0 0
        %2621 = vmatpush.bf16.msra.mxu0 0
        %2622 = vmatpush.bf16.msra.mxu0 0
        %2623 = vmatpush.bf16.msra.mxu0 0
        %2624 = vmatpush.bf16.msra.mxu0 0
        %2625 = vmatpush.bf16.msra.mxu0 0
        %2626 = vmatpush.bf16.msra.mxu0 0
        %2627 = vmatpush.bf16.msra.mxu0 %v2534
        %2628 = vmatmul.bf16.gmra.mxu0 %v2513
        %v2629 = vpop.f32.mrf.mxu0
        %v2630 = vadd.f32 0.0, %v2629
        %v2631 = vpop.f32.mrf.mxu0
        %v2632 = vadd.f32 0.0, %v2631
        %2633 = vdwg.mxu0
        %v2634 = vadd.f32 %v2419, %v2546
        %v2635 = vadd.f32 %v2420, %v2560
        %v2636 = vadd.f32 %v2421, %v2574
        %v2637 = vadd.f32 %v2422, %v2588
        %v2638 = vadd.f32 %v2423, %v2602
        %v2639 = vadd.f32 %v2424, %v2616
        %v2640 = vadd.f32 %v2425, %v2630
        %v2641 = vadd.f32 %v2426, %v2548
        %v2642 = vadd.f32 %v2427, %v2562
        %v2643 = vadd.f32 %v2428, %v2576
        %v2644 = vadd.f32 %v2429, %v2590
        %v2645 = vadd.f32 %v2430, %v2604
        %v2646 = vadd.f32 %v2431, %v2618
        %v2647 = vadd.f32 %v2432, %v2632
        %v2648 = vld [vmem:[%s545] sm:$0x77]
        %v2649 = vld [vmem:[%s545 + $0x8] sm:$0x77]
        %v2650 = vld [vmem:[%s545 + $0x10] sm:$0x77]
        %v2651 = vld [vmem:[%s545 + $0x18] sm:$0x77]
        %2656 = vst [vmem:[#allocation1] ss:$2 sm:$0xff] %v2648
        %s2657 = scalar_lea.vmem [#allocation1], 16
        %2658 = vst [vmem:[%s2657] ss:$2 sm:$0xff] %v2649
        %s2659 = scalar_lea.vmem [#allocation1], 32
        %2660 = vst [vmem:[%s2659] ss:$2 sm:$0xff] %v2650
        %s2661 = scalar_lea.vmem [#allocation1], 48
        %2662 = vst [vmem:[%s2661] ss:$2 sm:$0xff] %v2651
        %v2663 = vld.sshfl [vmem:[#allocation1] sm:$0xff pattern:$0x75316420]
        %v2664 = vld.sshfl [vmem:[#allocation1 + $0x8] sm:$0xff pattern:$0x75316420]
        %v2665 = vld.sshfl [vmem:[#allocation1 + $0x10] sm:$0xff pattern:$0x75316420]
        %v2666 = vld.sshfl [vmem:[#allocation1 + $0x18] sm:$0xff pattern:$0x75316420]
        %v2667 = vld.sshfl [vmem:[#allocation1 + $0x20] sm:$0xff pattern:$0x75316420]
        %v2668 = vld.sshfl [vmem:[#allocation1 + $0x28] sm:$0xff pattern:$0x75316420]
        %v2669 = vld.sshfl [vmem:[#allocation1 + $0x30] sm:$0xff pattern:$0x75316420]
        %v2670 = vld.sshfl [vmem:[#allocation1 + $0x38] sm:$0xff pattern:$0x75316420]
        %v2679 = vpack.c.bf16 %v2663, %v2663
        %v2680 = vpack.c.bf16 %v2664, %v2664
        %v2681 = vpack.c.bf16 %v2665, %v2665
        %v2682 = vpack.c.bf16 %v2666, %v2666
        %v2683 = vpack.c.bf16 %v2667, %v2667
        %v2684 = vpack.c.bf16 %v2668, %v2668
        %v2685 = vpack.c.bf16 %v2669, %v2669
        %v2686 = vpack.c.bf16 %v2670, %v2670
        %s2687 = scalar_lea.vmem %s1, 80
        %v2688 = vld [vmem:[%s2687] sm:$0xf]
        %v2689 = vld [vmem:[%s2687 + $0x4] sm:$0xf]
        %v2692 = vunpack.c.l.b16 %v2688
        %v2693 = vunpack.c.l.b16 %v2689
        %v2694 = vpack.c.b16 %v2693, %v2692
        %2703 = vrot.lane.b32.xlu0 %v2679, 62
        %v2704 = vpop.permute.xlu0 %2703
        %2705 = vrot.lane.b32.xlu0 %v2680, 62
        %v2706 = vpop.permute.xlu0 %2705
        %2707 = vrot.lane.b32.xlu0 %v2681, 62
        %v2708 = vpop.permute.xlu0 %2707
        %2709 = vrot.lane.b32.xlu0 %v2682, 62
        %v2710 = vpop.permute.xlu0 %2709
        %2711 = vrot.lane.b32.xlu0 %v2683, 62
        %v2712 = vpop.permute.xlu0 %2711
        %2713 = vrot.lane.b32.xlu0 %v2684, 62
        %v2714 = vpop.permute.xlu0 %2713
        %2715 = vrot.lane.b32.xlu0 %v2685, 62
        %v2716 = vpop.permute.xlu0 %2715
        %2717 = vrot.lane.b32.xlu0 %v2686, 62
        %v2718 = vpop.permute.xlu0 %2717
        %vm2719 = vcmask 506880
        %v2720 = vsel %vm2719, %v2704, %v2706
        %v2721 = vsel %vm2719, %v2706, %v2708
        %v2722 = vsel %vm2719, %v2708, %v2710
        %v2723 = vsel %vm2719, %v2710, %v2712
        %v2724 = vsel %vm2719, %v2712, %v2714
        %v2725 = vsel %vm2719, %v2714, %v2716
        %v2726 = vsel %vm2719, %v2716, %v2718
        %v2728 = vsel %vm674, %v2694, 0
        %v2731 = vand.u32 %v2720, %v681
        %v2734 = vand.u32 %v2721, %v681
        %v2737 = vand.u32 %v2722, %v681
        %v2740 = vand.u32 %v2723, %v681
        %v2743 = vand.u32 %v2724, %v681
        %v2746 = vand.u32 %v2725, %v681
        %v2749 = vand.u32 %v2726, %v681
        %2751 = vmatpush.bf16.msra.mxu0 0
        %2752 = vmatpush.bf16.msra.mxu0 0
        %2753 = vmatpush.bf16.msra.mxu0 0
        %2754 = vmatpush.bf16.msra.mxu0 0
        %2755 = vmatpush.bf16.msra.mxu0 0
        %2756 = vmatpush.bf16.msra.mxu0 0
        %2757 = vmatpush.bf16.msra.mxu0 0
        %2758 = vmatpush.bf16.msra.mxu0 %v2731
        %2759 = vmatmul.bf16.gmra.mxu0 %v2728
        %v2760 = vpop.f32.mrf.mxu0
        %v2761 = vadd.f32 0.0, %v2760
        %v2762 = vpop.f32.mrf.mxu0
        %v2763 = vadd.f32 0.0, %v2762
        %2764 = vdwg.mxu0
        %2765 = vmatpush.bf16.msra.mxu0 0
        %2766 = vmatpush.bf16.msra.mxu0 0
        %2767 = vmatpush.bf16.msra.mxu0 0
        %2768 = vmatpush.bf16.msra.mxu0 0
        %2769 = vmatpush.bf16.msra.mxu0 0
        %2770 = vmatpush.bf16.msra.mxu0 0
        %2771 = vmatpush.bf16.msra.mxu0 0
        %2772 = vmatpush.bf16.msra.mxu0 %v2734
        %2773 = vmatmul.bf16.gmra.mxu0 %v2728
        %v2774 = vpop.f32.mrf.mxu0
        %v2775 = vadd.f32 0.0, %v2774
        %v2776 = vpop.f32.mrf.mxu0
        %v2777 = vadd.f32 0.0, %v2776
        %2778 = vdwg.mxu0
        %2779 = vmatpush.bf16.msra.mxu0 0
        %2780 = vmatpush.bf16.msra.mxu0 0
        %2781 = vmatpush.bf16.msra.mxu0 0
        %2782 = vmatpush.bf16.msra.mxu0 0
        %2783 = vmatpush.bf16.msra.mxu0 0
        %2784 = vmatpush.bf16.msra.mxu0 0
        %2785 = vmatpush.bf16.msra.mxu0 0
        %2786 = vmatpush.bf16.msra.mxu0 %v2737
        %2787 = vmatmul.bf16.gmra.mxu0 %v2728
        %v2788 = vpop.f32.mrf.mxu0
        %v2789 = vadd.f32 0.0, %v2788
        %v2790 = vpop.f32.mrf.mxu0
        %v2791 = vadd.f32 0.0, %v2790
        %2792 = vdwg.mxu0
        %2793 = vmatpush.bf16.msra.mxu0 0
        %2794 = vmatpush.bf16.msra.mxu0 0
        %2795 = vmatpush.bf16.msra.mxu0 0
        %2796 = vmatpush.bf16.msra.mxu0 0
        %2797 = vmatpush.bf16.msra.mxu0 0
        %2798 = vmatpush.bf16.msra.mxu0 0
        %2799 = vmatpush.bf16.msra.mxu0 0
        %2800 = vmatpush.bf16.msra.mxu0 %v2740
        %2801 = vmatmul.bf16.gmra.mxu0 %v2728
        %v2802 = vpop.f32.mrf.mxu0
        %v2803 = vadd.f32 0.0, %v2802
        %v2804 = vpop.f32.mrf.mxu0
        %v2805 = vadd.f32 0.0, %v2804
        %2806 = vdwg.mxu0
        %2807 = vmatpush.bf16.msra.mxu0 0
        %2808 = vmatpush.bf16.msra.mxu0 0
        %2809 = vmatpush.bf16.msra.mxu0 0
        %2810 = vmatpush.bf16.msra.mxu0 0
        %2811 = vmatpush.bf16.msra.mxu0 0
        %2812 = vmatpush.bf16.msra.mxu0 0
        %2813 = vmatpush.bf16.msra.mxu0 0
        %2814 = vmatpush.bf16.msra.mxu0 %v2743
        %2815 = vmatmul.bf16.gmra.mxu0 %v2728
        %v2816 = vpop.f32.mrf.mxu0
        %v2817 = vadd.f32 0.0, %v2816
        %v2818 = vpop.f32.mrf.mxu0
        %v2819 = vadd.f32 0.0, %v2818
        %2820 = vdwg.mxu0
        %2821 = vmatpush.bf16.msra.mxu0 0
        %2822 = vmatpush.bf16.msra.mxu0 0
        %2823 = vmatpush.bf16.msra.mxu0 0
        %2824 = vmatpush.bf16.msra.mxu0 0
        %2825 = vmatpush.bf16.msra.mxu0 0
        %2826 = vmatpush.bf16.msra.mxu0 0
        %2827 = vmatpush.bf16.msra.mxu0 0
        %2828 = vmatpush.bf16.msra.mxu0 %v2746
        %2829 = vmatmul.bf16.gmra.mxu0 %v2728
        %v2830 = vpop.f32.mrf.mxu0
        %v2831 = vadd.f32 0.0, %v2830
        %v2832 = vpop.f32.mrf.mxu0
        %v2833 = vadd.f32 0.0, %v2832
        %2834 = vdwg.mxu0
        %2835 = vmatpush.bf16.msra.mxu0 0
        %2836 = vmatpush.bf16.msra.mxu0 0
        %2837 = vmatpush.bf16.msra.mxu0 0
        %2838 = vmatpush.bf16.msra.mxu0 0
        %2839 = vmatpush.bf16.msra.mxu0 0
        %2840 = vmatpush.bf16.msra.mxu0 0
        %2841 = vmatpush.bf16.msra.mxu0 0
        %2842 = vmatpush.bf16.msra.mxu0 %v2749
        %2843 = vmatmul.bf16.gmra.mxu0 %v2728
        %v2844 = vpop.f32.mrf.mxu0
        %v2845 = vadd.f32 0.0, %v2844
        %v2846 = vpop.f32.mrf.mxu0
        %v2847 = vadd.f32 0.0, %v2846
        %2848 = vdwg.mxu0
        %v2849 = vadd.f32 %v2634, %v2761
        %v2850 = vadd.f32 %v2635, %v2775
        %v2851 = vadd.f32 %v2636, %v2789
        %v2852 = vadd.f32 %v2637, %v2803
        %v2853 = vadd.f32 %v2638, %v2817
        %v2854 = vadd.f32 %v2639, %v2831
        %v2855 = vadd.f32 %v2640, %v2845
        %v2856 = vadd.f32 %v2641, %v2763
        %v2857 = vadd.f32 %v2642, %v2777
        %v2858 = vadd.f32 %v2643, %v2791
        %v2859 = vadd.f32 %v2644, %v2805
        %v2860 = vadd.f32 %v2645, %v2819
        %v2861 = vadd.f32 %v2646, %v2833
        %v2862 = vadd.f32 %v2647, %v2847
        %v2863 = vld [vmem:[%s545] sm:$0x77]
        %v2864 = vld [vmem:[%s545 + $0x8] sm:$0x77]
        %v2865 = vld [vmem:[%s545 + $0x10] sm:$0x77]
        %v2866 = vld [vmem:[%s545 + $0x18] sm:$0x77]
        %2871 = vst [vmem:[#allocation1] ss:$2 sm:$0xff] %v2863
        %s2872 = scalar_lea.vmem [#allocation1], 16
        %2873 = vst [vmem:[%s2872] ss:$2 sm:$0xff] %v2864
        %s2874 = scalar_lea.vmem [#allocation1], 32
        %2875 = vst [vmem:[%s2874] ss:$2 sm:$0xff] %v2865
        %s2876 = scalar_lea.vmem [#allocation1], 48
        %2877 = vst [vmem:[%s2876] ss:$2 sm:$0xff] %v2866
        %v2878 = vld.sshfl [vmem:[#allocation1] sm:$0xff pattern:$0x75316420]
        %v2879 = vld.sshfl [vmem:[#allocation1 + $0x8] sm:$0xff pattern:$0x75316420]
        %v2880 = vld.sshfl [vmem:[#allocation1 + $0x10] sm:$0xff pattern:$0x75316420]
        %v2881 = vld.sshfl [vmem:[#allocation1 + $0x18] sm:$0xff pattern:$0x75316420]
        %v2882 = vld.sshfl [vmem:[#allocation1 + $0x20] sm:$0xff pattern:$0x75316420]
        %v2883 = vld.sshfl [vmem:[#allocation1 + $0x28] sm:$0xff pattern:$0x75316420]
        %v2884 = vld.sshfl [vmem:[#allocation1 + $0x30] sm:$0xff pattern:$0x75316420]
        %v2885 = vld.sshfl [vmem:[#allocation1 + $0x38] sm:$0xff pattern:$0x75316420]
        %v2894 = vpack.c.bf16 %v2878, %v2878
        %v2895 = vpack.c.bf16 %v2879, %v2879
        %v2896 = vpack.c.bf16 %v2880, %v2880
        %v2897 = vpack.c.bf16 %v2881, %v2881
        %v2898 = vpack.c.bf16 %v2882, %v2882
        %v2899 = vpack.c.bf16 %v2883, %v2883
        %v2900 = vpack.c.bf16 %v2884, %v2884
        %v2901 = vpack.c.bf16 %v2885, %v2885
        %s2902 = scalar_lea.vmem %s1, 88
        %v2903 = vld [vmem:[%s2902] sm:$0xf]
        %v2904 = vld [vmem:[%s2902 + $0x4] sm:$0xf]
        %v2907 = vunpack.c.l.b16 %v2903
        %v2908 = vunpack.c.l.b16 %v2904
        %v2909 = vpack.c.b16 %v2908, %v2907
        %2918 = vrot.lane.b32.xlu0 %v2894, 61
        %v2919 = vpop.permute.xlu0 %2918
        %2920 = vrot.lane.b32.xlu0 %v2895, 61
        %v2921 = vpop.permute.xlu0 %2920
        %2922 = vrot.lane.b32.xlu0 %v2896, 61
        %v2923 = vpop.permute.xlu0 %2922
        %2924 = vrot.lane.b32.xlu0 %v2897, 61
        %v2925 = vpop.permute.xlu0 %2924
        %2926 = vrot.lane.b32.xlu0 %v2898, 61
        %v2927 = vpop.permute.xlu0 %2926
        %2928 = vrot.lane.b32.xlu0 %v2899, 61
        %v2929 = vpop.permute.xlu0 %2928
        %2930 = vrot.lane.b32.xlu0 %v2900, 61
        %v2931 = vpop.permute.xlu0 %2930
        %2932 = vrot.lane.b32.xlu0 %v2901, 61
        %v2933 = vpop.permute.xlu0 %2932
        %vm2934 = vcmask 498688
        %v2935 = vsel %vm2934, %v2919, %v2921
        %v2936 = vsel %vm2934, %v2921, %v2923
        %v2937 = vsel %vm2934, %v2923, %v2925
        %v2938 = vsel %vm2934, %v2925, %v2927
        %v2939 = vsel %vm2934, %v2927, %v2929
        %v2940 = vsel %vm2934, %v2929, %v2931
        %v2941 = vsel %vm2934, %v2931, %v2933
        %v2943 = vsel %vm674, %v2909, 0
        %v2946 = vand.u32 %v2935, %v681
        %v2949 = vand.u32 %v2936, %v681
        %v2952 = vand.u32 %v2937, %v681
        %v2955 = vand.u32 %v2938, %v681
        %v2958 = vand.u32 %v2939, %v681
        %v2961 = vand.u32 %v2940, %v681
        %v2964 = vand.u32 %v2941, %v681
        %2966 = vmatpush.bf16.msra.mxu0 0
        %2967 = vmatpush.bf16.msra.mxu0 0
        %2968 = vmatpush.bf16.msra.mxu0 0
        %2969 = vmatpush.bf16.msra.mxu0 0
        %2970 = vmatpush.bf16.msra.mxu0 0
        %2971 = vmatpush.bf16.msra.mxu0 0
        %2972 = vmatpush.bf16.msra.mxu0 0
        %2973 = vmatpush.bf16.msra.mxu0 %v2946
        %2974 = vmatmul.bf16.gmra.mxu0 %v2943
        %v2975 = vpop.f32.mrf.mxu0
        %v2976 = vadd.f32 0.0, %v2975
        %v2977 = vpop.f32.mrf.mxu0
        %v2978 = vadd.f32 0.0, %v2977
        %2979 = vdwg.mxu0
        %2980 = vmatpush.bf16.msra.mxu0 0
        %2981 = vmatpush.bf16.msra.mxu0 0
        %2982 = vmatpush.bf16.msra.mxu0 0
        %2983 = vmatpush.bf16.msra.mxu0 0
        %2984 = vmatpush.bf16.msra.mxu0 0
        %2985 = vmatpush.bf16.msra.mxu0 0
        %2986 = vmatpush.bf16.msra.mxu0 0
        %2987 = vmatpush.bf16.msra.mxu0 %v2949
        %2988 = vmatmul.bf16.gmra.mxu0 %v2943
        %v2989 = vpop.f32.mrf.mxu0
        %v2990 = vadd.f32 0.0, %v2989
        %v2991 = vpop.f32.mrf.mxu0
        %v2992 = vadd.f32 0.0, %v2991
        %2993 = vdwg.mxu0
        %2994 = vmatpush.bf16.msra.mxu0 0
        %2995 = vmatpush.bf16.msra.mxu0 0
        %2996 = vmatpush.bf16.msra.mxu0 0
        %2997 = vmatpush.bf16.msra.mxu0 0
        %2998 = vmatpush.bf16.msra.mxu0 0
        %2999 = vmatpush.bf16.msra.mxu0 0
        %3000 = vmatpush.bf16.msra.mxu0 0
        %3001 = vmatpush.bf16.msra.mxu0 %v2952
        %3002 = vmatmul.bf16.gmra.mxu0 %v2943
        %v3003 = vpop.f32.mrf.mxu0
        %v3004 = vadd.f32 0.0, %v3003
        %v3005 = vpop.f32.mrf.mxu0
        %v3006 = vadd.f32 0.0, %v3005
        %3007 = vdwg.mxu0
        %3008 = vmatpush.bf16.msra.mxu0 0
        %3009 = vmatpush.bf16.msra.mxu0 0
        %3010 = vmatpush.bf16.msra.mxu0 0
        %3011 = vmatpush.bf16.msra.mxu0 0
        %3012 = vmatpush.bf16.msra.mxu0 0
        %3013 = vmatpush.bf16.msra.mxu0 0
        %3014 = vmatpush.bf16.msra.mxu0 0
        %3015 = vmatpush.bf16.msra.mxu0 %v2955
        %3016 = vmatmul.bf16.gmra.mxu0 %v2943
        %v3017 = vpop.f32.mrf.mxu0
        %v3018 = vadd.f32 0.0, %v3017
        %v3019 = vpop.f32.mrf.mxu0
        %v3020 = vadd.f32 0.0, %v3019
        %3021 = vdwg.mxu0
        %3022 = vmatpush.bf16.msra.mxu0 0
        %3023 = vmatpush.bf16.msra.mxu0 0
        %3024 = vmatpush.bf16.msra.mxu0 0
        %3025 = vmatpush.bf16.msra.mxu0 0
        %3026 = vmatpush.bf16.msra.mxu0 0
        %3027 = vmatpush.bf16.msra.mxu0 0
        %3028 = vmatpush.bf16.msra.mxu0 0
        %3029 = vmatpush.bf16.msra.mxu0 %v2958
        %3030 = vmatmul.bf16.gmra.mxu0 %v2943
        %v3031 = vpop.f32.mrf.mxu0
        %v3032 = vadd.f32 0.0, %v3031
        %v3033 = vpop.f32.mrf.mxu0
        %v3034 = vadd.f32 0.0, %v3033
        %3035 = vdwg.mxu0
        %3036 = vmatpush.bf16.msra.mxu0 0
        %3037 = vmatpush.bf16.msra.mxu0 0
        %3038 = vmatpush.bf16.msra.mxu0 0
        %3039 = vmatpush.bf16.msra.mxu0 0
        %3040 = vmatpush.bf16.msra.mxu0 0
        %3041 = vmatpush.bf16.msra.mxu0 0
        %3042 = vmatpush.bf16.msra.mxu0 0
        %3043 = vmatpush.bf16.msra.mxu0 %v2961
        %3044 = vmatmul.bf16.gmra.mxu0 %v2943
        %v3045 = vpop.f32.mrf.mxu0
        %v3046 = vadd.f32 0.0, %v3045
        %v3047 = vpop.f32.mrf.mxu0
        %v3048 = vadd.f32 0.0, %v3047
        %3049 = vdwg.mxu0
        %3050 = vmatpush.bf16.msra.mxu0 0
        %3051 = vmatpush.bf16.msra.mxu0 0
        %3052 = vmatpush.bf16.msra.mxu0 0
        %3053 = vmatpush.bf16.msra.mxu0 0
        %3054 = vmatpush.bf16.msra.mxu0 0
        %3055 = vmatpush.bf16.msra.mxu0 0
        %3056 = vmatpush.bf16.msra.mxu0 0
        %3057 = vmatpush.bf16.msra.mxu0 %v2964
        %3058 = vmatmul.bf16.gmra.mxu0 %v2943
        %v3059 = vpop.f32.mrf.mxu0
        %v3060 = vadd.f32 0.0, %v3059
        %v3061 = vpop.f32.mrf.mxu0
        %v3062 = vadd.f32 0.0, %v3061
        %3063 = vdwg.mxu0
        %v3064 = vadd.f32 %v2849, %v2976
        %v3065 = vadd.f32 %v2850, %v2990
        %v3066 = vadd.f32 %v2851, %v3004
        %v3067 = vadd.f32 %v2852, %v3018
        %v3068 = vadd.f32 %v2853, %v3032
        %v3069 = vadd.f32 %v2854, %v3046
        %v3070 = vadd.f32 %v2855, %v3060
        %v3071 = vadd.f32 %v2856, %v2978
        %v3072 = vadd.f32 %v2857, %v2992
        %v3073 = vadd.f32 %v2858, %v3006
        %v3074 = vadd.f32 %v2859, %v3020
        %v3075 = vadd.f32 %v2860, %v3034
        %v3076 = vadd.f32 %v2861, %v3048
        %v3077 = vadd.f32 %v2862, %v3062
        %v3078 = vld [vmem:[%s545] sm:$0x77]
        %v3079 = vld [vmem:[%s545 + $0x8] sm:$0x77]
        %v3080 = vld [vmem:[%s545 + $0x10] sm:$0x77]
        %v3081 = vld [vmem:[%s545 + $0x18] sm:$0x77]
        %3086 = vst [vmem:[#allocation1] ss:$2 sm:$0xff] %v3078
        %s3087 = scalar_lea.vmem [#allocation1], 16
        %3088 = vst [vmem:[%s3087] ss:$2 sm:$0xff] %v3079
        %s3089 = scalar_lea.vmem [#allocation1], 32
        %3090 = vst [vmem:[%s3089] ss:$2 sm:$0xff] %v3080
        %s3091 = scalar_lea.vmem [#allocation1], 48
        %3092 = vst [vmem:[%s3091] ss:$2 sm:$0xff] %v3081
        %v3093 = vld.sshfl [vmem:[#allocation1] sm:$0xff pattern:$0x75316420]
        %v3094 = vld.sshfl [vmem:[#allocation1 + $0x8] sm:$0xff pattern:$0x75316420]
        %v3095 = vld.sshfl [vmem:[#allocation1 + $0x10] sm:$0xff pattern:$0x75316420]
        %v3096 = vld.sshfl [vmem:[#allocation1 + $0x18] sm:$0xff pattern:$0x75316420]
        %v3097 = vld.sshfl [vmem:[#allocation1 + $0x20] sm:$0xff pattern:$0x75316420]
        %v3098 = vld.sshfl [vmem:[#allocation1 + $0x28] sm:$0xff pattern:$0x75316420]
        %v3099 = vld.sshfl [vmem:[#allocation1 + $0x30] sm:$0xff pattern:$0x75316420]
        %v3100 = vld.sshfl [vmem:[#allocation1 + $0x38] sm:$0xff pattern:$0x75316420]
        %v3109 = vpack.c.bf16 %v3093, %v3093
        %v3110 = vpack.c.bf16 %v3094, %v3094
        %v3111 = vpack.c.bf16 %v3095, %v3095
        %v3112 = vpack.c.bf16 %v3096, %v3096
        %v3113 = vpack.c.bf16 %v3097, %v3097
        %v3114 = vpack.c.bf16 %v3098, %v3098
        %v3115 = vpack.c.bf16 %v3099, %v3099
        %v3116 = vpack.c.bf16 %v3100, %v3100
        %s3117 = scalar_lea.vmem %s1, 96
        %v3118 = vld [vmem:[%s3117] sm:$0xf]
        %v3119 = vld [vmem:[%s3117 + $0x4] sm:$0xf]
        %v3122 = vunpack.c.l.b16 %v3118
        %v3123 = vunpack.c.l.b16 %v3119
        %v3124 = vpack.c.b16 %v3123, %v3122
        %3133 = vrot.lane.b32.xlu0 %v3109, 32
        %v3134 = vpop.permute.xlu0 %3133
        %3135 = vrot.lane.b32.xlu0 %v3110, 32
        %v3136 = vpop.permute.xlu0 %3135
        %3137 = vrot.lane.b32.xlu0 %v3111, 32
        %v3138 = vpop.permute.xlu0 %3137
        %3139 = vrot.lane.b32.xlu0 %v3112, 32
        %v3140 = vpop.permute.xlu0 %3139
        %3141 = vrot.lane.b32.xlu0 %v3113, 32
        %v3142 = vpop.permute.xlu0 %3141
        %3143 = vrot.lane.b32.xlu0 %v3114, 32
        %v3144 = vpop.permute.xlu0 %3143
        %3145 = vrot.lane.b32.xlu0 %v3115, 32
        %v3146 = vpop.permute.xlu0 %3145
        %3147 = vrot.lane.b32.xlu0 %v3116, 32
        %v3148 = vpop.permute.xlu0 %3147
        %vm3149 = vcmask 261120
        %v3150 = vsel %vm3149, %v3134, %v3136
        %v3151 = vsel %vm3149, %v3136, %v3138
        %v3152 = vsel %vm3149, %v3138, %v3140
        %v3153 = vsel %vm3149, %v3140, %v3142
        %v3154 = vsel %vm3149, %v3142, %v3144
        %v3155 = vsel %vm3149, %v3144, %v3146
        %v3156 = vsel %vm3149, %v3146, %v3148
        %v3158 = vsel %vm674, %v3124, 0
        %v3161 = vand.u32 %v3150, %v681
        %v3164 = vand.u32 %v3151, %v681
        %v3167 = vand.u32 %v3152, %v681
        %v3170 = vand.u32 %v3153, %v681
        %v3173 = vand.u32 %v3154, %v681
        %v3176 = vand.u32 %v3155, %v681
        %v3179 = vand.u32 %v3156, %v681
        %3181 = vmatpush.bf16.msra.mxu0 0
        %3182 = vmatpush.bf16.msra.mxu0 0
        %3183 = vmatpush.bf16.msra.mxu0 0
        %3184 = vmatpush.bf16.msra.mxu0 0
        %3185 = vmatpush.bf16.msra.mxu0 0
        %3186 = vmatpush.bf16.msra.mxu0 0
        %3187 = vmatpush.bf16.msra.mxu0 0
        %3188 = vmatpush.bf16.msra.mxu0 %v3161
        %3189 = vmatmul.bf16.gmra.mxu0 %v3158
        %v3190 = vpop.f32.mrf.mxu0
        %v3191 = vadd.f32 0.0, %v3190
        %v3192 = vpop.f32.mrf.mxu0
        %v3193 = vadd.f32 0.0, %v3192
        %3194 = vdwg.mxu0
        %3195 = vmatpush.bf16.msra.mxu0 0
        %3196 = vmatpush.bf16.msra.mxu0 0
        %3197 = vmatpush.bf16.msra.mxu0 0
        %3198 = vmatpush.bf16.msra.mxu0 0
        %3199 = vmatpush.bf16.msra.mxu0 0
        %3200 = vmatpush.bf16.msra.mxu0 0
        %3201 = vmatpush.bf16.msra.mxu0 0
        %3202 = vmatpush.bf16.msra.mxu0 %v3164
        %3203 = vmatmul.bf16.gmra.mxu0 %v3158
        %v3204 = vpop.f32.mrf.mxu0
        %v3205 = vadd.f32 0.0, %v3204
        %v3206 = vpop.f32.mrf.mxu0
        %v3207 = vadd.f32 0.0, %v3206
        %3208 = vdwg.mxu0
        %3209 = vmatpush.bf16.msra.mxu0 0
        %3210 = vmatpush.bf16.msra.mxu0 0
        %3211 = vmatpush.bf16.msra.mxu0 0
        %3212 = vmatpush.bf16.msra.mxu0 0
        %3213 = vmatpush.bf16.msra.mxu0 0
        %3214 = vmatpush.bf16.msra.mxu0 0
        %3215 = vmatpush.bf16.msra.mxu0 0
        %3216 = vmatpush.bf16.msra.mxu0 %v3167
        %3217 = vmatmul.bf16.gmra.mxu0 %v3158
        %v3218 = vpop.f32.mrf.mxu0
        %v3219 = vadd.f32 0.0, %v3218
        %v3220 = vpop.f32.mrf.mxu0
        %v3221 = vadd.f32 0.0, %v3220
        %3222 = vdwg.mxu0
        %3223 = vmatpush.bf16.msra.mxu0 0
        %3224 = vmatpush.bf16.msra.mxu0 0
        %3225 = vmatpush.bf16.msra.mxu0 0
        %3226 = vmatpush.bf16.msra.mxu0 0
        %3227 = vmatpush.bf16.msra.mxu0 0
        %3228 = vmatpush.bf16.msra.mxu0 0
        %3229 = vmatpush.bf16.msra.mxu0 0
        %3230 = vmatpush.bf16.msra.mxu0 %v3170
        %3231 = vmatmul.bf16.gmra.mxu0 %v3158
        %v3232 = vpop.f32.mrf.mxu0
        %v3233 = vadd.f32 0.0, %v3232
        %v3234 = vpop.f32.mrf.mxu0
        %v3235 = vadd.f32 0.0, %v3234
        %3236 = vdwg.mxu0
        %3237 = vmatpush.bf16.msra.mxu0 0
        %3238 = vmatpush.bf16.msra.mxu0 0
        %3239 = vmatpush.bf16.msra.mxu0 0
        %3240 = vmatpush.bf16.msra.mxu0 0
        %3241 = vmatpush.bf16.msra.mxu0 0
        %3242 = vmatpush.bf16.msra.mxu0 0
        %3243 = vmatpush.bf16.msra.mxu0 0
        %3244 = vmatpush.bf16.msra.mxu0 %v3173
        %3245 = vmatmul.bf16.gmra.mxu0 %v3158
        %v3246 = vpop.f32.mrf.mxu0
        %v3247 = vadd.f32 0.0, %v3246
        %v3248 = vpop.f32.mrf.mxu0
        %v3249 = vadd.f32 0.0, %v3248
        %3250 = vdwg.mxu0
        %3251 = vmatpush.bf16.msra.mxu0 0
        %3252 = vmatpush.bf16.msra.mxu0 0
        %3253 = vmatpush.bf16.msra.mxu0 0
        %3254 = vmatpush.bf16.msra.mxu0 0
        %3255 = vmatpush.bf16.msra.mxu0 0
        %3256 = vmatpush.bf16.msra.mxu0 0
        %3257 = vmatpush.bf16.msra.mxu0 0
        %3258 = vmatpush.bf16.msra.mxu0 %v3176
        %3259 = vmatmul.bf16.gmra.mxu0 %v3158
        %v3260 = vpop.f32.mrf.mxu0
        %v3261 = vadd.f32 0.0, %v3260
        %v3262 = vpop.f32.mrf.mxu0
        %v3263 = vadd.f32 0.0, %v3262
        %3264 = vdwg.mxu0
        %3265 = vmatpush.bf16.msra.mxu0 0
        %3266 = vmatpush.bf16.msra.mxu0 0
        %3267 = vmatpush.bf16.msra.mxu0 0
        %3268 = vmatpush.bf16.msra.mxu0 0
        %3269 = vmatpush.bf16.msra.mxu0 0
        %3270 = vmatpush.bf16.msra.mxu0 0
        %3271 = vmatpush.bf16.msra.mxu0 0
        %3272 = vmatpush.bf16.msra.mxu0 %v3179
        %3273 = vmatmul.bf16.gmra.mxu0 %v3158
        %v3274 = vpop.f32.mrf.mxu0
        %v3275 = vadd.f32 0.0, %v3274
        %v3276 = vpop.f32.mrf.mxu0
        %v3277 = vadd.f32 0.0, %v3276
        %3278 = vdwg.mxu0
        %v3279 = vadd.f32 %v3064, %v3191
        %v3280 = vadd.f32 %v3065, %v3205
        %v3281 = vadd.f32 %v3066, %v3219
        %v3282 = vadd.f32 %v3067, %v3233
        %v3283 = vadd.f32 %v3068, %v3247
        %v3284 = vadd.f32 %v3069, %v3261
        %v3285 = vadd.f32 %v3070, %v3275
        %v3286 = vadd.f32 %v3071, %v3193
        %v3287 = vadd.f32 %v3072, %v3207
        %v3288 = vadd.f32 %v3073, %v3221
        %v3289 = vadd.f32 %v3074, %v3235
        %v3290 = vadd.f32 %v3075, %v3249
        %v3291 = vadd.f32 %v3076, %v3263
        %v3292 = vadd.f32 %v3077, %v3277
        %v3293 = vld [vmem:[%s545] sm:$0x77]
        %v3294 = vld [vmem:[%s545 + $0x8] sm:$0x77]
        %v3295 = vld [vmem:[%s545 + $0x10] sm:$0x77]
        %v3296 = vld [vmem:[%s545 + $0x18] sm:$0x77]
        %3301 = vst [vmem:[#allocation1] ss:$2 sm:$0xff] %v3293
        %s3302 = scalar_lea.vmem [#allocation1], 16
        %3303 = vst [vmem:[%s3302] ss:$2 sm:$0xff] %v3294
        %s3304 = scalar_lea.vmem [#allocation1], 32
        %3305 = vst [vmem:[%s3304] ss:$2 sm:$0xff] %v3295
        %s3306 = scalar_lea.vmem [#allocation1], 48
        %3307 = vst [vmem:[%s3306] ss:$2 sm:$0xff] %v3296
        %v3308 = vld.sshfl [vmem:[#allocation1] sm:$0xff pattern:$0x75316420]
        %v3309 = vld.sshfl [vmem:[#allocation1 + $0x8] sm:$0xff pattern:$0x75316420]
        %v3310 = vld.sshfl [vmem:[#allocation1 + $0x10] sm:$0xff pattern:$0x75316420]
        %v3311 = vld.sshfl [vmem:[#allocation1 + $0x18] sm:$0xff pattern:$0x75316420]
        %v3312 = vld.sshfl [vmem:[#allocation1 + $0x20] sm:$0xff pattern:$0x75316420]
        %v3313 = vld.sshfl [vmem:[#allocation1 + $0x28] sm:$0xff pattern:$0x75316420]
        %v3314 = vld.sshfl [vmem:[#allocation1 + $0x30] sm:$0xff pattern:$0x75316420]
        %v3315 = vld.sshfl [vmem:[#allocation1 + $0x38] sm:$0xff pattern:$0x75316420]
        %v3324 = vpack.c.bf16 %v3308, %v3308
        %v3325 = vpack.c.bf16 %v3309, %v3309
        %v3326 = vpack.c.bf16 %v3310, %v3310
        %v3327 = vpack.c.bf16 %v3311, %v3311
        %v3328 = vpack.c.bf16 %v3312, %v3312
        %v3329 = vpack.c.bf16 %v3313, %v3313
        %v3330 = vpack.c.bf16 %v3314, %v3314
        %v3331 = vpack.c.bf16 %v3315, %v3315
        %s3332 = scalar_lea.vmem %s1, 104
        %v3333 = vld [vmem:[%s3332] sm:$0xf]
        %v3334 = vld [vmem:[%s3332 + $0x4] sm:$0xf]
        %v3337 = vunpack.c.l.b16 %v3333
        %v3338 = vunpack.c.l.b16 %v3334
        %v3339 = vpack.c.b16 %v3338, %v3337
        %3348 = vrot.lane.b32.xlu0 %v3324, 31
        %v3349 = vpop.permute.xlu0 %3348
        %3350 = vrot.lane.b32.xlu0 %v3325, 31
        %v3351 = vpop.permute.xlu0 %3350
        %3352 = vrot.lane.b32.xlu0 %v3326, 31
        %v3353 = vpop.permute.xlu0 %3352
        %3354 = vrot.lane.b32.xlu0 %v3327, 31
        %v3355 = vpop.permute.xlu0 %3354
        %3356 = vrot.lane.b32.xlu0 %v3328, 31
        %v3357 = vpop.permute.xlu0 %3356
        %3358 = vrot.lane.b32.xlu0 %v3329, 31
        %v3359 = vpop.permute.xlu0 %3358
        %3360 = vrot.lane.b32.xlu0 %v3330, 31
        %v3361 = vpop.permute.xlu0 %3360
        %3362 = vrot.lane.b32.xlu0 %v3331, 31
        %v3363 = vpop.permute.xlu0 %3362
        %vm3364 = vcmask 252928
        %v3365 = vsel %vm3364, %v3349, %v3351
        %v3366 = vsel %vm3364, %v3351, %v3353
        %v3367 = vsel %vm3364, %v3353, %v3355
        %v3368 = vsel %vm3364, %v3355, %v3357
        %v3369 = vsel %vm3364, %v3357, %v3359
        %v3370 = vsel %vm3364, %v3359, %v3361
        %v3371 = vsel %vm3364, %v3361, %v3363
        %v3373 = vsel %vm674, %v3339, 0
        %v3376 = vand.u32 %v3365, %v681
        %v3379 = vand.u32 %v3366, %v681
        %v3382 = vand.u32 %v3367, %v681
        %v3385 = vand.u32 %v3368, %v681
        %v3388 = vand.u32 %v3369, %v681
        %v3391 = vand.u32 %v3370, %v681
        %v3394 = vand.u32 %v3371, %v681
        %3396 = vmatpush.bf16.msra.mxu0 0
        %3397 = vmatpush.bf16.msra.mxu0 0
        %3398 = vmatpush.bf16.msra.mxu0 0
        %3399 = vmatpush.bf16.msra.mxu0 0
        %3400 = vmatpush.bf16.msra.mxu0 0
        %3401 = vmatpush.bf16.msra.mxu0 0
        %3402 = vmatpush.bf16.msra.mxu0 0
        %3403 = vmatpush.bf16.msra.mxu0 %v3376
        %3404 = vmatmul.bf16.gmra.mxu0 %v3373
        %v3405 = vpop.f32.mrf.mxu0
        %v3406 = vadd.f32 0.0, %v3405
        %v3407 = vpop.f32.mrf.mxu0
        %v3408 = vadd.f32 0.0, %v3407
        %3409 = vdwg.mxu0
        %3410 = vmatpush.bf16.msra.mxu0 0
        %3411 = vmatpush.bf16.msra.mxu0 0
        %3412 = vmatpush.bf16.msra.mxu0 0
        %3413 = vmatpush.bf16.msra.mxu0 0
        %3414 = vmatpush.bf16.msra.mxu0 0
        %3415 = vmatpush.bf16.msra.mxu0 0
        %3416 = vmatpush.bf16.msra.mxu0 0
        %3417 = vmatpush.bf16.msra.mxu0 %v3379
        %3418 = vmatmul.bf16.gmra.mxu0 %v3373
        %v3419 = vpop.f32.mrf.mxu0
        %v3420 = vadd.f32 0.0, %v3419
        %v3421 = vpop.f32.mrf.mxu0
        %v3422 = vadd.f32 0.0, %v3421
        %3423 = vdwg.mxu0
        %3424 = vmatpush.bf16.msra.mxu0 0
        %3425 = vmatpush.bf16.msra.mxu0 0
        %3426 = vmatpush.bf16.msra.mxu0 0
        %3427 = vmatpush.bf16.msra.mxu0 0
        %3428 = vmatpush.bf16.msra.mxu0 0
        %3429 = vmatpush.bf16.msra.mxu0 0
        %3430 = vmatpush.bf16.msra.mxu0 0
        %3431 = vmatpush.bf16.msra.mxu0 %v3382
        %3432 = vmatmul.bf16.gmra.mxu0 %v3373
        %v3433 = vpop.f32.mrf.mxu0
        %v3434 = vadd.f32 0.0, %v3433
        %v3435 = vpop.f32.mrf.mxu0
        %v3436 = vadd.f32 0.0, %v3435
        %3437 = vdwg.mxu0
        %3438 = vmatpush.bf16.msra.mxu0 0
        %3439 = vmatpush.bf16.msra.mxu0 0
        %3440 = vmatpush.bf16.msra.mxu0 0
        %3441 = vmatpush.bf16.msra.mxu0 0
        %3442 = vmatpush.bf16.msra.mxu0 0
        %3443 = vmatpush.bf16.msra.mxu0 0
        %3444 = vmatpush.bf16.msra.mxu0 0
        %3445 = vmatpush.bf16.msra.mxu0 %v3385
        %3446 = vmatmul.bf16.gmra.mxu0 %v3373
        %v3447 = vpop.f32.mrf.mxu0
        %v3448 = vadd.f32 0.0, %v3447
        %v3449 = vpop.f32.mrf.mxu0
        %v3450 = vadd.f32 0.0, %v3449
        %3451 = vdwg.mxu0
        %3452 = vmatpush.bf16.msra.mxu0 0
        %3453 = vmatpush.bf16.msra.mxu0 0
        %3454 = vmatpush.bf16.msra.mxu0 0
        %3455 = vmatpush.bf16.msra.mxu0 0
        %3456 = vmatpush.bf16.msra.mxu0 0
        %3457 = vmatpush.bf16.msra.mxu0 0
        %3458 = vmatpush.bf16.msra.mxu0 0
        %3459 = vmatpush.bf16.msra.mxu0 %v3388
        %3460 = vmatmul.bf16.gmra.mxu0 %v3373
        %v3461 = vpop.f32.mrf.mxu0
        %v3462 = vadd.f32 0.0, %v3461
        %v3463 = vpop.f32.mrf.mxu0
        %v3464 = vadd.f32 0.0, %v3463
        %3465 = vdwg.mxu0
        %3466 = vmatpush.bf16.msra.mxu0 0
        %3467 = vmatpush.bf16.msra.mxu0 0
        %3468 = vmatpush.bf16.msra.mxu0 0
        %3469 = vmatpush.bf16.msra.mxu0 0
        %3470 = vmatpush.bf16.msra.mxu0 0
        %3471 = vmatpush.bf16.msra.mxu0 0
        %3472 = vmatpush.bf16.msra.mxu0 0
        %3473 = vmatpush.bf16.msra.mxu0 %v3391
        %3474 = vmatmul.bf16.gmra.mxu0 %v3373
        %v3475 = vpop.f32.mrf.mxu0
        %v3476 = vadd.f32 0.0, %v3475
        %v3477 = vpop.f32.mrf.mxu0
        %v3478 = vadd.f32 0.0, %v3477
        %3479 = vdwg.mxu0
        %3480 = vmatpush.bf16.msra.mxu0 0
        %3481 = vmatpush.bf16.msra.mxu0 0
        %3482 = vmatpush.bf16.msra.mxu0 0
        %3483 = vmatpush.bf16.msra.mxu0 0
        %3484 = vmatpush.bf16.msra.mxu0 0
        %3485 = vmatpush.bf16.msra.mxu0 0
        %3486 = vmatpush.bf16.msra.mxu0 0
        %3487 = vmatpush.bf16.msra.mxu0 %v3394
        %3488 = vmatmul.bf16.gmra.mxu0 %v3373
        %v3489 = vpop.f32.mrf.mxu0
        %v3490 = vadd.f32 0.0, %v3489
        %v3491 = vpop.f32.mrf.mxu0
        %v3492 = vadd.f32 0.0, %v3491
        %3493 = vdwg.mxu0
        %v3494 = vadd.f32 %v3279, %v3406
        %v3495 = vadd.f32 %v3280, %v3420
        %v3496 = vadd.f32 %v3281, %v3434
        %v3497 = vadd.f32 %v3282, %v3448
        %v3498 = vadd.f32 %v3283, %v3462
        %v3499 = vadd.f32 %v3284, %v3476
        %v3500 = vadd.f32 %v3285, %v3490
        %v3501 = vadd.f32 %v3286, %v3408
        %v3502 = vadd.f32 %v3287, %v3422
        %v3503 = vadd.f32 %v3288, %v3436
        %v3504 = vadd.f32 %v3289, %v3450
        %v3505 = vadd.f32 %v3290, %v3464
        %v3506 = vadd.f32 %v3291, %v3478
        %v3507 = vadd.f32 %v3292, %v3492
        %v3508 = vld [vmem:[%s545] sm:$0x77]
        %v3509 = vld [vmem:[%s545 + $0x8] sm:$0x77]
        %v3510 = vld [vmem:[%s545 + $0x10] sm:$0x77]
        %v3511 = vld [vmem:[%s545 + $0x18] sm:$0x77]
        %3516 = vst [vmem:[#allocation1] ss:$2 sm:$0xff] %v3508
        %s3517 = scalar_lea.vmem [#allocation1], 16
        %3518 = vst [vmem:[%s3517] ss:$2 sm:$0xff] %v3509
        %s3519 = scalar_lea.vmem [#allocation1], 32
        %3520 = vst [vmem:[%s3519] ss:$2 sm:$0xff] %v3510
        %s3521 = scalar_lea.vmem [#allocation1], 48
        %3522 = vst [vmem:[%s3521] ss:$2 sm:$0xff] %v3511
        %v3523 = vld.sshfl [vmem:[#allocation1] sm:$0xff pattern:$0x75316420]
        %v3524 = vld.sshfl [vmem:[#allocation1 + $0x8] sm:$0xff pattern:$0x75316420]
        %v3525 = vld.sshfl [vmem:[#allocation1 + $0x10] sm:$0xff pattern:$0x75316420]
        %v3526 = vld.sshfl [vmem:[#allocation1 + $0x18] sm:$0xff pattern:$0x75316420]
        %v3527 = vld.sshfl [vmem:[#allocation1 + $0x20] sm:$0xff pattern:$0x75316420]
        %v3528 = vld.sshfl [vmem:[#allocation1 + $0x28] sm:$0xff pattern:$0x75316420]
        %v3529 = vld.sshfl [vmem:[#allocation1 + $0x30] sm:$0xff pattern:$0x75316420]
        %v3530 = vld.sshfl [vmem:[#allocation1 + $0x38] sm:$0xff pattern:$0x75316420]
        %v3539 = vpack.c.bf16 %v3523, %v3523
        %v3540 = vpack.c.bf16 %v3524, %v3524
        %v3541 = vpack.c.bf16 %v3525, %v3525
        %v3542 = vpack.c.bf16 %v3526, %v3526
        %v3543 = vpack.c.bf16 %v3527, %v3527
        %v3544 = vpack.c.bf16 %v3528, %v3528
        %v3545 = vpack.c.bf16 %v3529, %v3529
        %v3546 = vpack.c.bf16 %v3530, %v3530
        %s3547 = scalar_lea.vmem %s1, 112
        %v3548 = vld [vmem:[%s3547] sm:$0xf]
        %v3549 = vld [vmem:[%s3547 + $0x4] sm:$0xf]
        %v3552 = vunpack.c.l.b16 %v3548
        %v3553 = vunpack.c.l.b16 %v3549
        %v3554 = vpack.c.b16 %v3553, %v3552
        %3563 = vrot.lane.b32.xlu0 %v3539, 30
        %v3564 = vpop.permute.xlu0 %3563
        %3565 = vrot.lane.b32.xlu0 %v3540, 30
        %v3566 = vpop.permute.xlu0 %3565
        %3567 = vrot.lane.b32.xlu0 %v3541, 30
        %v3568 = vpop.permute.xlu0 %3567
        %3569 = vrot.lane.b32.xlu0 %v3542, 30
        %v3570 = vpop.permute.xlu0 %3569
        %3571 = vrot.lane.b32.xlu0 %v3543, 30
        %v3572 = vpop.permute.xlu0 %3571
        %3573 = vrot.lane.b32.xlu0 %v3544, 30
        %v3574 = vpop.permute.xlu0 %3573
        %3575 = vrot.lane.b32.xlu0 %v3545, 30
        %v3576 = vpop.permute.xlu0 %3575
        %3577 = vrot.lane.b32.xlu0 %v3546, 30
        %v3578 = vpop.permute.xlu0 %3577
        %vm3579 = vcmask 244736
        %v3580 = vsel %vm3579, %v3564, %v3566
        %v3581 = vsel %vm3579, %v3566, %v3568
        %v3582 = vsel %vm3579, %v3568, %v3570
        %v3583 = vsel %vm3579, %v3570, %v3572
        %v3584 = vsel %vm3579, %v3572, %v3574
        %v3585 = vsel %vm3579, %v3574, %v3576
        %v3586 = vsel %vm3579, %v3576, %v3578
        %v3588 = vsel %vm674, %v3554, 0
        %v3591 = vand.u32 %v3580, %v681
        %v3594 = vand.u32 %v3581, %v681
        %v3597 = vand.u32 %v3582, %v681
        %v3600 = vand.u32 %v3583, %v681
        %v3603 = vand.u32 %v3584, %v681
        %v3606 = vand.u32 %v3585, %v681
        %v3609 = vand.u32 %v3586, %v681
        %3611 = vmatpush.bf16.msra.mxu0 0
        %3612 = vmatpush.bf16.msra.mxu0 0
        %3613 = vmatpush.bf16.msra.mxu0 0
        %3614 = vmatpush.bf16.msra.mxu0 0
        %3615 = vmatpush.bf16.msra.mxu0 0
        %3616 = vmatpush.bf16.msra.mxu0 0
        %3617 = vmatpush.bf16.msra.mxu0 0
        %3618 = vmatpush.bf16.msra.mxu0 %v3591
        %3619 = vmatmul.bf16.gmra.mxu0 %v3588
        %v3620 = vpop.f32.mrf.mxu0
        %v3621 = vadd.f32 0.0, %v3620
        %v3622 = vpop.f32.mrf.mxu0
        %v3623 = vadd.f32 0.0, %v3622
        %3624 = vdwg.mxu0
        %3625 = vmatpush.bf16.msra.mxu0 0
        %3626 = vmatpush.bf16.msra.mxu0 0
        %3627 = vmatpush.bf16.msra.mxu0 0
        %3628 = vmatpush.bf16.msra.mxu0 0
        %3629 = vmatpush.bf16.msra.mxu0 0
        %3630 = vmatpush.bf16.msra.mxu0 0
        %3631 = vmatpush.bf16.msra.mxu0 0
        %3632 = vmatpush.bf16.msra.mxu0 %v3594
        %3633 = vmatmul.bf16.gmra.mxu0 %v3588
        %v3634 = vpop.f32.mrf.mxu0
        %v3635 = vadd.f32 0.0, %v3634
        %v3636 = vpop.f32.mrf.mxu0
        %v3637 = vadd.f32 0.0, %v3636
        %3638 = vdwg.mxu0
        %3639 = vmatpush.bf16.msra.mxu0 0
        %3640 = vmatpush.bf16.msra.mxu0 0
        %3641 = vmatpush.bf16.msra.mxu0 0
        %3642 = vmatpush.bf16.msra.mxu0 0
        %3643 = vmatpush.bf16.msra.mxu0 0
        %3644 = vmatpush.bf16.msra.mxu0 0
        %3645 = vmatpush.bf16.msra.mxu0 0
        %3646 = vmatpush.bf16.msra.mxu0 %v3597
        %3647 = vmatmul.bf16.gmra.mxu0 %v3588
        %v3648 = vpop.f32.mrf.mxu0
        %v3649 = vadd.f32 0.0, %v3648
        %v3650 = vpop.f32.mrf.mxu0
        %v3651 = vadd.f32 0.0, %v3650
        %3652 = vdwg.mxu0
        %3653 = vmatpush.bf16.msra.mxu0 0
        %3654 = vmatpush.bf16.msra.mxu0 0
        %3655 = vmatpush.bf16.msra.mxu0 0
        %3656 = vmatpush.bf16.msra.mxu0 0
        %3657 = vmatpush.bf16.msra.mxu0 0
        %3658 = vmatpush.bf16.msra.mxu0 0
        %3659 = vmatpush.bf16.msra.mxu0 0
        %3660 = vmatpush.bf16.msra.mxu0 %v3600
        %3661 = vmatmul.bf16.gmra.mxu0 %v3588
        %v3662 = vpop.f32.mrf.mxu0
        %v3663 = vadd.f32 0.0, %v3662
        %v3664 = vpop.f32.mrf.mxu0
        %v3665 = vadd.f32 0.0, %v3664
        %3666 = vdwg.mxu0
        %3667 = vmatpush.bf16.msra.mxu0 0
        %3668 = vmatpush.bf16.msra.mxu0 0
        %3669 = vmatpush.bf16.msra.mxu0 0
        %3670 = vmatpush.bf16.msra.mxu0 0
        %3671 = vmatpush.bf16.msra.mxu0 0
        %3672 = vmatpush.bf16.msra.mxu0 0
        %3673 = vmatpush.bf16.msra.mxu0 0
        %3674 = vmatpush.bf16.msra.mxu0 %v3603
        %3675 = vmatmul.bf16.gmra.mxu0 %v3588
        %v3676 = vpop.f32.mrf.mxu0
        %v3677 = vadd.f32 0.0, %v3676
        %v3678 = vpop.f32.mrf.mxu0
        %v3679 = vadd.f32 0.0, %v3678
        %3680 = vdwg.mxu0
        %3681 = vmatpush.bf16.msra.mxu0 0
        %3682 = vmatpush.bf16.msra.mxu0 0
        %3683 = vmatpush.bf16.msra.mxu0 0
        %3684 = vmatpush.bf16.msra.mxu0 0
        %3685 = vmatpush.bf16.msra.mxu0 0
        %3686 = vmatpush.bf16.msra.mxu0 0
        %3687 = vmatpush.bf16.msra.mxu0 0
        %3688 = vmatpush.bf16.msra.mxu0 %v3606
        %3689 = vmatmul.bf16.gmra.mxu0 %v3588
        %v3690 = vpop.f32.mrf.mxu0
        %v3691 = vadd.f32 0.0, %v3690
        %v3692 = vpop.f32.mrf.mxu0
        %v3693 = vadd.f32 0.0, %v3692
        %3694 = vdwg.mxu0
        %3695 = vmatpush.bf16.msra.mxu0 0
        %3696 = vmatpush.bf16.msra.mxu0 0
        %3697 = vmatpush.bf16.msra.mxu0 0
        %3698 = vmatpush.bf16.msra.mxu0 0
        %3699 = vmatpush.bf16.msra.mxu0 0
        %3700 = vmatpush.bf16.msra.mxu0 0
        %3701 = vmatpush.bf16.msra.mxu0 0
        %3702 = vmatpush.bf16.msra.mxu0 %v3609
        %3703 = vmatmul.bf16.gmra.mxu0 %v3588
        %v3704 = vpop.f32.mrf.mxu0
        %v3705 = vadd.f32 0.0, %v3704
        %v3706 = vpop.f32.mrf.mxu0
        %v3707 = vadd.f32 0.0, %v3706
        %3708 = vdwg.mxu0
        %v3709 = vadd.f32 %v3494, %v3621
        %v3710 = vadd.f32 %v3495, %v3635
        %v3711 = vadd.f32 %v3496, %v3649
        %v3712 = vadd.f32 %v3497, %v3663
        %v3713 = vadd.f32 %v3498, %v3677
        %v3714 = vadd.f32 %v3499, %v3691
        %v3715 = vadd.f32 %v3500, %v3705
        %v3716 = vadd.f32 %v3501, %v3623
        %v3717 = vadd.f32 %v3502, %v3637
        %v3718 = vadd.f32 %v3503, %v3651
        %v3719 = vadd.f32 %v3504, %v3665
        %v3720 = vadd.f32 %v3505, %v3679
        %v3721 = vadd.f32 %v3506, %v3693
        %v3722 = vadd.f32 %v3507, %v3707
        %v3723 = vld [vmem:[%s545] sm:$0x77]
        %v3724 = vld [vmem:[%s545 + $0x8] sm:$0x77]
        %v3725 = vld [vmem:[%s545 + $0x10] sm:$0x77]
        %v3726 = vld [vmem:[%s545 + $0x18] sm:$0x77]
        %3731 = vst [vmem:[#allocation1] ss:$2 sm:$0xff] %v3723
        %s3732 = scalar_lea.vmem [#allocation1], 16
        %3733 = vst [vmem:[%s3732] ss:$2 sm:$0xff] %v3724
        %s3734 = scalar_lea.vmem [#allocation1], 32
        %3735 = vst [vmem:[%s3734] ss:$2 sm:$0xff] %v3725
        %s3736 = scalar_lea.vmem [#allocation1], 48
        %3737 = vst [vmem:[%s3736] ss:$2 sm:$0xff] %v3726
        %v3738 = vld.sshfl [vmem:[#allocation1] sm:$0xff pattern:$0x75316420]
        %v3739 = vld.sshfl [vmem:[#allocation1 + $0x8] sm:$0xff pattern:$0x75316420]
        %v3740 = vld.sshfl [vmem:[#allocation1 + $0x10] sm:$0xff pattern:$0x75316420]
        %v3741 = vld.sshfl [vmem:[#allocation1 + $0x18] sm:$0xff pattern:$0x75316420]
        %v3742 = vld.sshfl [vmem:[#allocation1 + $0x20] sm:$0xff pattern:$0x75316420]
        %v3743 = vld.sshfl [vmem:[#allocation1 + $0x28] sm:$0xff pattern:$0x75316420]
        %v3744 = vld.sshfl [vmem:[#allocation1 + $0x30] sm:$0xff pattern:$0x75316420]
        %v3745 = vld.sshfl [vmem:[#allocation1 + $0x38] sm:$0xff pattern:$0x75316420]
        %v3754 = vpack.c.bf16 %v3738, %v3738
        %v3755 = vpack.c.bf16 %v3739, %v3739
        %v3756 = vpack.c.bf16 %v3740, %v3740
        %v3757 = vpack.c.bf16 %v3741, %v3741
        %v3758 = vpack.c.bf16 %v3742, %v3742
        %v3759 = vpack.c.bf16 %v3743, %v3743
        %v3760 = vpack.c.bf16 %v3744, %v3744
        %v3761 = vpack.c.bf16 %v3745, %v3745
        %s3762 = scalar_lea.vmem %s1, 120
        %v3763 = vld [vmem:[%s3762] sm:$0xf]
        %v3764 = vld [vmem:[%s3762 + $0x4] sm:$0xf]
        %v3767 = vunpack.c.l.b16 %v3763
        %v3768 = vunpack.c.l.b16 %v3764
        %v3769 = vpack.c.b16 %v3768, %v3767
        %3778 = vrot.lane.b32.xlu0 %v3754, 29
        %v3779 = vpop.permute.xlu0 %3778
        %3780 = vrot.lane.b32.xlu0 %v3755, 29
        %v3781 = vpop.permute.xlu0 %3780
        %3782 = vrot.lane.b32.xlu0 %v3756, 29
        %v3783 = vpop.permute.xlu0 %3782
        %3784 = vrot.lane.b32.xlu0 %v3757, 29
        %v3785 = vpop.permute.xlu0 %3784
        %3786 = vrot.lane.b32.xlu0 %v3758, 29
        %v3787 = vpop.permute.xlu0 %3786
        %3788 = vrot.lane.b32.xlu0 %v3759, 29
        %v3789 = vpop.permute.xlu0 %3788
        %3790 = vrot.lane.b32.xlu0 %v3760, 29
        %v3791 = vpop.permute.xlu0 %3790
        %3792 = vrot.lane.b32.xlu0 %v3761, 29
        %v3793 = vpop.permute.xlu0 %3792
        %vm3794 = vcmask 236544
        %v3795 = vsel %vm3794, %v3779, %v3781
        %v3796 = vsel %vm3794, %v3781, %v3783
        %v3797 = vsel %vm3794, %v3783, %v3785
        %v3798 = vsel %vm3794, %v3785, %v3787
        %v3799 = vsel %vm3794, %v3787, %v3789
        %v3800 = vsel %vm3794, %v3789, %v3791
        %v3801 = vsel %vm3794, %v3791, %v3793
        %v3803 = vsel %vm674, %v3769, 0
        %v3806 = vand.u32 %v3795, %v681
        %v3809 = vand.u32 %v3796, %v681
        %v3812 = vand.u32 %v3797, %v681
        %v3815 = vand.u32 %v3798, %v681
        %v3818 = vand.u32 %v3799, %v681
        %v3821 = vand.u32 %v3800, %v681
        %v3824 = vand.u32 %v3801, %v681
        %3826 = vmatpush.bf16.msra.mxu0 0
        %3827 = vmatpush.bf16.msra.mxu0 0
        %3828 = vmatpush.bf16.msra.mxu0 0
        %3829 = vmatpush.bf16.msra.mxu0 0
        %3830 = vmatpush.bf16.msra.mxu0 0
        %3831 = vmatpush.bf16.msra.mxu0 0
        %3832 = vmatpush.bf16.msra.mxu0 0
        %3833 = vmatpush.bf16.msra.mxu0 %v3806
        %3834 = vmatmul.bf16.gmra.mxu0 %v3803
        %v3835 = vpop.f32.mrf.mxu0
        %v3836 = vadd.f32 0.0, %v3835
        %v3837 = vpop.f32.mrf.mxu0
        %v3838 = vadd.f32 0.0, %v3837
        %3839 = vdwg.mxu0
        %3840 = vmatpush.bf16.msra.mxu0 0
        %3841 = vmatpush.bf16.msra.mxu0 0
        %3842 = vmatpush.bf16.msra.mxu0 0
        %3843 = vmatpush.bf16.msra.mxu0 0
        %3844 = vmatpush.bf16.msra.mxu0 0
        %3845 = vmatpush.bf16.msra.mxu0 0
        %3846 = vmatpush.bf16.msra.mxu0 0
        %3847 = vmatpush.bf16.msra.mxu0 %v3809
        %3848 = vmatmul.bf16.gmra.mxu0 %v3803
        %v3849 = vpop.f32.mrf.mxu0
        %v3850 = vadd.f32 0.0, %v3849
        %v3851 = vpop.f32.mrf.mxu0
        %v3852 = vadd.f32 0.0, %v3851
        %3853 = vdwg.mxu0
        %3854 = vmatpush.bf16.msra.mxu0 0
        %3855 = vmatpush.bf16.msra.mxu0 0
        %3856 = vmatpush.bf16.msra.mxu0 0
        %3857 = vmatpush.bf16.msra.mxu0 0
        %3858 = vmatpush.bf16.msra.mxu0 0
        %3859 = vmatpush.bf16.msra.mxu0 0
        %3860 = vmatpush.bf16.msra.mxu0 0
        %3861 = vmatpush.bf16.msra.mxu0 %v3812
        %3862 = vmatmul.bf16.gmra.mxu0 %v3803
        %v3863 = vpop.f32.mrf.mxu0
        %v3864 = vadd.f32 0.0, %v3863
        %v3865 = vpop.f32.mrf.mxu0
        %v3866 = vadd.f32 0.0, %v3865
        %3867 = vdwg.mxu0
        %3868 = vmatpush.bf16.msra.mxu0 0
        %3869 = vmatpush.bf16.msra.mxu0 0
        %3870 = vmatpush.bf16.msra.mxu0 0
        %3871 = vmatpush.bf16.msra.mxu0 0
        %3872 = vmatpush.bf16.msra.mxu0 0
        %3873 = vmatpush.bf16.msra.mxu0 0
        %3874 = vmatpush.bf16.msra.mxu0 0
        %3875 = vmatpush.bf16.msra.mxu0 %v3815
        %3876 = vmatmul.bf16.gmra.mxu0 %v3803
        %v3877 = vpop.f32.mrf.mxu0
        %v3878 = vadd.f32 0.0, %v3877
        %v3879 = vpop.f32.mrf.mxu0
        %v3880 = vadd.f32 0.0, %v3879
        %3881 = vdwg.mxu0
        %3882 = vmatpush.bf16.msra.mxu0 0
        %3883 = vmatpush.bf16.msra.mxu0 0
        %3884 = vmatpush.bf16.msra.mxu0 0
        %3885 = vmatpush.bf16.msra.mxu0 0
        %3886 = vmatpush.bf16.msra.mxu0 0
        %3887 = vmatpush.bf16.msra.mxu0 0
        %3888 = vmatpush.bf16.msra.mxu0 0
        %3889 = vmatpush.bf16.msra.mxu0 %v3818
        %3890 = vmatmul.bf16.gmra.mxu0 %v3803
        %v3891 = vpop.f32.mrf.mxu0
        %v3892 = vadd.f32 0.0, %v3891
        %v3893 = vpop.f32.mrf.mxu0
        %v3894 = vadd.f32 0.0, %v3893
        %3895 = vdwg.mxu0
        %3896 = vmatpush.bf16.msra.mxu0 0
        %3897 = vmatpush.bf16.msra.mxu0 0
        %3898 = vmatpush.bf16.msra.mxu0 0
        %3899 = vmatpush.bf16.msra.mxu0 0
        %3900 = vmatpush.bf16.msra.mxu0 0
        %3901 = vmatpush.bf16.msra.mxu0 0
        %3902 = vmatpush.bf16.msra.mxu0 0
        %3903 = vmatpush.bf16.msra.mxu0 %v3821
        %3904 = vmatmul.bf16.gmra.mxu0 %v3803
        %v3905 = vpop.f32.mrf.mxu0
        %v3906 = vadd.f32 0.0, %v3905
        %v3907 = vpop.f32.mrf.mxu0
        %v3908 = vadd.f32 0.0, %v3907
        %3909 = vdwg.mxu0
        %3910 = vmatpush.bf16.msra.mxu0 0
        %3911 = vmatpush.bf16.msra.mxu0 0
        %3912 = vmatpush.bf16.msra.mxu0 0
        %3913 = vmatpush.bf16.msra.mxu0 0
        %3914 = vmatpush.bf16.msra.mxu0 0
        %3915 = vmatpush.bf16.msra.mxu0 0
        %3916 = vmatpush.bf16.msra.mxu0 0
        %3917 = vmatpush.bf16.msra.mxu0 %v3824
        %3918 = vmatmul.bf16.gmra.mxu0 %v3803
        %v3919 = vpop.f32.mrf.mxu0
        %v3920 = vadd.f32 0.0, %v3919
        %v3921 = vpop.f32.mrf.mxu0
        %v3922 = vadd.f32 0.0, %v3921
        %3923 = vdwg.mxu0
        %v3924 = vadd.f32 %v3709, %v3836
        %v3925 = vadd.f32 %v3710, %v3850
        %v3926 = vadd.f32 %v3711, %v3864
        %v3927 = vadd.f32 %v3712, %v3878
        %v3928 = vadd.f32 %v3713, %v3892
        %v3929 = vadd.f32 %v3714, %v3906
        %v3930 = vadd.f32 %v3715, %v3920
        %v3931 = vadd.f32 %v3716, %v3838
        %v3932 = vadd.f32 %v3717, %v3852
        %v3933 = vadd.f32 %v3718, %v3866
        %v3934 = vadd.f32 %v3719, %v3880
        %v3935 = vadd.f32 %v3720, %v3894
        %v3936 = vadd.f32 %v3721, %v3908
        %v3937 = vadd.f32 %v3722, %v3922
        %v3938 = vld [vmem:[%s2] sm:$0xff]
        %v3939 = vld [vmem:[%s2 + $0x8] sm:$0xff]
        %3941 = vset.pattern.permute.xlu0 0
        %3942 = vperm.xlu0 %3941, %v3938
        %v3943 = vpop.permute.xlu0 %3942
        %3946 = vset.pattern.permute.xlu0 0
        %3947 = vperm.xlu0 %3946, %v3939
        %v3948 = vpop.permute.xlu0 %3947
        %v3950 = vadd.f32 %v3924, %v3943
        %v3951 = vadd.f32 %v3925, %v3943
        %v3952 = vadd.f32 %v3926, %v3943
        %v3953 = vadd.f32 %v3927, %v3943
        %v3954 = vadd.f32 %v3928, %v3943
        %v3955 = vadd.f32 %v3929, %v3943
        %v3956 = vadd.f32 %v3930, %v3943
        %v3957 = vadd.f32 %v3931, %v3948
        %v3958 = vadd.f32 %v3932, %v3948
        %v3959 = vadd.f32 %v3933, %v3948
        %v3960 = vadd.f32 %v3934, %v3948
        %v3961 = vadd.f32 %v3935, %v3948
        %v3962 = vadd.f32 %v3936, %v3948
        %v3963 = vadd.f32 %v3937, %v3948
        %vm3964 = vcmp.ge.f32.partialorder %v3950, 0.0
        %vm3965 = vcmp.ge.f32.partialorder %v3951, 0.0
        %vm3966 = vcmp.ge.f32.partialorder %v3952, 0.0
        %vm3967 = vcmp.ge.f32.partialorder %v3953, 0.0
        %vm3968 = vcmp.ge.f32.partialorder %v3954, 0.0
        %vm3969 = vcmp.ge.f32.partialorder %v3955, 0.0
        %vm3970 = vcmp.ge.f32.partialorder %v3956, 0.0
        %vm3971 = vcmp.ge.f32.partialorder %v3957, 0.0
        %vm3972 = vcmp.ge.f32.partialorder %v3958, 0.0
        %vm3973 = vcmp.ge.f32.partialorder %v3959, 0.0
        %vm3974 = vcmp.ge.f32.partialorder %v3960, 0.0
        %vm3975 = vcmp.ge.f32.partialorder %v3961, 0.0
        %vm3976 = vcmp.ge.f32.partialorder %v3962, 0.0
        %vm3977 = vcmp.ge.f32.partialorder %v3963, 0.0
        %v3978 = vmul.f32 %v3950, 0.2
        %v3979 = vmul.f32 %v3951, 0.2
        %v3980 = vmul.f32 %v3952, 0.2
        %v3981 = vmul.f32 %v3953, 0.2
        %v3982 = vmul.f32 %v3954, 0.2
        %v3983 = vmul.f32 %v3955, 0.2
        %v3984 = vmul.f32 %v3956, 0.2
        %v3985 = vmul.f32 %v3957, 0.2
        %v3986 = vmul.f32 %v3958, 0.2
        %v3987 = vmul.f32 %v3959, 0.2
        %v3988 = vmul.f32 %v3960, 0.2
        %v3989 = vmul.f32 %v3961, 0.2
        %v3990 = vmul.f32 %v3962, 0.2
        %v3991 = vmul.f32 %v3963, 0.2
        %v3992 = vsel %vm3964, %v3950, %v3978
        %v3993 = vsel %vm3965, %v3951, %v3979
        %v3994 = vsel %vm3966, %v3952, %v3980
        %v3995 = vsel %vm3967, %v3953, %v3981
        %v3996 = vsel %vm3968, %v3954, %v3982
        %v3997 = vsel %vm3969, %v3955, %v3983
        %v3998 = vsel %vm3970, %v3956, %v3984
        %v3999 = vsel %vm3971, %v3957, %v3985
        %v4000 = vsel %vm3972, %v3958, %v3986
        %v4001 = vsel %vm3973, %v3959, %v3987
        %v4002 = vsel %vm3974, %v3960, %v3988
        %v4003 = vsel %vm3975, %v3961, %v3989
        %v4004 = vsel %vm3976, %v3962, %v3990
        %v4005 = vsel %vm3977, %v3963, %v3991
        %v4006 = vlaneseq
        %v4007 = vshrl.u32 %v4006, 7
        %v4008 = vadd.s32 %v4007, 8
        %v4009 = vadd.s32 %v4007, 16
        %v4010 = vadd.s32 %v4007, 24
        %v4011 = vadd.s32 %v4007, 32
        %v4012 = vadd.s32 %v4007, 40
        %v4013 = vadd.s32 %v4007, 48
        %v4014 = vadd.s32 %v4007, 56
        %v4015 = vlaneseq
        %v4016 = vand.u32 %v4015, 127
        %v4017 = vmul.u32 %v4016, 2
        %v4018 = vsub.s32 %v4007, %v4017
        %v4019 = vsub.s32 %v4008, %v4017
        %v4020 = vsub.s32 %v4009, %v4017
        %v4021 = vsub.s32 %v4010, %v4017
        %v4022 = vsub.s32 %v4011, %v4017
        %v4023 = vsub.s32 %v4012, %v4017
        %v4024 = vsub.s32 %v4013, %v4017
        %v4025 = vsub.s32 %v4014, %v4017
        %vm4026 = vcmp.eq.s32.totalorder %v4018, 0
        %vm4027 = vcmp.eq.s32.totalorder %v4019, 0
        %vm4028 = vcmp.eq.s32.totalorder %v4020, 0
        %vm4029 = vcmp.eq.s32.totalorder %v4021, 0
        %vm4030 = vcmp.eq.s32.totalorder %v4022, 0
        %vm4031 = vcmp.eq.s32.totalorder %v4023, 0
        %vm4032 = vcmp.eq.s32.totalorder %v4024, 0
        %vm4033 = vcmp.eq.s32.totalorder %v4025, 0
        %vm4034 = vcmp.eq.s32.totalorder %v4018, 1
        %vm4035 = vcmp.eq.s32.totalorder %v4019, 1
        %vm4036 = vcmp.eq.s32.totalorder %v4020, 1
        %vm4037 = vcmp.eq.s32.totalorder %v4021, 1
        %vm4038 = vcmp.eq.s32.totalorder %v4022, 1
        %vm4039 = vcmp.eq.s32.totalorder %v4023, 1
        %vm4040 = vcmp.eq.s32.totalorder %v4024, 1
        %vm4041 = vcmp.eq.s32.totalorder %v4025, 1
        %vm4042 = vmor %vm4026, %vm4034
        %vm4043 = vmor %vm4027, %vm4035
        %vm4044 = vmor %vm4028, %vm4036
        %vm4045 = vmor %vm4029, %vm4037
        %vm4046 = vmor %vm4030, %vm4038
        %vm4047 = vmor %vm4031, %vm4039
        %vm4048 = vmor %vm4032, %vm4040
        %vm4049 = vmor %vm4033, %vm4041
        %vm4050 = vcmp.eq.s32.totalorder %v4018, 32
        %vm4051 = vcmp.eq.s32.totalorder %v4019, 32
        %vm4052 = vcmp.eq.s32.totalorder %v4020, 32
        %vm4053 = vcmp.eq.s32.totalorder %v4021, 32
        %vm4054 = vcmp.eq.s32.totalorder %v4022, 32
        %vm4055 = vcmp.eq.s32.totalorder %v4023, 32
        %vm4056 = vcmp.eq.s32.totalorder %v4024, 32
        %vm4057 = vcmp.eq.s32.totalorder %v4025, 32
        %vm4058 = vmor %vm4042, %vm4050
        %vm4059 = vmor %vm4043, %vm4051
        %vm4060 = vmor %vm4044, %vm4052
        %vm4061 = vmor %vm4045, %vm4053
        %vm4062 = vmor %vm4046, %vm4054
        %vm4063 = vmor %vm4047, %vm4055
        %vm4064 = vmor %vm4048, %vm4056
        %vm4065 = vmor %vm4049, %vm4057
        %vm4066 = vcmp.eq.s32.totalorder %v4018, 33
        %vm4067 = vcmp.eq.s32.totalorder %v4019, 33
        %vm4068 = vcmp.eq.s32.totalorder %v4020, 33
        %vm4069 = vcmp.eq.s32.totalorder %v4021, 33
        %vm4070 = vcmp.eq.s32.totalorder %v4022, 33
        %vm4071 = vcmp.eq.s32.totalorder %v4023, 33
        %vm4072 = vcmp.eq.s32.totalorder %v4024, 33
        %vm4073 = vcmp.eq.s32.totalorder %v4025, 33
        %vm4074 = vmor %vm4058, %vm4066
        %vm4075 = vmor %vm4059, %vm4067
        %vm4076 = vmor %vm4060, %vm4068
        %vm4077 = vmor %vm4061, %vm4069
        %vm4078 = vmor %vm4062, %vm4070
        %vm4079 = vmor %vm4063, %vm4071
        %vm4080 = vmor %vm4064, %vm4072
        %vm4081 = vmor %vm4065, %vm4073
        %v4082 = vsel %vm4074, 1, 0
        %v4083 = vsel %vm4075, 1, 0
        %v4084 = vsel %vm4076, 1, 0
        %v4085 = vsel %vm4077, 1, 0
        %v4086 = vsel %vm4078, 1, 0
        %v4087 = vsel %vm4079, 1, 0
        %v4088 = vsel %vm4080, 1, 0
        %v4089 = vsel %vm4081, 1, 0
        %v4090 = vcvt.s32.f32 %v4082
        %v4091 = vcvt.s32.f32 %v4083
        %v4092 = vcvt.s32.f32 %v4084
        %v4093 = vcvt.s32.f32 %v4085
        %v4094 = vcvt.s32.f32 %v4086
        %v4095 = vcvt.s32.f32 %v4087
        %v4096 = vcvt.s32.f32 %v4088
        %v4097 = vcvt.s32.f32 %v4089
        %v4098 = vmul.f32 %v4090, 0.25
        %v4099 = vmul.f32 %v4091, 0.25
        %v4100 = vmul.f32 %v4092, 0.25
        %v4101 = vmul.f32 %v4093, 0.25
        %v4102 = vmul.f32 %v4094, 0.25
        %v4103 = vmul.f32 %v4095, 0.25
        %v4104 = vmul.f32 %v4096, 0.25
        %v4105 = vmul.f32 %v4097, 0.25
        %vm4106 = vcmask 498688
        %v4108 = vsel %vm4106, %v3992, 0
        %v4111 = vsel %vm4106, %v3999, 0
        %vm4113 = vcmask 1044480
        %v4115 = vsel %vm4113, %v4105, 0
        %4117 = vmatpush.msra.mxu0 0.0
        %4118 = vmatpush.msra.mxu0 0.0
        %4119 = vmatpush.msra.mxu0 0.0
        %4120 = vmatpush.msra.mxu0 0.0
        %4121 = vmatpush.msra.mxu0 0.0
        %4122 = vmatpush.msra.mxu0 0.0
        %4123 = vmatpush.msra.mxu0 0.0
        %4124 = vmatpush.msra.mxu0 0.0
        %4125 = vmatpush.msra.mxu0 %v4115
        %4126 = vmatpush.msra.mxu0 %v4104
        %4127 = vmatpush.msra.mxu0 %v4103
        %4128 = vmatpush.msra.mxu0 %v4102
        %4129 = vmatpush.msra.mxu0 %v4101
        %4130 = vmatpush.msra.mxu0 %v4100
        %4131 = vmatpush.msra.mxu0 %v4099
        %4132 = vmatpush.msra.mxu0 %v4098
        %4133 = vmatmul.f32.gmra.mxu0 %v4108
        %v4134 = vpop.f32.mrf.mxu0
        %v4135 = vadd.f32 0.0, %v4134
        %4136 = vmatmul.f32.gmra.mxu0 %v4111
        %v4137 = vpop.f32.mrf.mxu0
        %v4138 = vadd.f32 0.0, %v4137
        %4139 = vdwg.mxu0
        %vm4140 = vcmask 113664
        %4141 = vst.msk [vmem:[%s520] sm:$0xff] %vm4140, %v4135
        %4142 = vst.msk [vmem:[%s520 + $0x10] sm:$0xff] %vm4140, %v4138
        %4143 = vrot.lane.b32.xlu0 %v3992, 64
        %v4144 = vpop.permute.xlu0 %4143
        %4145 = vrot.lane.b32.xlu0 %v3999, 64
        %v4146 = vpop.permute.xlu0 %4145
        %v4147 = vsel %vm4106, %v4144, 0
        %v4149 = vsel %vm4106, %v4146, 0
        %4151 = vmatpush.msra.mxu0 0.0
        %4152 = vmatpush.msra.mxu0 0.0
        %4153 = vmatpush.msra.mxu0 0.0
        %4154 = vmatpush.msra.mxu0 0.0
        %4155 = vmatpush.msra.mxu0 0.0
        %4156 = vmatpush.msra.mxu0 0.0
        %4157 = vmatpush.msra.mxu0 0.0
        %4158 = vmatpush.msra.mxu0 0.0
        %4159 = vmatpush.msra.mxu0 %v4115
        %4160 = vmatpush.msra.mxu0 %v4104
        %4161 = vmatpush.msra.mxu0 %v4103
        %4162 = vmatpush.msra.mxu0 %v4102
        %4163 = vmatpush.msra.mxu0 %v4101
        %4164 = vmatpush.msra.mxu0 %v4100
        %4165 = vmatpush.msra.mxu0 %v4099
        %4166 = vmatpush.msra.mxu0 %v4098
        %4167 = vmatmul.f32.gmra.mxu0 %v4147
        %v4168 = vpop.f32.mrf.mxu0
        %v4169 = vadd.f32 0.0, %v4168
        %4170 = vmatmul.f32.gmra.mxu0 %v4149
        %v4171 = vpop.f32.mrf.mxu0
        %v4172 = vadd.f32 0.0, %v4171
        %4173 = vdwg.mxu0
        %4176 = vrot.lane.b32.xlu0 %v4169, 14
        %v4177 = vpop.permute.xlu0 %4176
        %4178 = vrot.lane.b32.xlu0 %v4172, 14
        %v4179 = vpop.permute.xlu0 %4178
        %vm4182 = vcmask 228464
        %4183 = vst.msk [vmem:[%s520] sm:$0xff] %vm4182, %v4177
        %4184 = vst.msk [vmem:[%s520 + $0x10] sm:$0xff] %vm4182, %v4179
        %v4186 = vsel %vm4106, %v3993, 0
        %v4189 = vsel %vm4106, %v4000, 0
        %4191 = vmatpush.msra.mxu0 0.0
        %4192 = vmatpush.msra.mxu0 0.0
        %4193 = vmatpush.msra.mxu0 0.0
        %4194 = vmatpush.msra.mxu0 0.0
        %4195 = vmatpush.msra.mxu0 0.0
        %4196 = vmatpush.msra.mxu0 0.0
        %4197 = vmatpush.msra.mxu0 0.0
        %4198 = vmatpush.msra.mxu0 0.0
        %4199 = vmatpush.msra.mxu0 %v4115
        %4200 = vmatpush.msra.mxu0 %v4104
        %4201 = vmatpush.msra.mxu0 %v4103
        %4202 = vmatpush.msra.mxu0 %v4102
        %4203 = vmatpush.msra.mxu0 %v4101
        %4204 = vmatpush.msra.mxu0 %v4100
        %4205 = vmatpush.msra.mxu0 %v4099
        %4206 = vmatpush.msra.mxu0 %v4098
        %4207 = vmatmul.f32.gmra.mxu0 %v4186
        %v4208 = vpop.f32.mrf.mxu0
        %v4209 = vadd.f32 0.0, %v4208
        %4210 = vmatmul.f32.gmra.mxu0 %v4189
        %v4211 = vpop.f32.mrf.mxu0
        %v4212 = vadd.f32 0.0, %v4211
        %4213 = vdwg.mxu0
        %4216 = vrot.lane.b32.xlu0 %v4209, 28
        %v4217 = vpop.permute.xlu0 %4216
        %4218 = vrot.lane.b32.xlu0 %v4212, 28
        %v4219 = vpop.permute.xlu0 %4218
        %vm4222 = vcmask 343264
        %4223 = vst.msk [vmem:[%s520] sm:$0xff] %vm4222, %v4217
        %4224 = vst.msk [vmem:[%s520 + $0x10] sm:$0xff] %vm4222, %v4219
        %4225 = vrot.lane.b32.xlu0 %v3993, 64
        %v4226 = vpop.permute.xlu0 %4225
        %4227 = vrot.lane.b32.xlu0 %v4000, 64
        %v4228 = vpop.permute.xlu0 %4227
        %v4229 = vsel %vm4106, %v4226, 0
        %v4231 = vsel %vm4106, %v4228, 0
        %4233 = vmatpush.msra.mxu0 0.0
        %4234 = vmatpush.msra.mxu0 0.0
        %4235 = vmatpush.msra.mxu0 0.0
        %4236 = vmatpush.msra.mxu0 0.0
        %4237 = vmatpush.msra.mxu0 0.0
        %4238 = vmatpush.msra.mxu0 0.0
        %4239 = vmatpush.msra.mxu0 0.0
        %4240 = vmatpush.msra.mxu0 0.0
        %4241 = vmatpush.msra.mxu0 %v4115
        %4242 = vmatpush.msra.mxu0 %v4104
        %4243 = vmatpush.msra.mxu0 %v4103
        %4244 = vmatpush.msra.mxu0 %v4102
        %4245 = vmatpush.msra.mxu0 %v4101
        %4246 = vmatpush.msra.mxu0 %v4100
        %4247 = vmatpush.msra.mxu0 %v4099
        %4248 = vmatpush.msra.mxu0 %v4098
        %4249 = vmatmul.f32.gmra.mxu0 %v4229
        %v4250 = vpop.f32.mrf.mxu0
        %v4251 = vadd.f32 0.0, %v4250
        %4252 = vmatmul.f32.gmra.mxu0 %v4231
        %v4253 = vpop.f32.mrf.mxu0
        %v4254 = vadd.f32 0.0, %v4253
        %4255 = vdwg.mxu0
        %4258 = vrot.lane.b32.xlu0 %v4251, 42
        %v4259 = vpop.permute.xlu0 %4258
        %4260 = vrot.lane.b32.xlu0 %v4254, 42
        %v4261 = vpop.permute.xlu0 %4260
        %vm4264 = vcmask 458064
        %4265 = vst.msk [vmem:[%s520] sm:$0xff] %vm4264, %v4259
        %4266 = vst.msk [vmem:[%s520 + $0x10] sm:$0xff] %vm4264, %v4261
        %v4268 = vsel %vm4106, %v3994, 0
        %v4271 = vsel %vm4106, %v4001, 0
        %4273 = vmatpush.msra.mxu0 0.0
        %4274 = vmatpush.msra.mxu0 0.0
        %4275 = vmatpush.msra.mxu0 0.0
        %4276 = vmatpush.msra.mxu0 0.0
        %4277 = vmatpush.msra.mxu0 0.0
        %4278 = vmatpush.msra.mxu0 0.0
        %4279 = vmatpush.msra.mxu0 0.0
        %4280 = vmatpush.msra.mxu0 0.0
        %4281 = vmatpush.msra.mxu0 %v4115
        %4282 = vmatpush.msra.mxu0 %v4104
        %4283 = vmatpush.msra.mxu0 %v4103
        %4284 = vmatpush.msra.mxu0 %v4102
        %4285 = vmatpush.msra.mxu0 %v4101
        %4286 = vmatpush.msra.mxu0 %v4100
        %4287 = vmatpush.msra.mxu0 %v4099
        %4288 = vmatpush.msra.mxu0 %v4098
        %4289 = vmatmul.f32.gmra.mxu0 %v4268
        %v4290 = vpop.f32.mrf.mxu0
        %v4291 = vadd.f32 0.0, %v4290
        %4292 = vmatmul.f32.gmra.mxu0 %v4271
        %v4293 = vpop.f32.mrf.mxu0
        %v4294 = vadd.f32 0.0, %v4293
        %4295 = vdwg.mxu0
        %4298 = vrot.lane.b32.xlu0 %v4291, 56
        %v4299 = vpop.permute.xlu0 %4298
        %4300 = vrot.lane.b32.xlu0 %v4294, 56
        %v4301 = vpop.permute.xlu0 %4300
        %vm4304 = vcmask 572864
        %4305 = vst.msk [vmem:[%s520] sm:$0xff] %vm4304, %v4299
        %4306 = vst.msk [vmem:[%s520 + $0x10] sm:$0xff] %vm4304, %v4301
        %4307 = vrot.lane.b32.xlu0 %v3994, 64
        %v4308 = vpop.permute.xlu0 %4307
        %4309 = vrot.lane.b32.xlu0 %v4001, 64
        %v4310 = vpop.permute.xlu0 %4309
        %v4311 = vsel %vm4106, %v4308, 0
        %v4313 = vsel %vm4106, %v4310, 0
        %4315 = vmatpush.msra.mxu0 0.0
        %4316 = vmatpush.msra.mxu0 0.0
        %4317 = vmatpush.msra.mxu0 0.0
        %4318 = vmatpush.msra.mxu0 0.0
        %4319 = vmatpush.msra.mxu0 0.0
        %4320 = vmatpush.msra.mxu0 0.0
        %4321 = vmatpush.msra.mxu0 0.0
        %4322 = vmatpush.msra.mxu0 0.0
        %4323 = vmatpush.msra.mxu0 %v4115
        %4324 = vmatpush.msra.mxu0 %v4104
        %4325 = vmatpush.msra.mxu0 %v4103
        %4326 = vmatpush.msra.mxu0 %v4102
        %4327 = vmatpush.msra.mxu0 %v4101
        %4328 = vmatpush.msra.mxu0 %v4100
        %4329 = vmatpush.msra.mxu0 %v4099
        %4330 = vmatpush.msra.mxu0 %v4098
        %4331 = vmatmul.f32.gmra.mxu0 %v4311
        %v4332 = vpop.f32.mrf.mxu0
        %v4333 = vadd.f32 0.0, %v4332
        %4334 = vmatmul.f32.gmra.mxu0 %v4313
        %v4335 = vpop.f32.mrf.mxu0
        %v4336 = vadd.f32 0.0, %v4335
        %4337 = vdwg.mxu0
        %4340 = vrot.lane.b32.xlu0 %v4333, 70
        %v4341 = vpop.permute.xlu0 %4340
        %4342 = vrot.lane.b32.xlu0 %v4336, 70
        %v4343 = vpop.permute.xlu0 %4342
        %vm4346 = vcmask 687664
        %4347 = vst.msk [vmem:[%s520] sm:$0xff] %vm4346, %v4341
        %4348 = vst.msk [vmem:[%s520 + $0x10] sm:$0xff] %vm4346, %v4343
        %v4350 = vsel %vm4106, %v3995, 0
        %v4353 = vsel %vm4106, %v4002, 0
        %4355 = vmatpush.msra.mxu0 0.0
        %4356 = vmatpush.msra.mxu0 0.0
        %4357 = vmatpush.msra.mxu0 0.0
        %4358 = vmatpush.msra.mxu0 0.0
        %4359 = vmatpush.msra.mxu0 0.0
        %4360 = vmatpush.msra.mxu0 0.0
        %4361 = vmatpush.msra.mxu0 0.0
        %4362 = vmatpush.msra.mxu0 0.0
        %4363 = vmatpush.msra.mxu0 %v4115
        %4364 = vmatpush.msra.mxu0 %v4104
        %4365 = vmatpush.msra.mxu0 %v4103
        %4366 = vmatpush.msra.mxu0 %v4102
        %4367 = vmatpush.msra.mxu0 %v4101
        %4368 = vmatpush.msra.mxu0 %v4100
        %4369 = vmatpush.msra.mxu0 %v4099
        %4370 = vmatpush.msra.mxu0 %v4098
        %4371 = vmatmul.f32.gmra.mxu0 %v4350
        %v4372 = vpop.f32.mrf.mxu0
        %v4373 = vadd.f32 0.0, %v4372
        %4374 = vmatmul.f32.gmra.mxu0 %v4353
        %v4375 = vpop.f32.mrf.mxu0
        %v4376 = vadd.f32 0.0, %v4375
        %4377 = vdwg.mxu0
        %4380 = vrot.lane.b32.xlu0 %v4373, 84
        %v4381 = vpop.permute.xlu0 %4380
        %4382 = vrot.lane.b32.xlu0 %v4376, 84
        %v4383 = vpop.permute.xlu0 %4382
        %vm4386 = vcmask 802464
        %4387 = vst.msk [vmem:[%s520] sm:$0xff] %vm4386, %v4381
        %4388 = vst.msk [vmem:[%s520 + $0x10] sm:$0xff] %vm4386, %v4383
        %4389 = vrot.lane.b32.xlu0 %v3995, 64
        %v4390 = vpop.permute.xlu0 %4389
        %4391 = vrot.lane.b32.xlu0 %v4002, 64
        %v4392 = vpop.permute.xlu0 %4391
        %v4393 = vsel %vm4106, %v4390, 0
        %v4395 = vsel %vm4106, %v4392, 0
        %4397 = vmatpush.msra.mxu0 0.0
        %4398 = vmatpush.msra.mxu0 0.0
        %4399 = vmatpush.msra.mxu0 0.0
        %4400 = vmatpush.msra.mxu0 0.0
        %4401 = vmatpush.msra.mxu0 0.0
        %4402 = vmatpush.msra.mxu0 0.0
        %4403 = vmatpush.msra.mxu0 0.0
        %4404 = vmatpush.msra.mxu0 0.0
        %4405 = vmatpush.msra.mxu0 %v4115
        %4406 = vmatpush.msra.mxu0 %v4104
        %4407 = vmatpush.msra.mxu0 %v4103
        %4408 = vmatpush.msra.mxu0 %v4102
        %4409 = vmatpush.msra.mxu0 %v4101
        %4410 = vmatpush.msra.mxu0 %v4100
        %4411 = vmatpush.msra.mxu0 %v4099
        %4412 = vmatpush.msra.mxu0 %v4098
        %4413 = vmatmul.f32.gmra.mxu0 %v4393
        %v4414 = vpop.f32.mrf.mxu0
        %v4415 = vadd.f32 0.0, %v4414
        %4416 = vmatmul.f32.gmra.mxu0 %v4395
        %v4417 = vpop.f32.mrf.mxu0
        %v4418 = vadd.f32 0.0, %v4417
        %4419 = vdwg.mxu0
        %4422 = vrot.lane.b32.xlu0 %v4415, 98
        %v4423 = vpop.permute.xlu0 %4422
        %4424 = vrot.lane.b32.xlu0 %v4418, 98
        %v4425 = vpop.permute.xlu0 %4424
        %vm4428 = vcmask 917264
        %4429 = vst.msk [vmem:[%s520] sm:$0xff] %vm4428, %v4423
        %4430 = vst.msk [vmem:[%s520 + $0x10] sm:$0xff] %vm4428, %v4425
        %v4432 = vsel %vm4106, %v3996, 0
        %v4435 = vsel %vm4106, %v4003, 0
        %4437 = vmatpush.msra.mxu0 0.0
        %4438 = vmatpush.msra.mxu0 0.0
        %4439 = vmatpush.msra.mxu0 0.0
        %4440 = vmatpush.msra.mxu0 0.0
        %4441 = vmatpush.msra.mxu0 0.0
        %4442 = vmatpush.msra.mxu0 0.0
        %4443 = vmatpush.msra.mxu0 0.0
        %4444 = vmatpush.msra.mxu0 0.0
        %4445 = vmatpush.msra.mxu0 %v4115
        %4446 = vmatpush.msra.mxu0 %v4104
        %4447 = vmatpush.msra.mxu0 %v4103
        %4448 = vmatpush.msra.mxu0 %v4102
        %4449 = vmatpush.msra.mxu0 %v4101
        %4450 = vmatpush.msra.mxu0 %v4100
        %4451 = vmatpush.msra.mxu0 %v4099
        %4452 = vmatpush.msra.mxu0 %v4098
        %4453 = vmatmul.f32.gmra.mxu0 %v4432
        %v4454 = vpop.f32.mrf.mxu0
        %v4455 = vadd.f32 0.0, %v4454
        %4456 = vmatmul.f32.gmra.mxu0 %v4435
        %v4457 = vpop.f32.mrf.mxu0
        %v4458 = vadd.f32 0.0, %v4457
        %4459 = vdwg.mxu0
        %4462 = vrot.lane.b32.xlu0 %v4455, 112
        %v4463 = vpop.permute.xlu0 %4462
        %4464 = vrot.lane.b32.xlu0 %v4458, 112
        %v4465 = vpop.permute.xlu0 %4464
        %vm4468 = vcmask 1032064
        %4469 = vst.msk [vmem:[%s520] sm:$0xff] %vm4468, %v4463
        %4470 = vst.msk [vmem:[%s520 + $0x10] sm:$0xff] %vm4468, %v4465
        %4471 = vrot.lane.b32.xlu0 %v3996, 64
        %v4472 = vpop.permute.xlu0 %4471
        %4473 = vrot.lane.b32.xlu0 %v4003, 64
        %v4474 = vpop.permute.xlu0 %4473
        %v4475 = vsel %vm4106, %v4472, 0
        %v4477 = vsel %vm4106, %v4474, 0
        %4479 = vmatpush.msra.mxu0 0.0
        %4480 = vmatpush.msra.mxu0 0.0
        %4481 = vmatpush.msra.mxu0 0.0
        %4482 = vmatpush.msra.mxu0 0.0
        %4483 = vmatpush.msra.mxu0 0.0
        %4484 = vmatpush.msra.mxu0 0.0
        %4485 = vmatpush.msra.mxu0 0.0
        %4486 = vmatpush.msra.mxu0 0.0
        %4487 = vmatpush.msra.mxu0 %v4115
        %4488 = vmatpush.msra.mxu0 %v4104
        %4489 = vmatpush.msra.mxu0 %v4103
        %4490 = vmatpush.msra.mxu0 %v4102
        %4491 = vmatpush.msra.mxu0 %v4101
        %4492 = vmatpush.msra.mxu0 %v4100
        %4493 = vmatpush.msra.mxu0 %v4099
        %4494 = vmatpush.msra.mxu0 %v4098
        %4495 = vmatmul.f32.gmra.mxu0 %v4475
        %v4496 = vpop.f32.mrf.mxu0
        %v4497 = vadd.f32 0.0, %v4496
        %4498 = vmatmul.f32.gmra.mxu0 %v4477
        %v4499 = vpop.f32.mrf.mxu0
        %v4500 = vadd.f32 0.0, %v4499
        %4501 = vdwg.mxu0
        %4504 = vrot.lane.b32.xlu0 %v4497, 126
        %v4505 = vpop.permute.xlu0 %4504
        %4506 = vrot.lane.b32.xlu0 %v4500, 126
        %v4507 = vpop.permute.xlu0 %4506
        %vm4510 = vcmask 1048560
        %4511 = vst.msk [vmem:[%s520] sm:$0xff] %vm4510, %v4505
        %vm4512 = vcmask 97280
        %4513 = vst.msk [vmem:[%s520 + $0x8] sm:$0xff] %vm4512, %v4505
        %4514 = vst.msk [vmem:[%s520 + $0x10] sm:$0xff] %vm4510, %v4507
        %4515 = vst.msk [vmem:[%s520 + $0x18] sm:$0xff] %vm4512, %v4507
        %v4517 = vsel %vm4106, %v3997, 0
        %v4520 = vsel %vm4106, %v4004, 0
        %4522 = vmatpush.msra.mxu0 0.0
        %4523 = vmatpush.msra.mxu0 0.0
        %4524 = vmatpush.msra.mxu0 0.0
        %4525 = vmatpush.msra.mxu0 0.0
        %4526 = vmatpush.msra.mxu0 0.0
        %4527 = vmatpush.msra.mxu0 0.0
        %4528 = vmatpush.msra.mxu0 0.0
        %4529 = vmatpush.msra.mxu0 0.0
        %4530 = vmatpush.msra.mxu0 %v4115
        %4531 = vmatpush.msra.mxu0 %v4104
        %4532 = vmatpush.msra.mxu0 %v4103
        %4533 = vmatpush.msra.mxu0 %v4102
        %4534 = vmatpush.msra.mxu0 %v4101
        %4535 = vmatpush.msra.mxu0 %v4100
        %4536 = vmatpush.msra.mxu0 %v4099
        %4537 = vmatpush.msra.mxu0 %v4098
        %4538 = vmatmul.f32.gmra.mxu0 %v4517
        %v4539 = vpop.f32.mrf.mxu0
        %v4540 = vadd.f32 0.0, %v4539
        %4541 = vmatmul.f32.gmra.mxu0 %v4520
        %v4542 = vpop.f32.mrf.mxu0
        %v4543 = vadd.f32 0.0, %v4542
        %4544 = vdwg.mxu0
        %4547 = vrot.lane.b32.xlu0 %v4540, 12
        %v4548 = vpop.permute.xlu0 %4547
        %4549 = vrot.lane.b32.xlu0 %v4543, 12
        %v4550 = vpop.permute.xlu0 %4549
        %vm4553 = vcmask 212064
        %4554 = vst.msk [vmem:[%s520 + $0x8] sm:$0xff] %vm4553, %v4548
        %4555 = vst.msk [vmem:[%s520 + $0x18] sm:$0xff] %vm4553, %v4550
        %4556 = vrot.lane.b32.xlu0 %v3997, 64
        %v4557 = vpop.permute.xlu0 %4556
        %4558 = vrot.lane.b32.xlu0 %v4004, 64
        %v4559 = vpop.permute.xlu0 %4558
        %v4560 = vsel %vm4106, %v4557, 0
        %v4562 = vsel %vm4106, %v4559, 0
        %4564 = vmatpush.msra.mxu0 0.0
        %4565 = vmatpush.msra.mxu0 0.0
        %4566 = vmatpush.msra.mxu0 0.0
        %4567 = vmatpush.msra.mxu0 0.0
        %4568 = vmatpush.msra.mxu0 0.0
        %4569 = vmatpush.msra.mxu0 0.0
        %4570 = vmatpush.msra.mxu0 0.0
        %4571 = vmatpush.msra.mxu0 0.0
        %4572 = vmatpush.msra.mxu0 %v4115
        %4573 = vmatpush.msra.mxu0 %v4104
        %4574 = vmatpush.msra.mxu0 %v4103
        %4575 = vmatpush.msra.mxu0 %v4102
        %4576 = vmatpush.msra.mxu0 %v4101
        %4577 = vmatpush.msra.mxu0 %v4100
        %4578 = vmatpush.msra.mxu0 %v4099
        %4579 = vmatpush.msra.mxu0 %v4098
        %4580 = vmatmul.f32.gmra.mxu0 %v4560
        %v4581 = vpop.f32.mrf.mxu0
        %v4582 = vadd.f32 0.0, %v4581
        %4583 = vmatmul.f32.gmra.mxu0 %v4562
        %v4584 = vpop.f32.mrf.mxu0
        %v4585 = vadd.f32 0.0, %v4584
        %4586 = vdwg.mxu0
        %4589 = vrot.lane.b32.xlu0 %v4582, 26
        %v4590 = vpop.permute.xlu0 %4589
        %4591 = vrot.lane.b32.xlu0 %v4585, 26
        %v4592 = vpop.permute.xlu0 %4591
        %vm4595 = vcmask 326864
        %4596 = vst.msk [vmem:[%s520 + $0x8] sm:$0xff] %vm4595, %v4590
        %4597 = vst.msk [vmem:[%s520 + $0x18] sm:$0xff] %vm4595, %v4592
        %v4599 = vsel %vm4106, %v3998, 0
        %v4602 = vsel %vm4106, %v4005, 0
        %4604 = vmatpush.msra.mxu0 0.0
        %4605 = vmatpush.msra.mxu0 0.0
        %4606 = vmatpush.msra.mxu0 0.0
        %4607 = vmatpush.msra.mxu0 0.0
        %4608 = vmatpush.msra.mxu0 0.0
        %4609 = vmatpush.msra.mxu0 0.0
        %4610 = vmatpush.msra.mxu0 0.0
        %4611 = vmatpush.msra.mxu0 0.0
        %4612 = vmatpush.msra.mxu0 %v4115
        %4613 = vmatpush.msra.mxu0 %v4104
        %4614 = vmatpush.msra.mxu0 %v4103
        %4615 = vmatpush.msra.mxu0 %v4102
        %4616 = vmatpush.msra.mxu0 %v4101
        %4617 = vmatpush.msra.mxu0 %v4100
        %4618 = vmatpush.msra.mxu0 %v4099
        %4619 = vmatpush.msra.mxu0 %v4098
        %4620 = vmatmul.f32.gmra.mxu0 %v4599
        %v4621 = vpop.f32.mrf.mxu0
        %v4622 = vadd.f32 0.0, %v4621
        %4623 = vmatmul.f32.gmra.mxu0 %v4602
        %v4624 = vpop.f32.mrf.mxu0
        %v4625 = vadd.f32 0.0, %v4624
        %4626 = vdwg.mxu0
        %4629 = vrot.lane.b32.xlu0 %v4622, 40
        %v4630 = vpop.permute.xlu0 %4629
        %4631 = vrot.lane.b32.xlu0 %v4625, 40
        %v4632 = vpop.permute.xlu0 %4631
        %vm4635 = vcmask 441664
        %4636 = vst.msk [vmem:[%s520 + $0x8] sm:$0xff] %vm4635, %v4630
        %4637 = vst.msk [vmem:[%s520 + $0x18] sm:$0xff] %vm4635, %v4632
        %4638 = vrot.lane.b32.xlu0 %v3998, 64
        %v4639 = vpop.permute.xlu0 %4638
        %4640 = vrot.lane.b32.xlu0 %v4005, 64
        %v4641 = vpop.permute.xlu0 %4640
        %v4642 = vsel %vm4106, %v4639, 0
        %v4644 = vsel %vm4106, %v4641, 0
        %4646 = vmatpush.msra.mxu0 0.0
        %4647 = vmatpush.msra.mxu0 0.0
        %4648 = vmatpush.msra.mxu0 0.0
        %4649 = vmatpush.msra.mxu0 0.0
        %4650 = vmatpush.msra.mxu0 0.0
        %4651 = vmatpush.msra.mxu0 0.0
        %4652 = vmatpush.msra.mxu0 0.0
        %4653 = vmatpush.msra.mxu0 0.0
        %4654 = vmatpush.msra.mxu0 %v4115
        %4655 = vmatpush.msra.mxu0 %v4104
        %4656 = vmatpush.msra.mxu0 %v4103
        %4657 = vmatpush.msra.mxu0 %v4102
        %4658 = vmatpush.msra.mxu0 %v4101
        %4659 = vmatpush.msra.mxu0 %v4100
        %4660 = vmatpush.msra.mxu0 %v4099
        %4661 = vmatpush.msra.mxu0 %v4098
        %4662 = vmatmul.f32.gmra.mxu0 %v4642
        %v4663 = vpop.f32.mrf.mxu0
        %v4664 = vadd.f32 0.0, %v4663
        %4665 = vmatmul.f32.gmra.mxu0 %v4644
        %v4666 = vpop.f32.mrf.mxu0
        %v4667 = vadd.f32 0.0, %v4666
        %4668 = vdwg.mxu0
        %4671 = vrot.lane.b32.xlu0 %v4664, 54
        %v4672 = vpop.permute.xlu0 %4671
        %4673 = vrot.lane.b32.xlu0 %v4667, 54
        %v4674 = vpop.permute.xlu0 %4673
        %vm4677 = vcmask 556464
        %4678 = vst.msk [vmem:[%s520 + $0x8] sm:$0xff] %vm4677, %v4672
        %4679 = vst.msk [vmem:[%s520 + $0x18] sm:$0xff] %vm4677, %v4674
        %v4680 = vld [vmem:[%s520] sm:$0xff]
        %v4681 = vld [vmem:[%s520 + $0x8] sm:$0xff]
        %v4682 = vld [vmem:[%s520 + $0x10] sm:$0xff]
        %v4683 = vld [vmem:[%s520 + $0x18] sm:$0xff]
        %v4684 = vpack.c.bf16 %v4682, %v4680
        %v4685 = vpack.c.bf16 %v4683, %v4681
        %v4686 = vld [vmem:[%s3] sm:$0xf]
        %v4687 = vld [vmem:[%s3 + $0x4] sm:$0xf]
        %v4688 = vld [vmem:[%s3 + $0x8] sm:$0xf]
        %v4689 = vld [vmem:[%s3 + $0xc] sm:$0xf]
        %s4690 = scalar_lea.vmem %s3, 16
        %v4691 = vld [vmem:[%s4690] sm:$0xf]
        %v4692 = vld [vmem:[%s4690 + $0x4] sm:$0xf]
        %v4693 = vld [vmem:[%s4690 + $0x8] sm:$0xf]
        %v4694 = vld [vmem:[%s4690 + $0xc] sm:$0xf]
        %v4699 = vunpack.c.l.b16 %v4691
        %v4700 = vunpack.c.l.b16 %v4692
        %v4701 = vunpack.c.l.b16 %v4693
        %v4702 = vunpack.c.l.b16 %v4694
        %v4703 = vpack.c.b16 %v4700, %v4699
        %v4704 = vpack.c.b16 %v4702, %v4701
        %4707 = vrot.lane.b32.xlu0 %v4684, 127
        %v4708 = vpop.permute.xlu0 %4707
        %4709 = vrot.lane.b32.xlu0 %v4685, 127
        %v4710 = vpop.permute.xlu0 %4709
        %v4711 = vsel %vm666, %v4708, %v4710
        %vm4714 = vcmask 130048
        %v4716 = vsel %vm4714, %v4703, 0
        %v4719 = vsel %vm4714, %v4704, 0
        %4721 = vmatpush.bf16.msra.mxu0 0
        %4722 = vmatpush.bf16.msra.mxu0 0
        %4723 = vmatpush.bf16.msra.mxu0 0
        %4724 = vmatpush.bf16.msra.mxu0 0
        %4725 = vmatpush.bf16.msra.mxu0 0
        %4726 = vmatpush.bf16.msra.mxu0 0
        %4727 = vmatpush.bf16.msra.mxu0 0
        %4728 = vmatpush.bf16.msra.mxu0 %v4711
        %4729 = vmatmul.bf16.gmra.mxu0 %v4716
        %v4730 = vpop.f32.mrf.mxu0
        %v4731 = vadd.f32 0.0, %v4730
        %v4732 = vpop.f32.mrf.mxu0
        %v4733 = vadd.f32 0.0, %v4732
        %4734 = vmatmul.bf16.gmra.mxu0 %v4719
        %v4735 = vpop.f32.mrf.mxu0
        %v4736 = vadd.f32 0.0, %v4735
        %v4737 = vpop.f32.mrf.mxu0
        %v4738 = vadd.f32 0.0, %v4737
        %4739 = vdwg.mxu0
        %4740 = vmatpush.bf16.msra.mxu0 0
        %4741 = vmatpush.bf16.msra.mxu0 0
        %4742 = vmatpush.bf16.msra.mxu0 0
        %4743 = vmatpush.bf16.msra.mxu0 0
        %4744 = vmatpush.bf16.msra.mxu0 0
        %4745 = vmatpush.bf16.msra.mxu0 0
        %4746 = vmatpush.bf16.msra.mxu0 0
        %4747 = vmatpush.bf16.msra.mxu0 %v4710
        %4748 = vmatmul.bf16.gmra.mxu0 %v4716
        %v4749 = vpop.f32.mrf.mxu0
        %v4750 = vadd.f32 0.0, %v4749
        %v4751 = vpop.f32.mrf.mxu0
        %v4752 = vadd.f32 0.0, %v4751
        %4753 = vmatmul.bf16.gmra.mxu0 %v4719
        %v4754 = vpop.f32.mrf.mxu0
        %v4755 = vadd.f32 0.0, %v4754
        %v4756 = vpop.f32.mrf.mxu0
        %v4757 = vadd.f32 0.0, %v4756
        %4758 = vdwg.mxu0
        %v4763 = vunpack.c.l.b16 %v4686
        %v4764 = vunpack.c.l.b16 %v4687
        %v4765 = vunpack.c.l.b16 %v4688
        %v4766 = vunpack.c.l.b16 %v4689
        %v4767 = vpack.c.b16 %v4764, %v4763
        %v4768 = vpack.c.b16 %v4766, %v4765
        %v4770 = vsel %vm4714, %v4767, 0
        %v4773 = vsel %vm4714, %v4768, 0
        %4775 = vmatpush.bf16.msra.mxu0 0
        %4776 = vmatpush.bf16.msra.mxu0 0
        %4777 = vmatpush.bf16.msra.mxu0 0
        %4778 = vmatpush.bf16.msra.mxu0 0
        %4779 = vmatpush.bf16.msra.mxu0 0
        %4780 = vmatpush.bf16.msra.mxu0 0
        %4781 = vmatpush.bf16.msra.mxu0 0
        %4782 = vmatpush.bf16.msra.mxu0 %v4684
        %4783 = vmatmul.bf16.gmra.mxu0 %v4770
        %v4784 = vpop.f32.mrf.mxu0
        %v4785 = vadd.f32 %v4731, %v4784
        %v4786 = vpop.f32.mrf.mxu0
        %v4787 = vadd.f32 %v4733, %v4786
        %4788 = vmatmul.bf16.gmra.mxu0 %v4773
        %v4789 = vpop.f32.mrf.mxu0
        %v4790 = vadd.f32 %v4736, %v4789
        %v4791 = vpop.f32.mrf.mxu0
        %v4792 = vadd.f32 %v4738, %v4791
        %4793 = vdwg.mxu0
        %4794 = vmatpush.bf16.msra.mxu0 0
        %4795 = vmatpush.bf16.msra.mxu0 0
        %4796 = vmatpush.bf16.msra.mxu0 0
        %4797 = vmatpush.bf16.msra.mxu0 0
        %4798 = vmatpush.bf16.msra.mxu0 0
        %4799 = vmatpush.bf16.msra.mxu0 0
        %4800 = vmatpush.bf16.msra.mxu0 0
        %4801 = vmatpush.bf16.msra.mxu0 %v4685
        %4802 = vmatmul.bf16.gmra.mxu0 %v4770
        %v4803 = vpop.f32.mrf.mxu0
        %v4804 = vadd.f32 %v4750, %v4803
        %v4805 = vpop.f32.mrf.mxu0
        %v4806 = vadd.f32 %v4752, %v4805
        %4807 = vmatmul.bf16.gmra.mxu0 %v4773
        %v4808 = vpop.f32.mrf.mxu0
        %v4809 = vadd.f32 %v4755, %v4808
        %v4810 = vpop.f32.mrf.mxu0
        %v4811 = vadd.f32 %v4757, %v4810
        %4812 = vdwg.mxu0
        %s4813 = scalar_lea.vmem %s3, 32
        %v4814 = vld [vmem:[%s4813] sm:$0xf]
        %v4815 = vld [vmem:[%s4813 + $0x4] sm:$0xf]
        %v4816 = vld [vmem:[%s4813 + $0x8] sm:$0xf]
        %v4817 = vld [vmem:[%s4813 + $0xc] sm:$0xf]
        %v4822 = vunpack.c.l.b16 %v4814
        %v4823 = vunpack.c.l.b16 %v4815
        %v4824 = vunpack.c.l.b16 %v4816
        %v4825 = vunpack.c.l.b16 %v4817
        %v4826 = vpack.c.b16 %v4823, %v4822
        %v4827 = vpack.c.b16 %v4825, %v4824
        %4828 = vrot.lane.b32.xlu0 %v4684, 126
        %v4829 = vpop.permute.xlu0 %4828
        %4830 = vrot.lane.b32.xlu0 %v4685, 126
        %v4831 = vpop.permute.xlu0 %4830
        %v4832 = vsel %vm999, %v4829, %v4831
        %v4836 = vsel %vm4714, %v4826, 0
        %v4839 = vsel %vm4714, %v4827, 0
        %4841 = vmatpush.bf16.msra.mxu0 0
        %4842 = vmatpush.bf16.msra.mxu0 0
        %4843 = vmatpush.bf16.msra.mxu0 0
        %4844 = vmatpush.bf16.msra.mxu0 0
        %4845 = vmatpush.bf16.msra.mxu0 0
        %4846 = vmatpush.bf16.msra.mxu0 0
        %4847 = vmatpush.bf16.msra.mxu0 0
        %4848 = vmatpush.bf16.msra.mxu0 %v4832
        %4849 = vmatmul.bf16.gmra.mxu0 %v4836
        %v4850 = vpop.f32.mrf.mxu0
        %v4851 = vadd.f32 0.0, %v4850
        %v4852 = vpop.f32.mrf.mxu0
        %v4853 = vadd.f32 0.0, %v4852
        %4854 = vmatmul.bf16.gmra.mxu0 %v4839
        %v4855 = vpop.f32.mrf.mxu0
        %v4856 = vadd.f32 0.0, %v4855
        %v4857 = vpop.f32.mrf.mxu0
        %v4858 = vadd.f32 0.0, %v4857
        %4859 = vdwg.mxu0
        %4860 = vmatpush.bf16.msra.mxu0 0
        %4861 = vmatpush.bf16.msra.mxu0 0
        %4862 = vmatpush.bf16.msra.mxu0 0
        %4863 = vmatpush.bf16.msra.mxu0 0
        %4864 = vmatpush.bf16.msra.mxu0 0
        %4865 = vmatpush.bf16.msra.mxu0 0
        %4866 = vmatpush.bf16.msra.mxu0 0
        %4867 = vmatpush.bf16.msra.mxu0 %v4831
        %4868 = vmatmul.bf16.gmra.mxu0 %v4836
        %v4869 = vpop.f32.mrf.mxu0
        %v4870 = vadd.f32 0.0, %v4869
        %v4871 = vpop.f32.mrf.mxu0
        %v4872 = vadd.f32 0.0, %v4871
        %4873 = vmatmul.bf16.gmra.mxu0 %v4839
        %v4874 = vpop.f32.mrf.mxu0
        %v4875 = vadd.f32 0.0, %v4874
        %v4876 = vpop.f32.mrf.mxu0
        %v4877 = vadd.f32 0.0, %v4876
        %4878 = vdwg.mxu0
        %v4879 = vadd.f32 %v4785, %v4851
        %v4880 = vadd.f32 %v4804, %v4870
        %v4881 = vadd.f32 %v4787, %v4853
        %v4882 = vadd.f32 %v4806, %v4872
        %v4883 = vadd.f32 %v4790, %v4856
        %v4884 = vadd.f32 %v4809, %v4875
        %v4885 = vadd.f32 %v4792, %v4858
        %v4886 = vadd.f32 %v4811, %v4877
        %s4887 = scalar_lea.vmem %s3, 48
        %v4888 = vld [vmem:[%s4887] sm:$0xf]
        %v4889 = vld [vmem:[%s4887 + $0x4] sm:$0xf]
        %v4890 = vld [vmem:[%s4887 + $0x8] sm:$0xf]
        %v4891 = vld [vmem:[%s4887 + $0xc] sm:$0xf]
        %v4896 = vunpack.c.l.b16 %v4888
        %v4897 = vunpack.c.l.b16 %v4889
        %v4898 = vunpack.c.l.b16 %v4890
        %v4899 = vunpack.c.l.b16 %v4891
        %v4900 = vpack.c.b16 %v4897, %v4896
        %v4901 = vpack.c.b16 %v4899, %v4898
        %4902 = vrot.lane.b32.xlu0 %v4684, 125
        %v4903 = vpop.permute.xlu0 %4902
        %4904 = vrot.lane.b32.xlu0 %v4685, 125
        %v4905 = vpop.permute.xlu0 %4904
        %v4906 = vsel %vm1214, %v4903, %v4905
        %v4910 = vsel %vm4714, %v4900, 0
        %v4913 = vsel %vm4714, %v4901, 0
        %4915 = vmatpush.bf16.msra.mxu0 0
        %4916 = vmatpush.bf16.msra.mxu0 0
        %4917 = vmatpush.bf16.msra.mxu0 0
        %4918 = vmatpush.bf16.msra.mxu0 0
        %4919 = vmatpush.bf16.msra.mxu0 0
        %4920 = vmatpush.bf16.msra.mxu0 0
        %4921 = vmatpush.bf16.msra.mxu0 0
        %4922 = vmatpush.bf16.msra.mxu0 %v4906
        %4923 = vmatmul.bf16.gmra.mxu0 %v4910
        %v4924 = vpop.f32.mrf.mxu0
        %v4925 = vadd.f32 0.0, %v4924
        %v4926 = vpop.f32.mrf.mxu0
        %v4927 = vadd.f32 0.0, %v4926
        %4928 = vmatmul.bf16.gmra.mxu0 %v4913
        %v4929 = vpop.f32.mrf.mxu0
        %v4930 = vadd.f32 0.0, %v4929
        %v4931 = vpop.f32.mrf.mxu0
        %v4932 = vadd.f32 0.0, %v4931
        %4933 = vdwg.mxu0
        %4934 = vmatpush.bf16.msra.mxu0 0
        %4935 = vmatpush.bf16.msra.mxu0 0
        %4936 = vmatpush.bf16.msra.mxu0 0
        %4937 = vmatpush.bf16.msra.mxu0 0
        %4938 = vmatpush.bf16.msra.mxu0 0
        %4939 = vmatpush.bf16.msra.mxu0 0
        %4940 = vmatpush.bf16.msra.mxu0 0
        %4941 = vmatpush.bf16.msra.mxu0 %v4905
        %4942 = vmatmul.bf16.gmra.mxu0 %v4910
        %v4943 = vpop.f32.mrf.mxu0
        %v4944 = vadd.f32 0.0, %v4943
        %v4945 = vpop.f32.mrf.mxu0
        %v4946 = vadd.f32 0.0, %v4945
        %4947 = vmatmul.bf16.gmra.mxu0 %v4913
        %v4948 = vpop.f32.mrf.mxu0
        %v4949 = vadd.f32 0.0, %v4948
        %v4950 = vpop.f32.mrf.mxu0
        %v4951 = vadd.f32 0.0, %v4950
        %4952 = vdwg.mxu0
        %v4953 = vadd.f32 %v4879, %v4925
        %v4954 = vadd.f32 %v4880, %v4944
        %v4955 = vadd.f32 %v4881, %v4927
        %v4956 = vadd.f32 %v4882, %v4946
        %v4957 = vadd.f32 %v4883, %v4930
        %v4958 = vadd.f32 %v4884, %v4949
        %v4959 = vadd.f32 %v4885, %v4932
        %v4960 = vadd.f32 %v4886, %v4951
        %s4961 = scalar_lea.vmem %s3, 64
        %v4962 = vld [vmem:[%s4961] sm:$0xf]
        %v4963 = vld [vmem:[%s4961 + $0x4] sm:$0xf]
        %v4964 = vld [vmem:[%s4961 + $0x8] sm:$0xf]
        %v4965 = vld [vmem:[%s4961 + $0xc] sm:$0xf]
        %v4970 = vunpack.c.l.b16 %v4962
        %v4971 = vunpack.c.l.b16 %v4963
        %v4972 = vunpack.c.l.b16 %v4964
        %v4973 = vunpack.c.l.b16 %v4965
        %v4974 = vpack.c.b16 %v4971, %v4970
        %v4975 = vpack.c.b16 %v4973, %v4972
        %4976 = vrot.lane.b32.xlu0 %v4684, 114
        %v4977 = vpop.permute.xlu0 %4976
        %4978 = vrot.lane.b32.xlu0 %v4685, 114
        %v4979 = vpop.permute.xlu0 %4978
        %vm4980 = vcmask 932864
        %v4981 = vsel %vm4980, %v4977, %v4979
        %v4985 = vsel %vm4714, %v4974, 0
        %v4988 = vsel %vm4714, %v4975, 0
        %4990 = vmatpush.bf16.msra.mxu0 0
        %4991 = vmatpush.bf16.msra.mxu0 0
        %4992 = vmatpush.bf16.msra.mxu0 0
        %4993 = vmatpush.bf16.msra.mxu0 0
        %4994 = vmatpush.bf16.msra.mxu0 0
        %4995 = vmatpush.bf16.msra.mxu0 0
        %4996 = vmatpush.bf16.msra.mxu0 0
        %4997 = vmatpush.bf16.msra.mxu0 %v4981
        %4998 = vmatmul.bf16.gmra.mxu0 %v4985
        %v4999 = vpop.f32.mrf.mxu0
        %v5000 = vadd.f32 0.0, %v4999
        %v5001 = vpop.f32.mrf.mxu0
        %v5002 = vadd.f32 0.0, %v5001
        %5003 = vmatmul.bf16.gmra.mxu0 %v4988
        %v5004 = vpop.f32.mrf.mxu0
        %v5005 = vadd.f32 0.0, %v5004
        %v5006 = vpop.f32.mrf.mxu0
        %v5007 = vadd.f32 0.0, %v5006
        %5008 = vdwg.mxu0
        %5009 = vmatpush.bf16.msra.mxu0 0
        %5010 = vmatpush.bf16.msra.mxu0 0
        %5011 = vmatpush.bf16.msra.mxu0 0
        %5012 = vmatpush.bf16.msra.mxu0 0
        %5013 = vmatpush.bf16.msra.mxu0 0
        %5014 = vmatpush.bf16.msra.mxu0 0
        %5015 = vmatpush.bf16.msra.mxu0 0
        %5016 = vmatpush.bf16.msra.mxu0 %v4979
        %5017 = vmatmul.bf16.gmra.mxu0 %v4985
        %v5018 = vpop.f32.mrf.mxu0
        %v5019 = vadd.f32 0.0, %v5018
        %v5020 = vpop.f32.mrf.mxu0
        %v5021 = vadd.f32 0.0, %v5020
        %5022 = vmatmul.bf16.gmra.mxu0 %v4988
        %v5023 = vpop.f32.mrf.mxu0
        %v5024 = vadd.f32 0.0, %v5023
        %v5025 = vpop.f32.mrf.mxu0
        %v5026 = vadd.f32 0.0, %v5025
        %5027 = vdwg.mxu0
        %v5028 = vadd.f32 %v4953, %v5000
        %v5029 = vadd.f32 %v4954, %v5019
        %v5030 = vadd.f32 %v4955, %v5002
        %v5031 = vadd.f32 %v4956, %v5021
        %v5032 = vadd.f32 %v4957, %v5005
        %v5033 = vadd.f32 %v4958, %v5024
        %v5034 = vadd.f32 %v4959, %v5007
        %v5035 = vadd.f32 %v4960, %v5026
        %s5036 = scalar_lea.vmem %s3, 80
        %v5037 = vld [vmem:[%s5036] sm:$0xf]
        %v5038 = vld [vmem:[%s5036 + $0x4] sm:$0xf]
        %v5039 = vld [vmem:[%s5036 + $0x8] sm:$0xf]
        %v5040 = vld [vmem:[%s5036 + $0xc] sm:$0xf]
        %v5045 = vunpack.c.l.b16 %v5037
        %v5046 = vunpack.c.l.b16 %v5038
        %v5047 = vunpack.c.l.b16 %v5039
        %v5048 = vunpack.c.l.b16 %v5040
        %v5049 = vpack.c.b16 %v5046, %v5045
        %v5050 = vpack.c.b16 %v5048, %v5047
        %5051 = vrot.lane.b32.xlu0 %v4684, 113
        %v5052 = vpop.permute.xlu0 %5051
        %5053 = vrot.lane.b32.xlu0 %v4685, 113
        %v5054 = vpop.permute.xlu0 %5053
        %vm5055 = vcmask 924672
        %v5056 = vsel %vm5055, %v5052, %v5054
        %v5060 = vsel %vm4714, %v5049, 0
        %v5063 = vsel %vm4714, %v5050, 0
        %5065 = vmatpush.bf16.msra.mxu0 0
        %5066 = vmatpush.bf16.msra.mxu0 0
        %5067 = vmatpush.bf16.msra.mxu0 0
        %5068 = vmatpush.bf16.msra.mxu0 0
        %5069 = vmatpush.bf16.msra.mxu0 0
        %5070 = vmatpush.bf16.msra.mxu0 0
        %5071 = vmatpush.bf16.msra.mxu0 0
        %5072 = vmatpush.bf16.msra.mxu0 %v5056
        %5073 = vmatmul.bf16.gmra.mxu0 %v5060
        %v5074 = vpop.f32.mrf.mxu0
        %v5075 = vadd.f32 0.0, %v5074
        %v5076 = vpop.f32.mrf.mxu0
        %v5077 = vadd.f32 0.0, %v5076
        %5078 = vmatmul.bf16.gmra.mxu0 %v5063
        %v5079 = vpop.f32.mrf.mxu0
        %v5080 = vadd.f32 0.0, %v5079
        %v5081 = vpop.f32.mrf.mxu0
        %v5082 = vadd.f32 0.0, %v5081
        %5083 = vdwg.mxu0
        %5084 = vmatpush.bf16.msra.mxu0 0
        %5085 = vmatpush.bf16.msra.mxu0 0
        %5086 = vmatpush.bf16.msra.mxu0 0
        %5087 = vmatpush.bf16.msra.mxu0 0
        %5088 = vmatpush.bf16.msra.mxu0 0
        %5089 = vmatpush.bf16.msra.mxu0 0
        %5090 = vmatpush.bf16.msra.mxu0 0
        %5091 = vmatpush.bf16.msra.mxu0 %v5054
        %5092 = vmatmul.bf16.gmra.mxu0 %v5060
        %v5093 = vpop.f32.mrf.mxu0
        %v5094 = vadd.f32 0.0, %v5093
        %v5095 = vpop.f32.mrf.mxu0
        %v5096 = vadd.f32 0.0, %v5095
        %5097 = vmatmul.bf16.gmra.mxu0 %v5063
        %v5098 = vpop.f32.mrf.mxu0
        %v5099 = vadd.f32 0.0, %v5098
        %v5100 = vpop.f32.mrf.mxu0
        %v5101 = vadd.f32 0.0, %v5100
        %5102 = vdwg.mxu0
        %v5103 = vadd.f32 %v5028, %v5075
        %v5104 = vadd.f32 %v5029, %v5094
        %v5105 = vadd.f32 %v5030, %v5077
        %v5106 = vadd.f32 %v5031, %v5096
        %v5107 = vadd.f32 %v5032, %v5080
        %v5108 = vadd.f32 %v5033, %v5099
        %v5109 = vadd.f32 %v5034, %v5082
        %v5110 = vadd.f32 %v5035, %v5101
        %s5111 = scalar_lea.vmem %s3, 96
        %v5112 = vld [vmem:[%s5111] sm:$0xf]
        %v5113 = vld [vmem:[%s5111 + $0x4] sm:$0xf]
        %v5114 = vld [vmem:[%s5111 + $0x8] sm:$0xf]
        %v5115 = vld [vmem:[%s5111 + $0xc] sm:$0xf]
        %v5120 = vunpack.c.l.b16 %v5112
        %v5121 = vunpack.c.l.b16 %v5113
        %v5122 = vunpack.c.l.b16 %v5114
        %v5123 = vunpack.c.l.b16 %v5115
        %v5124 = vpack.c.b16 %v5121, %v5120
        %v5125 = vpack.c.b16 %v5123, %v5122
        %5126 = vrot.lane.b32.xlu0 %v4684, 112
        %v5127 = vpop.permute.xlu0 %5126
        %5128 = vrot.lane.b32.xlu0 %v4685, 112
        %v5129 = vpop.permute.xlu0 %5128
        %vm5130 = vcmask 916480
        %v5131 = vsel %vm5130, %v5127, %v5129
        %v5135 = vsel %vm4714, %v5124, 0
        %v5138 = vsel %vm4714, %v5125, 0
        %5140 = vmatpush.bf16.msra.mxu0 0
        %5141 = vmatpush.bf16.msra.mxu0 0
        %5142 = vmatpush.bf16.msra.mxu0 0
        %5143 = vmatpush.bf16.msra.mxu0 0
        %5144 = vmatpush.bf16.msra.mxu0 0
        %5145 = vmatpush.bf16.msra.mxu0 0
        %5146 = vmatpush.bf16.msra.mxu0 0
        %5147 = vmatpush.bf16.msra.mxu0 %v5131
        %5148 = vmatmul.bf16.gmra.mxu0 %v5135
        %v5149 = vpop.f32.mrf.mxu0
        %v5150 = vadd.f32 0.0, %v5149
        %v5151 = vpop.f32.mrf.mxu0
        %v5152 = vadd.f32 0.0, %v5151
        %5153 = vmatmul.bf16.gmra.mxu0 %v5138
        %v5154 = vpop.f32.mrf.mxu0
        %v5155 = vadd.f32 0.0, %v5154
        %v5156 = vpop.f32.mrf.mxu0
        %v5157 = vadd.f32 0.0, %v5156
        %5158 = vdwg.mxu0
        %5159 = vmatpush.bf16.msra.mxu0 0
        %5160 = vmatpush.bf16.msra.mxu0 0
        %5161 = vmatpush.bf16.msra.mxu0 0
        %5162 = vmatpush.bf16.msra.mxu0 0
        %5163 = vmatpush.bf16.msra.mxu0 0
        %5164 = vmatpush.bf16.msra.mxu0 0
        %5165 = vmatpush.bf16.msra.mxu0 0
        %5166 = vmatpush.bf16.msra.mxu0 %v5129
        %5167 = vmatmul.bf16.gmra.mxu0 %v5135
        %v5168 = vpop.f32.mrf.mxu0
        %v5169 = vadd.f32 0.0, %v5168
        %v5170 = vpop.f32.mrf.mxu0
        %v5171 = vadd.f32 0.0, %v5170
        %5172 = vmatmul.bf16.gmra.mxu0 %v5138
        %v5173 = vpop.f32.mrf.mxu0
        %v5174 = vadd.f32 0.0, %v5173
        %v5175 = vpop.f32.mrf.mxu0
        %v5176 = vadd.f32 0.0, %v5175
        %5177 = vdwg.mxu0
        %v5178 = vadd.f32 %v5103, %v5150
        %v5179 = vadd.f32 %v5104, %v5169
        %v5180 = vadd.f32 %v5105, %v5152
        %v5181 = vadd.f32 %v5106, %v5171
        %v5182 = vadd.f32 %v5107, %v5155
        %v5183 = vadd.f32 %v5108, %v5174
        %v5184 = vadd.f32 %v5109, %v5157
        %v5185 = vadd.f32 %v5110, %v5176
        %s5186 = scalar_lea.vmem %s3, 112
        %v5187 = vld [vmem:[%s5186] sm:$0xf]
        %v5188 = vld [vmem:[%s5186 + $0x4] sm:$0xf]
        %v5189 = vld [vmem:[%s5186 + $0x8] sm:$0xf]
        %v5190 = vld [vmem:[%s5186 + $0xc] sm:$0xf]
        %v5195 = vunpack.c.l.b16 %v5187
        %v5196 = vunpack.c.l.b16 %v5188
        %v5197 = vunpack.c.l.b16 %v5189
        %v5198 = vunpack.c.l.b16 %v5190
        %v5199 = vpack.c.b16 %v5196, %v5195
        %v5200 = vpack.c.b16 %v5198, %v5197
        %5201 = vrot.lane.b32.xlu0 %v4684, 111
        %v5202 = vpop.permute.xlu0 %5201
        %5203 = vrot.lane.b32.xlu0 %v4685, 111
        %v5204 = vpop.permute.xlu0 %5203
        %vm5205 = vcmask 908288
        %v5206 = vsel %vm5205, %v5202, %v5204
        %v5210 = vsel %vm4714, %v5199, 0
        %v5213 = vsel %vm4714, %v5200, 0
        %5215 = vmatpush.bf16.msra.mxu0 0
        %5216 = vmatpush.bf16.msra.mxu0 0
        %5217 = vmatpush.bf16.msra.mxu0 0
        %5218 = vmatpush.bf16.msra.mxu0 0
        %5219 = vmatpush.bf16.msra.mxu0 0
        %5220 = vmatpush.bf16.msra.mxu0 0
        %5221 = vmatpush.bf16.msra.mxu0 0
        %5222 = vmatpush.bf16.msra.mxu0 %v5206
        %5223 = vmatmul.bf16.gmra.mxu0 %v5210
        %v5224 = vpop.f32.mrf.mxu0
        %v5225 = vadd.f32 0.0, %v5224
        %v5226 = vpop.f32.mrf.mxu0
        %v5227 = vadd.f32 0.0, %v5226
        %5228 = vmatmul.bf16.gmra.mxu0 %v5213
        %v5229 = vpop.f32.mrf.mxu0
        %v5230 = vadd.f32 0.0, %v5229
        %v5231 = vpop.f32.mrf.mxu0
        %v5232 = vadd.f32 0.0, %v5231
        %5233 = vdwg.mxu0
        %5234 = vmatpush.bf16.msra.mxu0 0
        %5235 = vmatpush.bf16.msra.mxu0 0
        %5236 = vmatpush.bf16.msra.mxu0 0
        %5237 = vmatpush.bf16.msra.mxu0 0
        %5238 = vmatpush.bf16.msra.mxu0 0
        %5239 = vmatpush.bf16.msra.mxu0 0
        %5240 = vmatpush.bf16.msra.mxu0 0
        %5241 = vmatpush.bf16.msra.mxu0 %v5204
        %5242 = vmatmul.bf16.gmra.mxu0 %v5210
        %v5243 = vpop.f32.mrf.mxu0
        %v5244 = vadd.f32 0.0, %v5243
        %v5245 = vpop.f32.mrf.mxu0
        %v5246 = vadd.f32 0.0, %v5245
        %5247 = vmatmul.bf16.gmra.mxu0 %v5213
        %v5248 = vpop.f32.mrf.mxu0
        %v5249 = vadd.f32 0.0, %v5248
        %v5250 = vpop.f32.mrf.mxu0
        %v5251 = vadd.f32 0.0, %v5250
        %5252 = vdwg.mxu0
        %v5253 = vadd.f32 %v5178, %v5225
        %v5254 = vadd.f32 %v5179, %v5244
        %v5255 = vadd.f32 %v5180, %v5227
        %v5256 = vadd.f32 %v5181, %v5246
        %v5257 = vadd.f32 %v5182, %v5230
        %v5258 = vadd.f32 %v5183, %v5249
        %v5259 = vadd.f32 %v5184, %v5232
        %v5260 = vadd.f32 %v5185, %v5251
        %s5261 = scalar_lea.vmem %s3, 128
        %v5262 = vld [vmem:[%s5261] sm:$0xf]
        %v5263 = vld [vmem:[%s5261 + $0x4] sm:$0xf]
        %v5264 = vld [vmem:[%s5261 + $0x8] sm:$0xf]
        %v5265 = vld [vmem:[%s5261 + $0xc] sm:$0xf]
        %v5270 = vunpack.c.l.b16 %v5262
        %v5271 = vunpack.c.l.b16 %v5263
        %v5272 = vunpack.c.l.b16 %v5264
        %v5273 = vunpack.c.l.b16 %v5265
        %v5274 = vpack.c.b16 %v5271, %v5270
        %v5275 = vpack.c.b16 %v5273, %v5272
        %5276 = vrot.lane.b32.xlu0 %v4684, 100
        %v5277 = vpop.permute.xlu0 %5276
        %5278 = vrot.lane.b32.xlu0 %v4685, 100
        %v5279 = vpop.permute.xlu0 %5278
        %vm5280 = vcmask 818176
        %v5281 = vsel %vm5280, %v5277, %v5279
        %v5285 = vsel %vm4714, %v5274, 0
        %v5288 = vsel %vm4714, %v5275, 0
        %5290 = vmatpush.bf16.msra.mxu0 0
        %5291 = vmatpush.bf16.msra.mxu0 0
        %5292 = vmatpush.bf16.msra.mxu0 0
        %5293 = vmatpush.bf16.msra.mxu0 0
        %5294 = vmatpush.bf16.msra.mxu0 0
        %5295 = vmatpush.bf16.msra.mxu0 0
        %5296 = vmatpush.bf16.msra.mxu0 0
        %5297 = vmatpush.bf16.msra.mxu0 %v5281
        %5298 = vmatmul.bf16.gmra.mxu0 %v5285
        %v5299 = vpop.f32.mrf.mxu0
        %v5300 = vadd.f32 0.0, %v5299
        %v5301 = vpop.f32.mrf.mxu0
        %v5302 = vadd.f32 0.0, %v5301
        %5303 = vmatmul.bf16.gmra.mxu0 %v5288
        %v5304 = vpop.f32.mrf.mxu0
        %v5305 = vadd.f32 0.0, %v5304
        %v5306 = vpop.f32.mrf.mxu0
        %v5307 = vadd.f32 0.0, %v5306
        %5308 = vdwg.mxu0
        %5309 = vmatpush.bf16.msra.mxu0 0
        %5310 = vmatpush.bf16.msra.mxu0 0
        %5311 = vmatpush.bf16.msra.mxu0 0
        %5312 = vmatpush.bf16.msra.mxu0 0
        %5313 = vmatpush.bf16.msra.mxu0 0
        %5314 = vmatpush.bf16.msra.mxu0 0
        %5315 = vmatpush.bf16.msra.mxu0 0
        %5316 = vmatpush.bf16.msra.mxu0 %v5279
        %5317 = vmatmul.bf16.gmra.mxu0 %v5285
        %v5318 = vpop.f32.mrf.mxu0
        %v5319 = vadd.f32 0.0, %v5318
        %v5320 = vpop.f32.mrf.mxu0
        %v5321 = vadd.f32 0.0, %v5320
        %5322 = vmatmul.bf16.gmra.mxu0 %v5288
        %v5323 = vpop.f32.mrf.mxu0
        %v5324 = vadd.f32 0.0, %v5323
        %v5325 = vpop.f32.mrf.mxu0
        %v5326 = vadd.f32 0.0, %v5325
        %5327 = vdwg.mxu0
        %v5328 = vadd.f32 %v5253, %v5300
        %v5329 = vadd.f32 %v5254, %v5319
        %v5330 = vadd.f32 %v5255, %v5302
        %v5331 = vadd.f32 %v5256, %v5321
        %v5332 = vadd.f32 %v5257, %v5305
        %v5333 = vadd.f32 %v5258, %v5324
        %v5334 = vadd.f32 %v5259, %v5307
        %v5335 = vadd.f32 %v5260, %v5326
        %s5336 = scalar_lea.vmem %s3, 144
        %v5337 = vld [vmem:[%s5336] sm:$0xf]
        %v5338 = vld [vmem:[%s5336 + $0x4] sm:$0xf]
        %v5339 = vld [vmem:[%s5336 + $0x8] sm:$0xf]
        %v5340 = vld [vmem:[%s5336 + $0xc] sm:$0xf]
        %v5345 = vunpack.c.l.b16 %v5337
        %v5346 = vunpack.c.l.b16 %v5338
        %v5347 = vunpack.c.l.b16 %v5339
        %v5348 = vunpack.c.l.b16 %v5340
        %v5349 = vpack.c.b16 %v5346, %v5345
        %v5350 = vpack.c.b16 %v5348, %v5347
        %5351 = vrot.lane.b32.xlu0 %v4684, 99
        %v5352 = vpop.permute.xlu0 %5351
        %5353 = vrot.lane.b32.xlu0 %v4685, 99
        %v5354 = vpop.permute.xlu0 %5353
        %vm5355 = vcmask 809984
        %v5356 = vsel %vm5355, %v5352, %v5354
        %v5360 = vsel %vm4714, %v5349, 0
        %v5363 = vsel %vm4714, %v5350, 0
        %5365 = vmatpush.bf16.msra.mxu0 0
        %5366 = vmatpush.bf16.msra.mxu0 0
        %5367 = vmatpush.bf16.msra.mxu0 0
        %5368 = vmatpush.bf16.msra.mxu0 0
        %5369 = vmatpush.bf16.msra.mxu0 0
        %5370 = vmatpush.bf16.msra.mxu0 0
        %5371 = vmatpush.bf16.msra.mxu0 0
        %5372 = vmatpush.bf16.msra.mxu0 %v5356
        %5373 = vmatmul.bf16.gmra.mxu0 %v5360
        %v5374 = vpop.f32.mrf.mxu0
        %v5375 = vadd.f32 0.0, %v5374
        %v5376 = vpop.f32.mrf.mxu0
        %v5377 = vadd.f32 0.0, %v5376
        %5378 = vmatmul.bf16.gmra.mxu0 %v5363
        %v5379 = vpop.f32.mrf.mxu0
        %v5380 = vadd.f32 0.0, %v5379
        %v5381 = vpop.f32.mrf.mxu0
        %v5382 = vadd.f32 0.0, %v5381
        %5383 = vdwg.mxu0
        %5384 = vmatpush.bf16.msra.mxu0 0
        %5385 = vmatpush.bf16.msra.mxu0 0
        %5386 = vmatpush.bf16.msra.mxu0 0
        %5387 = vmatpush.bf16.msra.mxu0 0
        %5388 = vmatpush.bf16.msra.mxu0 0
        %5389 = vmatpush.bf16.msra.mxu0 0
        %5390 = vmatpush.bf16.msra.mxu0 0
        %5391 = vmatpush.bf16.msra.mxu0 %v5354
        %5392 = vmatmul.bf16.gmra.mxu0 %v5360
        %v5393 = vpop.f32.mrf.mxu0
        %v5394 = vadd.f32 0.0, %v5393
        %v5395 = vpop.f32.mrf.mxu0
        %v5396 = vadd.f32 0.0, %v5395
        %5397 = vmatmul.bf16.gmra.mxu0 %v5363
        %v5398 = vpop.f32.mrf.mxu0
        %v5399 = vadd.f32 0.0, %v5398
        %v5400 = vpop.f32.mrf.mxu0
        %v5401 = vadd.f32 0.0, %v5400
        %5402 = vdwg.mxu0
        %v5403 = vadd.f32 %v5328, %v5375
        %v5404 = vadd.f32 %v5329, %v5394
        %v5405 = vadd.f32 %v5330, %v5377
        %v5406 = vadd.f32 %v5331, %v5396
        %v5407 = vadd.f32 %v5332, %v5380
        %v5408 = vadd.f32 %v5333, %v5399
        %v5409 = vadd.f32 %v5334, %v5382
        %v5410 = vadd.f32 %v5335, %v5401
        %s5411 = scalar_lea.vmem %s3, 160
        %v5412 = vld [vmem:[%s5411] sm:$0xf]
        %v5413 = vld [vmem:[%s5411 + $0x4] sm:$0xf]
        %v5414 = vld [vmem:[%s5411 + $0x8] sm:$0xf]
        %v5415 = vld [vmem:[%s5411 + $0xc] sm:$0xf]
        %v5420 = vunpack.c.l.b16 %v5412
        %v5421 = vunpack.c.l.b16 %v5413
        %v5422 = vunpack.c.l.b16 %v5414
        %v5423 = vunpack.c.l.b16 %v5415
        %v5424 = vpack.c.b16 %v5421, %v5420
        %v5425 = vpack.c.b16 %v5423, %v5422
        %5426 = vrot.lane.b32.xlu0 %v4684, 98
        %v5427 = vpop.permute.xlu0 %5426
        %5428 = vrot.lane.b32.xlu0 %v4685, 98
        %v5429 = vpop.permute.xlu0 %5428
        %vm5430 = vcmask 801792
        %v5431 = vsel %vm5430, %v5427, %v5429
        %v5435 = vsel %vm4714, %v5424, 0
        %v5438 = vsel %vm4714, %v5425, 0
        %5440 = vmatpush.bf16.msra.mxu0 0
        %5441 = vmatpush.bf16.msra.mxu0 0
        %5442 = vmatpush.bf16.msra.mxu0 0
        %5443 = vmatpush.bf16.msra.mxu0 0
        %5444 = vmatpush.bf16.msra.mxu0 0
        %5445 = vmatpush.bf16.msra.mxu0 0
        %5446 = vmatpush.bf16.msra.mxu0 0
        %5447 = vmatpush.bf16.msra.mxu0 %v5431
        %5448 = vmatmul.bf16.gmra.mxu0 %v5435
        %v5449 = vpop.f32.mrf.mxu0
        %v5450 = vadd.f32 0.0, %v5449
        %v5451 = vpop.f32.mrf.mxu0
        %v5452 = vadd.f32 0.0, %v5451
        %5453 = vmatmul.bf16.gmra.mxu0 %v5438
        %v5454 = vpop.f32.mrf.mxu0
        %v5455 = vadd.f32 0.0, %v5454
        %v5456 = vpop.f32.mrf.mxu0
        %v5457 = vadd.f32 0.0, %v5456
        %5458 = vdwg.mxu0
        %5459 = vmatpush.bf16.msra.mxu0 0
        %5460 = vmatpush.bf16.msra.mxu0 0
        %5461 = vmatpush.bf16.msra.mxu0 0
        %5462 = vmatpush.bf16.msra.mxu0 0
        %5463 = vmatpush.bf16.msra.mxu0 0
        %5464 = vmatpush.bf16.msra.mxu0 0
        %5465 = vmatpush.bf16.msra.mxu0 0
        %5466 = vmatpush.bf16.msra.mxu0 %v5429
        %5467 = vmatmul.bf16.gmra.mxu0 %v5435
        %v5468 = vpop.f32.mrf.mxu0
        %v5469 = vadd.f32 0.0, %v5468
        %v5470 = vpop.f32.mrf.mxu0
        %v5471 = vadd.f32 0.0, %v5470
        %5472 = vmatmul.bf16.gmra.mxu0 %v5438
        %v5473 = vpop.f32.mrf.mxu0
        %v5474 = vadd.f32 0.0, %v5473
        %v5475 = vpop.f32.mrf.mxu0
        %v5476 = vadd.f32 0.0, %v5475
        %5477 = vdwg.mxu0
        %v5478 = vadd.f32 %v5403, %v5450
        %v5479 = vadd.f32 %v5404, %v5469
        %v5480 = vadd.f32 %v5405, %v5452
        %v5481 = vadd.f32 %v5406, %v5471
        %v5482 = vadd.f32 %v5407, %v5455
        %v5483 = vadd.f32 %v5408, %v5474
        %v5484 = vadd.f32 %v5409, %v5457
        %v5485 = vadd.f32 %v5410, %v5476
        %s5486 = scalar_lea.vmem %s3, 176
        %v5487 = vld [vmem:[%s5486] sm:$0xf]
        %v5488 = vld [vmem:[%s5486 + $0x4] sm:$0xf]
        %v5489 = vld [vmem:[%s5486 + $0x8] sm:$0xf]
        %v5490 = vld [vmem:[%s5486 + $0xc] sm:$0xf]
        %v5495 = vunpack.c.l.b16 %v5487
        %v5496 = vunpack.c.l.b16 %v5488
        %v5497 = vunpack.c.l.b16 %v5489
        %v5498 = vunpack.c.l.b16 %v5490
        %v5499 = vpack.c.b16 %v5496, %v5495
        %v5500 = vpack.c.b16 %v5498, %v5497
        %5501 = vrot.lane.b32.xlu0 %v4684, 97
        %v5502 = vpop.permute.xlu0 %5501
        %5503 = vrot.lane.b32.xlu0 %v4685, 97
        %v5504 = vpop.permute.xlu0 %5503
        %vm5505 = vcmask 793600
        %v5506 = vsel %vm5505, %v5502, %v5504
        %v5510 = vsel %vm4714, %v5499, 0
        %v5513 = vsel %vm4714, %v5500, 0
        %5515 = vmatpush.bf16.msra.mxu0 0
        %5516 = vmatpush.bf16.msra.mxu0 0
        %5517 = vmatpush.bf16.msra.mxu0 0
        %5518 = vmatpush.bf16.msra.mxu0 0
        %5519 = vmatpush.bf16.msra.mxu0 0
        %5520 = vmatpush.bf16.msra.mxu0 0
        %5521 = vmatpush.bf16.msra.mxu0 0
        %5522 = vmatpush.bf16.msra.mxu0 %v5506
        %5523 = vmatmul.bf16.gmra.mxu0 %v5510
        %v5524 = vpop.f32.mrf.mxu0
        %v5525 = vadd.f32 0.0, %v5524
        %v5526 = vpop.f32.mrf.mxu0
        %v5527 = vadd.f32 0.0, %v5526
        %5528 = vmatmul.bf16.gmra.mxu0 %v5513
        %v5529 = vpop.f32.mrf.mxu0
        %v5530 = vadd.f32 0.0, %v5529
        %v5531 = vpop.f32.mrf.mxu0
        %v5532 = vadd.f32 0.0, %v5531
        %5533 = vdwg.mxu0
        %5534 = vmatpush.bf16.msra.mxu0 0
        %5535 = vmatpush.bf16.msra.mxu0 0
        %5536 = vmatpush.bf16.msra.mxu0 0
        %5537 = vmatpush.bf16.msra.mxu0 0
        %5538 = vmatpush.bf16.msra.mxu0 0
        %5539 = vmatpush.bf16.msra.mxu0 0
        %5540 = vmatpush.bf16.msra.mxu0 0
        %5541 = vmatpush.bf16.msra.mxu0 %v5504
        %5542 = vmatmul.bf16.gmra.mxu0 %v5510
        %v5543 = vpop.f32.mrf.mxu0
        %v5544 = vadd.f32 0.0, %v5543
        %v5545 = vpop.f32.mrf.mxu0
        %v5546 = vadd.f32 0.0, %v5545
        %5547 = vmatmul.bf16.gmra.mxu0 %v5513
        %v5548 = vpop.f32.mrf.mxu0
        %v5549 = vadd.f32 0.0, %v5548
        %v5550 = vpop.f32.mrf.mxu0
        %v5551 = vadd.f32 0.0, %v5550
        %5552 = vdwg.mxu0
        %v5553 = vadd.f32 %v5478, %v5525
        %v5554 = vadd.f32 %v5479, %v5544
        %v5555 = vadd.f32 %v5480, %v5527
        %v5556 = vadd.f32 %v5481, %v5546
        %v5557 = vadd.f32 %v5482, %v5530
        %v5558 = vadd.f32 %v5483, %v5549
        %v5559 = vadd.f32 %v5484, %v5532
        %v5560 = vadd.f32 %v5485, %v5551
        %s5561 = scalar_lea.vmem %s3, 192
        %v5562 = vld [vmem:[%s5561] sm:$0xf]
        %v5563 = vld [vmem:[%s5561 + $0x4] sm:$0xf]
        %v5564 = vld [vmem:[%s5561 + $0x8] sm:$0xf]
        %v5565 = vld [vmem:[%s5561 + $0xc] sm:$0xf]
        %v5570 = vunpack.c.l.b16 %v5562
        %v5571 = vunpack.c.l.b16 %v5563
        %v5572 = vunpack.c.l.b16 %v5564
        %v5573 = vunpack.c.l.b16 %v5565
        %v5574 = vpack.c.b16 %v5571, %v5570
        %v5575 = vpack.c.b16 %v5573, %v5572
        %5576 = vrot.lane.b32.xlu0 %v4684, 86
        %v5577 = vpop.permute.xlu0 %5576
        %5578 = vrot.lane.b32.xlu0 %v4685, 86
        %v5579 = vpop.permute.xlu0 %5578
        %vm5580 = vcmask 703488
        %v5581 = vsel %vm5580, %v5577, %v5579
        %v5585 = vsel %vm4714, %v5574, 0
        %v5588 = vsel %vm4714, %v5575, 0
        %5590 = vmatpush.bf16.msra.mxu0 0
        %5591 = vmatpush.bf16.msra.mxu0 0
        %5592 = vmatpush.bf16.msra.mxu0 0
        %5593 = vmatpush.bf16.msra.mxu0 0
        %5594 = vmatpush.bf16.msra.mxu0 0
        %5595 = vmatpush.bf16.msra.mxu0 0
        %5596 = vmatpush.bf16.msra.mxu0 0
        %5597 = vmatpush.bf16.msra.mxu0 %v5581
        %5598 = vmatmul.bf16.gmra.mxu0 %v5585
        %v5599 = vpop.f32.mrf.mxu0
        %v5600 = vadd.f32 0.0, %v5599
        %v5601 = vpop.f32.mrf.mxu0
        %v5602 = vadd.f32 0.0, %v5601
        %5603 = vmatmul.bf16.gmra.mxu0 %v5588
        %v5604 = vpop.f32.mrf.mxu0
        %v5605 = vadd.f32 0.0, %v5604
        %v5606 = vpop.f32.mrf.mxu0
        %v5607 = vadd.f32 0.0, %v5606
        %5608 = vdwg.mxu0
        %5609 = vmatpush.bf16.msra.mxu0 0
        %5610 = vmatpush.bf16.msra.mxu0 0
        %5611 = vmatpush.bf16.msra.mxu0 0
        %5612 = vmatpush.bf16.msra.mxu0 0
        %5613 = vmatpush.bf16.msra.mxu0 0
        %5614 = vmatpush.bf16.msra.mxu0 0
        %5615 = vmatpush.bf16.msra.mxu0 0
        %5616 = vmatpush.bf16.msra.mxu0 %v5579
        %5617 = vmatmul.bf16.gmra.mxu0 %v5585
        %v5618 = vpop.f32.mrf.mxu0
        %v5619 = vadd.f32 0.0, %v5618
        %v5620 = vpop.f32.mrf.mxu0
        %v5621 = vadd.f32 0.0, %v5620
        %5622 = vmatmul.bf16.gmra.mxu0 %v5588
        %v5623 = vpop.f32.mrf.mxu0
        %v5624 = vadd.f32 0.0, %v5623
        %v5625 = vpop.f32.mrf.mxu0
        %v5626 = vadd.f32 0.0, %v5625
        %5627 = vdwg.mxu0
        %v5628 = vadd.f32 %v5553, %v5600
        %v5629 = vadd.f32 %v5554, %v5619
        %v5630 = vadd.f32 %v5555, %v5602
        %v5631 = vadd.f32 %v5556, %v5621
        %v5632 = vadd.f32 %v5557, %v5605
        %v5633 = vadd.f32 %v5558, %v5624
        %v5634 = vadd.f32 %v5559, %v5607
        %v5635 = vadd.f32 %v5560, %v5626
        %s5636 = scalar_lea.vmem %s3, 208
        %v5637 = vld [vmem:[%s5636] sm:$0xf]
        %v5638 = vld [vmem:[%s5636 + $0x4] sm:$0xf]
        %v5639 = vld [vmem:[%s5636 + $0x8] sm:$0xf]
        %v5640 = vld [vmem:[%s5636 + $0xc] sm:$0xf]
        %v5645 = vunpack.c.l.b16 %v5637
        %v5646 = vunpack.c.l.b16 %v5638
        %v5647 = vunpack.c.l.b16 %v5639
        %v5648 = vunpack.c.l.b16 %v5640
        %v5649 = vpack.c.b16 %v5646, %v5645
        %v5650 = vpack.c.b16 %v5648, %v5647
        %5651 = vrot.lane.b32.xlu0 %v4684, 85
        %v5652 = vpop.permute.xlu0 %5651
        %5653 = vrot.lane.b32.xlu0 %v4685, 85
        %v5654 = vpop.permute.xlu0 %5653
        %vm5655 = vcmask 695296
        %v5656 = vsel %vm5655, %v5652, %v5654
        %v5660 = vsel %vm4714, %v5649, 0
        %v5663 = vsel %vm4714, %v5650, 0
        %5665 = vmatpush.bf16.msra.mxu0 0
        %5666 = vmatpush.bf16.msra.mxu0 0
        %5667 = vmatpush.bf16.msra.mxu0 0
        %5668 = vmatpush.bf16.msra.mxu0 0
        %5669 = vmatpush.bf16.msra.mxu0 0
        %5670 = vmatpush.bf16.msra.mxu0 0
        %5671 = vmatpush.bf16.msra.mxu0 0
        %5672 = vmatpush.bf16.msra.mxu0 %v5656
        %5673 = vmatmul.bf16.gmra.mxu0 %v5660
        %v5674 = vpop.f32.mrf.mxu0
        %v5675 = vadd.f32 0.0, %v5674
        %v5676 = vpop.f32.mrf.mxu0
        %v5677 = vadd.f32 0.0, %v5676
        %5678 = vmatmul.bf16.gmra.mxu0 %v5663
        %v5679 = vpop.f32.mrf.mxu0
        %v5680 = vadd.f32 0.0, %v5679
        %v5681 = vpop.f32.mrf.mxu0
        %v5682 = vadd.f32 0.0, %v5681
        %5683 = vdwg.mxu0
        %5684 = vmatpush.bf16.msra.mxu0 0
        %5685 = vmatpush.bf16.msra.mxu0 0
        %5686 = vmatpush.bf16.msra.mxu0 0
        %5687 = vmatpush.bf16.msra.mxu0 0
        %5688 = vmatpush.bf16.msra.mxu0 0
        %5689 = vmatpush.bf16.msra.mxu0 0
        %5690 = vmatpush.bf16.msra.mxu0 0
        %5691 = vmatpush.bf16.msra.mxu0 %v5654
        %5692 = vmatmul.bf16.gmra.mxu0 %v5660
        %v5693 = vpop.f32.mrf.mxu0
        %v5694 = vadd.f32 0.0, %v5693
        %v5695 = vpop.f32.mrf.mxu0
        %v5696 = vadd.f32 0.0, %v5695
        %5697 = vmatmul.bf16.gmra.mxu0 %v5663
        %v5698 = vpop.f32.mrf.mxu0
        %v5699 = vadd.f32 0.0, %v5698
        %v5700 = vpop.f32.mrf.mxu0
        %v5701 = vadd.f32 0.0, %v5700
        %5702 = vdwg.mxu0
        %v5703 = vadd.f32 %v5628, %v5675
        %v5704 = vadd.f32 %v5629, %v5694
        %v5705 = vadd.f32 %v5630, %v5677
        %v5706 = vadd.f32 %v5631, %v5696
        %v5707 = vadd.f32 %v5632, %v5680
        %v5708 = vadd.f32 %v5633, %v5699
        %v5709 = vadd.f32 %v5634, %v5682
        %v5710 = vadd.f32 %v5635, %v5701
        %s5711 = scalar_lea.vmem %s3, 224
        %v5712 = vld [vmem:[%s5711] sm:$0xf]
        %v5713 = vld [vmem:[%s5711 + $0x4] sm:$0xf]
        %v5714 = vld [vmem:[%s5711 + $0x8] sm:$0xf]
        %v5715 = vld [vmem:[%s5711 + $0xc] sm:$0xf]
        %v5720 = vunpack.c.l.b16 %v5712
        %v5721 = vunpack.c.l.b16 %v5713
        %v5722 = vunpack.c.l.b16 %v5714
        %v5723 = vunpack.c.l.b16 %v5715
        %v5724 = vpack.c.b16 %v5721, %v5720
        %v5725 = vpack.c.b16 %v5723, %v5722
        %5726 = vrot.lane.b32.xlu0 %v4684, 84
        %v5727 = vpop.permute.xlu0 %5726
        %5728 = vrot.lane.b32.xlu0 %v4685, 84
        %v5729 = vpop.permute.xlu0 %5728
        %vm5730 = vcmask 687104
        %v5731 = vsel %vm5730, %v5727, %v5729
        %v5735 = vsel %vm4714, %v5724, 0
        %v5738 = vsel %vm4714, %v5725, 0
        %5740 = vmatpush.bf16.msra.mxu0 0
        %5741 = vmatpush.bf16.msra.mxu0 0
        %5742 = vmatpush.bf16.msra.mxu0 0
        %5743 = vmatpush.bf16.msra.mxu0 0
        %5744 = vmatpush.bf16.msra.mxu0 0
        %5745 = vmatpush.bf16.msra.mxu0 0
        %5746 = vmatpush.bf16.msra.mxu0 0
        %5747 = vmatpush.bf16.msra.mxu0 %v5731
        %5748 = vmatmul.bf16.gmra.mxu0 %v5735
        %v5749 = vpop.f32.mrf.mxu0
        %v5750 = vadd.f32 0.0, %v5749
        %v5751 = vpop.f32.mrf.mxu0
        %v5752 = vadd.f32 0.0, %v5751
        %5753 = vmatmul.bf16.gmra.mxu0 %v5738
        %v5754 = vpop.f32.mrf.mxu0
        %v5755 = vadd.f32 0.0, %v5754
        %v5756 = vpop.f32.mrf.mxu0
        %v5757 = vadd.f32 0.0, %v5756
        %5758 = vdwg.mxu0
        %5759 = vmatpush.bf16.msra.mxu0 0
        %5760 = vmatpush.bf16.msra.mxu0 0
        %5761 = vmatpush.bf16.msra.mxu0 0
        %5762 = vmatpush.bf16.msra.mxu0 0
        %5763 = vmatpush.bf16.msra.mxu0 0
        %5764 = vmatpush.bf16.msra.mxu0 0
        %5765 = vmatpush.bf16.msra.mxu0 0
        %5766 = vmatpush.bf16.msra.mxu0 %v5729
        %5767 = vmatmul.bf16.gmra.mxu0 %v5735
        %v5768 = vpop.f32.mrf.mxu0
        %v5769 = vadd.f32 0.0, %v5768
        %v5770 = vpop.f32.mrf.mxu0
        %v5771 = vadd.f32 0.0, %v5770
        %5772 = vmatmul.bf16.gmra.mxu0 %v5738
        %v5773 = vpop.f32.mrf.mxu0
        %v5774 = vadd.f32 0.0, %v5773
        %v5775 = vpop.f32.mrf.mxu0
        %v5776 = vadd.f32 0.0, %v5775
        %5777 = vdwg.mxu0
        %v5778 = vadd.f32 %v5703, %v5750
        %v5779 = vadd.f32 %v5704, %v5769
        %v5780 = vadd.f32 %v5705, %v5752
        %v5781 = vadd.f32 %v5706, %v5771
        %v5782 = vadd.f32 %v5707, %v5755
        %v5783 = vadd.f32 %v5708, %v5774
        %v5784 = vadd.f32 %v5709, %v5757
        %v5785 = vadd.f32 %v5710, %v5776
        %s5786 = scalar_lea.vmem %s3, 240
        %v5787 = vld [vmem:[%s5786] sm:$0xf]
        %v5788 = vld [vmem:[%s5786 + $0x4] sm:$0xf]
        %v5789 = vld [vmem:[%s5786 + $0x8] sm:$0xf]
        %v5790 = vld [vmem:[%s5786 + $0xc] sm:$0xf]
        %v5795 = vunpack.c.l.b16 %v5787
        %v5796 = vunpack.c.l.b16 %v5788
        %v5797 = vunpack.c.l.b16 %v5789
        %v5798 = vunpack.c.l.b16 %v5790
        %v5799 = vpack.c.b16 %v5796, %v5795
        %v5800 = vpack.c.b16 %v5798, %v5797
        %5801 = vrot.lane.b32.xlu0 %v4684, 83
        %v5802 = vpop.permute.xlu0 %5801
        %5803 = vrot.lane.b32.xlu0 %v4685, 83
        %v5804 = vpop.permute.xlu0 %5803
        %vm5805 = vcmask 678912
        %v5806 = vsel %vm5805, %v5802, %v5804
        %v5810 = vsel %vm4714, %v5799, 0
        %v5813 = vsel %vm4714, %v5800, 0
        %5815 = vmatpush.bf16.msra.mxu0 0
        %5816 = vmatpush.bf16.msra.mxu0 0
        %5817 = vmatpush.bf16.msra.mxu0 0
        %5818 = vmatpush.bf16.msra.mxu0 0
        %5819 = vmatpush.bf16.msra.mxu0 0
        %5820 = vmatpush.bf16.msra.mxu0 0
        %5821 = vmatpush.bf16.msra.mxu0 0
        %5822 = vmatpush.bf16.msra.mxu0 %v5806
        %5823 = vmatmul.bf16.gmra.mxu0 %v5810
        %v5824 = vpop.f32.mrf.mxu0
        %v5825 = vadd.f32 0.0, %v5824
        %v5826 = vpop.f32.mrf.mxu0
        %v5827 = vadd.f32 0.0, %v5826
        %5828 = vmatmul.bf16.gmra.mxu0 %v5813
        %v5829 = vpop.f32.mrf.mxu0
        %v5830 = vadd.f32 0.0, %v5829
        %v5831 = vpop.f32.mrf.mxu0
        %v5832 = vadd.f32 0.0, %v5831
        %5833 = vdwg.mxu0
        %5834 = vmatpush.bf16.msra.mxu0 0
        %5835 = vmatpush.bf16.msra.mxu0 0
        %5836 = vmatpush.bf16.msra.mxu0 0
        %5837 = vmatpush.bf16.msra.mxu0 0
        %5838 = vmatpush.bf16.msra.mxu0 0
        %5839 = vmatpush.bf16.msra.mxu0 0
        %5840 = vmatpush.bf16.msra.mxu0 0
        %5841 = vmatpush.bf16.msra.mxu0 %v5804
        %5842 = vmatmul.bf16.gmra.mxu0 %v5810
        %v5843 = vpop.f32.mrf.mxu0
        %v5844 = vadd.f32 0.0, %v5843
        %v5845 = vpop.f32.mrf.mxu0
        %v5846 = vadd.f32 0.0, %v5845
        %5847 = vmatmul.bf16.gmra.mxu0 %v5813
        %v5848 = vpop.f32.mrf.mxu0
        %v5849 = vadd.f32 0.0, %v5848
        %v5850 = vpop.f32.mrf.mxu0
        %v5851 = vadd.f32 0.0, %v5850
        %5852 = vdwg.mxu0
        %v5853 = vadd.f32 %v5778, %v5825
        %v5854 = vadd.f32 %v5779, %v5844
        %v5855 = vadd.f32 %v5780, %v5827
        %v5856 = vadd.f32 %v5781, %v5846
        %v5857 = vadd.f32 %v5782, %v5830
        %v5858 = vadd.f32 %v5783, %v5849
        %v5859 = vadd.f32 %v5784, %v5832
        %v5860 = vadd.f32 %v5785, %v5851
        %v5861 = vld [vmem:[%s4] sm:$0xff]
        %v5862 = vld [vmem:[%s4 + $0x8] sm:$0xff]
        %v5863 = vld [vmem:[%s4 + $0x10] sm:$0xff]
        %v5864 = vld [vmem:[%s4 + $0x18] sm:$0xff]
        %5866 = vset.pattern.permute.xlu0 0
        %5867 = vperm.xlu0 %5866, %v5861
        %v5868 = vpop.permute.xlu0 %5867
        %5871 = vset.pattern.permute.xlu0 0
        %5872 = vperm.xlu0 %5871, %v5862
        %v5873 = vpop.permute.xlu0 %5872
        %5876 = vset.pattern.permute.xlu0 0
        %5877 = vperm.xlu0 %5876, %v5863
        %v5878 = vpop.permute.xlu0 %5877
        %5881 = vset.pattern.permute.xlu0 0
        %5882 = vperm.xlu0 %5881, %v5864
        %v5883 = vpop.permute.xlu0 %5882
        %v5885 = vadd.f32 %v5853, %v5868
        %v5886 = vadd.f32 %v5854, %v5868
        %v5887 = vadd.f32 %v5855, %v5873
        %v5888 = vadd.f32 %v5856, %v5873
        %v5889 = vadd.f32 %v5857, %v5878
        %v5890 = vadd.f32 %v5858, %v5878
        %v5891 = vadd.f32 %v5859, %v5883
        %v5892 = vadd.f32 %v5860, %v5883
        %v5893 = vadd.s32 %v4016, 128
        %vm5894 = vcmp.lt.s32.totalorder %v4016, 11
        %vm5895 = vcmp.lt.s32.totalorder %v5893, 11
        %vm5896 = vcmp.ge.s32.totalorder %v4016, 14
        %vm5897 = vcmp.ge.s32.totalorder %v5893, 14
        %vm5898 = vcmp.lt.s32.totalorder %v4016, 25
        %vm5899 = vcmp.lt.s32.totalorder %v5893, 25
        %vm5900 = vmand %vm5896, %vm5898
        %vm5901 = vmand %vm5897, %vm5899
        %vm5902 = vmor %vm5894, %vm5900
        %vm5903 = vmor %vm5895, %vm5901
        %vm5904 = vcmp.ge.s32.totalorder %v4016, 28
        %vm5905 = vcmp.ge.s32.totalorder %v5893, 28
        %vm5906 = vcmp.lt.s32.totalorder %v4016, 39
        %vm5907 = vcmp.lt.s32.totalorder %v5893, 39
        %vm5908 = vmand %vm5904, %vm5906
        %vm5909 = vmand %vm5905, %vm5907
        %vm5910 = vmor %vm5902, %vm5908
        %vm5911 = vmor %vm5903, %vm5909
        %vm5912 = vcmp.ge.s32.totalorder %v4016, 42
        %vm5913 = vcmp.ge.s32.totalorder %v5893, 42
        %vm5914 = vcmp.lt.s32.totalorder %v4016, 53
        %vm5915 = vcmp.lt.s32.totalorder %v5893, 53
        %vm5916 = vmand %vm5912, %vm5914
        %vm5917 = vmand %vm5913, %vm5915
        %vm5918 = vmor %vm5910, %vm5916
        %vm5919 = vmor %vm5911, %vm5917
        %vm5920 = vcmp.ge.s32.totalorder %v4016, 56
        %vm5921 = vcmp.ge.s32.totalorder %v5893, 56
        %vm5922 = vcmp.lt.s32.totalorder %v4016, 67
        %vm5923 = vcmp.lt.s32.totalorder %v5893, 67
        %vm5924 = vmand %vm5920, %vm5922
        %vm5925 = vmand %vm5921, %vm5923
        %vm5926 = vmor %vm5918, %vm5924
        %vm5927 = vmor %vm5919, %vm5925
        %vm5928 = vcmp.ge.s32.totalorder %v4016, 70
        %vm5929 = vcmp.ge.s32.totalorder %v5893, 70
        %vm5930 = vcmp.lt.s32.totalorder %v4016, 81
        %vm5931 = vcmp.lt.s32.totalorder %v5893, 81
        %vm5932 = vmand %vm5928, %vm5930
        %vm5933 = vmand %vm5929, %vm5931
        %vm5934 = vmor %vm5926, %vm5932
        %vm5935 = vmor %vm5927, %vm5933
        %vm5936 = vcmp.ge.s32.totalorder %v4016, 84
        %vm5937 = vcmp.ge.s32.totalorder %v5893, 84
        %vm5938 = vcmp.lt.s32.totalorder %v4016, 95
        %vm5939 = vcmp.lt.s32.totalorder %v5893, 95
        %vm5940 = vmand %vm5936, %vm5938
        %vm5941 = vmand %vm5937, %vm5939
        %vm5942 = vmor %vm5934, %vm5940
        %vm5943 = vmor %vm5935, %vm5941
        %vm5944 = vcmp.ge.s32.totalorder %v4016, 98
        %vm5945 = vcmp.ge.s32.totalorder %v5893, 98
        %vm5946 = vcmp.lt.s32.totalorder %v4016, 109
        %vm5947 = vcmp.lt.s32.totalorder %v5893, 109
        %vm5948 = vmand %vm5944, %vm5946
        %vm5949 = vmand %vm5945, %vm5947
        %vm5950 = vmor %vm5942, %vm5948
        %vm5951 = vmor %vm5943, %vm5949
        %vm5952 = vcmp.ge.s32.totalorder %v4016, 112
        %vm5953 = vcmp.ge.s32.totalorder %v5893, 112
        %vm5954 = vcmp.lt.s32.totalorder %v4016, 123
        %vm5955 = vcmp.lt.s32.totalorder %v5893, 123
        %vm5956 = vmand %vm5952, %vm5954
        %vm5957 = vmand %vm5953, %vm5955
        %vm5958 = vmor %vm5950, %vm5956
        %vm5959 = vmor %vm5951, %vm5957
        %vm5960 = vcmp.ge.s32.totalorder %v4016, 126
        %vm5961 = vcmp.ge.s32.totalorder %v5893, 126
        %vm5962 = vcmp.lt.s32.totalorder %v4016, 137
        %vm5963 = vcmp.lt.s32.totalorder %v5893, 137
        %vm5964 = vmand %vm5960, %vm5962
        %vm5965 = vmand %vm5961, %vm5963
        %vm5966 = vmor %vm5958, %vm5964
        %vm5967 = vmor %vm5959, %vm5965
        %vm5968 = vcmp.ge.s32.totalorder %v4016, 140
        %vm5969 = vcmp.ge.s32.totalorder %v5893, 140
        %vm5970 = vcmp.lt.s32.totalorder %v4016, 151
        %vm5971 = vcmp.lt.s32.totalorder %v5893, 151
        %vm5972 = vmand %vm5968, %vm5970
        %vm5973 = vmand %vm5969, %vm5971
        %vm5974 = vmor %vm5966, %vm5972
        %vm5975 = vmor %vm5967, %vm5973
        %v5976 = vsel %vm5974, 1, 0
        %v5977 = vsel %vm5975, 1, 0
        %vm5978 = vcmp.eq.s32.totalorder %v5976, 1
        %vm5979 = vcmp.eq.s32.totalorder %v5977, 1
        %v5980 = vsel %vm5978, %v5885, 0.0
        %v5981 = vsel %vm5979, %v5886, 0.0
        %v5982 = vsel %vm5978, %v5887, 0.0
        %v5983 = vsel %vm5979, %v5888, 0.0
        %v5984 = vsel %vm5978, %v5889, 0.0
        %v5985 = vsel %vm5979, %v5890, 0.0
        %v5986 = vsel %vm5978, %v5891, 0.0
        %v5987 = vsel %vm5979, %v5892, 0.0
        %vm5988 = vcmask 187392
        %v5989 = vsel %vm5988, %v5981, 0.0
        %v5990 = vadd.f32 %v5980, %v5989
        %5991 = vadd.xlane.f32.xlu0 %v5990
        %v5992 = vpop.xlane.xlu0 %5991
        %v5993 = vsel %vm5988, %v5983, 0.0
        %v5994 = vadd.f32 %v5982, %v5993
        %5995 = vadd.xlane.f32.xlu0 %v5994
        %v5996 = vpop.xlane.xlu0 %5995
        %v5997 = vsel %vm5988, %v5985, 0.0
        %v5998 = vadd.f32 %v5984, %v5997
        %5999 = vadd.xlane.f32.xlu0 %v5998
        %v6000 = vpop.xlane.xlu0 %5999
        %v6001 = vsel %vm5988, %v5987, 0.0
        %v6002 = vadd.f32 %v5986, %v6001
        %6003 = vadd.xlane.f32.xlu0 %v6002
        %v6004 = vpop.xlane.xlu0 %6003
        %v6005 = vmul.f32 %v5992, 0.008264462
        %v6006 = vmul.f32 %v5996, 0.008264462
        %v6007 = vmul.f32 %v6000, 0.008264462
        %v6008 = vmul.f32 %v6004, 0.008264462
        %v6009 = vsub.f32 %v5885, %v6005
        %v6010 = vsub.f32 %v5886, %v6005
        %v6011 = vsub.f32 %v5887, %v6006
        %v6012 = vsub.f32 %v5888, %v6006
        %v6013 = vsub.f32 %v5889, %v6007
        %v6014 = vsub.f32 %v5890, %v6007
        %v6015 = vsub.f32 %v5891, %v6008
        %v6016 = vsub.f32 %v5892, %v6008
        %v6017 = vmul.f32 %v6009, %v6009
        %v6018 = vmul.f32 %v6010, %v6010
        %v6019 = vmul.f32 %v6011, %v6011
        %v6020 = vmul.f32 %v6012, %v6012
        %v6021 = vmul.f32 %v6013, %v6013
        %v6022 = vmul.f32 %v6014, %v6014
        %v6023 = vmul.f32 %v6015, %v6015
        %v6024 = vmul.f32 %v6016, %v6016
        %v6025 = vsel %vm5978, %v6017, 0.0
        %v6026 = vsel %vm5979, %v6018, 0.0
        %v6027 = vsel %vm5978, %v6019, 0.0
        %v6028 = vsel %vm5979, %v6020, 0.0
        %v6029 = vsel %vm5978, %v6021, 0.0
        %v6030 = vsel %vm5979, %v6022, 0.0
        %v6031 = vsel %vm5978, %v6023, 0.0
        %v6032 = vsel %vm5979, %v6024, 0.0
        %v6033 = vsel %vm5988, %v6026, 0.0
        %v6034 = vadd.f32 %v6025, %v6033
        %6035 = vadd.xlane.f32.xlu0 %v6034
        %v6036 = vpop.xlane.xlu0 %6035
        %v6037 = vsel %vm5988, %v6028, 0.0
        %v6038 = vadd.f32 %v6027, %v6037
        %6039 = vadd.xlane.f32.xlu0 %v6038
        %v6040 = vpop.xlane.xlu0 %6039
        %v6041 = vsel %vm5988, %v6030, 0.0
        %v6042 = vadd.f32 %v6029, %v6041
        %6043 = vadd.xlane.f32.xlu0 %v6042
        %v6044 = vpop.xlane.xlu0 %6043
        %v6045 = vsel %vm5988, %v6032, 0.0
        %v6046 = vadd.f32 %v6031, %v6045
        %6047 = vadd.xlane.f32.xlu0 %v6046
        %v6048 = vpop.xlane.xlu0 %6047
        %v6049 = vmul.f32 %v6036, 0.008264462
        %v6050 = vmul.f32 %v6040, 0.008264462
        %v6051 = vmul.f32 %v6044, 0.008264462
        %v6052 = vmul.f32 %v6048, 0.008264462
        %v6053 = vadd.f32 %v6049, 1e-05
        %v6054 = vadd.f32 %v6050, 1e-05
        %v6055 = vadd.f32 %v6051, 1e-05
        %v6056 = vadd.f32 %v6052, 1e-05
        %v6057 = vrsqrt.pop %v6053
        %v6058 = vmul.f32 %v6057, %v6053
        %v6059 = vmul.f32 %v6058, %v6057
        %v6060 = vmul.f32 0.5, %v6059
        %v6061 = vsub.f32 1.5, %v6060
        %v6062 = vmul.f32 %v6057, %v6061
        %vm6063 = vweird.f32 %v6053
        %vm6064 = vweird.f32 %v6057
        %vm6065 = vmor %vm6063, %vm6064
        %v6066 = vsel %vm6065, %v6057, %v6062
        %v6067 = vrsqrt.pop %v6054
        %v6068 = vmul.f32 %v6067, %v6054
        %v6069 = vmul.f32 %v6068, %v6067
        %v6070 = vmul.f32 0.5, %v6069
        %v6071 = vsub.f32 1.5, %v6070
        %v6072 = vmul.f32 %v6067, %v6071
        %vm6073 = vweird.f32 %v6054
        %vm6074 = vweird.f32 %v6067
        %vm6075 = vmor %vm6073, %vm6074
        %v6076 = vsel %vm6075, %v6067, %v6072
        %v6077 = vrsqrt.pop %v6055
        %v6078 = vmul.f32 %v6077, %v6055
        %v6079 = vmul.f32 %v6078, %v6077
        %v6080 = vmul.f32 0.5, %v6079
        %v6081 = vsub.f32 1.5, %v6080
        %v6082 = vmul.f32 %v6077, %v6081
        %vm6083 = vweird.f32 %v6055
        %vm6084 = vweird.f32 %v6077
        %vm6085 = vmor %vm6083, %vm6084
        %v6086 = vsel %vm6085, %v6077, %v6082
        %v6087 = vrsqrt.pop %v6056
        %v6088 = vmul.f32 %v6087, %v6056
        %v6089 = vmul.f32 %v6088, %v6087
        %v6090 = vmul.f32 0.5, %v6089
        %v6091 = vsub.f32 1.5, %v6090
        %v6092 = vmul.f32 %v6087, %v6091
        %vm6093 = vweird.f32 %v6056
        %vm6094 = vweird.f32 %v6087
        %vm6095 = vmor %vm6093, %vm6094
        %v6096 = vsel %vm6095, %v6087, %v6092
        %v6097 = vmul.f32 %v6009, %v6066
        %v6098 = vmul.f32 %v6010, %v6066
        %v6099 = vmul.f32 %v6011, %v6076
        %v6100 = vmul.f32 %v6012, %v6076
        %v6101 = vmul.f32 %v6013, %v6086
        %v6102 = vmul.f32 %v6014, %v6086
        %v6103 = vmul.f32 %v6015, %v6096
        %v6104 = vmul.f32 %v6016, %v6096
        %v6105 = vld [vmem:[%s5] sm:$0xff]
        %v6106 = vld [vmem:[%s5 + $0x8] sm:$0xff]
        %v6107 = vld [vmem:[%s5 + $0x10] sm:$0xff]
        %v6108 = vld [vmem:[%s5 + $0x18] sm:$0xff]
        %6110 = vset.pattern.permute.xlu0 0
        %6111 = vperm.xlu0 %6110, %v6105
        %v6112 = vpop.permute.xlu0 %6111
        %6115 = vset.pattern.permute.xlu0 0
        %6116 = vperm.xlu0 %6115, %v6106
        %v6117 = vpop.permute.xlu0 %6116
        %6120 = vset.pattern.permute.xlu0 0
        %6121 = vperm.xlu0 %6120, %v6107
        %v6122 = vpop.permute.xlu0 %6121
        %6125 = vset.pattern.permute.xlu0 0
        %6126 = vperm.xlu0 %6125, %v6108
        %v6127 = vpop.permute.xlu0 %6126
        %v6129 = vmul.f32 %v6097, %v6112
        %v6130 = vmul.f32 %v6098, %v6112
        %v6131 = vmul.f32 %v6099, %v6117
        %v6132 = vmul.f32 %v6100, %v6117
        %v6133 = vmul.f32 %v6101, %v6122
        %v6134 = vmul.f32 %v6102, %v6122
        %v6135 = vmul.f32 %v6103, %v6127
        %v6136 = vmul.f32 %v6104, %v6127
        %v6137 = vld [vmem:[%s6] sm:$0xff]
        %v6138 = vld [vmem:[%s6 + $0x8] sm:$0xff]
        %v6139 = vld [vmem:[%s6 + $0x10] sm:$0xff]
        %v6140 = vld [vmem:[%s6 + $0x18] sm:$0xff]
        %6142 = vset.pattern.permute.xlu0 0
        %6143 = vperm.xlu0 %6142, %v6137
        %v6144 = vpop.permute.xlu0 %6143
        %6147 = vset.pattern.permute.xlu0 0
        %6148 = vperm.xlu0 %6147, %v6138
        %v6149 = vpop.permute.xlu0 %6148
        %6152 = vset.pattern.permute.xlu0 0
        %6153 = vperm.xlu0 %6152, %v6139
        %v6154 = vpop.permute.xlu0 %6153
        %6157 = vset.pattern.permute.xlu0 0
        %6158 = vperm.xlu0 %6157, %v6140
        %v6159 = vpop.permute.xlu0 %6158
        %v6161 = vadd.f32 %v6129, %v6144
        %v6162 = vadd.f32 %v6130, %v6144
        %v6163 = vadd.f32 %v6131, %v6149
        %v6164 = vadd.f32 %v6132, %v6149
        %v6165 = vadd.f32 %v6133, %v6154
        %v6166 = vadd.f32 %v6134, %v6154
        %v6167 = vadd.f32 %v6135, %v6159
        %v6168 = vadd.f32 %v6136, %v6159
        %vm6169 = vcmp.ge.f32.partialorder %v6161, 0.0
        %vm6170 = vcmp.ge.f32.partialorder %v6162, 0.0
        %vm6171 = vcmp.ge.f32.partialorder %v6163, 0.0
        %vm6172 = vcmp.ge.f32.partialorder %v6164, 0.0
        %vm6173 = vcmp.ge.f32.partialorder %v6165, 0.0
        %vm6174 = vcmp.ge.f32.partialorder %v6166, 0.0
        %vm6175 = vcmp.ge.f32.partialorder %v6167, 0.0
        %vm6176 = vcmp.ge.f32.partialorder %v6168, 0.0
        %v6177 = vmul.f32 %v6161, 0.2
        %v6178 = vmul.f32 %v6162, 0.2
        %v6179 = vmul.f32 %v6163, 0.2
        %v6180 = vmul.f32 %v6164, 0.2
        %v6181 = vmul.f32 %v6165, 0.2
        %v6182 = vmul.f32 %v6166, 0.2
        %v6183 = vmul.f32 %v6167, 0.2
        %v6184 = vmul.f32 %v6168, 0.2
        %v6185 = vsel %vm6169, %v6161, %v6177
        %v6186 = vsel %vm6170, %v6162, %v6178
        %v6187 = vsel %vm6171, %v6163, %v6179
        %v6188 = vsel %vm6172, %v6164, %v6180
        %v6189 = vsel %vm6173, %v6165, %v6181
        %v6190 = vsel %vm6174, %v6166, %v6182
        %v6191 = vsel %vm6175, %v6167, %v6183
        %v6192 = vsel %vm6176, %v6168, %v6184
        %vm6193 = vcmp.eq.s32.totalorder %v4018, 14
        %vm6194 = vcmp.eq.s32.totalorder %v4019, 14
        %vm6195 = vcmp.eq.s32.totalorder %v4020, 14
        %vm6196 = vcmp.eq.s32.totalorder %v4021, 14
        %vm6197 = vmor %vm4042, %vm6193
        %vm6198 = vmor %vm4043, %vm6194
        %vm6199 = vmor %vm4044, %vm6195
        %vm6200 = vmor %vm4045, %vm6196
        %vm6201 = vcmp.eq.s32.totalorder %v4018, 15
        %vm6202 = vcmp.eq.s32.totalorder %v4019, 15
        %vm6203 = vcmp.eq.s32.totalorder %v4020, 15
        %vm6204 = vcmp.eq.s32.totalorder %v4021, 15
        %vm6205 = vmor %vm6197, %vm6201
        %vm6206 = vmor %vm6198, %vm6202
        %vm6207 = vmor %vm6199, %vm6203
        %vm6208 = vmor %vm6200, %vm6204
        %v6209 = vsel %vm6205, 1, 0
        %v6210 = vsel %vm6206, 1, 0
        %v6211 = vsel %vm6207, 1, 0
        %v6212 = vsel %vm6208, 1, 0
        %v6213 = vcvt.s32.f32 %v6209
        %v6214 = vcvt.s32.f32 %v6210
        %v6215 = vcvt.s32.f32 %v6211
        %v6216 = vcvt.s32.f32 %v6212
        %v6217 = vmul.f32 %v6213, 0.25
        %v6218 = vmul.f32 %v6214, 0.25
        %v6219 = vmul.f32 %v6215, 0.25
        %v6220 = vmul.f32 %v6216, 0.25
        %vm6221 = vcmask 203776
        %v6223 = vsel %vm6221, %v6185, 0
        %v6226 = vsel %vm6221, %v6187, 0
        %v6229 = vsel %vm6221, %v6189, 0
        %v6232 = vsel %vm6221, %v6191, 0
        %v6235 = vsel %vm678, %v6220, 0
        %6237 = vmatpush.msra.mxu0 0.0
        %6238 = vmatpush.msra.mxu0 0.0
        %6239 = vmatpush.msra.mxu0 0.0
        %6240 = vmatpush.msra.mxu0 0.0
        %6241 = vmatpush.msra.mxu0 0.0
        %6242 = vmatpush.msra.mxu0 0.0
        %6243 = vmatpush.msra.mxu0 0.0
        %6244 = vmatpush.msra.mxu0 0.0
        %6245 = vmatpush.msra.mxu0 0.0
        %6246 = vmatpush.msra.mxu0 0.0
        %6247 = vmatpush.msra.mxu0 0.0
        %6248 = vmatpush.msra.mxu0 0.0
        %6249 = vmatpush.msra.mxu0 %v6235
        %6250 = vmatpush.msra.mxu0 %v6219
        %6251 = vmatpush.msra.mxu0 %v6218
        %6252 = vmatpush.msra.mxu0 %v6217
        %6253 = vmatmul.f32.gmra.mxu0 %v6223
        %v6254 = vpop.f32.mrf.mxu0
        %v6255 = vadd.f32 0.0, %v6254
        %6256 = vmatmul.f32.gmra.mxu0 %v6226
        %v6257 = vpop.f32.mrf.mxu0
        %v6258 = vadd.f32 0.0, %v6257
        %6259 = vmatmul.f32.gmra.mxu0 %v6229
        %v6260 = vpop.f32.mrf.mxu0
        %v6261 = vadd.f32 0.0, %v6260
        %6262 = vmatmul.f32.gmra.mxu0 %v6232
        %v6263 = vpop.f32.mrf.mxu0
        %v6264 = vadd.f32 0.0, %v6263
        %6265 = vdwg.mxu0
        %vm6266 = vcmask 39936
        %6267 = vst.msk [vmem:[%s550] sm:$0xff] %vm6266, %v6255
        %6268 = vst.msk [vmem:[%s550 + $0x8] sm:$0xff] %vm6266, %v6258
        %6269 = vst.msk [vmem:[%s550 + $0x10] sm:$0xff] %vm6266, %v6261
        %6270 = vst.msk [vmem:[%s550 + $0x18] sm:$0xff] %vm6266, %v6264
        %6271 = vrot.lane.b32.xlu0 %v6185, 100
        %v6272 = vpop.permute.xlu0 %6271
        %6273 = vrot.lane.b32.xlu0 %v6187, 100
        %v6274 = vpop.permute.xlu0 %6273
        %6275 = vrot.lane.b32.xlu0 %v6189, 100
        %v6276 = vpop.permute.xlu0 %6275
        %6277 = vrot.lane.b32.xlu0 %v6191, 100
        %v6278 = vpop.permute.xlu0 %6277
        %v6279 = vsel %vm6221, %v6272, 0
        %v6281 = vsel %vm6221, %v6274, 0
        %v6283 = vsel %vm6221, %v6276, 0
        %v6285 = vsel %vm6221, %v6278, 0
        %6287 = vmatpush.msra.mxu0 0.0
        %6288 = vmatpush.msra.mxu0 0.0
        %6289 = vmatpush.msra.mxu0 0.0
        %6290 = vmatpush.msra.mxu0 0.0
        %6291 = vmatpush.msra.mxu0 0.0
        %6292 = vmatpush.msra.mxu0 0.0
        %6293 = vmatpush.msra.mxu0 0.0
        %6294 = vmatpush.msra.mxu0 0.0
        %6295 = vmatpush.msra.mxu0 0.0
        %6296 = vmatpush.msra.mxu0 0.0
        %6297 = vmatpush.msra.mxu0 0.0
        %6298 = vmatpush.msra.mxu0 0.0
        %6299 = vmatpush.msra.mxu0 %v6235
        %6300 = vmatpush.msra.mxu0 %v6219
        %6301 = vmatpush.msra.mxu0 %v6218
        %6302 = vmatpush.msra.mxu0 %v6217
        %6303 = vmatmul.f32.gmra.mxu0 %v6279
        %v6304 = vpop.f32.mrf.mxu0
        %v6305 = vadd.f32 0.0, %v6304
        %6306 = vmatmul.f32.gmra.mxu0 %v6281
        %v6307 = vpop.f32.mrf.mxu0
        %v6308 = vadd.f32 0.0, %v6307
        %6309 = vmatmul.f32.gmra.mxu0 %v6283
        %v6310 = vpop.f32.mrf.mxu0
        %v6311 = vadd.f32 0.0, %v6310
        %6312 = vmatmul.f32.gmra.mxu0 %v6285
        %v6313 = vpop.f32.mrf.mxu0
        %v6314 = vadd.f32 0.0, %v6313
        %6315 = vdwg.mxu0
        %6320 = vrot.lane.b32.xlu0 %v6305, 5
        %v6321 = vpop.permute.xlu0 %6320
        %6322 = vrot.lane.b32.xlu0 %v6308, 5
        %v6323 = vpop.permute.xlu0 %6322
        %6324 = vrot.lane.b32.xlu0 %v6311, 5
        %v6325 = vpop.permute.xlu0 %6324
        %6326 = vrot.lane.b32.xlu0 %v6314, 5
        %v6327 = vpop.permute.xlu0 %6326
        %vm6332 = vcmask 80936
        %6333 = vst.msk [vmem:[%s550] sm:$0xff] %vm6332, %v6321
        %6334 = vst.msk [vmem:[%s550 + $0x8] sm:$0xff] %vm6332, %v6323
        %6335 = vst.msk [vmem:[%s550 + $0x10] sm:$0xff] %vm6332, %v6325
        %6336 = vst.msk [vmem:[%s550 + $0x18] sm:$0xff] %vm6332, %v6327
        %6337 = vrot.lane.b32.xlu0 %v6185, 72
        %v6338 = vpop.permute.xlu0 %6337
        %6339 = vrot.lane.b32.xlu0 %v6187, 72
        %v6340 = vpop.permute.xlu0 %6339
        %6341 = vrot.lane.b32.xlu0 %v6189, 72
        %v6342 = vpop.permute.xlu0 %6341
        %6343 = vrot.lane.b32.xlu0 %v6191, 72
        %v6344 = vpop.permute.xlu0 %6343
        %v6345 = vsel %vm6221, %v6338, 0
        %v6347 = vsel %vm6221, %v6340, 0
        %v6349 = vsel %vm6221, %v6342, 0
        %v6351 = vsel %vm6221, %v6344, 0
        %6353 = vmatpush.msra.mxu0 0.0
        %6354 = vmatpush.msra.mxu0 0.0
        %6355 = vmatpush.msra.mxu0 0.0
        %6356 = vmatpush.msra.mxu0 0.0
        %6357 = vmatpush.msra.mxu0 0.0
        %6358 = vmatpush.msra.mxu0 0.0
        %6359 = vmatpush.msra.mxu0 0.0
        %6360 = vmatpush.msra.mxu0 0.0
        %6361 = vmatpush.msra.mxu0 0.0
        %6362 = vmatpush.msra.mxu0 0.0
        %6363 = vmatpush.msra.mxu0 0.0
        %6364 = vmatpush.msra.mxu0 0.0
        %6365 = vmatpush.msra.mxu0 %v6235
        %6366 = vmatpush.msra.mxu0 %v6219
        %6367 = vmatpush.msra.mxu0 %v6218
        %6368 = vmatpush.msra.mxu0 %v6217
        %6369 = vmatmul.f32.gmra.mxu0 %v6345
        %v6370 = vpop.f32.mrf.mxu0
        %v6371 = vadd.f32 0.0, %v6370
        %6372 = vmatmul.f32.gmra.mxu0 %v6347
        %v6373 = vpop.f32.mrf.mxu0
        %v6374 = vadd.f32 0.0, %v6373
        %6375 = vmatmul.f32.gmra.mxu0 %v6349
        %v6376 = vpop.f32.mrf.mxu0
        %v6377 = vadd.f32 0.0, %v6376
        %6378 = vmatmul.f32.gmra.mxu0 %v6351
        %v6379 = vpop.f32.mrf.mxu0
        %v6380 = vadd.f32 0.0, %v6379
        %6381 = vdwg.mxu0
        %6386 = vrot.lane.b32.xlu0 %v6371, 10
        %v6387 = vpop.permute.xlu0 %6386
        %6388 = vrot.lane.b32.xlu0 %v6374, 10
        %v6389 = vpop.permute.xlu0 %6388
        %6390 = vrot.lane.b32.xlu0 %v6377, 10
        %v6391 = vpop.permute.xlu0 %6390
        %6392 = vrot.lane.b32.xlu0 %v6380, 10
        %v6393 = vpop.permute.xlu0 %6392
        %vm6398 = vcmask 121936
        %6399 = vst.msk [vmem:[%s550] sm:$0xff] %vm6398, %v6387
        %6400 = vst.msk [vmem:[%s550 + $0x8] sm:$0xff] %vm6398, %v6389
        %6401 = vst.msk [vmem:[%s550 + $0x10] sm:$0xff] %vm6398, %v6391
        %6402 = vst.msk [vmem:[%s550 + $0x18] sm:$0xff] %vm6398, %v6393
        %6403 = vrot.lane.b32.xlu0 %v6185, 44
        %v6404 = vpop.permute.xlu0 %6403
        %6405 = vrot.lane.b32.xlu0 %v6187, 44
        %v6406 = vpop.permute.xlu0 %6405
        %6407 = vrot.lane.b32.xlu0 %v6189, 44
        %v6408 = vpop.permute.xlu0 %6407
        %6409 = vrot.lane.b32.xlu0 %v6191, 44
        %v6410 = vpop.permute.xlu0 %6409
        %v6411 = vsel %vm6221, %v6404, 0
        %v6413 = vsel %vm6221, %v6406, 0
        %v6415 = vsel %vm6221, %v6408, 0
        %v6417 = vsel %vm6221, %v6410, 0
        %6419 = vmatpush.msra.mxu0 0.0
        %6420 = vmatpush.msra.mxu0 0.0
        %6421 = vmatpush.msra.mxu0 0.0
        %6422 = vmatpush.msra.mxu0 0.0
        %6423 = vmatpush.msra.mxu0 0.0
        %6424 = vmatpush.msra.mxu0 0.0
        %6425 = vmatpush.msra.mxu0 0.0
        %6426 = vmatpush.msra.mxu0 0.0
        %6427 = vmatpush.msra.mxu0 0.0
        %6428 = vmatpush.msra.mxu0 0.0
        %6429 = vmatpush.msra.mxu0 0.0
        %6430 = vmatpush.msra.mxu0 0.0
        %6431 = vmatpush.msra.mxu0 %v6235
        %6432 = vmatpush.msra.mxu0 %v6219
        %6433 = vmatpush.msra.mxu0 %v6218
        %6434 = vmatpush.msra.mxu0 %v6217
        %6435 = vmatmul.f32.gmra.mxu0 %v6411
        %v6436 = vpop.f32.mrf.mxu0
        %v6437 = vadd.f32 0.0, %v6436
        %6438 = vmatmul.f32.gmra.mxu0 %v6413
        %v6439 = vpop.f32.mrf.mxu0
        %v6440 = vadd.f32 0.0, %v6439
        %6441 = vmatmul.f32.gmra.mxu0 %v6415
        %v6442 = vpop.f32.mrf.mxu0
        %v6443 = vadd.f32 0.0, %v6442
        %6444 = vmatmul.f32.gmra.mxu0 %v6417
        %v6445 = vpop.f32.mrf.mxu0
        %v6446 = vadd.f32 0.0, %v6445
        %6447 = vdwg.mxu0
        %6452 = vrot.lane.b32.xlu0 %v6437, 15
        %v6453 = vpop.permute.xlu0 %6452
        %6454 = vrot.lane.b32.xlu0 %v6440, 15
        %v6455 = vpop.permute.xlu0 %6454
        %6456 = vrot.lane.b32.xlu0 %v6443, 15
        %v6457 = vpop.permute.xlu0 %6456
        %6458 = vrot.lane.b32.xlu0 %v6446, 15
        %v6459 = vpop.permute.xlu0 %6458
        %vm6464 = vcmask 162936
        %6465 = vst.msk [vmem:[%s550] sm:$0xff] %vm6464, %v6453
        %6466 = vst.msk [vmem:[%s550 + $0x8] sm:$0xff] %vm6464, %v6455
        %6467 = vst.msk [vmem:[%s550 + $0x10] sm:$0xff] %vm6464, %v6457
        %6468 = vst.msk [vmem:[%s550 + $0x18] sm:$0xff] %vm6464, %v6459
        %6473 = vrot.lane.b32.xlu0 %v6185, 16
        %v6474 = vpop.permute.xlu0 %6473
        %6475 = vrot.lane.b32.xlu0 %v6186, 16
        %v6476 = vpop.permute.xlu0 %6475
        %6477 = vrot.lane.b32.xlu0 %v6187, 16
        %v6478 = vpop.permute.xlu0 %6477
        %6479 = vrot.lane.b32.xlu0 %v6188, 16
        %v6480 = vpop.permute.xlu0 %6479
        %6481 = vrot.lane.b32.xlu0 %v6189, 16
        %v6482 = vpop.permute.xlu0 %6481
        %6483 = vrot.lane.b32.xlu0 %v6190, 16
        %v6484 = vpop.permute.xlu0 %6483
        %6485 = vrot.lane.b32.xlu0 %v6191, 16
        %v6486 = vpop.permute.xlu0 %6485
        %6487 = vrot.lane.b32.xlu0 %v6192, 16
        %v6488 = vpop.permute.xlu0 %6487
        %v6489 = vsel %vm4714, %v6474, %v6476
        %v6490 = vsel %vm4714, %v6478, %v6480
        %v6491 = vsel %vm4714, %v6482, %v6484
        %v6492 = vsel %vm4714, %v6486, %v6488
        %v6493 = vsel %vm6221, %v6489, 0
        %v6495 = vsel %vm6221, %v6490, 0
        %v6497 = vsel %vm6221, %v6491, 0
        %v6499 = vsel %vm6221, %v6492, 0
        %6501 = vmatpush.msra.mxu0 0.0
        %6502 = vmatpush.msra.mxu0 0.0
        %6503 = vmatpush.msra.mxu0 0.0
        %6504 = vmatpush.msra.mxu0 0.0
        %6505 = vmatpush.msra.mxu0 0.0
        %6506 = vmatpush.msra.mxu0 0.0
        %6507 = vmatpush.msra.mxu0 0.0
        %6508 = vmatpush.msra.mxu0 0.0
        %6509 = vmatpush.msra.mxu0 0.0
        %6510 = vmatpush.msra.mxu0 0.0
        %6511 = vmatpush.msra.mxu0 0.0
        %6512 = vmatpush.msra.mxu0 0.0
        %6513 = vmatpush.msra.mxu0 %v6235
        %6514 = vmatpush.msra.mxu0 %v6219
        %6515 = vmatpush.msra.mxu0 %v6218
        %6516 = vmatpush.msra.mxu0 %v6217
        %6517 = vmatmul.f32.gmra.mxu0 %v6493
        %v6518 = vpop.f32.mrf.mxu0
        %v6519 = vadd.f32 0.0, %v6518
        %6520 = vmatmul.f32.gmra.mxu0 %v6495
        %v6521 = vpop.f32.mrf.mxu0
        %v6522 = vadd.f32 0.0, %v6521
        %6523 = vmatmul.f32.gmra.mxu0 %v6497
        %v6524 = vpop.f32.mrf.mxu0
        %v6525 = vadd.f32 0.0, %v6524
        %6526 = vmatmul.f32.gmra.mxu0 %v6499
        %v6527 = vpop.f32.mrf.mxu0
        %v6528 = vadd.f32 0.0, %v6527
        %6529 = vdwg.mxu0
        %6534 = vrot.lane.b32.xlu0 %v6519, 20
        %v6535 = vpop.permute.xlu0 %6534
        %6536 = vrot.lane.b32.xlu0 %v6522, 20
        %v6537 = vpop.permute.xlu0 %6536
        %6538 = vrot.lane.b32.xlu0 %v6525, 20
        %v6539 = vpop.permute.xlu0 %6538
        %6540 = vrot.lane.b32.xlu0 %v6528, 20
        %v6541 = vpop.permute.xlu0 %6540
        %vm6546 = vcmask 203936
        %6547 = vst.msk [vmem:[%s550] sm:$0xff] %vm6546, %v6535
        %6548 = vst.msk [vmem:[%s550 + $0x8] sm:$0xff] %vm6546, %v6537
        %6549 = vst.msk [vmem:[%s550 + $0x10] sm:$0xff] %vm6546, %v6539
        %6550 = vst.msk [vmem:[%s550 + $0x18] sm:$0xff] %vm6546, %v6541
        %v6551 = vld [vmem:[%s550] sm:$0xff]
        %v6552 = vld [vmem:[%s550 + $0x8] sm:$0xff]
        %v6553 = vld [vmem:[%s550 + $0x10] sm:$0xff]
        %v6554 = vld [vmem:[%s550 + $0x18] sm:$0xff]
        %v6555 = vpack.c.bf16 %v6552, %v6551
        %v6556 = vpack.c.bf16 %v6554, %v6553
        %v6557 = vld [vmem:[%s7] sm:$0xf]
        %v6558 = vld [vmem:[%s7 + $0x4] sm:$0xf]
        %v6559 = vld [vmem:[%s7 + $0x8] sm:$0xf]
        %v6560 = vld [vmem:[%s7 + $0xc] sm:$0xf]
        %s6561 = scalar_lea.vmem %s7, 16
        %v6562 = vld [vmem:[%s6561] sm:$0xf]
        %v6563 = vld [vmem:[%s6561 + $0x4] sm:$0xf]
        %v6564 = vld [vmem:[%s6561 + $0x8] sm:$0xf]
        %v6565 = vld [vmem:[%s6561 + $0xc] sm:$0xf]
        %v6570 = vunpack.c.l.b16 %v6562
        %v6571 = vunpack.c.l.b16 %v6563
        %v6572 = vunpack.c.l.b16 %v6564
        %v6573 = vunpack.c.l.b16 %v6565
        %v6574 = vpack.c.b16 %v6571, %v6570
        %v6575 = vpack.c.b16 %v6573, %v6572
        %6578 = vrot.lane.b32.xlu0 %v6555, 127
        %v6579 = vpop.permute.xlu0 %6578
        %6580 = vrot.lane.b32.xlu0 %v6556, 127
        %v6581 = vpop.permute.xlu0 %6580
        %vm6584 = vcmask 261120
        %v6586 = vsel %vm6584, %v6574, 0
        %v6589 = vsel %vm6584, %v6575, 0
        %6591 = vmatpush.bf16.msra.mxu0 0
        %6592 = vmatpush.bf16.msra.mxu0 0
        %6593 = vmatpush.bf16.msra.mxu0 0
        %6594 = vmatpush.bf16.msra.mxu0 0
        %6595 = vmatpush.bf16.msra.mxu0 0
        %6596 = vmatpush.bf16.msra.mxu0 0
        %6597 = vmatpush.bf16.msra.mxu0 %v6581
        %6598 = vmatpush.bf16.msra.mxu0 %v6579
        %6599 = vmatmul.bf16.gmra.mxu0 %v6586
        %v6600 = vpop.f32.mrf.mxu0
        %v6601 = vadd.f32 0.0, %v6600
        %v6602 = vpop.f32.mrf.mxu0
        %v6603 = vadd.f32 0.0, %v6602
        %6604 = vmatmul.bf16.gmra.mxu0 %v6589
        %v6605 = vpop.f32.mrf.mxu0
        %v6606 = vadd.f32 0.0, %v6605
        %v6607 = vpop.f32.mrf.mxu0
        %v6608 = vadd.f32 0.0, %v6607
        %6609 = vdwg.mxu0
        %v6614 = vunpack.c.l.b16 %v6557
        %v6615 = vunpack.c.l.b16 %v6558
        %v6616 = vunpack.c.l.b16 %v6559
        %v6617 = vunpack.c.l.b16 %v6560
        %v6618 = vpack.c.b16 %v6615, %v6614
        %v6619 = vpack.c.b16 %v6617, %v6616
        %v6621 = vsel %vm6584, %v6618, 0
        %v6624 = vsel %vm6584, %v6619, 0
        %6626 = vmatpush.bf16.msra.mxu0 0
        %6627 = vmatpush.bf16.msra.mxu0 0
        %6628 = vmatpush.bf16.msra.mxu0 0
        %6629 = vmatpush.bf16.msra.mxu0 0
        %6630 = vmatpush.bf16.msra.mxu0 0
        %6631 = vmatpush.bf16.msra.mxu0 0
        %6632 = vmatpush.bf16.msra.mxu0 %v6556
        %6633 = vmatpush.bf16.msra.mxu0 %v6555
        %6634 = vmatmul.bf16.gmra.mxu0 %v6621
        %v6635 = vpop.f32.mrf.mxu0
        %v6636 = vadd.f32 %v6601, %v6635
        %v6637 = vpop.f32.mrf.mxu0
        %v6638 = vadd.f32 %v6603, %v6637
        %6639 = vmatmul.bf16.gmra.mxu0 %v6624
        %v6640 = vpop.f32.mrf.mxu0
        %v6641 = vadd.f32 %v6606, %v6640
        %v6642 = vpop.f32.mrf.mxu0
        %v6643 = vadd.f32 %v6608, %v6642
        %6644 = vdwg.mxu0
        %s6645 = scalar_lea.vmem %s7, 32
        %v6646 = vld [vmem:[%s6645] sm:$0xf]
        %v6647 = vld [vmem:[%s6645 + $0x4] sm:$0xf]
        %v6648 = vld [vmem:[%s6645 + $0x8] sm:$0xf]
        %v6649 = vld [vmem:[%s6645 + $0xc] sm:$0xf]
        %v6654 = vunpack.c.l.b16 %v6646
        %v6655 = vunpack.c.l.b16 %v6647
        %v6656 = vunpack.c.l.b16 %v6648
        %v6657 = vunpack.c.l.b16 %v6649
        %v6658 = vpack.c.b16 %v6655, %v6654
        %v6659 = vpack.c.b16 %v6657, %v6656
        %6660 = vrot.lane.b32.xlu0 %v6555, 126
        %v6661 = vpop.permute.xlu0 %6660
        %6662 = vrot.lane.b32.xlu0 %v6556, 126
        %v6663 = vpop.permute.xlu0 %6662
        %v6667 = vsel %vm6584, %v6658, 0
        %v6670 = vsel %vm6584, %v6659, 0
        %6672 = vmatpush.bf16.msra.mxu0 0
        %6673 = vmatpush.bf16.msra.mxu0 0
        %6674 = vmatpush.bf16.msra.mxu0 0
        %6675 = vmatpush.bf16.msra.mxu0 0
        %6676 = vmatpush.bf16.msra.mxu0 0
        %6677 = vmatpush.bf16.msra.mxu0 0
        %6678 = vmatpush.bf16.msra.mxu0 %v6663
        %6679 = vmatpush.bf16.msra.mxu0 %v6661
        %6680 = vmatmul.bf16.gmra.mxu0 %v6667
        %v6681 = vpop.f32.mrf.mxu0
        %v6682 = vadd.f32 0.0, %v6681
        %v6683 = vpop.f32.mrf.mxu0
        %v6684 = vadd.f32 0.0, %v6683
        %6685 = vmatmul.bf16.gmra.mxu0 %v6670
        %v6686 = vpop.f32.mrf.mxu0
        %v6687 = vadd.f32 0.0, %v6686
        %v6688 = vpop.f32.mrf.mxu0
        %v6689 = vadd.f32 0.0, %v6688
        %6690 = vdwg.mxu0
        %v6691 = vadd.f32 %v6636, %v6682
        %v6692 = vadd.f32 %v6638, %v6684
        %v6693 = vadd.f32 %v6641, %v6687
        %v6694 = vadd.f32 %v6643, %v6689
        %s6695 = scalar_lea.vmem %s7, 48
        %v6696 = vld [vmem:[%s6695] sm:$0xf]
        %v6697 = vld [vmem:[%s6695 + $0x4] sm:$0xf]
        %v6698 = vld [vmem:[%s6695 + $0x8] sm:$0xf]
        %v6699 = vld [vmem:[%s6695 + $0xc] sm:$0xf]
        %v6704 = vunpack.c.l.b16 %v6696
        %v6705 = vunpack.c.l.b16 %v6697
        %v6706 = vunpack.c.l.b16 %v6698
        %v6707 = vunpack.c.l.b16 %v6699
        %v6708 = vpack.c.b16 %v6705, %v6704
        %v6709 = vpack.c.b16 %v6707, %v6706
        %6710 = vrot.lane.b32.xlu0 %v6555, 125
        %v6711 = vpop.permute.xlu0 %6710
        %6712 = vrot.lane.b32.xlu0 %v6556, 125
        %v6713 = vpop.permute.xlu0 %6712
        %v6717 = vsel %vm6584, %v6708, 0
        %v6720 = vsel %vm6584, %v6709, 0
        %6722 = vmatpush.bf16.msra.mxu0 0
        %6723 = vmatpush.bf16.msra.mxu0 0
        %6724 = vmatpush.bf16.msra.mxu0 0
        %6725 = vmatpush.bf16.msra.mxu0 0
        %6726 = vmatpush.bf16.msra.mxu0 0
        %6727 = vmatpush.bf16.msra.mxu0 0
        %6728 = vmatpush.bf16.msra.mxu0 %v6713
        %6729 = vmatpush.bf16.msra.mxu0 %v6711
        %6730 = vmatmul.bf16.gmra.mxu0 %v6717
        %v6731 = vpop.f32.mrf.mxu0
        %v6732 = vadd.f32 0.0, %v6731
        %v6733 = vpop.f32.mrf.mxu0
        %v6734 = vadd.f32 0.0, %v6733
        %6735 = vmatmul.bf16.gmra.mxu0 %v6720
        %v6736 = vpop.f32.mrf.mxu0
        %v6737 = vadd.f32 0.0, %v6736
        %v6738 = vpop.f32.mrf.mxu0
        %v6739 = vadd.f32 0.0, %v6738
        %6740 = vdwg.mxu0
        %v6741 = vadd.f32 %v6691, %v6732
        %v6742 = vadd.f32 %v6692, %v6734
        %v6743 = vadd.f32 %v6693, %v6737
        %v6744 = vadd.f32 %v6694, %v6739
        %s6745 = scalar_lea.vmem %s7, 64
        %v6746 = vld [vmem:[%s6745] sm:$0xf]
        %v6747 = vld [vmem:[%s6745 + $0x4] sm:$0xf]
        %v6748 = vld [vmem:[%s6745 + $0x8] sm:$0xf]
        %v6749 = vld [vmem:[%s6745 + $0xc] sm:$0xf]
        %v6754 = vunpack.c.l.b16 %v6746
        %v6755 = vunpack.c.l.b16 %v6747
        %v6756 = vunpack.c.l.b16 %v6748
        %v6757 = vunpack.c.l.b16 %v6749
        %v6758 = vpack.c.b16 %v6755, %v6754
        %v6759 = vpack.c.b16 %v6757, %v6756
        %6760 = vrot.lane.b32.xlu0 %v6555, 123
        %v6761 = vpop.permute.xlu0 %6760
        %6762 = vrot.lane.b32.xlu0 %v6556, 123
        %v6763 = vpop.permute.xlu0 %6762
        %v6767 = vsel %vm6584, %v6758, 0
        %v6770 = vsel %vm6584, %v6759, 0
        %6772 = vmatpush.bf16.msra.mxu0 0
        %6773 = vmatpush.bf16.msra.mxu0 0
        %6774 = vmatpush.bf16.msra.mxu0 0
        %6775 = vmatpush.bf16.msra.mxu0 0
        %6776 = vmatpush.bf16.msra.mxu0 0
        %6777 = vmatpush.bf16.msra.mxu0 0
        %6778 = vmatpush.bf16.msra.mxu0 %v6763
        %6779 = vmatpush.bf16.msra.mxu0 %v6761
        %6780 = vmatmul.bf16.gmra.mxu0 %v6767
        %v6781 = vpop.f32.mrf.mxu0
        %v6782 = vadd.f32 0.0, %v6781
        %v6783 = vpop.f32.mrf.mxu0
        %v6784 = vadd.f32 0.0, %v6783
        %6785 = vmatmul.bf16.gmra.mxu0 %v6770
        %v6786 = vpop.f32.mrf.mxu0
        %v6787 = vadd.f32 0.0, %v6786
        %v6788 = vpop.f32.mrf.mxu0
        %v6789 = vadd.f32 0.0, %v6788
        %6790 = vdwg.mxu0
        %v6791 = vadd.f32 %v6741, %v6782
        %v6792 = vadd.f32 %v6742, %v6784
        %v6793 = vadd.f32 %v6743, %v6787
        %v6794 = vadd.f32 %v6744, %v6789
        %s6795 = scalar_lea.vmem %s7, 80
        %v6796 = vld [vmem:[%s6795] sm:$0xf]
        %v6797 = vld [vmem:[%s6795 + $0x4] sm:$0xf]
        %v6798 = vld [vmem:[%s6795 + $0x8] sm:$0xf]
        %v6799 = vld [vmem:[%s6795 + $0xc] sm:$0xf]
        %v6804 = vunpack.c.l.b16 %v6796
        %v6805 = vunpack.c.l.b16 %v6797
        %v6806 = vunpack.c.l.b16 %v6798
        %v6807 = vunpack.c.l.b16 %v6799
        %v6808 = vpack.c.b16 %v6805, %v6804
        %v6809 = vpack.c.b16 %v6807, %v6806
        %6810 = vrot.lane.b32.xlu0 %v6555, 122
        %v6811 = vpop.permute.xlu0 %6810
        %6812 = vrot.lane.b32.xlu0 %v6556, 122
        %v6813 = vpop.permute.xlu0 %6812
        %v6817 = vsel %vm6584, %v6808, 0
        %v6820 = vsel %vm6584, %v6809, 0
        %6822 = vmatpush.bf16.msra.mxu0 0
        %6823 = vmatpush.bf16.msra.mxu0 0
        %6824 = vmatpush.bf16.msra.mxu0 0
        %6825 = vmatpush.bf16.msra.mxu0 0
        %6826 = vmatpush.bf16.msra.mxu0 0
        %6827 = vmatpush.bf16.msra.mxu0 0
        %6828 = vmatpush.bf16.msra.mxu0 %v6813
        %6829 = vmatpush.bf16.msra.mxu0 %v6811
        %6830 = vmatmul.bf16.gmra.mxu0 %v6817
        %v6831 = vpop.f32.mrf.mxu0
        %v6832 = vadd.f32 0.0, %v6831
        %v6833 = vpop.f32.mrf.mxu0
        %v6834 = vadd.f32 0.0, %v6833
        %6835 = vmatmul.bf16.gmra.mxu0 %v6820
        %v6836 = vpop.f32.mrf.mxu0
        %v6837 = vadd.f32 0.0, %v6836
        %v6838 = vpop.f32.mrf.mxu0
        %v6839 = vadd.f32 0.0, %v6838
        %6840 = vdwg.mxu0
        %v6841 = vadd.f32 %v6791, %v6832
        %v6842 = vadd.f32 %v6792, %v6834
        %v6843 = vadd.f32 %v6793, %v6837
        %v6844 = vadd.f32 %v6794, %v6839
        %s6845 = scalar_lea.vmem %s7, 96
        %v6846 = vld [vmem:[%s6845] sm:$0xf]
        %v6847 = vld [vmem:[%s6845 + $0x4] sm:$0xf]
        %v6848 = vld [vmem:[%s6845 + $0x8] sm:$0xf]
        %v6849 = vld [vmem:[%s6845 + $0xc] sm:$0xf]
        %v6854 = vunpack.c.l.b16 %v6846
        %v6855 = vunpack.c.l.b16 %v6847
        %v6856 = vunpack.c.l.b16 %v6848
        %v6857 = vunpack.c.l.b16 %v6849
        %v6858 = vpack.c.b16 %v6855, %v6854
        %v6859 = vpack.c.b16 %v6857, %v6856
        %6860 = vrot.lane.b32.xlu0 %v6555, 121
        %v6861 = vpop.permute.xlu0 %6860
        %6862 = vrot.lane.b32.xlu0 %v6556, 121
        %v6863 = vpop.permute.xlu0 %6862
        %v6867 = vsel %vm6584, %v6858, 0
        %v6870 = vsel %vm6584, %v6859, 0
        %6872 = vmatpush.bf16.msra.mxu0 0
        %6873 = vmatpush.bf16.msra.mxu0 0
        %6874 = vmatpush.bf16.msra.mxu0 0
        %6875 = vmatpush.bf16.msra.mxu0 0
        %6876 = vmatpush.bf16.msra.mxu0 0
        %6877 = vmatpush.bf16.msra.mxu0 0
        %6878 = vmatpush.bf16.msra.mxu0 %v6863
        %6879 = vmatpush.bf16.msra.mxu0 %v6861
        %6880 = vmatmul.bf16.gmra.mxu0 %v6867
        %v6881 = vpop.f32.mrf.mxu0
        %v6882 = vadd.f32 0.0, %v6881
        %v6883 = vpop.f32.mrf.mxu0
        %v6884 = vadd.f32 0.0, %v6883
        %6885 = vmatmul.bf16.gmra.mxu0 %v6870
        %v6886 = vpop.f32.mrf.mxu0
        %v6887 = vadd.f32 0.0, %v6886
        %v6888 = vpop.f32.mrf.mxu0
        %v6889 = vadd.f32 0.0, %v6888
        %6890 = vdwg.mxu0
        %v6891 = vadd.f32 %v6841, %v6882
        %v6892 = vadd.f32 %v6842, %v6884
        %v6893 = vadd.f32 %v6843, %v6887
        %v6894 = vadd.f32 %v6844, %v6889
        %s6895 = scalar_lea.vmem %s7, 112
        %v6896 = vld [vmem:[%s6895] sm:$0xf]
        %v6897 = vld [vmem:[%s6895 + $0x4] sm:$0xf]
        %v6898 = vld [vmem:[%s6895 + $0x8] sm:$0xf]
        %v6899 = vld [vmem:[%s6895 + $0xc] sm:$0xf]
        %v6904 = vunpack.c.l.b16 %v6896
        %v6905 = vunpack.c.l.b16 %v6897
        %v6906 = vunpack.c.l.b16 %v6898
        %v6907 = vunpack.c.l.b16 %v6899
        %v6908 = vpack.c.b16 %v6905, %v6904
        %v6909 = vpack.c.b16 %v6907, %v6906
        %6910 = vrot.lane.b32.xlu0 %v6555, 120
        %v6911 = vpop.permute.xlu0 %6910
        %6912 = vrot.lane.b32.xlu0 %v6556, 120
        %v6913 = vpop.permute.xlu0 %6912
        %v6917 = vsel %vm6584, %v6908, 0
        %v6920 = vsel %vm6584, %v6909, 0
        %6922 = vmatpush.bf16.msra.mxu0 0
        %6923 = vmatpush.bf16.msra.mxu0 0
        %6924 = vmatpush.bf16.msra.mxu0 0
        %6925 = vmatpush.bf16.msra.mxu0 0
        %6926 = vmatpush.bf16.msra.mxu0 0
        %6927 = vmatpush.bf16.msra.mxu0 0
        %6928 = vmatpush.bf16.msra.mxu0 %v6913
        %6929 = vmatpush.bf16.msra.mxu0 %v6911
        %6930 = vmatmul.bf16.gmra.mxu0 %v6917
        %v6931 = vpop.f32.mrf.mxu0
        %v6932 = vadd.f32 0.0, %v6931
        %v6933 = vpop.f32.mrf.mxu0
        %v6934 = vadd.f32 0.0, %v6933
        %6935 = vmatmul.bf16.gmra.mxu0 %v6920
        %v6936 = vpop.f32.mrf.mxu0
        %v6937 = vadd.f32 0.0, %v6936
        %v6938 = vpop.f32.mrf.mxu0
        %v6939 = vadd.f32 0.0, %v6938
        %6940 = vdwg.mxu0
        %v6941 = vadd.f32 %v6891, %v6932
        %v6942 = vadd.f32 %v6892, %v6934
        %v6943 = vadd.f32 %v6893, %v6937
        %v6944 = vadd.f32 %v6894, %v6939
        %s6945 = scalar_lea.vmem %s7, 128
        %v6946 = vld [vmem:[%s6945] sm:$0xf]
        %v6947 = vld [vmem:[%s6945 + $0x4] sm:$0xf]
        %v6948 = vld [vmem:[%s6945 + $0x8] sm:$0xf]
        %v6949 = vld [vmem:[%s6945 + $0xc] sm:$0xf]
        %v6954 = vunpack.c.l.b16 %v6946
        %v6955 = vunpack.c.l.b16 %v6947
        %v6956 = vunpack.c.l.b16 %v6948
        %v6957 = vunpack.c.l.b16 %v6949
        %v6958 = vpack.c.b16 %v6955, %v6954
        %v6959 = vpack.c.b16 %v6957, %v6956
        %6960 = vrot.lane.b32.xlu0 %v6555, 118
        %v6961 = vpop.permute.xlu0 %6960
        %6962 = vrot.lane.b32.xlu0 %v6556, 118
        %v6963 = vpop.permute.xlu0 %6962
        %v6967 = vsel %vm6584, %v6958, 0
        %v6970 = vsel %vm6584, %v6959, 0
        %6972 = vmatpush.bf16.msra.mxu0 0
        %6973 = vmatpush.bf16.msra.mxu0 0
        %6974 = vmatpush.bf16.msra.mxu0 0
        %6975 = vmatpush.bf16.msra.mxu0 0
        %6976 = vmatpush.bf16.msra.mxu0 0
        %6977 = vmatpush.bf16.msra.mxu0 0
        %6978 = vmatpush.bf16.msra.mxu0 %v6963
        %6979 = vmatpush.bf16.msra.mxu0 %v6961
        %6980 = vmatmul.bf16.gmra.mxu0 %v6967
        %v6981 = vpop.f32.mrf.mxu0
        %v6982 = vadd.f32 0.0, %v6981
        %v6983 = vpop.f32.mrf.mxu0
        %v6984 = vadd.f32 0.0, %v6983
        %6985 = vmatmul.bf16.gmra.mxu0 %v6970
        %v6986 = vpop.f32.mrf.mxu0
        %v6987 = vadd.f32 0.0, %v6986
        %v6988 = vpop.f32.mrf.mxu0
        %v6989 = vadd.f32 0.0, %v6988
        %6990 = vdwg.mxu0
        %v6991 = vadd.f32 %v6941, %v6982
        %v6992 = vadd.f32 %v6942, %v6984
        %v6993 = vadd.f32 %v6943, %v6987
        %v6994 = vadd.f32 %v6944, %v6989
        %s6995 = scalar_lea.vmem %s7, 144
        %v6996 = vld [vmem:[%s6995] sm:$0xf]
        %v6997 = vld [vmem:[%s6995 + $0x4] sm:$0xf]
        %v6998 = vld [vmem:[%s6995 + $0x8] sm:$0xf]
        %v6999 = vld [vmem:[%s6995 + $0xc] sm:$0xf]
        %v7004 = vunpack.c.l.b16 %v6996
        %v7005 = vunpack.c.l.b16 %v6997
        %v7006 = vunpack.c.l.b16 %v6998
        %v7007 = vunpack.c.l.b16 %v6999
        %v7008 = vpack.c.b16 %v7005, %v7004
        %v7009 = vpack.c.b16 %v7007, %v7006
        %7010 = vrot.lane.b32.xlu0 %v6555, 117
        %v7011 = vpop.permute.xlu0 %7010
        %7012 = vrot.lane.b32.xlu0 %v6556, 117
        %v7013 = vpop.permute.xlu0 %7012
        %v7017 = vsel %vm6584, %v7008, 0
        %v7020 = vsel %vm6584, %v7009, 0
        %7022 = vmatpush.bf16.msra.mxu0 0
        %7023 = vmatpush.bf16.msra.mxu0 0
        %7024 = vmatpush.bf16.msra.mxu0 0
        %7025 = vmatpush.bf16.msra.mxu0 0
        %7026 = vmatpush.bf16.msra.mxu0 0
        %7027 = vmatpush.bf16.msra.mxu0 0
        %7028 = vmatpush.bf16.msra.mxu0 %v7013
        %7029 = vmatpush.bf16.msra.mxu0 %v7011
        %7030 = vmatmul.bf16.gmra.mxu0 %v7017
        %v7031 = vpop.f32.mrf.mxu0
        %v7032 = vadd.f32 0.0, %v7031
        %v7033 = vpop.f32.mrf.mxu0
        %v7034 = vadd.f32 0.0, %v7033
        %7035 = vmatmul.bf16.gmra.mxu0 %v7020
        %v7036 = vpop.f32.mrf.mxu0
        %v7037 = vadd.f32 0.0, %v7036
        %v7038 = vpop.f32.mrf.mxu0
        %v7039 = vadd.f32 0.0, %v7038
        %7040 = vdwg.mxu0
        %v7041 = vadd.f32 %v6991, %v7032
        %v7042 = vadd.f32 %v6992, %v7034
        %v7043 = vadd.f32 %v6993, %v7037
        %v7044 = vadd.f32 %v6994, %v7039
        %s7045 = scalar_lea.vmem %s7, 160
        %v7046 = vld [vmem:[%s7045] sm:$0xf]
        %v7047 = vld [vmem:[%s7045 + $0x4] sm:$0xf]
        %v7048 = vld [vmem:[%s7045 + $0x8] sm:$0xf]
        %v7049 = vld [vmem:[%s7045 + $0xc] sm:$0xf]
        %v7054 = vunpack.c.l.b16 %v7046
        %v7055 = vunpack.c.l.b16 %v7047
        %v7056 = vunpack.c.l.b16 %v7048
        %v7057 = vunpack.c.l.b16 %v7049
        %v7058 = vpack.c.b16 %v7055, %v7054
        %v7059 = vpack.c.b16 %v7057, %v7056
        %7060 = vrot.lane.b32.xlu0 %v6555, 116
        %v7061 = vpop.permute.xlu0 %7060
        %7062 = vrot.lane.b32.xlu0 %v6556, 116
        %v7063 = vpop.permute.xlu0 %7062
        %v7067 = vsel %vm6584, %v7058, 0
        %v7070 = vsel %vm6584, %v7059, 0
        %7072 = vmatpush.bf16.msra.mxu0 0
        %7073 = vmatpush.bf16.msra.mxu0 0
        %7074 = vmatpush.bf16.msra.mxu0 0
        %7075 = vmatpush.bf16.msra.mxu0 0
        %7076 = vmatpush.bf16.msra.mxu0 0
        %7077 = vmatpush.bf16.msra.mxu0 0
        %7078 = vmatpush.bf16.msra.mxu0 %v7063
        %7079 = vmatpush.bf16.msra.mxu0 %v7061
        %7080 = vmatmul.bf16.gmra.mxu0 %v7067
        %v7081 = vpop.f32.mrf.mxu0
        %v7082 = vadd.f32 0.0, %v7081
        %v7083 = vpop.f32.mrf.mxu0
        %v7084 = vadd.f32 0.0, %v7083
        %7085 = vmatmul.bf16.gmra.mxu0 %v7070
        %v7086 = vpop.f32.mrf.mxu0
        %v7087 = vadd.f32 0.0, %v7086
        %v7088 = vpop.f32.mrf.mxu0
        %v7089 = vadd.f32 0.0, %v7088
        %7090 = vdwg.mxu0
        %v7091 = vadd.f32 %v7041, %v7082
        %v7092 = vadd.f32 %v7042, %v7084
        %v7093 = vadd.f32 %v7043, %v7087
        %v7094 = vadd.f32 %v7044, %v7089
        %s7095 = scalar_lea.vmem %s7, 176
        %v7096 = vld [vmem:[%s7095] sm:$0xf]
        %v7097 = vld [vmem:[%s7095 + $0x4] sm:$0xf]
        %v7098 = vld [vmem:[%s7095 + $0x8] sm:$0xf]
        %v7099 = vld [vmem:[%s7095 + $0xc] sm:$0xf]
        %v7104 = vunpack.c.l.b16 %v7096
        %v7105 = vunpack.c.l.b16 %v7097
        %v7106 = vunpack.c.l.b16 %v7098
        %v7107 = vunpack.c.l.b16 %v7099
        %v7108 = vpack.c.b16 %v7105, %v7104
        %v7109 = vpack.c.b16 %v7107, %v7106
        %7110 = vrot.lane.b32.xlu0 %v6555, 115
        %v7111 = vpop.permute.xlu0 %7110
        %7112 = vrot.lane.b32.xlu0 %v6556, 115
        %v7113 = vpop.permute.xlu0 %7112
        %v7117 = vsel %vm6584, %v7108, 0
        %v7120 = vsel %vm6584, %v7109, 0
        %7122 = vmatpush.bf16.msra.mxu0 0
        %7123 = vmatpush.bf16.msra.mxu0 0
        %7124 = vmatpush.bf16.msra.mxu0 0
        %7125 = vmatpush.bf16.msra.mxu0 0
        %7126 = vmatpush.bf16.msra.mxu0 0
        %7127 = vmatpush.bf16.msra.mxu0 0
        %7128 = vmatpush.bf16.msra.mxu0 %v7113
        %7129 = vmatpush.bf16.msra.mxu0 %v7111
        %7130 = vmatmul.bf16.gmra.mxu0 %v7117
        %v7131 = vpop.f32.mrf.mxu0
        %v7132 = vadd.f32 0.0, %v7131
        %v7133 = vpop.f32.mrf.mxu0
        %v7134 = vadd.f32 0.0, %v7133
        %7135 = vmatmul.bf16.gmra.mxu0 %v7120
        %v7136 = vpop.f32.mrf.mxu0
        %v7137 = vadd.f32 0.0, %v7136
        %v7138 = vpop.f32.mrf.mxu0
        %v7139 = vadd.f32 0.0, %v7138
        %7140 = vdwg.mxu0
        %v7141 = vadd.f32 %v7091, %v7132
        %v7142 = vadd.f32 %v7092, %v7134
        %v7143 = vadd.f32 %v7093, %v7137
        %v7144 = vadd.f32 %v7094, %v7139
        %s7145 = scalar_lea.vmem %s7, 192
        %v7146 = vld [vmem:[%s7145] sm:$0xf]
        %v7147 = vld [vmem:[%s7145 + $0x4] sm:$0xf]
        %v7148 = vld [vmem:[%s7145 + $0x8] sm:$0xf]
        %v7149 = vld [vmem:[%s7145 + $0xc] sm:$0xf]
        %v7154 = vunpack.c.l.b16 %v7146
        %v7155 = vunpack.c.l.b16 %v7147
        %v7156 = vunpack.c.l.b16 %v7148
        %v7157 = vunpack.c.l.b16 %v7149
        %v7158 = vpack.c.b16 %v7155, %v7154
        %v7159 = vpack.c.b16 %v7157, %v7156
        %7160 = vrot.lane.b32.xlu0 %v6555, 113
        %v7161 = vpop.permute.xlu0 %7160
        %7162 = vrot.lane.b32.xlu0 %v6556, 113
        %v7163 = vpop.permute.xlu0 %7162
        %v7167 = vsel %vm6584, %v7158, 0
        %v7170 = vsel %vm6584, %v7159, 0
        %7172 = vmatpush.bf16.msra.mxu0 0
        %7173 = vmatpush.bf16.msra.mxu0 0
        %7174 = vmatpush.bf16.msra.mxu0 0
        %7175 = vmatpush.bf16.msra.mxu0 0
        %7176 = vmatpush.bf16.msra.mxu0 0
        %7177 = vmatpush.bf16.msra.mxu0 0
        %7178 = vmatpush.bf16.msra.mxu0 %v7163
        %7179 = vmatpush.bf16.msra.mxu0 %v7161
        %7180 = vmatmul.bf16.gmra.mxu0 %v7167
        %v7181 = vpop.f32.mrf.mxu0
        %v7182 = vadd.f32 0.0, %v7181
        %v7183 = vpop.f32.mrf.mxu0
        %v7184 = vadd.f32 0.0, %v7183
        %7185 = vmatmul.bf16.gmra.mxu0 %v7170
        %v7186 = vpop.f32.mrf.mxu0
        %v7187 = vadd.f32 0.0, %v7186
        %v7188 = vpop.f32.mrf.mxu0
        %v7189 = vadd.f32 0.0, %v7188
        %7190 = vdwg.mxu0
        %v7191 = vadd.f32 %v7141, %v7182
        %v7192 = vadd.f32 %v7142, %v7184
        %v7193 = vadd.f32 %v7143, %v7187
        %v7194 = vadd.f32 %v7144, %v7189
        %s7195 = scalar_lea.vmem %s7, 208
        %v7196 = vld [vmem:[%s7195] sm:$0xf]
        %v7197 = vld [vmem:[%s7195 + $0x4] sm:$0xf]
        %v7198 = vld [vmem:[%s7195 + $0x8] sm:$0xf]
        %v7199 = vld [vmem:[%s7195 + $0xc] sm:$0xf]
        %v7204 = vunpack.c.l.b16 %v7196
        %v7205 = vunpack.c.l.b16 %v7197
        %v7206 = vunpack.c.l.b16 %v7198
        %v7207 = vunpack.c.l.b16 %v7199
        %v7208 = vpack.c.b16 %v7205, %v7204
        %v7209 = vpack.c.b16 %v7207, %v7206
        %7210 = vrot.lane.b32.xlu0 %v6555, 112
        %v7211 = vpop.permute.xlu0 %7210
        %7212 = vrot.lane.b32.xlu0 %v6556, 112
        %v7213 = vpop.permute.xlu0 %7212
        %v7217 = vsel %vm6584, %v7208, 0
        %v7220 = vsel %vm6584, %v7209, 0
        %7222 = vmatpush.bf16.msra.mxu0 0
        %7223 = vmatpush.bf16.msra.mxu0 0
        %7224 = vmatpush.bf16.msra.mxu0 0
        %7225 = vmatpush.bf16.msra.mxu0 0
        %7226 = vmatpush.bf16.msra.mxu0 0
        %7227 = vmatpush.bf16.msra.mxu0 0
        %7228 = vmatpush.bf16.msra.mxu0 %v7213
        %7229 = vmatpush.bf16.msra.mxu0 %v7211
        %7230 = vmatmul.bf16.gmra.mxu0 %v7217
        %v7231 = vpop.f32.mrf.mxu0
        %v7232 = vadd.f32 0.0, %v7231
        %v7233 = vpop.f32.mrf.mxu0
        %v7234 = vadd.f32 0.0, %v7233
        %7235 = vmatmul.bf16.gmra.mxu0 %v7220
        %v7236 = vpop.f32.mrf.mxu0
        %v7237 = vadd.f32 0.0, %v7236
        %v7238 = vpop.f32.mrf.mxu0
        %v7239 = vadd.f32 0.0, %v7238
        %7240 = vdwg.mxu0
        %v7241 = vadd.f32 %v7191, %v7232
        %v7242 = vadd.f32 %v7192, %v7234
        %v7243 = vadd.f32 %v7193, %v7237
        %v7244 = vadd.f32 %v7194, %v7239
        %s7245 = scalar_lea.vmem %s7, 224
        %v7246 = vld [vmem:[%s7245] sm:$0xf]
        %v7247 = vld [vmem:[%s7245 + $0x4] sm:$0xf]
        %v7248 = vld [vmem:[%s7245 + $0x8] sm:$0xf]
        %v7249 = vld [vmem:[%s7245 + $0xc] sm:$0xf]
        %v7254 = vunpack.c.l.b16 %v7246
        %v7255 = vunpack.c.l.b16 %v7247
        %v7256 = vunpack.c.l.b16 %v7248
        %v7257 = vunpack.c.l.b16 %v7249
        %v7258 = vpack.c.b16 %v7255, %v7254
        %v7259 = vpack.c.b16 %v7257, %v7256
        %7260 = vrot.lane.b32.xlu0 %v6555, 111
        %v7261 = vpop.permute.xlu0 %7260
        %7262 = vrot.lane.b32.xlu0 %v6556, 111
        %v7263 = vpop.permute.xlu0 %7262
        %v7267 = vsel %vm6584, %v7258, 0
        %v7270 = vsel %vm6584, %v7259, 0
        %7272 = vmatpush.bf16.msra.mxu0 0
        %7273 = vmatpush.bf16.msra.mxu0 0
        %7274 = vmatpush.bf16.msra.mxu0 0
        %7275 = vmatpush.bf16.msra.mxu0 0
        %7276 = vmatpush.bf16.msra.mxu0 0
        %7277 = vmatpush.bf16.msra.mxu0 0
        %7278 = vmatpush.bf16.msra.mxu0 %v7263
        %7279 = vmatpush.bf16.msra.mxu0 %v7261
        %7280 = vmatmul.bf16.gmra.mxu0 %v7267
        %v7281 = vpop.f32.mrf.mxu0
        %v7282 = vadd.f32 0.0, %v7281
        %v7283 = vpop.f32.mrf.mxu0
        %v7284 = vadd.f32 0.0, %v7283
        %7285 = vmatmul.bf16.gmra.mxu0 %v7270
        %v7286 = vpop.f32.mrf.mxu0
        %v7287 = vadd.f32 0.0, %v7286
        %v7288 = vpop.f32.mrf.mxu0
        %v7289 = vadd.f32 0.0, %v7288
        %7290 = vdwg.mxu0
        %v7291 = vadd.f32 %v7241, %v7282
        %v7292 = vadd.f32 %v7242, %v7284
        %v7293 = vadd.f32 %v7243, %v7287
        %v7294 = vadd.f32 %v7244, %v7289
        %s7295 = scalar_lea.vmem %s7, 240
        %v7296 = vld [vmem:[%s7295] sm:$0xf]
        %v7297 = vld [vmem:[%s7295 + $0x4] sm:$0xf]
        %v7298 = vld [vmem:[%s7295 + $0x8] sm:$0xf]
        %v7299 = vld [vmem:[%s7295 + $0xc] sm:$0xf]
        %v7304 = vunpack.c.l.b16 %v7296
        %v7305 = vunpack.c.l.b16 %v7297
        %v7306 = vunpack.c.l.b16 %v7298
        %v7307 = vunpack.c.l.b16 %v7299
        %v7308 = vpack.c.b16 %v7305, %v7304
        %v7309 = vpack.c.b16 %v7307, %v7306
        %7310 = vrot.lane.b32.xlu0 %v6555, 110
        %v7311 = vpop.permute.xlu0 %7310
        %7312 = vrot.lane.b32.xlu0 %v6556, 110
        %v7313 = vpop.permute.xlu0 %7312
        %v7317 = vsel %vm6584, %v7308, 0
        %v7320 = vsel %vm6584, %v7309, 0
        %7322 = vmatpush.bf16.msra.mxu0 0
        %7323 = vmatpush.bf16.msra.mxu0 0
        %7324 = vmatpush.bf16.msra.mxu0 0
        %7325 = vmatpush.bf16.msra.mxu0 0
        %7326 = vmatpush.bf16.msra.mxu0 0
        %7327 = vmatpush.bf16.msra.mxu0 0
        %7328 = vmatpush.bf16.msra.mxu0 %v7313
        %7329 = vmatpush.bf16.msra.mxu0 %v7311
        %7330 = vmatmul.bf16.gmra.mxu0 %v7317
        %v7331 = vpop.f32.mrf.mxu0
        %v7332 = vadd.f32 0.0, %v7331
        %v7333 = vpop.f32.mrf.mxu0
        %v7334 = vadd.f32 0.0, %v7333
        %7335 = vmatmul.bf16.gmra.mxu0 %v7320
        %v7336 = vpop.f32.mrf.mxu0
        %v7337 = vadd.f32 0.0, %v7336
        %v7338 = vpop.f32.mrf.mxu0
        %v7339 = vadd.f32 0.0, %v7338
        %7340 = vdwg.mxu0
        %v7341 = vadd.f32 %v7291, %v7332
        %v7342 = vadd.f32 %v7292, %v7334
        %v7343 = vadd.f32 %v7293, %v7337
        %v7344 = vadd.f32 %v7294, %v7339
        %v7345 = vld [vmem:[%s8] sm:$0xff]
        %v7346 = vld [vmem:[%s8 + $0x8] sm:$0xff]
        %v7347 = vld [vmem:[%s8 + $0x10] sm:$0xff]
        %v7348 = vld [vmem:[%s8 + $0x18] sm:$0xff]
        %7350 = vset.pattern.permute.xlu0 0
        %7351 = vperm.xlu0 %7350, %v7345
        %v7352 = vpop.permute.xlu0 %7351
        %7355 = vset.pattern.permute.xlu0 0
        %7356 = vperm.xlu0 %7355, %v7346
        %v7357 = vpop.permute.xlu0 %7356
        %7360 = vset.pattern.permute.xlu0 0
        %7361 = vperm.xlu0 %7360, %v7347
        %v7362 = vpop.permute.xlu0 %7361
        %7365 = vset.pattern.permute.xlu0 0
        %7366 = vperm.xlu0 %7365, %v7348
        %v7367 = vpop.permute.xlu0 %7366
        %v7369 = vadd.f32 %v7341, %v7352
        %v7370 = vadd.f32 %v7342, %v7357
        %v7371 = vadd.f32 %v7343, %v7362
        %v7372 = vadd.f32 %v7344, %v7367
        %vm7373 = vcmp.lt.s32.totalorder %v4016, 2
        %vm7374 = vcmp.ge.s32.totalorder %v4016, 5
        %vm7375 = vcmp.lt.s32.totalorder %v4016, 7
        %vm7376 = vmand %vm7374, %vm7375
        %vm7377 = vmor %vm7373, %vm7376
        %v7378 = vsel %vm7377, 1, 0
        %vm7379 = vcmp.eq.s32.totalorder %v7378, 1
        %v7380 = vsel %vm7379, %v7369, 0.0
        %v7381 = vsel %vm7379, %v7370, 0.0
        %v7382 = vsel %vm7379, %v7371, 0.0
        %v7383 = vsel %vm7379, %v7372, 0.0
        %vm7384 = vcmask 56320
        %v7385 = vsel %vm7384, %v7380, 0.0
        %7386 = vadd.xlane.f32.xlu0 %v7385
        %v7387 = vpop.xlane.xlu0 %7386
        %v7388 = vsel %vm7384, %v7381, 0.0
        %7389 = vadd.xlane.f32.xlu0 %v7388
        %v7390 = vpop.xlane.xlu0 %7389
        %v7391 = vsel %vm7384, %v7382, 0.0
        %7392 = vadd.xlane.f32.xlu0 %v7391
        %v7393 = vpop.xlane.xlu0 %7392
        %v7394 = vsel %vm7384, %v7383, 0.0
        %7395 = vadd.xlane.f32.xlu0 %v7394
        %v7396 = vpop.xlane.xlu0 %7395
        %v7397 = vmul.f32 %v7387, 0.25
        %v7398 = vmul.f32 %v7390, 0.25
        %v7399 = vmul.f32 %v7393, 0.25
        %v7400 = vmul.f32 %v7396, 0.25
        %v7401 = vsub.f32 %v7369, %v7397
        %v7402 = vsub.f32 %v7370, %v7398
        %v7403 = vsub.f32 %v7371, %v7399
        %v7404 = vsub.f32 %v7372, %v7400
        %v7405 = vmul.f32 %v7401, %v7401
        %v7406 = vmul.f32 %v7402, %v7402
        %v7407 = vmul.f32 %v7403, %v7403
        %v7408 = vmul.f32 %v7404, %v7404
        %v7409 = vsel %vm7379, %v7405, 0.0
        %v7410 = vsel %vm7379, %v7406, 0.0
        %v7411 = vsel %vm7379, %v7407, 0.0
        %v7412 = vsel %vm7379, %v7408, 0.0
        %v7413 = vsel %vm7384, %v7409, 0.0
        %7414 = vadd.xlane.f32.xlu0 %v7413
        %v7415 = vpop.xlane.xlu0 %7414
        %v7416 = vsel %vm7384, %v7410, 0.0
        %7417 = vadd.xlane.f32.xlu0 %v7416
        %v7418 = vpop.xlane.xlu0 %7417
        %v7419 = vsel %vm7384, %v7411, 0.0
        %7420 = vadd.xlane.f32.xlu0 %v7419
        %v7421 = vpop.xlane.xlu0 %7420
        %v7422 = vsel %vm7384, %v7412, 0.0
        %7423 = vadd.xlane.f32.xlu0 %v7422
        %v7424 = vpop.xlane.xlu0 %7423
        %v7425 = vmul.f32 %v7415, 0.25
        %v7426 = vmul.f32 %v7418, 0.25
        %v7427 = vmul.f32 %v7421, 0.25
        %v7428 = vmul.f32 %v7424, 0.25
        %v7429 = vadd.f32 %v7425, 1e-05
        %v7430 = vadd.f32 %v7426, 1e-05
        %v7431 = vadd.f32 %v7427, 1e-05
        %v7432 = vadd.f32 %v7428, 1e-05
        %v7433 = vrsqrt.pop %v7429
        %v7434 = vmul.f32 %v7433, %v7429
        %v7435 = vmul.f32 %v7434, %v7433
        %v7436 = vmul.f32 0.5, %v7435
        %v7437 = vsub.f32 1.5, %v7436
        %v7438 = vmul.f32 %v7433, %v7437
        %vm7439 = vweird.f32 %v7429
        %vm7440 = vweird.f32 %v7433
        %vm7441 = vmor %vm7439, %vm7440
        %v7442 = vsel %vm7441, %v7433, %v7438
        %v7443 = vrsqrt.pop %v7430
        %v7444 = vmul.f32 %v7443, %v7430
        %v7445 = vmul.f32 %v7444, %v7443
        %v7446 = vmul.f32 0.5, %v7445
        %v7447 = vsub.f32 1.5, %v7446
        %v7448 = vmul.f32 %v7443, %v7447
        %vm7449 = vweird.f32 %v7430
        %vm7450 = vweird.f32 %v7443
        %vm7451 = vmor %vm7449, %vm7450
        %v7452 = vsel %vm7451, %v7443, %v7448
        %v7453 = vrsqrt.pop %v7431
        %v7454 = vmul.f32 %v7453, %v7431
        %v7455 = vmul.f32 %v7454, %v7453
        %v7456 = vmul.f32 0.5, %v7455
        %v7457 = vsub.f32 1.5, %v7456
        %v7458 = vmul.f32 %v7453, %v7457
        %vm7459 = vweird.f32 %v7431
        %vm7460 = vweird.f32 %v7453
        %vm7461 = vmor %vm7459, %vm7460
        %v7462 = vsel %vm7461, %v7453, %v7458
        %v7463 = vrsqrt.pop %v7432
        %v7464 = vmul.f32 %v7463, %v7432
        %v7465 = vmul.f32 %v7464, %v7463
        %v7466 = vmul.f32 0.5, %v7465
        %v7467 = vsub.f32 1.5, %v7466
        %v7468 = vmul.f32 %v7463, %v7467
        %vm7469 = vweird.f32 %v7432
        %vm7470 = vweird.f32 %v7463
        %vm7471 = vmor %vm7469, %vm7470
        %v7472 = vsel %vm7471, %v7463, %v7468
        %v7473 = vmul.f32 %v7401, %v7442
        %v7474 = vmul.f32 %v7402, %v7452
        %v7475 = vmul.f32 %v7403, %v7462
        %v7476 = vmul.f32 %v7404, %v7472
        %v7477 = vld [vmem:[%s9] sm:$0xff]
        %v7478 = vld [vmem:[%s9 + $0x8] sm:$0xff]
        %v7479 = vld [vmem:[%s9 + $0x10] sm:$0xff]
        %v7480 = vld [vmem:[%s9 + $0x18] sm:$0xff]
        %7482 = vset.pattern.permute.xlu0 0
        %7483 = vperm.xlu0 %7482, %v7477
        %v7484 = vpop.permute.xlu0 %7483
        %7487 = vset.pattern.permute.xlu0 0
        %7488 = vperm.xlu0 %7487, %v7478
        %v7489 = vpop.permute.xlu0 %7488
        %7492 = vset.pattern.permute.xlu0 0
        %7493 = vperm.xlu0 %7492, %v7479
        %v7494 = vpop.permute.xlu0 %7493
        %7497 = vset.pattern.permute.xlu0 0
        %7498 = vperm.xlu0 %7497, %v7480
        %v7499 = vpop.permute.xlu0 %7498
        %v7501 = vmul.f32 %v7473, %v7484
        %v7502 = vmul.f32 %v7474, %v7489
        %v7503 = vmul.f32 %v7475, %v7494
        %v7504 = vmul.f32 %v7476, %v7499
        %v7505 = vld [vmem:[%s10] sm:$0xff]
        %v7506 = vld [vmem:[%s10 + $0x8] sm:$0xff]
        %v7507 = vld [vmem:[%s10 + $0x10] sm:$0xff]
        %v7508 = vld [vmem:[%s10 + $0x18] sm:$0xff]
        %7510 = vset.pattern.permute.xlu0 0
        %7511 = vperm.xlu0 %7510, %v7505
        %v7512 = vpop.permute.xlu0 %7511
        %7515 = vset.pattern.permute.xlu0 0
        %7516 = vperm.xlu0 %7515, %v7506
        %v7517 = vpop.permute.xlu0 %7516
        %7520 = vset.pattern.permute.xlu0 0
        %7521 = vperm.xlu0 %7520, %v7507
        %v7522 = vpop.permute.xlu0 %7521
        %7525 = vset.pattern.permute.xlu0 0
        %7526 = vperm.xlu0 %7525, %v7508
        %v7527 = vpop.permute.xlu0 %7526
        %v7529 = vadd.f32 %v7501, %v7512
        %v7530 = vadd.f32 %v7502, %v7517
        %v7531 = vadd.f32 %v7503, %v7522
        %v7532 = vadd.f32 %v7504, %v7527
        %vm7533 = vcmp.ge.f32.partialorder %v7529, 0.0
        %vm7534 = vcmp.ge.f32.partialorder %v7530, 0.0
        %vm7535 = vcmp.ge.f32.partialorder %v7531, 0.0
        %vm7536 = vcmp.ge.f32.partialorder %v7532, 0.0
        %v7537 = vmul.f32 %v7529, 0.2
        %v7538 = vmul.f32 %v7530, 0.2
        %v7539 = vmul.f32 %v7531, 0.2
        %v7540 = vmul.f32 %v7532, 0.2
        %v7541 = vsel %vm7533, %v7529, %v7537
        %v7542 = vsel %vm7534, %v7530, %v7538
        %v7543 = vsel %vm7535, %v7531, %v7539
        %v7544 = vsel %vm7536, %v7532, %v7540
        %vm7545 = vcmask 15360
        %7546 = vst.msk [vmem:[%s555] sm:$0xff] %vm7545, %v7541
        %7547 = vst.msk [vmem:[%s555 + $0x8] sm:$0xff] %vm7545, %v7542
        %7548 = vst.msk [vmem:[%s555 + $0x10] sm:$0xff] %vm7545, %v7543
        %7549 = vst.msk [vmem:[%s555 + $0x18] sm:$0xff] %vm7545, %v7544
        %7554 = vrot.lane.b32.xlu0 %v7541, 125
        %v7555 = vpop.permute.xlu0 %7554
        %7556 = vrot.lane.b32.xlu0 %v7542, 125
        %v7557 = vpop.permute.xlu0 %7556
        %7558 = vrot.lane.b32.xlu0 %v7543, 125
        %v7559 = vpop.permute.xlu0 %7558
        %7560 = vrot.lane.b32.xlu0 %v7544, 125
        %v7561 = vpop.permute.xlu0 %7560
        %vm7566 = vcmask 31760
        %7567 = vst.msk [vmem:[%s555] sm:$0xff] %vm7566, %v7555
        %7568 = vst.msk [vmem:[%s555 + $0x8] sm:$0xff] %vm7566, %v7557
        %7569 = vst.msk [vmem:[%s555 + $0x10] sm:$0xff] %vm7566, %v7559
        %7570 = vst.msk [vmem:[%s555 + $0x18] sm:$0xff] %vm7566, %v7561
        %v7571 = vld [vmem:[%s555] sm:$0xff]
        %v7572 = vld [vmem:[%s555 + $0x8] sm:$0xff]
        %v7573 = vld [vmem:[%s555 + $0x10] sm:$0xff]
        %v7574 = vld [vmem:[%s555 + $0x18] sm:$0xff]
        %v7575 = vld [vmem:[%s11] sm:$0xff]
        %v7576 = vld [vmem:[%s11 + $0x8] sm:$0xff]
        %v7577 = vld [vmem:[%s11 + $0x10] sm:$0xff]
        %v7578 = vld [vmem:[%s11 + $0x18] sm:$0xff]
        %7580 = vset.pattern.permute.xlu0 0
        %7581 = vperm.xlu0 %7580, %v7575
        %v7582 = vpop.permute.xlu0 %7581
        %7585 = vset.pattern.permute.xlu0 0
        %7586 = vperm.xlu0 %7585, %v7576
        %v7587 = vpop.permute.xlu0 %7586
        %7590 = vset.pattern.permute.xlu0 0
        %7591 = vperm.xlu0 %7590, %v7577
        %v7592 = vpop.permute.xlu0 %7591
        %7595 = vset.pattern.permute.xlu0 0
        %7596 = vperm.xlu0 %7595, %v7578
        %v7597 = vpop.permute.xlu0 %7596
        %v7599 = vmul.f32 %v7571, %v7582
        %v7600 = vmul.f32 %v7572, %v7587
        %v7601 = vmul.f32 %v7573, %v7592
        %v7602 = vmul.f32 %v7574, %v7597
        %vm7603 = vcmask 31744
        %v7604 = vsel %vm7603, %v7599, 0.0
        %v7605 = vsel %vm7603, %v7600, 0.0
        %v7606 = vadd.f32 %v7604, %v7605
        %v7607 = vsel %vm7603, %v7601, 0.0
        %v7608 = vadd.f32 %v7606, %v7607
        %v7609 = vsel %vm7603, %v7602, 0.0
        %v7610 = vadd.f32 %v7608, %v7609
        %v7611 = vrot.slane %v7610, 4
        %v7612 = vadd.f32 %v7610, %v7611
        %v7613 = vrot.slane %v7612, 2
        %v7614 = vadd.f32 %v7612, %v7613
        %v7615 = vrot.slane %v7614, 1
        %v7616 = vadd.f32 %v7614, %v7615
        %v7617 = vld [vmem:[#allocation2] sm:$0x1]
        %7619 = vset.pattern.permute.xlu0 0
        %7620 = vperm.xlu0 %7619, %v7617
        %v7621 = vpop.permute.xlu0 %7620
        %v7623 = vperm.slane %v7621, 0
        %v7624 = vadd.f32 %v7616, %v7623
        %vm7625 = vcmask 24576
        %7626 = vst.msk [vmem:[%s540] sm:$0x1] %vm7625, %v7624
        %s7627 = sand.u32 %s322, 1
        %s7628 = scalar_lea.sflag [#allocation4], %s7627
        %s7629 = sand.u32 %s322, 1
        %s7630 = smul.addr %s7629, 32
        %s7631 = scalar_lea.vmem [#allocation3], %s7630
        %p7632 = scmp.lt.s32.totalorder %s36, 1
        %s7633 = scalar_select %p7632, %s36, 1
        %s7634 = smul.addr %s7633, 4
        %s7635 = smul.addr %s7634, 8
        %s7636 = scalar_lea.vmem %s14, %s7635
        %p7637 = scmp.lt.s32.totalorder %s36, 1
        %s7638 = scalar_select %p7637, %s36, 1
        %s7639 = smul.addr %s7638, 4
        %s7640 = smul.addr %s7639, 8
        %s7641 = scalar_lea.vmem %s15, %s7640
        %s7642 = sand.u32 %s400, 1
        %s7643 = scalar_lea.sflag [#allocation6], %s7642
        %s7644 = sand.u32 %s400, 1
        %s7645 = scalar_lea.vmem [#allocation5], %s7644
        // Predicated region
        $region73: #{tpu_custom_call.1} parent=71 // pred_check
          %p7646 = pneg %p332
        $region74: #{tpu_custom_call.1} parent=71 // pred_check_branch
          %7648 = sbr.rel (%p7646) target = $region76
        $region75: #{tpu_custom_call.1} parent=71 // pred_region
          %7650 = vsyncadd %s7628, 0
          %s7651 = smul.addr %s36, 4
          %s7652 = smul.addr %s7651, 8
          %s7653 = scalar_lea.hbm %s13, %s7652
          %s7654 = sshll.u32 %s7631, 4
          %s7655 = int_to_ptr.vmem [resolvable:$true] %s7654
          %s7656 = sshll.u32 %s7653, 4
          %s7657 = int_to_ptr.hbm [resolvable:$true] %s7656
          %7662 = dma.vmem_to_hbm [thread:$0]  %s7655, 512, %s7657, %s7628, 256, 256, 16
        $region76: #{tpu_custom_call.1} parent=71 // pred_fallthru
          _
        // Predicated region
        $region77: #{tpu_custom_call.1} parent=71 // pred_check
          %p7663 = pneg %p358
        $region78: #{tpu_custom_call.1} parent=71 // pred_check_branch
          %7665 = sbr.rel (%p7663) target = $region80
        $region79: #{tpu_custom_call.1} parent=71 // pred_region
          _
        $region80: #{tpu_custom_call.1} parent=71 // pred_fallthru
          _
        // Predicated region
        $region81: #{tpu_custom_call.1} parent=71 // pred_check
          %p7666 = pneg %p384
        $region82: #{tpu_custom_call.1} parent=71 // pred_check_branch
          %7668 = sbr.rel (%p7666) target = $region84
        $region83: #{tpu_custom_call.1} parent=71 // pred_region
          _
        $region84: #{tpu_custom_call.1} parent=71 // pred_fallthru
          _
        // Predicated region
        $region85: #{tpu_custom_call.1} parent=71 // pred_check
          %p7669 = pneg %p410
        $region86: #{tpu_custom_call.1} parent=71 // pred_check_branch
          %7671 = sbr.rel (%p7669) target = $region88
        $region87: #{tpu_custom_call.1} parent=71 // pred_region
          %7673 = vsyncadd %s7643, 0
          %s7674 = scalar_lea.hbm %s16, %s36
          %s7676 = sshll.u32 %s7645, 4
          %s7677 = int_to_ptr.vmem [resolvable:$true] %s7676
          %s7678 = sshll.u32 %s7674, 4
          %s7679 = int_to_ptr.hbm [resolvable:$true] %s7678
          %7681 = dma.vmem_to_hbm [thread:$0]  %s7677, 16, %s7679, %s7643
        $region88: #{tpu_custom_call.1} parent=71 // pred_fallthru
          _
      $region72: #{tpu_custom_call.1} parent=5 // pred_fallthru
        _
      %p7682 = scmp.le.s32.totalorder 2, %s31
      // Predicated region
      $region89: #{tpu_custom_call.1} parent=5 // pred_check
        %p7683 = pneg %p7682
      $region90: #{tpu_custom_call.1} parent=5 // pred_check_branch
        %7685 = sbr.rel (%p7683) target = $region92
      $region91: #{tpu_custom_call.1} parent=5 // pred_region
        %s7686 = ssub.s32 %s31, 2
        // Predicated region
        $region93: #{tpu_custom_call.1} parent=91 // pred_check
          %p7687 = pneg %p338
        $region94: #{tpu_custom_call.1} parent=91 // pred_check_branch
          %7689 = sbr.rel (%p7687) target = $region96
        $region95: #{tpu_custom_call.1} parent=91 // pred_region
          %s7690 = sand.u32 %s323, 1
          %s7691 = scalar_lea.sflag [#allocation4], %s7690
          %s7692 = sand.u32 %s323, 1
          %s7693 = smul.addr %s7692, 32
          %s7694 = scalar_lea.vmem [#allocation3], %s7693
          %7696 = dma.done %s7691, 512
        $region96: #{tpu_custom_call.1} parent=91 // pred_fallthru
          _
        // Predicated region
        $region97: #{tpu_custom_call.1} parent=91 // pred_check
          %p7697 = pneg %p364
        $region98: #{tpu_custom_call.1} parent=91 // pred_check_branch
          %7699 = sbr.rel (%p7697) target = $region100
        $region99: #{tpu_custom_call.1} parent=91 // pred_region
          %p7700 = scmp.lt.s32.totalorder %s37, 1
          %s7701 = scalar_select %p7700, %s37, 1
          %s7702 = smul.addr %s7701, 4
          %s7703 = smul.addr %s7702, 8
          %s7704 = scalar_lea.vmem %s14, %s7703
        $region100: #{tpu_custom_call.1} parent=91 // pred_fallthru
          _
        // Predicated region
        $region101: #{tpu_custom_call.1} parent=91 // pred_check
          %p7705 = pneg %p390
        $region102: #{tpu_custom_call.1} parent=91 // pred_check_branch
          %7707 = sbr.rel (%p7705) target = $region104
        $region103: #{tpu_custom_call.1} parent=91 // pred_region
          %p7708 = scmp.lt.s32.totalorder %s37, 1
          %s7709 = scalar_select %p7708, %s37, 1
          %s7710 = smul.addr %s7709, 4
          %s7711 = smul.addr %s7710, 8
          %s7712 = scalar_lea.vmem %s15, %s7711
        $region104: #{tpu_custom_call.1} parent=91 // pred_fallthru
          _
        // Predicated region
        $region105: #{tpu_custom_call.1} parent=91 // pred_check
          %p7713 = pneg %p416
        $region106: #{tpu_custom_call.1} parent=91 // pred_check_branch
          %7715 = sbr.rel (%p7713) target = $region108
        $region107: #{tpu_custom_call.1} parent=91 // pred_region
          %s7716 = sand.u32 %s401, 1
          %s7717 = scalar_lea.sflag [#allocation6], %s7716
          %s7718 = sand.u32 %s401, 1
          %s7719 = scalar_lea.vmem [#allocation5], %s7718
          %7721 = dma.done %s7717, 16
        $region108: #{tpu_custom_call.1} parent=91 // pred_fallthru
          _
      $region92: #{tpu_custom_call.1} parent=5 // pred_fallthru
        _
    $region6: #{tpu_custom_call.1} parent=1 // loop_footer
      %s35 = sadd.s32 1, %s31
    $region7: #{tpu_custom_call.1} parent=1 // loop_footer_branch
      %30 = sbr.rel target = $region3
    $region8: #{tpu_custom_call.1} parent=1 // loop_exit
      _
    %7722 = vsyncpa [#allocation4], 1
    %s7723 = scalar_lea.sflag [#allocation4], 1
    %7724 = vsyncpa %s7723, 1
    %7725 = vsyncpa [#allocation6], 1
    %s7726 = scalar_lea.sflag [#allocation6], 1
    %7727 = vsyncpa %s7726, 1

</llo_original>
